<compile_context>
chip_gen: v7x
topology: tpu7x:2x2x1
jax: 0.10.0
libtpu: 0.0.40
codegen_flags: <defaults>
</compile_context>

<pallas_src>
import jax
import jax.numpy as jnp
from jax import lax
from jax.experimental import pallas as pl
from jax.experimental.pallas import tpu as pltpu

# Geometry implied by the module (fc1 takes 16*5*5 -> 32x32x3 inputs).
KS = 5                      # conv kernel size
H = W = 32                  # input spatial
CIN = 3                     # input channels
C1P = 16                    # kj*CIN + c lanes of the expanded input (15 -> 16)
OC1, OC1P = 6, 8            # conv1 out channels (padded to 8 lanes)
OC2 = 16                    # conv2 out channels
HP1 = WP1 = 14              # pooled conv1 spatial
W2 = 14                     # conv2 input width
HO2 = WO2 = 10              # conv2 output spatial
HP2 = WP2 = 5               # pooled conv2 spatial
ROWS1 = 2 * HP1 * W         # 896 conv1 output rows computed per image
CH1 = 128                   # conv1 chunk rows (one folded matmul each)
S2 = (HO2 - 1) * W2 + WO2   # 136 conv2 output rows per image (row-wrap trick)
P1ROWS = HP1 * WP1          # 196 pooled1 rows per image
P1EROWS = S2 + (KS - 1) * W2  # 192 rows of the kj-expanded pooled1
FQ = HP2 * WP2              # 25 flattened spatial positions
NCLS = 10
BT = 8                      # images per grid step (batch tile)
CONV2_CHUNKS = ((0, 72), (72, 64))   # row chunks covering the 136 conv2 rows


# ----------------------------------------------------------------------------
# The fused kernel.
# ----------------------------------------------------------------------------
def _lenet_kernel(xe_ref, w1_ref, b1_ref, w2_ref, b2_ref,
                  w1f_ref, b1f_ref, w2f_ref, b2f_ref, w3f_ref, b3f_ref,
                  out_ref,
                  y1_ref, p1_ref, p1e_ref, y2_ref, feat_ref):
    B = out_ref.shape[0]

    @pl.loop(0, B)
    def _per_image(b):
        img0 = b * (H * W)

        # ---- conv1 (5x5, 3->6) + ReLU: one folded MXU dot per 128-row chunk.
        #      xe rows are h*W + w with lanes j = kj*3 + c, so the 5 ki taps
        #      are contiguous row-shifted slices concatenated on lanes (K=80).
        for g in range(ROWS1 // CH1):                         # 7 chunks
            s0 = g * CH1
            pieces = []
            for ki in range(KS):
                start = pl.multiple_of(img0 + s0 + ki * W, 32)
                pieces.append(
                    xe_ref[pl.ds(start, CH1), :].astype(jnp.bfloat16))
            patch = jnp.concatenate(pieces, axis=1)           # (128, 80) bf16
            y = jnp.dot(patch, w1_ref[...],
                        preferred_element_type=jnp.float32)   # (128, 8) f32
            y1_ref[pl.ds(s0, CH1), :] = jnp.maximum(y + b1_ref[...], 0.0)

        # ---- 2x2/2 maxpool of conv1 (stride-2 row views; junk rows skipped).
        for hp in range(HP1):
            r0 = 2 * hp * W
            a = y1_ref[pl.ds(r0,         WP1, stride=2), :]
            bq = y1_ref[pl.ds(r0 + 1,     WP1, stride=2), :]
            c = y1_ref[pl.ds(r0 + W,     WP1, stride=2), :]
            d = y1_ref[pl.ds(r0 + W + 1, WP1, stride=2), :]
            p1_ref[pl.ds(hp * WP1, WP1), :] = jnp.maximum(
                jnp.maximum(a, bq), jnp.maximum(c, d))

        # ---- kj-expand pooled1 once: p1e[r, kj*8 + c] = p1[r + kj, c].
        for kj in range(KS):
            p1e_ref[:, kj * OC1P:(kj + 1) * OC1P] = p1_ref[pl.ds(kj, P1EROWS), :]

        # ---- conv2 (5x5, 6->16) + ReLU: folded dots with K = 5*40 = 200.
        for s0, ch in CONV2_CHUNKS:
            pieces = [
                p1e_ref[pl.ds(s0 + ki * W2, ch), :].astype(jnp.bfloat16)
                for ki in range(KS)
            ]
            patch = jnp.concatenate(pieces, axis=1)           # (ch, 200) bf16
            y = jnp.dot(patch, w2_ref[...],
                        preferred_element_type=jnp.float32)   # (ch, 16) f32
            y2_ref[pl.ds(s0, ch), :] = jnp.maximum(y + b2_ref[...], 0.0)

        # ---- 2x2/2 maxpool of conv2 -> 25 x 16 feature rows for this image.
        for hp in range(HP2):
            r0 = 2 * hp * W2
            a = y2_ref[pl.ds(r0,          WP2, stride=2), :]
            bq = y2_ref[pl.ds(r0 + 1,      WP2, stride=2), :]
            c = y2_ref[pl.ds(r0 + W2,     WP2, stride=2), :]
            d = y2_ref[pl.ds(r0 + W2 + 1, WP2, stride=2), :]
            feat_ref[pl.ds(b * FQ + hp * WP2, WP2), :] = jnp.maximum(
                jnp.maximum(a, bq), jnp.maximum(c, d))

    # ---- fused FC head (weights VMEM-resident; contraction over the 400 real
    #      features only).  xf[b, q*16 + c] = feat[b*25 + q, c].
    pieces = [feat_ref[pl.ds(q, B, stride=FQ), :] for q in range(FQ)]
    xf = jnp.concatenate(pieces, axis=1).astype(jnp.bfloat16)        # (B, 400)
    h = jnp.dot(xf, w1f_ref[...], preferred_element_type=jnp.float32)
    h = jnp.maximum(h + b1f_ref[...], 0.0).astype(jnp.bfloat16)
    h = jnp.dot(h, w2f_ref[...], preferred_element_type=jnp.float32)
    h = jnp.maximum(h + b2f_ref[...], 0.0).astype(jnp.bfloat16)
    out_ref[...] = (jnp.dot(h, w3f_ref[...],
                            preferred_element_type=jnp.float32)
                    + b3f_ref[...])


def _lenet_call(xe, w1, b1, w2, b2, w1f, b1f, w2f, b2f, w3f, b3f, *, n_pad):
    return pl.pallas_call(
        _lenet_kernel,
        out_shape=jax.ShapeDtypeStruct((n_pad, 128), jnp.float32),
        grid=(n_pad // BT,),
        in_specs=[
            pl.BlockSpec((BT * H * W, C1P), lambda n: (n, 0)),        # xe
            pl.BlockSpec((KS * C1P, OC1P), lambda n: (0, 0)),          # w1
            pl.BlockSpec((1, OC1P), lambda n: (0, 0)),                 # b1
            pl.BlockSpec((KS * KS * OC1P, OC2), lambda n: (0, 0)),     # w2
            pl.BlockSpec((1, OC2), lambda n: (0, 0)),                  # b2
            pl.BlockSpec((FQ * OC2, 128), lambda n: (0, 0)),           # w1f
            pl.BlockSpec((1, 128), lambda n: (0, 0)),                  # b1f
            pl.BlockSpec((128, 128), lambda n: (0, 0)),                # w2f
            pl.BlockSpec((1, 128), lambda n: (0, 0)),                  # b2f
            pl.BlockSpec((128, 128), lambda n: (0, 0)),                # w3f
            pl.BlockSpec((1, 128), lambda n: (0, 0)),                  # b3f
        ],
        out_specs=pl.BlockSpec((BT, 128), lambda n: (n, 0)),
        scratch_shapes=[
            pltpu.VMEM((ROWS1, OC1P), jnp.float32),         # y1  (conv1 out)
            pltpu.VMEM((P1ROWS, OC1P), jnp.float32),        # p1  (pooled1)
            pltpu.VMEM((P1EROWS, KS * OC1P), jnp.float32),  # p1e (kj-expanded)
            pltpu.VMEM((S2, OC2), jnp.float32),             # y2  (conv2 out)
            pltpu.VMEM((BT * FQ, OC2), jnp.float32),        # features
        ],
        compiler_params=pltpu.CompilerParams(
            dimension_semantics=("parallel",)),
    )(xe, w1, b1, w2, b2, w1f, b1f, w2f, b2f, w3f, b3f)


# ----------------------------------------------------------------------------
# One-time layout glue at the kernel boundary.
# ----------------------------------------------------------------------------
def expand_input(x):
    """NCHW f32 -> (N_pad*H*W, 16) f32 with lanes j = kj*3 + c = x[.., h, w+kj, c].

    Width-only (kj) expansion of the tiny 3-channel input: pure layout glue
    (stack of shifted views) done once so the kernel's conv1 taps are
    lane-dense contiguous row slices.
    """
    n = x.shape[0]
    n_pad = ((n + BT - 1) // BT) * BT
    xh = jnp.transpose(x, (0, 2, 3, 1))                       # (N, H, W, C)
    cols = []
    for kj in range(KS):
        s = xh[:, :, kj:, :]
        cols.append(jnp.pad(s, ((0, 0), (0, 0), (0, kj), (0, 0))))
    xe = jnp.concatenate(cols, axis=-1)                       # (N, H, W, 15)
    xe = jnp.pad(xe, ((0, n_pad - n), (0, 0), (0, 0), (0, C1P - KS * CIN)))
    return xe.reshape(n_pad * H * W, C1P), n_pad


def prepare_params(p):
    # conv1 -> (80, 8) bf16, rows ki*16 + kj*3 + c, cols = out channel.
    w = jnp.transpose(p["conv1_w"], (2, 3, 1, 0)).reshape(KS, KS * CIN, OC1)
    w = jnp.pad(w, ((0, 0), (0, C1P - KS * CIN), (0, OC1P - OC1)))
    w1 = w.reshape(KS * C1P, OC1P).astype(jnp.bfloat16)
    b1 = jnp.pad(p["conv1_b"], (0, OC1P - OC1)).reshape(1, OC1P)

    # conv2 -> (200, 16) bf16, rows ki*40 + kj*8 + c.
    w = jnp.transpose(p["conv2_w"], (2, 3, 1, 0))             # (ki, kj, c, o)
    w = jnp.pad(w, ((0, 0), (0, 0), (0, OC1P - OC1), (0, 0)))  # (5, 5, 8, 16)
    w2 = w.reshape(KS * KS * OC1P, OC2).astype(jnp.bfloat16)
    b2 = p["conv2_b"].reshape(1, OC2)

    # fc1: PyTorch's .view(-1, 400) flatten order is c*25 + q; the kernel's
    # flatten order is q*16 + c, so permute the weight once here.
    d1 = p["fc1_w"].shape[0]
    w = p["fc1_w"].reshape(d1, OC2, FQ).transpose(2, 1, 0)     # (q, c, j)
    w1f = jnp.pad(w, ((0, 0), (0, 0), (0, 128 - d1)))
    w1f = w1f.reshape(FQ * OC2, 128).astype(jnp.bfloat16)
    b1f = jnp.pad(p["fc1_b"], (0, 128 - d1)).reshape(1, 128)

    d2 = p["fc2_w"].shape[0]
    w2f = jnp.pad(p["fc2_w"].T,
                  ((0, 128 - d1), (0, 128 - d2))).astype(jnp.bfloat16)
    b2f = jnp.pad(p["fc2_b"], (0, 128 - d2)).reshape(1, 128)

    d3 = p["fc3_w"].shape[0]
    w3f = jnp.pad(p["fc3_w"].T,
                  ((0, 128 - d2), (0, 128 - d3))).astype(jnp.bfloat16)
    b3f = jnp.pad(p["fc3_b"], (0, 128 - d3)).reshape(1, 128)

    return (w1, b1, w2, b2, w1f, b1f, w2f, b2f, w3f, b3f)


def net_forward(x, params):
    """x: NCHW (N, 3, 32, 32) float32 -> logits (N, 10)."""
    pp = prepare_params(params)
    n = x.shape[0]
    xe, n_pad = expand_input(x)
    out = _lenet_call(xe, *pp, n_pad=n_pad)                   # (N_pad, 128)
    return out[:n, :NCLS]


def init_params(key):
    ks = jax.random.split(key, 10)

    def init(k, shape, fan_in):
        return (1.0 / jnp.sqrt(fan_in)) * jax.random.normal(k, shape, jnp.float32)

    return {
        "conv1_w": init(ks[0], (6, 3, 5, 5), 3 * 5 * 5),
        "conv1_b": init(ks[1], (6,), 3 * 5 * 5),
        "conv2_w": init(ks[2], (16, 6, 5, 5), 6 * 5 * 5),
        "conv2_b": init(ks[3], (16,), 6 * 5 * 5),
        "fc1_w": init(ks[4], (120, 400), 400),
        "fc1_b": init(ks[5], (120,), 400),
        "fc2_w": init(ks[6], (84, 120), 120),
        "fc2_b": init(ks[7], (84,), 120),
        "fc3_w": init(ks[8], (10, 84), 84),
        "fc3_b": init(ks[9], (10,), 84),
    }


# ----------------------------------------------------------------------------
# Pure-JAX reference (sanity check only)
# ----------------------------------------------------------------------------
def reference_forward(x, p):
    def conv(x, w, b):
        y = lax.conv_general_dilated(
            x, w, (1, 1), "VALID", dimension_numbers=("NCHW", "OIHW", "NCHW"))
        return y + b.reshape(1, -1, 1, 1)

    def pool(x):
        return lax.reduce_window(x, -jnp.inf, lax.max,
                                 (1, 1, 2, 2), (1, 1, 2, 2), "VALID")

    y = pool(jax.nn.relu(conv(x, p["conv1_w"], p["conv1_b"])))
    y = pool(jax.nn.relu(conv(y, p["conv2_w"], p["conv2_b"])))
    y = y.reshape(y.shape[0], -1)
    y = jax.nn.relu(y @ p["fc1_w"].T + p["fc1_b"])
    y = jax.nn.relu(y @ p["fc2_w"].T + p["fc2_b"])
    return y @ p["fc3_w"].T + p["fc3_b"]


if __name__ == "__main__":
    key = jax.random.PRNGKey(0)
    pkey, xkey = jax.random.split(key)
    params = init_params(pkey)
    # The 16*5*5 flatten implies a 32x32x3 spatial input; small batch of 2.
    x = jax.random.normal(xkey, (2, 3, 32, 32), jnp.float32)

    fwd = jax.jit(net_forward)
    out = jax.block_until_ready(fwd(x, params))
    assert out.shape == (2, NCLS), out.shape

    ref = reference_forward(x, params)
    max_err = float(jnp.max(jnp.abs(out - ref)))
    # Conv/FC matmuls use bf16 MXU operands with f32 accumulation.
    assert jnp.allclose(out, ref, atol=1e-1, rtol=1e-1), max_err

    print("KERNEL_OK")
</pallas_src>

<mosaic_0001>
module attributes {stable_mosaic.version = 11 : i64} {
  func.func @_lenet_kernel(%arg0: i32, %arg1: memref<8192x16xf32, #tpu.memory_space<vmem>>, %arg2: memref<80x8xbf16, #tpu.memory_space<vmem>>, %arg3: memref<1x8xf32, #tpu.memory_space<vmem>>, %arg4: memref<200x16xbf16, #tpu.memory_space<vmem>>, %arg5: memref<1x16xf32, #tpu.memory_space<vmem>>, %arg6: memref<400x128xbf16, #tpu.memory_space<vmem>>, %arg7: memref<1x128xf32, #tpu.memory_space<vmem>>, %arg8: memref<128x128xbf16, #tpu.memory_space<vmem>>, %arg9: memref<1x128xf32, #tpu.memory_space<vmem>>, %arg10: memref<128x128xbf16, #tpu.memory_space<vmem>>, %arg11: memref<1x128xf32, #tpu.memory_space<vmem>>, %arg12: memref<8x128xf32, #tpu.memory_space<vmem>>, %arg13: memref<896x8xf32, #tpu.memory_space<vmem>>, %arg14: memref<196x8xf32, #tpu.memory_space<vmem>>, %arg15: memref<192x40xf32, #tpu.memory_space<vmem>>, %arg16: memref<136x16xf32, #tpu.memory_space<vmem>>, %arg17: memref<200x16xf32, #tpu.memory_space<vmem>>) attributes {dimension_semantics = [#tpu.dimension_semantics<parallel>], iteration_bounds = array<i64: 1>, scalar_prefetch = 0 : i64, scratch_operands = 5 : i64, tpu.core_type = #tpu.core_type<tc>, window_params = [{transform_indices = @transform_0, window_bounds = array<i64: 8192, 16>}, {pipeline_mode = #tpu.pipeline_mode<synchronous>, transform_indices = @transform_1, window_bounds = array<i64: 80, 8>}, {pipeline_mode = #tpu.pipeline_mode<synchronous>, transform_indices = @transform_2, window_bounds = array<i64: 1, 8>}, {pipeline_mode = #tpu.pipeline_mode<synchronous>, transform_indices = @transform_3, window_bounds = array<i64: 200, 16>}, {pipeline_mode = #tpu.pipeline_mode<synchronous>, transform_indices = @transform_4, window_bounds = array<i64: 1, 16>}, {pipeline_mode = #tpu.pipeline_mode<synchronous>, transform_indices = @transform_5, window_bounds = array<i64: 400, 128>}, {pipeline_mode = #tpu.pipeline_mode<synchronous>, transform_indices = @transform_6, window_bounds = array<i64: 1, 128>}, {pipeline_mode = #tpu.pipeline_mode<synchronous>, transform_indices = @transform_7, window_bounds = array<i64: 128, 128>}, {pipeline_mode = #tpu.pipeline_mode<synchronous>, transform_indices = @transform_8, window_bounds = array<i64: 1, 128>}, {pipeline_mode = #tpu.pipeline_mode<synchronous>, transform_indices = @transform_9, window_bounds = array<i64: 128, 128>}, {pipeline_mode = #tpu.pipeline_mode<synchronous>, transform_indices = @transform_10, window_bounds = array<i64: 1, 128>}, {transform_indices = @transform_11, window_bounds = array<i64: 8, 128>}]} {
    %c0_i32 = arith.constant 0 : i32
    %c8_i32 = arith.constant 8 : i32
    %0 = arith.addi %c0_i32, %c8_i32 : i32
    %c1_i32 = arith.constant 1 : i32
    scf.for %arg18 = %c0_i32 to %0 step %c1_i32  : i32 {
      %c1_i32_44 = arith.constant 1 : i32
      %52 = arith.muli %arg18, %c1_i32_44 : i32
      %c0_i32_45 = arith.constant 0 : i32
      %53 = arith.addi %c0_i32_45, %52 : i32
      %c1024_i32 = arith.constant 1024 : i32
      %54 = arith.muli %53, %c1024_i32 : i32
      %c0_i32_46 = arith.constant 0 : i32
      %55 = arith.addi %54, %c0_i32_46 : i32
      %c0_i32_47 = arith.constant 0 : i32
      %56 = arith.addi %55, %c0_i32_47 : i32
      %57 = tpu.assume_multiple %56, 32 : i32
      %58 = arith.index_cast %57 : i32 to index
      %c0_48 = arith.constant 0 : index
      %59 = vector.load %arg1[%58, %c0_48] : memref<8192x16xf32, #tpu.memory_space<vmem>>, vector<128x16xf32>
      %60 = arith.truncf %59 : vector<128x16xf32> to vector<128x16xbf16>
      %c0_i32_49 = arith.constant 0 : i32
      %61 = arith.addi %54, %c0_i32_49 : i32
      %c32_i32 = arith.constant 32 : i32
      %62 = arith.addi %61, %c32_i32 : i32
      %63 = tpu.assume_multiple %62, 32 : i32
      %64 = arith.index_cast %63 : i32 to index
      %c0_50 = arith.constant 0 : index
      %65 = vector.load %arg1[%64, %c0_50] : memref<8192x16xf32, #tpu.memory_space<vmem>>, vector<128x16xf32>
      %66 = arith.truncf %65 : vector<128x16xf32> to vector<128x16xbf16>
      %c0_i32_51 = arith.constant 0 : i32
      %67 = arith.addi %54, %c0_i32_51 : i32
      %c64_i32 = arith.constant 64 : i32
      %68 = arith.addi %67, %c64_i32 : i32
      %69 = tpu.assume_multiple %68, 32 : i32
      %70 = arith.index_cast %69 : i32 to index
      %c0_52 = arith.constant 0 : index
      %71 = vector.load %arg1[%70, %c0_52] : memref<8192x16xf32, #tpu.memory_space<vmem>>, vector<128x16xf32>
      %72 = arith.truncf %71 : vector<128x16xf32> to vector<128x16xbf16>
      %c0_i32_53 = arith.constant 0 : i32
      %73 = arith.addi %54, %c0_i32_53 : i32
      %c96_i32 = arith.constant 96 : i32
      %74 = arith.addi %73, %c96_i32 : i32
      %75 = tpu.assume_multiple %74, 32 : i32
      %76 = arith.index_cast %75 : i32 to index
      %c0_54 = arith.constant 0 : index
      %77 = vector.load %arg1[%76, %c0_54] : memref<8192x16xf32, #tpu.memory_space<vmem>>, vector<128x16xf32>
      %78 = arith.truncf %77 : vector<128x16xf32> to vector<128x16xbf16>
      %c0_i32_55 = arith.constant 0 : i32
      %79 = arith.addi %54, %c0_i32_55 : i32
      %c128_i32 = arith.constant 128 : i32
      %80 = arith.addi %79, %c128_i32 : i32
      %81 = tpu.assume_multiple %80, 32 : i32
      %82 = arith.index_cast %81 : i32 to index
      %c0_56 = arith.constant 0 : index
      %83 = vector.load %arg1[%82, %c0_56] : memref<8192x16xf32, #tpu.memory_space<vmem>>, vector<128x16xf32>
      %84 = arith.truncf %83 : vector<128x16xf32> to vector<128x16xbf16>
      %85 = tpu.concatenate %60, %66, %72, %78, %84 in 1 : vector<128x16xbf16>, vector<128x16xbf16>, vector<128x16xbf16>, vector<128x16xbf16>, vector<128x16xbf16> -> vector<128x80xbf16>
      %c0_57 = arith.constant 0 : index
      %c0_58 = arith.constant 0 : index
      %86 = vector.load %arg2[%c0_57, %c0_58] : memref<80x8xbf16, #tpu.memory_space<vmem>>, vector<80x8xbf16>
      %cst_59 = arith.constant dense<0.000000e+00> : vector<128x8xf32>
      %87 = tpu.matmul %85, %86, %cst_59 {dimension_numbers = #tpu.dot_dimension_numbers<[1], [0], [0], [1], [0, 0, 1, 1], [], []>} : vector<128x80xbf16>, vector<80x8xbf16>, vector<128x8xf32> -> vector<128x8xf32>
      %c0_60 = arith.constant 0 : index
      %c0_61 = arith.constant 0 : index
      %88 = vector.load %arg3[%c0_60, %c0_61] : memref<1x8xf32, #tpu.memory_space<vmem>>, vector<1x8xf32>
      %89 = vector.broadcast %88 : vector<1x8xf32> to vector<128x8xf32>
      %90 = arith.addf %87, %89 : vector<128x8xf32>
      %cst_62 = arith.constant 0.000000e+00 : f32
      %91 = vector.broadcast %cst_62 : f32 to vector<128x8xf32>
      %92 = arith.maximumf %90, %91 : vector<128x8xf32>
      %c0_63 = arith.constant 0 : index
      %c0_64 = arith.constant 0 : index
      %93 = vector.load %arg13[%c0_63, %c0_64] : memref<896x8xf32, #tpu.memory_space<vmem>>, vector<128x8xf32>
      tpu.vector_store %arg13[%c0_63, %c0_64], %92 {strides = array<i32>} : memref<896x8xf32, #tpu.memory_space<vmem>>, vector<128x8xf32>,
      %c128_i32_65 = arith.constant 128 : i32
      %94 = arith.addi %54, %c128_i32_65 : i32
      %c0_i32_66 = arith.constant 0 : i32
      %95 = arith.addi %94, %c0_i32_66 : i32
      %96 = tpu.assume_multiple %95, 32 : i32
      %97 = arith.index_cast %96 : i32 to index
      %c0_67 = arith.constant 0 : index
      %98 = vector.load %arg1[%97, %c0_67] : memref<8192x16xf32, #tpu.memory_space<vmem>>, vector<128x16xf32>
      %99 = arith.truncf %98 : vector<128x16xf32> to vector<128x16xbf16>
      %c128_i32_68 = arith.constant 128 : i32
      %100 = arith.addi %54, %c128_i32_68 : i32
      %c32_i32_69 = arith.constant 32 : i32
      %101 = arith.addi %100, %c32_i32_69 : i32
      %102 = tpu.assume_multiple %101, 32 : i32
      %103 = arith.index_cast %102 : i32 to index
      %c0_70 = arith.constant 0 : index
      %104 = vector.load %arg1[%103, %c0_70] : memref<8192x16xf32, #tpu.memory_space<vmem>>, vector<128x16xf32>
      %105 = arith.truncf %104 : vector<128x16xf32> to vector<128x16xbf16>
      %c128_i32_71 = arith.constant 128 : i32
      %106 = arith.addi %54, %c128_i32_71 : i32
      %c64_i32_72 = arith.constant 64 : i32
      %107 = arith.addi %106, %c64_i32_72 : i32
      %108 = tpu.assume_multiple %107, 32 : i32
      %109 = arith.index_cast %108 : i32 to index
      %c0_73 = arith.constant 0 : index
      %110 = vector.load %arg1[%109, %c0_73] : memref<8192x16xf32, #tpu.memory_space<vmem>>, vector<128x16xf32>
      %111 = arith.truncf %110 : vector<128x16xf32> to vector<128x16xbf16>
      %c128_i32_74 = arith.constant 128 : i32
      %112 = arith.addi %54, %c128_i32_74 : i32
      %c96_i32_75 = arith.constant 96 : i32
      %113 = arith.addi %112, %c96_i32_75 : i32
      %114 = tpu.assume_multiple %113, 32 : i32
      %115 = arith.index_cast %114 : i32 to index
      %c0_76 = arith.constant 0 : index
      %116 = vector.load %arg1[%115, %c0_76] : memref<8192x16xf32, #tpu.memory_space<vmem>>, vector<128x16xf32>
      %117 = arith.truncf %116 : vector<128x16xf32> to vector<128x16xbf16>
      %c128_i32_77 = arith.constant 128 : i32
      %118 = arith.addi %54, %c128_i32_77 : i32
      %c128_i32_78 = arith.constant 128 : i32
      %119 = arith.addi %118, %c128_i32_78 : i32
      %120 = tpu.assume_multiple %119, 32 : i32
      %121 = arith.index_cast %120 : i32 to index
      %c0_79 = arith.constant 0 : index
      %122 = vector.load %arg1[%121, %c0_79] : memref<8192x16xf32, #tpu.memory_space<vmem>>, vector<128x16xf32>
      %123 = arith.truncf %122 : vector<128x16xf32> to vector<128x16xbf16>
      %124 = tpu.concatenate %99, %105, %111, %117, %123 in 1 : vector<128x16xbf16>, vector<128x16xbf16>, vector<128x16xbf16>, vector<128x16xbf16>, vector<128x16xbf16> -> vector<128x80xbf16>
      %c0_80 = arith.constant 0 : index
      %c0_81 = arith.constant 0 : index
      %125 = vector.load %arg2[%c0_80, %c0_81] : memref<80x8xbf16, #tpu.memory_space<vmem>>, vector<80x8xbf16>
      %cst_82 = arith.constant dense<0.000000e+00> : vector<128x8xf32>
      %126 = tpu.matmul %124, %125, %cst_82 {dimension_numbers = #tpu.dot_dimension_numbers<[1], [0], [0], [1], [0, 0, 1, 1], [], []>} : vector<128x80xbf16>, vector<80x8xbf16>, vector<128x8xf32> -> vector<128x8xf32>
      %c0_83 = arith.constant 0 : index
      %c0_84 = arith.constant 0 : index
      %127 = vector.load %arg3[%c0_83, %c0_84] : memref<1x8xf32, #tpu.memory_space<vmem>>, vector<1x8xf32>
      %128 = vector.broadcast %127 : vector<1x8xf32> to vector<128x8xf32>
      %129 = arith.addf %126, %128 : vector<128x8xf32>
      %cst_85 = arith.constant 0.000000e+00 : f32
      %130 = vector.broadcast %cst_85 : f32 to vector<128x8xf32>
      %131 = arith.maximumf %129, %130 : vector<128x8xf32>
      %c128 = arith.constant 128 : index
      %c0_86 = arith.constant 0 : index
      %132 = vector.load %arg13[%c128, %c0_86] : memref<896x8xf32, #tpu.memory_space<vmem>>, vector<128x8xf32>
      tpu.vector_store %arg13[%c128, %c0_86], %131 {strides = array<i32>} : memref<896x8xf32, #tpu.memory_space<vmem>>, vector<128x8xf32>,
      %c256_i32 = arith.constant 256 : i32
      %133 = arith.addi %54, %c256_i32 : i32
      %c0_i32_87 = arith.constant 0 : i32
      %134 = arith.addi %133, %c0_i32_87 : i32
      %135 = tpu.assume_multiple %134, 32 : i32
      %136 = arith.index_cast %135 : i32 to index
      %c0_88 = arith.constant 0 : index
      %137 = vector.load %arg1[%136, %c0_88] : memref<8192x16xf32, #tpu.memory_space<vmem>>, vector<128x16xf32>
      %138 = arith.truncf %137 : vector<128x16xf32> to vector<128x16xbf16>
      %c256_i32_89 = arith.constant 256 : i32
      %139 = arith.addi %54, %c256_i32_89 : i32
      %c32_i32_90 = arith.constant 32 : i32
      %140 = arith.addi %139, %c32_i32_90 : i32
      %141 = tpu.assume_multiple %140, 32 : i32
      %142 = arith.index_cast %141 : i32 to index
      %c0_91 = arith.constant 0 : index
      %143 = vector.load %arg1[%142, %c0_91] : memref<8192x16xf32, #tpu.memory_space<vmem>>, vector<128x16xf32>
      %144 = arith.truncf %143 : vector<128x16xf32> to vector<128x16xbf16>
      %c256_i32_92 = arith.constant 256 : i32
      %145 = arith.addi %54, %c256_i32_92 : i32
      %c64_i32_93 = arith.constant 64 : i32
      %146 = arith.addi %145, %c64_i32_93 : i32
      %147 = tpu.assume_multiple %146, 32 : i32
      %148 = arith.index_cast %147 : i32 to index
      %c0_94 = arith.constant 0 : index
      %149 = vector.load %arg1[%148, %c0_94] : memref<8192x16xf32, #tpu.memory_space<vmem>>, vector<128x16xf32>
      %150 = arith.truncf %149 : vector<128x16xf32> to vector<128x16xbf16>
      %c256_i32_95 = arith.constant 256 : i32
      %151 = arith.addi %54, %c256_i32_95 : i32
      %c96_i32_96 = arith.constant 96 : i32
      %152 = arith.addi %151, %c96_i32_96 : i32
      %153 = tpu.assume_multiple %152, 32 : i32
      %154 = arith.index_cast %153 : i32 to index
      %c0_97 = arith.constant 0 : index
      %155 = vector.load %arg1[%154, %c0_97] : memref<8192x16xf32, #tpu.memory_space<vmem>>, vector<128x16xf32>
      %156 = arith.truncf %155 : vector<128x16xf32> to vector<128x16xbf16>
      %c256_i32_98 = arith.constant 256 : i32
      %157 = arith.addi %54, %c256_i32_98 : i32
      %c128_i32_99 = arith.constant 128 : i32
      %158 = arith.addi %157, %c128_i32_99 : i32
      %159 = tpu.assume_multiple %158, 32 : i32
      %160 = arith.index_cast %159 : i32 to index
      %c0_100 = arith.constant 0 : index
      %161 = vector.load %arg1[%160, %c0_100] : memref<8192x16xf32, #tpu.memory_space<vmem>>, vector<128x16xf32>
      %162 = arith.truncf %161 : vector<128x16xf32> to vector<128x16xbf16>
      %163 = tpu.concatenate %138, %144, %150, %156, %162 in 1 : vector<128x16xbf16>, vector<128x16xbf16>, vector<128x16xbf16>, vector<128x16xbf16>, vector<128x16xbf16> -> vector<128x80xbf16>
      %c0_101 = arith.constant 0 : index
      %c0_102 = arith.constant 0 : index
      %164 = vector.load %arg2[%c0_101, %c0_102] : memref<80x8xbf16, #tpu.memory_space<vmem>>, vector<80x8xbf16>
      %cst_103 = arith.constant dense<0.000000e+00> : vector<128x8xf32>
      %165 = tpu.matmul %163, %164, %cst_103 {dimension_numbers = #tpu.dot_dimension_numbers<[1], [0], [0], [1], [0, 0, 1, 1], [], []>} : vector<128x80xbf16>, vector<80x8xbf16>, vector<128x8xf32> -> vector<128x8xf32>
      %c0_104 = arith.constant 0 : index
      %c0_105 = arith.constant 0 : index
      %166 = vector.load %arg3[%c0_104, %c0_105] : memref<1x8xf32, #tpu.memory_space<vmem>>, vector<1x8xf32>
      %167 = vector.broadcast %166 : vector<1x8xf32> to vector<128x8xf32>
      %168 = arith.addf %165, %167 : vector<128x8xf32>
      %cst_106 = arith.constant 0.000000e+00 : f32
      %169 = vector.broadcast %cst_106 : f32 to vector<128x8xf32>
      %170 = arith.maximumf %168, %169 : vector<128x8xf32>
      %c256 = arith.constant 256 : index
      %c0_107 = arith.constant 0 : index
      %171 = vector.load %arg13[%c256, %c0_107] : memref<896x8xf32, #tpu.memory_space<vmem>>, vector<128x8xf32>
      tpu.vector_store %arg13[%c256, %c0_107], %170 {strides = array<i32>} : memref<896x8xf32, #tpu.memory_space<vmem>>, vector<128x8xf32>,
      %c384_i32 = arith.constant 384 : i32
      %172 = arith.addi %54, %c384_i32 : i32
      %c0_i32_108 = arith.constant 0 : i32
      %173 = arith.addi %172, %c0_i32_108 : i32
      %174 = tpu.assume_multiple %173, 32 : i32
      %175 = arith.index_cast %174 : i32 to index
      %c0_109 = arith.constant 0 : index
      %176 = vector.load %arg1[%175, %c0_109] : memref<8192x16xf32, #tpu.memory_space<vmem>>, vector<128x16xf32>
      %177 = arith.truncf %176 : vector<128x16xf32> to vector<128x16xbf16>
      %c384_i32_110 = arith.constant 384 : i32
      %178 = arith.addi %54, %c384_i32_110 : i32
      %c32_i32_111 = arith.constant 32 : i32
      %179 = arith.addi %178, %c32_i32_111 : i32
      %180 = tpu.assume_multiple %179, 32 : i32
      %181 = arith.index_cast %180 : i32 to index
      %c0_112 = arith.constant 0 : index
      %182 = vector.load %arg1[%181, %c0_112] : memref<8192x16xf32, #tpu.memory_space<vmem>>, vector<128x16xf32>
      %183 = arith.truncf %182 : vector<128x16xf32> to vector<128x16xbf16>
      %c384_i32_113 = arith.constant 384 : i32
      %184 = arith.addi %54, %c384_i32_113 : i32
      %c64_i32_114 = arith.constant 64 : i32
      %185 = arith.addi %184, %c64_i32_114 : i32
      %186 = tpu.assume_multiple %185, 32 : i32
      %187 = arith.index_cast %186 : i32 to index
      %c0_115 = arith.constant 0 : index
      %188 = vector.load %arg1[%187, %c0_115] : memref<8192x16xf32, #tpu.memory_space<vmem>>, vector<128x16xf32>
      %189 = arith.truncf %188 : vector<128x16xf32> to vector<128x16xbf16>
      %c384_i32_116 = arith.constant 384 : i32
      %190 = arith.addi %54, %c384_i32_116 : i32
      %c96_i32_117 = arith.constant 96 : i32
      %191 = arith.addi %190, %c96_i32_117 : i32
      %192 = tpu.assume_multiple %191, 32 : i32
      %193 = arith.index_cast %192 : i32 to index
      %c0_118 = arith.constant 0 : index
      %194 = vector.load %arg1[%193, %c0_118] : memref<8192x16xf32, #tpu.memory_space<vmem>>, vector<128x16xf32>
      %195 = arith.truncf %194 : vector<128x16xf32> to vector<128x16xbf16>
      %c384_i32_119 = arith.constant 384 : i32
      %196 = arith.addi %54, %c384_i32_119 : i32
      %c128_i32_120 = arith.constant 128 : i32
      %197 = arith.addi %196, %c128_i32_120 : i32
      %198 = tpu.assume_multiple %197, 32 : i32
      %199 = arith.index_cast %198 : i32 to index
      %c0_121 = arith.constant 0 : index
      %200 = vector.load %arg1[%199, %c0_121] : memref<8192x16xf32, #tpu.memory_space<vmem>>, vector<128x16xf32>
      %201 = arith.truncf %200 : vector<128x16xf32> to vector<128x16xbf16>
      %202 = tpu.concatenate %177, %183, %189, %195, %201 in 1 : vector<128x16xbf16>, vector<128x16xbf16>, vector<128x16xbf16>, vector<128x16xbf16>, vector<128x16xbf16> -> vector<128x80xbf16>
      %c0_122 = arith.constant 0 : index
      %c0_123 = arith.constant 0 : index
      %203 = vector.load %arg2[%c0_122, %c0_123] : memref<80x8xbf16, #tpu.memory_space<vmem>>, vector<80x8xbf16>
      %cst_124 = arith.constant dense<0.000000e+00> : vector<128x8xf32>
      %204 = tpu.matmul %202, %203, %cst_124 {dimension_numbers = #tpu.dot_dimension_numbers<[1], [0], [0], [1], [0, 0, 1, 1], [], []>} : vector<128x80xbf16>, vector<80x8xbf16>, vector<128x8xf32> -> vector<128x8xf32>
      %c0_125 = arith.constant 0 : index
      %c0_126 = arith.constant 0 : index
      %205 = vector.load %arg3[%c0_125, %c0_126] : memref<1x8xf32, #tpu.memory_space<vmem>>, vector<1x8xf32>
      %206 = vector.broadcast %205 : vector<1x8xf32> to vector<128x8xf32>
      %207 = arith.addf %204, %206 : vector<128x8xf32>
      %cst_127 = arith.constant 0.000000e+00 : f32
      %208 = vector.broadcast %cst_127 : f32 to vector<128x8xf32>
      %209 = arith.maximumf %207, %208 : vector<128x8xf32>
      %c384 = arith.constant 384 : index
      %c0_128 = arith.constant 0 : index
      %210 = vector.load %arg13[%c384, %c0_128] : memref<896x8xf32, #tpu.memory_space<vmem>>, vector<128x8xf32>
      tpu.vector_store %arg13[%c384, %c0_128], %209 {strides = array<i32>} : memref<896x8xf32, #tpu.memory_space<vmem>>, vector<128x8xf32>,
      %c512_i32 = arith.constant 512 : i32
      %211 = arith.addi %54, %c512_i32 : i32
      %c0_i32_129 = arith.constant 0 : i32
      %212 = arith.addi %211, %c0_i32_129 : i32
      %213 = tpu.assume_multiple %212, 32 : i32
      %214 = arith.index_cast %213 : i32 to index
      %c0_130 = arith.constant 0 : index
      %215 = vector.load %arg1[%214, %c0_130] : memref<8192x16xf32, #tpu.memory_space<vmem>>, vector<128x16xf32>
      %216 = arith.truncf %215 : vector<128x16xf32> to vector<128x16xbf16>
      %c512_i32_131 = arith.constant 512 : i32
      %217 = arith.addi %54, %c512_i32_131 : i32
      %c32_i32_132 = arith.constant 32 : i32
      %218 = arith.addi %217, %c32_i32_132 : i32
      %219 = tpu.assume_multiple %218, 32 : i32
      %220 = arith.index_cast %219 : i32 to index
      %c0_133 = arith.constant 0 : index
      %221 = vector.load %arg1[%220, %c0_133] : memref<8192x16xf32, #tpu.memory_space<vmem>>, vector<128x16xf32>
      %222 = arith.truncf %221 : vector<128x16xf32> to vector<128x16xbf16>
      %c512_i32_134 = arith.constant 512 : i32
      %223 = arith.addi %54, %c512_i32_134 : i32
      %c64_i32_135 = arith.constant 64 : i32
      %224 = arith.addi %223, %c64_i32_135 : i32
      %225 = tpu.assume_multiple %224, 32 : i32
      %226 = arith.index_cast %225 : i32 to index
      %c0_136 = arith.constant 0 : index
      %227 = vector.load %arg1[%226, %c0_136] : memref<8192x16xf32, #tpu.memory_space<vmem>>, vector<128x16xf32>
      %228 = arith.truncf %227 : vector<128x16xf32> to vector<128x16xbf16>
      %c512_i32_137 = arith.constant 512 : i32
      %229 = arith.addi %54, %c512_i32_137 : i32
      %c96_i32_138 = arith.constant 96 : i32
      %230 = arith.addi %229, %c96_i32_138 : i32
      %231 = tpu.assume_multiple %230, 32 : i32
      %232 = arith.index_cast %231 : i32 to index
      %c0_139 = arith.constant 0 : index
      %233 = vector.load %arg1[%232, %c0_139] : memref<8192x16xf32, #tpu.memory_space<vmem>>, vector<128x16xf32>
      %234 = arith.truncf %233 : vector<128x16xf32> to vector<128x16xbf16>
      %c512_i32_140 = arith.constant 512 : i32
      %235 = arith.addi %54, %c512_i32_140 : i32
      %c128_i32_141 = arith.constant 128 : i32
      %236 = arith.addi %235, %c128_i32_141 : i32
      %237 = tpu.assume_multiple %236, 32 : i32
      %238 = arith.index_cast %237 : i32 to index
      %c0_142 = arith.constant 0 : index
      %239 = vector.load %arg1[%238, %c0_142] : memref<8192x16xf32, #tpu.memory_space<vmem>>, vector<128x16xf32>
      %240 = arith.truncf %239 : vector<128x16xf32> to vector<128x16xbf16>
      %241 = tpu.concatenate %216, %222, %228, %234, %240 in 1 : vector<128x16xbf16>, vector<128x16xbf16>, vector<128x16xbf16>, vector<128x16xbf16>, vector<128x16xbf16> -> vector<128x80xbf16>
      %c0_143 = arith.constant 0 : index
      %c0_144 = arith.constant 0 : index
      %242 = vector.load %arg2[%c0_143, %c0_144] : memref<80x8xbf16, #tpu.memory_space<vmem>>, vector<80x8xbf16>
      %cst_145 = arith.constant dense<0.000000e+00> : vector<128x8xf32>
      %243 = tpu.matmul %241, %242, %cst_145 {dimension_numbers = #tpu.dot_dimension_numbers<[1], [0], [0], [1], [0, 0, 1, 1], [], []>} : vector<128x80xbf16>, vector<80x8xbf16>, vector<128x8xf32> -> vector<128x8xf32>
      %c0_146 = arith.constant 0 : index
      %c0_147 = arith.constant 0 : index
      %244 = vector.load %arg3[%c0_146, %c0_147] : memref<1x8xf32, #tpu.memory_space<vmem>>, vector<1x8xf32>
      %245 = vector.broadcast %244 : vector<1x8xf32> to vector<128x8xf32>
      %246 = arith.addf %243, %245 : vector<128x8xf32>
      %cst_148 = arith.constant 0.000000e+00 : f32
      %247 = vector.broadcast %cst_148 : f32 to vector<128x8xf32>
      %248 = arith.maximumf %246, %247 : vector<128x8xf32>
      %c512 = arith.constant 512 : index
      %c0_149 = arith.constant 0 : index
      %249 = vector.load %arg13[%c512, %c0_149] : memref<896x8xf32, #tpu.memory_space<vmem>>, vector<128x8xf32>
      tpu.vector_store %arg13[%c512, %c0_149], %248 {strides = array<i32>} : memref<896x8xf32, #tpu.memory_space<vmem>>, vector<128x8xf32>,
      %c640_i32 = arith.constant 640 : i32
      %250 = arith.addi %54, %c640_i32 : i32
      %c0_i32_150 = arith.constant 0 : i32
      %251 = arith.addi %250, %c0_i32_150 : i32
      %252 = tpu.assume_multiple %251, 32 : i32
      %253 = arith.index_cast %252 : i32 to index
      %c0_151 = arith.constant 0 : index
      %254 = vector.load %arg1[%253, %c0_151] : memref<8192x16xf32, #tpu.memory_space<vmem>>, vector<128x16xf32>
      %255 = arith.truncf %254 : vector<128x16xf32> to vector<128x16xbf16>
      %c640_i32_152 = arith.constant 640 : i32
      %256 = arith.addi %54, %c640_i32_152 : i32
      %c32_i32_153 = arith.constant 32 : i32
      %257 = arith.addi %256, %c32_i32_153 : i32
      %258 = tpu.assume_multiple %257, 32 : i32
      %259 = arith.index_cast %258 : i32 to index
      %c0_154 = arith.constant 0 : index
      %260 = vector.load %arg1[%259, %c0_154] : memref<8192x16xf32, #tpu.memory_space<vmem>>, vector<128x16xf32>
      %261 = arith.truncf %260 : vector<128x16xf32> to vector<128x16xbf16>
      %c640_i32_155 = arith.constant 640 : i32
      %262 = arith.addi %54, %c640_i32_155 : i32
      %c64_i32_156 = arith.constant 64 : i32
      %263 = arith.addi %262, %c64_i32_156 : i32
      %264 = tpu.assume_multiple %263, 32 : i32
      %265 = arith.index_cast %264 : i32 to index
      %c0_157 = arith.constant 0 : index
      %266 = vector.load %arg1[%265, %c0_157] : memref<8192x16xf32, #tpu.memory_space<vmem>>, vector<128x16xf32>
      %267 = arith.truncf %266 : vector<128x16xf32> to vector<128x16xbf16>
      %c640_i32_158 = arith.constant 640 : i32
      %268 = arith.addi %54, %c640_i32_158 : i32
      %c96_i32_159 = arith.constant 96 : i32
      %269 = arith.addi %268, %c96_i32_159 : i32
      %270 = tpu.assume_multiple %269, 32 : i32
      %271 = arith.index_cast %270 : i32 to index
      %c0_160 = arith.constant 0 : index
      %272 = vector.load %arg1[%271, %c0_160] : memref<8192x16xf32, #tpu.memory_space<vmem>>, vector<128x16xf32>
      %273 = arith.truncf %272 : vector<128x16xf32> to vector<128x16xbf16>
      %c640_i32_161 = arith.constant 640 : i32
      %274 = arith.addi %54, %c640_i32_161 : i32
      %c128_i32_162 = arith.constant 128 : i32
      %275 = arith.addi %274, %c128_i32_162 : i32
      %276 = tpu.assume_multiple %275, 32 : i32
      %277 = arith.index_cast %276 : i32 to index
      %c0_163 = arith.constant 0 : index
      %278 = vector.load %arg1[%277, %c0_163] : memref<8192x16xf32, #tpu.memory_space<vmem>>, vector<128x16xf32>
      %279 = arith.truncf %278 : vector<128x16xf32> to vector<128x16xbf16>
      %280 = tpu.concatenate %255, %261, %267, %273, %279 in 1 : vector<128x16xbf16>, vector<128x16xbf16>, vector<128x16xbf16>, vector<128x16xbf16>, vector<128x16xbf16> -> vector<128x80xbf16>
      %c0_164 = arith.constant 0 : index
      %c0_165 = arith.constant 0 : index
      %281 = vector.load %arg2[%c0_164, %c0_165] : memref<80x8xbf16, #tpu.memory_space<vmem>>, vector<80x8xbf16>
      %cst_166 = arith.constant dense<0.000000e+00> : vector<128x8xf32>
      %282 = tpu.matmul %280, %281, %cst_166 {dimension_numbers = #tpu.dot_dimension_numbers<[1], [0], [0], [1], [0, 0, 1, 1], [], []>} : vector<128x80xbf16>, vector<80x8xbf16>, vector<128x8xf32> -> vector<128x8xf32>
      %c0_167 = arith.constant 0 : index
      %c0_168 = arith.constant 0 : index
      %283 = vector.load %arg3[%c0_167, %c0_168] : memref<1x8xf32, #tpu.memory_space<vmem>>, vector<1x8xf32>
      %284 = vector.broadcast %283 : vector<1x8xf32> to vector<128x8xf32>
      %285 = arith.addf %282, %284 : vector<128x8xf32>
      %cst_169 = arith.constant 0.000000e+00 : f32
      %286 = vector.broadcast %cst_169 : f32 to vector<128x8xf32>
      %287 = arith.maximumf %285, %286 : vector<128x8xf32>
      %c640 = arith.constant 640 : index
      %c0_170 = arith.constant 0 : index
      %288 = vector.load %arg13[%c640, %c0_170] : memref<896x8xf32, #tpu.memory_space<vmem>>, vector<128x8xf32>
      tpu.vector_store %arg13[%c640, %c0_170], %287 {strides = array<i32>} : memref<896x8xf32, #tpu.memory_space<vmem>>, vector<128x8xf32>,
      %c768_i32 = arith.constant 768 : i32
      %289 = arith.addi %54, %c768_i32 : i32
      %c0_i32_171 = arith.constant 0 : i32
      %290 = arith.addi %289, %c0_i32_171 : i32
      %291 = tpu.assume_multiple %290, 32 : i32
      %292 = arith.index_cast %291 : i32 to index
      %c0_172 = arith.constant 0 : index
      %293 = vector.load %arg1[%292, %c0_172] : memref<8192x16xf32, #tpu.memory_space<vmem>>, vector<128x16xf32>
      %294 = arith.truncf %293 : vector<128x16xf32> to vector<128x16xbf16>
      %c768_i32_173 = arith.constant 768 : i32
      %295 = arith.addi %54, %c768_i32_173 : i32
      %c32_i32_174 = arith.constant 32 : i32
      %296 = arith.addi %295, %c32_i32_174 : i32
      %297 = tpu.assume_multiple %296, 32 : i32
      %298 = arith.index_cast %297 : i32 to index
      %c0_175 = arith.constant 0 : index
      %299 = vector.load %arg1[%298, %c0_175] : memref<8192x16xf32, #tpu.memory_space<vmem>>, vector<128x16xf32>
      %300 = arith.truncf %299 : vector<128x16xf32> to vector<128x16xbf16>
      %c768_i32_176 = arith.constant 768 : i32
      %301 = arith.addi %54, %c768_i32_176 : i32
      %c64_i32_177 = arith.constant 64 : i32
      %302 = arith.addi %301, %c64_i32_177 : i32
      %303 = tpu.assume_multiple %302, 32 : i32
      %304 = arith.index_cast %303 : i32 to index
      %c0_178 = arith.constant 0 : index
      %305 = vector.load %arg1[%304, %c0_178] : memref<8192x16xf32, #tpu.memory_space<vmem>>, vector<128x16xf32>
      %306 = arith.truncf %305 : vector<128x16xf32> to vector<128x16xbf16>
      %c768_i32_179 = arith.constant 768 : i32
      %307 = arith.addi %54, %c768_i32_179 : i32
      %c96_i32_180 = arith.constant 96 : i32
      %308 = arith.addi %307, %c96_i32_180 : i32
      %309 = tpu.assume_multiple %308, 32 : i32
      %310 = arith.index_cast %309 : i32 to index
      %c0_181 = arith.constant 0 : index
      %311 = vector.load %arg1[%310, %c0_181] : memref<8192x16xf32, #tpu.memory_space<vmem>>, vector<128x16xf32>
      %312 = arith.truncf %311 : vector<128x16xf32> to vector<128x16xbf16>
      %c768_i32_182 = arith.constant 768 : i32
      %313 = arith.addi %54, %c768_i32_182 : i32
      %c128_i32_183 = arith.constant 128 : i32
      %314 = arith.addi %313, %c128_i32_183 : i32
      %315 = tpu.assume_multiple %314, 32 : i32
      %316 = arith.index_cast %315 : i32 to index
      %c0_184 = arith.constant 0 : index
      %317 = vector.load %arg1[%316, %c0_184] : memref<8192x16xf32, #tpu.memory_space<vmem>>, vector<128x16xf32>
      %318 = arith.truncf %317 : vector<128x16xf32> to vector<128x16xbf16>
      %319 = tpu.concatenate %294, %300, %306, %312, %318 in 1 : vector<128x16xbf16>, vector<128x16xbf16>, vector<128x16xbf16>, vector<128x16xbf16>, vector<128x16xbf16> -> vector<128x80xbf16>
      %c0_185 = arith.constant 0 : index
      %c0_186 = arith.constant 0 : index
      %320 = vector.load %arg2[%c0_185, %c0_186] : memref<80x8xbf16, #tpu.memory_space<vmem>>, vector<80x8xbf16>
      %cst_187 = arith.constant dense<0.000000e+00> : vector<128x8xf32>
      %321 = tpu.matmul %319, %320, %cst_187 {dimension_numbers = #tpu.dot_dimension_numbers<[1], [0], [0], [1], [0, 0, 1, 1], [], []>} : vector<128x80xbf16>, vector<80x8xbf16>, vector<128x8xf32> -> vector<128x8xf32>
      %c0_188 = arith.constant 0 : index
      %c0_189 = arith.constant 0 : index
      %322 = vector.load %arg3[%c0_188, %c0_189] : memref<1x8xf32, #tpu.memory_space<vmem>>, vector<1x8xf32>
      %323 = vector.broadcast %322 : vector<1x8xf32> to vector<128x8xf32>
      %324 = arith.addf %321, %323 : vector<128x8xf32>
      %cst_190 = arith.constant 0.000000e+00 : f32
      %325 = vector.broadcast %cst_190 : f32 to vector<128x8xf32>
      %326 = arith.maximumf %324, %325 : vector<128x8xf32>
      %c768 = arith.constant 768 : index
      %c0_191 = arith.constant 0 : index
      %327 = vector.load %arg13[%c768, %c0_191] : memref<896x8xf32, #tpu.memory_space<vmem>>, vector<128x8xf32>
      tpu.vector_store %arg13[%c768, %c0_191], %326 {strides = array<i32>} : memref<896x8xf32, #tpu.memory_space<vmem>>, vector<128x8xf32>,
      %c0_192 = arith.constant 0 : index
      %c0_193 = arith.constant 0 : index
      %328 = tpu.strided_load %arg13[%c0_192, %c0_193] {strides = array<i32: 2, 1>} : memref<896x8xf32, #tpu.memory_space<vmem>>, vector<14x8xf32>
      %c1_194 = arith.constant 1 : index
      %c0_195 = arith.constant 0 : index
      %329 = tpu.strided_load %arg13[%c1_194, %c0_195] {strides = array<i32: 2, 1>} : memref<896x8xf32, #tpu.memory_space<vmem>>, vector<14x8xf32>
      %c32 = arith.constant 32 : index
      %c0_196 = arith.constant 0 : index
      %330 = tpu.strided_load %arg13[%c32, %c0_196] {strides = array<i32: 2, 1>} : memref<896x8xf32, #tpu.memory_space<vmem>>, vector<14x8xf32>
      %c33 = arith.constant 33 : index
      %c0_197 = arith.constant 0 : index
      %331 = tpu.strided_load %arg13[%c33, %c0_197] {strides = array<i32: 2, 1>} : memref<896x8xf32, #tpu.memory_space<vmem>>, vector<14x8xf32>
      %332 = arith.maximumf %328, %329 : vector<14x8xf32>
      %333 = arith.maximumf %330, %331 : vector<14x8xf32>
      %334 = arith.maximumf %332, %333 : vector<14x8xf32>
      %c0_198 = arith.constant 0 : index
      %c0_199 = arith.constant 0 : index
      %335 = vector.load %arg14[%c0_198, %c0_199] : memref<196x8xf32, #tpu.memory_space<vmem>>, vector<14x8xf32>
      tpu.vector_store %arg14[%c0_198, %c0_199], %334 {strides = array<i32>} : memref<196x8xf32, #tpu.memory_space<vmem>>, vector<14x8xf32>,
      %c64 = arith.constant 64 : index
      %c0_200 = arith.constant 0 : index
      %336 = tpu.strided_load %arg13[%c64, %c0_200] {strides = array<i32: 2, 1>} : memref<896x8xf32, #tpu.memory_space<vmem>>, vector<14x8xf32>
      %c65 = arith.constant 65 : index
      %c0_201 = arith.constant 0 : index
      %337 = tpu.strided_load %arg13[%c65, %c0_201] {strides = array<i32: 2, 1>} : memref<896x8xf32, #tpu.memory_space<vmem>>, vector<14x8xf32>
      %c96 = arith.constant 96 : index
      %c0_202 = arith.constant 0 : index
      %338 = tpu.strided_load %arg13[%c96, %c0_202] {strides = array<i32: 2, 1>} : memref<896x8xf32, #tpu.memory_space<vmem>>, vector<14x8xf32>
      %c97 = arith.constant 97 : index
      %c0_203 = arith.constant 0 : index
      %339 = tpu.strided_load %arg13[%c97, %c0_203] {strides = array<i32: 2, 1>} : memref<896x8xf32, #tpu.memory_space<vmem>>, vector<14x8xf32>
      %340 = arith.maximumf %336, %337 : vector<14x8xf32>
      %341 = arith.maximumf %338, %339 : vector<14x8xf32>
      %342 = arith.maximumf %340, %341 : vector<14x8xf32>
      %c14_204 = arith.constant 14 : index
      %c0_205 = arith.constant 0 : index
      %343 = vector.load %arg14[%c14_204, %c0_205] : memref<196x8xf32, #tpu.memory_space<vmem>>, vector<14x8xf32>
      tpu.vector_store %arg14[%c14_204, %c0_205], %342 {strides = array<i32>} : memref<196x8xf32, #tpu.memory_space<vmem>>, vector<14x8xf32>,
      %c128_206 = arith.constant 128 : index
      %c0_207 = arith.constant 0 : index
      %344 = tpu.strided_load %arg13[%c128_206, %c0_207] {strides = array<i32: 2, 1>} : memref<896x8xf32, #tpu.memory_space<vmem>>, vector<14x8xf32>
      %c129 = arith.constant 129 : index
      %c0_208 = arith.constant 0 : index
      %345 = tpu.strided_load %arg13[%c129, %c0_208] {strides = array<i32: 2, 1>} : memref<896x8xf32, #tpu.memory_space<vmem>>, vector<14x8xf32>
      %c160 = arith.constant 160 : index
      %c0_209 = arith.constant 0 : index
      %346 = tpu.strided_load %arg13[%c160, %c0_209] {strides = array<i32: 2, 1>} : memref<896x8xf32, #tpu.memory_space<vmem>>, vector<14x8xf32>
      %c161 = arith.constant 161 : index
      %c0_210 = arith.constant 0 : index
      %347 = tpu.strided_load %arg13[%c161, %c0_210] {strides = array<i32: 2, 1>} : memref<896x8xf32, #tpu.memory_space<vmem>>, vector<14x8xf32>
      %348 = arith.maximumf %344, %345 : vector<14x8xf32>
      %349 = arith.maximumf %346, %347 : vector<14x8xf32>
      %350 = arith.maximumf %348, %349 : vector<14x8xf32>
      %c28 = arith.constant 28 : index
      %c0_211 = arith.constant 0 : index
      %351 = vector.load %arg14[%c28, %c0_211] : memref<196x8xf32, #tpu.memory_space<vmem>>, vector<14x8xf32>
      tpu.vector_store %arg14[%c28, %c0_211], %350 {strides = array<i32>} : memref<196x8xf32, #tpu.memory_space<vmem>>, vector<14x8xf32>,
      %c192 = arith.constant 192 : index
      %c0_212 = arith.constant 0 : index
      %352 = tpu.strided_load %arg13[%c192, %c0_212] {strides = array<i32: 2, 1>} : memref<896x8xf32, #tpu.memory_space<vmem>>, vector<14x8xf32>
      %c193 = arith.constant 193 : index
      %c0_213 = arith.constant 0 : index
      %353 = tpu.strided_load %arg13[%c193, %c0_213] {strides = array<i32: 2, 1>} : memref<896x8xf32, #tpu.memory_space<vmem>>, vector<14x8xf32>
      %c224 = arith.constant 224 : index
      %c0_214 = arith.constant 0 : index
      %354 = tpu.strided_load %arg13[%c224, %c0_214] {strides = array<i32: 2, 1>} : memref<896x8xf32, #tpu.memory_space<vmem>>, vector<14x8xf32>
      %c225 = arith.constant 225 : index
      %c0_215 = arith.constant 0 : index
      %355 = tpu.strided_load %arg13[%c225, %c0_215] {strides = array<i32: 2, 1>} : memref<896x8xf32, #tpu.memory_space<vmem>>, vector<14x8xf32>
      %356 = arith.maximumf %352, %353 : vector<14x8xf32>
      %357 = arith.maximumf %354, %355 : vector<14x8xf32>
      %358 = arith.maximumf %356, %357 : vector<14x8xf32>
      %c42 = arith.constant 42 : index
      %c0_216 = arith.constant 0 : index
      %359 = vector.load %arg14[%c42, %c0_216] : memref<196x8xf32, #tpu.memory_space<vmem>>, vector<14x8xf32>
      tpu.vector_store %arg14[%c42, %c0_216], %358 {strides = array<i32>} : memref<196x8xf32, #tpu.memory_space<vmem>>, vector<14x8xf32>,
      %c256_217 = arith.constant 256 : index
      %c0_218 = arith.constant 0 : index
      %360 = tpu.strided_load %arg13[%c256_217, %c0_218] {strides = array<i32: 2, 1>} : memref<896x8xf32, #tpu.memory_space<vmem>>, vector<14x8xf32>
      %c257 = arith.constant 257 : index
      %c0_219 = arith.constant 0 : index
      %361 = tpu.strided_load %arg13[%c257, %c0_219] {strides = array<i32: 2, 1>} : memref<896x8xf32, #tpu.memory_space<vmem>>, vector<14x8xf32>
      %c288 = arith.constant 288 : index
      %c0_220 = arith.constant 0 : index
      %362 = tpu.strided_load %arg13[%c288, %c0_220] {strides = array<i32: 2, 1>} : memref<896x8xf32, #tpu.memory_space<vmem>>, vector<14x8xf32>
      %c289 = arith.constant 289 : index
      %c0_221 = arith.constant 0 : index
      %363 = tpu.strided_load %arg13[%c289, %c0_221] {strides = array<i32: 2, 1>} : memref<896x8xf32, #tpu.memory_space<vmem>>, vector<14x8xf32>
      %364 = arith.maximumf %360, %361 : vector<14x8xf32>
      %365 = arith.maximumf %362, %363 : vector<14x8xf32>
      %366 = arith.maximumf %364, %365 : vector<14x8xf32>
      %c56 = arith.constant 56 : index
      %c0_222 = arith.constant 0 : index
      %367 = vector.load %arg14[%c56, %c0_222] : memref<196x8xf32, #tpu.memory_space<vmem>>, vector<14x8xf32>
      tpu.vector_store %arg14[%c56, %c0_222], %366 {strides = array<i32>} : memref<196x8xf32, #tpu.memory_space<vmem>>, vector<14x8xf32>,
      %c320 = arith.constant 320 : index
      %c0_223 = arith.constant 0 : index
      %368 = tpu.strided_load %arg13[%c320, %c0_223] {strides = array<i32: 2, 1>} : memref<896x8xf32, #tpu.memory_space<vmem>>, vector<14x8xf32>
      %c321 = arith.constant 321 : index
      %c0_224 = arith.constant 0 : index
      %369 = tpu.strided_load %arg13[%c321, %c0_224] {strides = array<i32: 2, 1>} : memref<896x8xf32, #tpu.memory_space<vmem>>, vector<14x8xf32>
      %c352 = arith.constant 352 : index
      %c0_225 = arith.constant 0 : index
      %370 = tpu.strided_load %arg13[%c352, %c0_225] {strides = array<i32: 2, 1>} : memref<896x8xf32, #tpu.memory_space<vmem>>, vector<14x8xf32>
      %c353 = arith.constant 353 : index
      %c0_226 = arith.constant 0 : index
      %371 = tpu.strided_load %arg13[%c353, %c0_226] {strides = array<i32: 2, 1>} : memref<896x8xf32, #tpu.memory_space<vmem>>, vector<14x8xf32>
      %372 = arith.maximumf %368, %369 : vector<14x8xf32>
      %373 = arith.maximumf %370, %371 : vector<14x8xf32>
      %374 = arith.maximumf %372, %373 : vector<14x8xf32>
      %c70 = arith.constant 70 : index
      %c0_227 = arith.constant 0 : index
      %375 = vector.load %arg14[%c70, %c0_227] : memref<196x8xf32, #tpu.memory_space<vmem>>, vector<14x8xf32>
      tpu.vector_store %arg14[%c70, %c0_227], %374 {strides = array<i32>} : memref<196x8xf32, #tpu.memory_space<vmem>>, vector<14x8xf32>,
      %c384_228 = arith.constant 384 : index
      %c0_229 = arith.constant 0 : index
      %376 = tpu.strided_load %arg13[%c384_228, %c0_229] {strides = array<i32: 2, 1>} : memref<896x8xf32, #tpu.memory_space<vmem>>, vector<14x8xf32>
      %c385 = arith.constant 385 : index
      %c0_230 = arith.constant 0 : index
      %377 = tpu.strided_load %arg13[%c385, %c0_230] {strides = array<i32: 2, 1>} : memref<896x8xf32, #tpu.memory_space<vmem>>, vector<14x8xf32>
      %c416 = arith.constant 416 : index
      %c0_231 = arith.constant 0 : index
      %378 = tpu.strided_load %arg13[%c416, %c0_231] {strides = array<i32: 2, 1>} : memref<896x8xf32, #tpu.memory_space<vmem>>, vector<14x8xf32>
      %c417 = arith.constant 417 : index
      %c0_232 = arith.constant 0 : index
      %379 = tpu.strided_load %arg13[%c417, %c0_232] {strides = array<i32: 2, 1>} : memref<896x8xf32, #tpu.memory_space<vmem>>, vector<14x8xf32>
      %380 = arith.maximumf %376, %377 : vector<14x8xf32>
      %381 = arith.maximumf %378, %379 : vector<14x8xf32>
      %382 = arith.maximumf %380, %381 : vector<14x8xf32>
      %c84 = arith.constant 84 : index
      %c0_233 = arith.constant 0 : index
      %383 = vector.load %arg14[%c84, %c0_233] : memref<196x8xf32, #tpu.memory_space<vmem>>, vector<14x8xf32>
      tpu.vector_store %arg14[%c84, %c0_233], %382 {strides = array<i32>} : memref<196x8xf32, #tpu.memory_space<vmem>>, vector<14x8xf32>,
      %c448 = arith.constant 448 : index
      %c0_234 = arith.constant 0 : index
      %384 = tpu.strided_load %arg13[%c448, %c0_234] {strides = array<i32: 2, 1>} : memref<896x8xf32, #tpu.memory_space<vmem>>, vector<14x8xf32>
      %c449 = arith.constant 449 : index
      %c0_235 = arith.constant 0 : index
      %385 = tpu.strided_load %arg13[%c449, %c0_235] {strides = array<i32: 2, 1>} : memref<896x8xf32, #tpu.memory_space<vmem>>, vector<14x8xf32>
      %c480 = arith.constant 480 : index
      %c0_236 = arith.constant 0 : index
      %386 = tpu.strided_load %arg13[%c480, %c0_236] {strides = array<i32: 2, 1>} : memref<896x8xf32, #tpu.memory_space<vmem>>, vector<14x8xf32>
      %c481 = arith.constant 481 : index
      %c0_237 = arith.constant 0 : index
      %387 = tpu.strided_load %arg13[%c481, %c0_237] {strides = array<i32: 2, 1>} : memref<896x8xf32, #tpu.memory_space<vmem>>, vector<14x8xf32>
      %388 = arith.maximumf %384, %385 : vector<14x8xf32>
      %389 = arith.maximumf %386, %387 : vector<14x8xf32>
      %390 = arith.maximumf %388, %389 : vector<14x8xf32>
      %c98 = arith.constant 98 : index
      %c0_238 = arith.constant 0 : index
      %391 = vector.load %arg14[%c98, %c0_238] : memref<196x8xf32, #tpu.memory_space<vmem>>, vector<14x8xf32>
      tpu.vector_store %arg14[%c98, %c0_238], %390 {strides = array<i32>} : memref<196x8xf32, #tpu.memory_space<vmem>>, vector<14x8xf32>,
      %c512_239 = arith.constant 512 : index
      %c0_240 = arith.constant 0 : index
      %392 = tpu.strided_load %arg13[%c512_239, %c0_240] {strides = array<i32: 2, 1>} : memref<896x8xf32, #tpu.memory_space<vmem>>, vector<14x8xf32>
      %c513 = arith.constant 513 : index
      %c0_241 = arith.constant 0 : index
      %393 = tpu.strided_load %arg13[%c513, %c0_241] {strides = array<i32: 2, 1>} : memref<896x8xf32, #tpu.memory_space<vmem>>, vector<14x8xf32>
      %c544 = arith.constant 544 : index
      %c0_242 = arith.constant 0 : index
      %394 = tpu.strided_load %arg13[%c544, %c0_242] {strides = array<i32: 2, 1>} : memref<896x8xf32, #tpu.memory_space<vmem>>, vector<14x8xf32>
      %c545 = arith.constant 545 : index
      %c0_243 = arith.constant 0 : index
      %395 = tpu.strided_load %arg13[%c545, %c0_243] {strides = array<i32: 2, 1>} : memref<896x8xf32, #tpu.memory_space<vmem>>, vector<14x8xf32>
      %396 = arith.maximumf %392, %393 : vector<14x8xf32>
      %397 = arith.maximumf %394, %395 : vector<14x8xf32>
      %398 = arith.maximumf %396, %397 : vector<14x8xf32>
      %c112 = arith.constant 112 : index
      %c0_244 = arith.constant 0 : index
      %399 = vector.load %arg14[%c112, %c0_244] : memref<196x8xf32, #tpu.memory_space<vmem>>, vector<14x8xf32>
      tpu.vector_store %arg14[%c112, %c0_244], %398 {strides = array<i32>} : memref<196x8xf32, #tpu.memory_space<vmem>>, vector<14x8xf32>,
      %c576 = arith.constant 576 : index
      %c0_245 = arith.constant 0 : index
      %400 = tpu.strided_load %arg13[%c576, %c0_245] {strides = array<i32: 2, 1>} : memref<896x8xf32, #tpu.memory_space<vmem>>, vector<14x8xf32>
      %c577 = arith.constant 577 : index
      %c0_246 = arith.constant 0 : index
      %401 = tpu.strided_load %arg13[%c577, %c0_246] {strides = array<i32: 2, 1>} : memref<896x8xf32, #tpu.memory_space<vmem>>, vector<14x8xf32>
      %c608 = arith.constant 608 : index
      %c0_247 = arith.constant 0 : index
      %402 = tpu.strided_load %arg13[%c608, %c0_247] {strides = array<i32: 2, 1>} : memref<896x8xf32, #tpu.memory_space<vmem>>, vector<14x8xf32>
      %c609 = arith.constant 609 : index
      %c0_248 = arith.constant 0 : index
      %403 = tpu.strided_load %arg13[%c609, %c0_248] {strides = array<i32: 2, 1>} : memref<896x8xf32, #tpu.memory_space<vmem>>, vector<14x8xf32>
      %404 = arith.maximumf %400, %401 : vector<14x8xf32>
      %405 = arith.maximumf %402, %403 : vector<14x8xf32>
      %406 = arith.maximumf %404, %405 : vector<14x8xf32>
      %c126 = arith.constant 126 : index
      %c0_249 = arith.constant 0 : index
      %407 = vector.load %arg14[%c126, %c0_249] : memref<196x8xf32, #tpu.memory_space<vmem>>, vector<14x8xf32>
      tpu.vector_store %arg14[%c126, %c0_249], %406 {strides = array<i32>} : memref<196x8xf32, #tpu.memory_space<vmem>>, vector<14x8xf32>,
      %c640_250 = arith.constant 640 : index
      %c0_251 = arith.constant 0 : index
      %408 = tpu.strided_load %arg13[%c640_250, %c0_251] {strides = array<i32: 2, 1>} : memref<896x8xf32, #tpu.memory_space<vmem>>, vector<14x8xf32>
      %c641 = arith.constant 641 : index
      %c0_252 = arith.constant 0 : index
      %409 = tpu.strided_load %arg13[%c641, %c0_252] {strides = array<i32: 2, 1>} : memref<896x8xf32, #tpu.memory_space<vmem>>, vector<14x8xf32>
      %c672 = arith.constant 672 : index
      %c0_253 = arith.constant 0 : index
      %410 = tpu.strided_load %arg13[%c672, %c0_253] {strides = array<i32: 2, 1>} : memref<896x8xf32, #tpu.memory_space<vmem>>, vector<14x8xf32>
      %c673 = arith.constant 673 : index
      %c0_254 = arith.constant 0 : index
      %411 = tpu.strided_load %arg13[%c673, %c0_254] {strides = array<i32: 2, 1>} : memref<896x8xf32, #tpu.memory_space<vmem>>, vector<14x8xf32>
      %412 = arith.maximumf %408, %409 : vector<14x8xf32>
      %413 = arith.maximumf %410, %411 : vector<14x8xf32>
      %414 = arith.maximumf %412, %413 : vector<14x8xf32>
      %c140 = arith.constant 140 : index
      %c0_255 = arith.constant 0 : index
      %415 = vector.load %arg14[%c140, %c0_255] : memref<196x8xf32, #tpu.memory_space<vmem>>, vector<14x8xf32>
      tpu.vector_store %arg14[%c140, %c0_255], %414 {strides = array<i32>} : memref<196x8xf32, #tpu.memory_space<vmem>>, vector<14x8xf32>,
      %c704 = arith.constant 704 : index
      %c0_256 = arith.constant 0 : index
      %416 = tpu.strided_load %arg13[%c704, %c0_256] {strides = array<i32: 2, 1>} : memref<896x8xf32, #tpu.memory_space<vmem>>, vector<14x8xf32>
      %c705 = arith.constant 705 : index
      %c0_257 = arith.constant 0 : index
      %417 = tpu.strided_load %arg13[%c705, %c0_257] {strides = array<i32: 2, 1>} : memref<896x8xf32, #tpu.memory_space<vmem>>, vector<14x8xf32>
      %c736 = arith.constant 736 : index
      %c0_258 = arith.constant 0 : index
      %418 = tpu.strided_load %arg13[%c736, %c0_258] {strides = array<i32: 2, 1>} : memref<896x8xf32, #tpu.memory_space<vmem>>, vector<14x8xf32>
      %c737 = arith.constant 737 : index
      %c0_259 = arith.constant 0 : index
      %419 = tpu.strided_load %arg13[%c737, %c0_259] {strides = array<i32: 2, 1>} : memref<896x8xf32, #tpu.memory_space<vmem>>, vector<14x8xf32>
      %420 = arith.maximumf %416, %417 : vector<14x8xf32>
      %421 = arith.maximumf %418, %419 : vector<14x8xf32>
      %422 = arith.maximumf %420, %421 : vector<14x8xf32>
      %c154 = arith.constant 154 : index
      %c0_260 = arith.constant 0 : index
      %423 = vector.load %arg14[%c154, %c0_260] : memref<196x8xf32, #tpu.memory_space<vmem>>, vector<14x8xf32>
      tpu.vector_store %arg14[%c154, %c0_260], %422 {strides = array<i32>} : memref<196x8xf32, #tpu.memory_space<vmem>>, vector<14x8xf32>,
      %c768_261 = arith.constant 768 : index
      %c0_262 = arith.constant 0 : index
      %424 = tpu.strided_load %arg13[%c768_261, %c0_262] {strides = array<i32: 2, 1>} : memref<896x8xf32, #tpu.memory_space<vmem>>, vector<14x8xf32>
      %c769 = arith.constant 769 : index
      %c0_263 = arith.constant 0 : index
      %425 = tpu.strided_load %arg13[%c769, %c0_263] {strides = array<i32: 2, 1>} : memref<896x8xf32, #tpu.memory_space<vmem>>, vector<14x8xf32>
      %c800 = arith.constant 800 : index
      %c0_264 = arith.constant 0 : index
      %426 = tpu.strided_load %arg13[%c800, %c0_264] {strides = array<i32: 2, 1>} : memref<896x8xf32, #tpu.memory_space<vmem>>, vector<14x8xf32>
      %c801 = arith.constant 801 : index
      %c0_265 = arith.constant 0 : index
      %427 = tpu.strided_load %arg13[%c801, %c0_265] {strides = array<i32: 2, 1>} : memref<896x8xf32, #tpu.memory_space<vmem>>, vector<14x8xf32>
      %428 = arith.maximumf %424, %425 : vector<14x8xf32>
      %429 = arith.maximumf %426, %427 : vector<14x8xf32>
      %430 = arith.maximumf %428, %429 : vector<14x8xf32>
      %c168 = arith.constant 168 : index
      %c0_266 = arith.constant 0 : index
      %431 = vector.load %arg14[%c168, %c0_266] : memref<196x8xf32, #tpu.memory_space<vmem>>, vector<14x8xf32>
      tpu.vector_store %arg14[%c168, %c0_266], %430 {strides = array<i32>} : memref<196x8xf32, #tpu.memory_space<vmem>>, vector<14x8xf32>,
      %c832 = arith.constant 832 : index
      %c0_267 = arith.constant 0 : index
      %432 = tpu.strided_load %arg13[%c832, %c0_267] {strides = array<i32: 2, 1>} : memref<896x8xf32, #tpu.memory_space<vmem>>, vector<14x8xf32>
      %c833 = arith.constant 833 : index
      %c0_268 = arith.constant 0 : index
      %433 = tpu.strided_load %arg13[%c833, %c0_268] {strides = array<i32: 2, 1>} : memref<896x8xf32, #tpu.memory_space<vmem>>, vector<14x8xf32>
      %c864 = arith.constant 864 : index
      %c0_269 = arith.constant 0 : index
      %434 = tpu.strided_load %arg13[%c864, %c0_269] {strides = array<i32: 2, 1>} : memref<896x8xf32, #tpu.memory_space<vmem>>, vector<14x8xf32>
      %c865 = arith.constant 865 : index
      %c0_270 = arith.constant 0 : index
      %435 = tpu.strided_load %arg13[%c865, %c0_270] {strides = array<i32: 2, 1>} : memref<896x8xf32, #tpu.memory_space<vmem>>, vector<14x8xf32>
      %436 = arith.maximumf %432, %433 : vector<14x8xf32>
      %437 = arith.maximumf %434, %435 : vector<14x8xf32>
      %438 = arith.maximumf %436, %437 : vector<14x8xf32>
      %c182 = arith.constant 182 : index
      %c0_271 = arith.constant 0 : index
      %439 = vector.load %arg14[%c182, %c0_271] : memref<196x8xf32, #tpu.memory_space<vmem>>, vector<14x8xf32>
      tpu.vector_store %arg14[%c182, %c0_271], %438 {strides = array<i32>} : memref<196x8xf32, #tpu.memory_space<vmem>>, vector<14x8xf32>,
      %c0_272 = arith.constant 0 : index
      %c0_273 = arith.constant 0 : index
      %440 = vector.load %arg14[%c0_272, %c0_273] : memref<196x8xf32, #tpu.memory_space<vmem>>, vector<192x8xf32>
      %c0_274 = arith.constant 0 : index
      %c0_275 = arith.constant 0 : index
      %441 = vector.load %arg15[%c0_274, %c0_275] : memref<192x40xf32, #tpu.memory_space<vmem>>, vector<192x8xf32>
      tpu.vector_store %arg15[%c0_274, %c0_275], %440 {strides = array<i32>} : memref<192x40xf32, #tpu.memory_space<vmem>>, vector<192x8xf32>,
      %c1_276 = arith.constant 1 : index
      %c0_277 = arith.constant 0 : index
      %442 = vector.load %arg14[%c1_276, %c0_277] : memref<196x8xf32, #tpu.memory_space<vmem>>, vector<192x8xf32>
      %c0_278 = arith.constant 0 : index
      %c8_279 = arith.constant 8 : index
      %443 = vector.load %arg15[%c0_278, %c8_279] : memref<192x40xf32, #tpu.memory_space<vmem>>, vector<192x8xf32>
      tpu.vector_store %arg15[%c0_278, %c8_279], %442 {strides = array<i32>} : memref<192x40xf32, #tpu.memory_space<vmem>>, vector<192x8xf32>,
      %c2_280 = arith.constant 2 : index
      %c0_281 = arith.constant 0 : index
      %444 = vector.load %arg14[%c2_280, %c0_281] : memref<196x8xf32, #tpu.memory_space<vmem>>, vector<192x8xf32>
      %c0_282 = arith.constant 0 : index
      %c16_283 = arith.constant 16 : index
      %445 = vector.load %arg15[%c0_282, %c16_283] : memref<192x40xf32, #tpu.memory_space<vmem>>, vector<192x8xf32>
      tpu.vector_store %arg15[%c0_282, %c16_283], %444 {strides = array<i32>} : memref<192x40xf32, #tpu.memory_space<vmem>>, vector<192x8xf32>,
      %c3_284 = arith.constant 3 : index
      %c0_285 = arith.constant 0 : index
      %446 = vector.load %arg14[%c3_284, %c0_285] : memref<196x8xf32, #tpu.memory_space<vmem>>, vector<192x8xf32>
      %c0_286 = arith.constant 0 : index
      %c24_287 = arith.constant 24 : index
      %447 = vector.load %arg15[%c0_286, %c24_287] : memref<192x40xf32, #tpu.memory_space<vmem>>, vector<192x8xf32>
      tpu.vector_store %arg15[%c0_286, %c24_287], %446 {strides = array<i32>} : memref<192x40xf32, #tpu.memory_space<vmem>>, vector<192x8xf32>,
      %c4_288 = arith.constant 4 : index
      %c0_289 = arith.constant 0 : index
      %448 = vector.load %arg14[%c4_288, %c0_289] : memref<196x8xf32, #tpu.memory_space<vmem>>, vector<192x8xf32>
      %c0_290 = arith.constant 0 : index
      %c32_291 = arith.constant 32 : index
      %449 = vector.load %arg15[%c0_290, %c32_291] : memref<192x40xf32, #tpu.memory_space<vmem>>, vector<192x8xf32>
      tpu.vector_store %arg15[%c0_290, %c32_291], %448 {strides = array<i32>} : memref<192x40xf32, #tpu.memory_space<vmem>>, vector<192x8xf32>,
      %c0_292 = arith.constant 0 : index
      %c0_293 = arith.constant 0 : index
      %450 = vector.load %arg15[%c0_292, %c0_293] : memref<192x40xf32, #tpu.memory_space<vmem>>, vector<72x40xf32>
      %451 = arith.truncf %450 : vector<72x40xf32> to vector<72x40xbf16>
      %c14_294 = arith.constant 14 : index
      %c0_295 = arith.constant 0 : index
      %452 = vector.load %arg15[%c14_294, %c0_295] : memref<192x40xf32, #tpu.memory_space<vmem>>, vector<72x40xf32>
      %453 = arith.truncf %452 : vector<72x40xf32> to vector<72x40xbf16>
      %c28_296 = arith.constant 28 : index
      %c0_297 = arith.constant 0 : index
      %454 = vector.load %arg15[%c28_296, %c0_297] : memref<192x40xf32, #tpu.memory_space<vmem>>, vector<72x40xf32>
      %455 = arith.truncf %454 : vector<72x40xf32> to vector<72x40xbf16>
      %c42_298 = arith.constant 42 : index
      %c0_299 = arith.constant 0 : index
      %456 = vector.load %arg15[%c42_298, %c0_299] : memref<192x40xf32, #tpu.memory_space<vmem>>, vector<72x40xf32>
      %457 = arith.truncf %456 : vector<72x40xf32> to vector<72x40xbf16>
      %c56_300 = arith.constant 56 : index
      %c0_301 = arith.constant 0 : index
      %458 = vector.load %arg15[%c56_300, %c0_301] : memref<192x40xf32, #tpu.memory_space<vmem>>, vector<72x40xf32>
      %459 = arith.truncf %458 : vector<72x40xf32> to vector<72x40xbf16>
      %460 = tpu.concatenate %451, %453, %455, %457, %459 in 1 : vector<72x40xbf16>, vector<72x40xbf16>, vector<72x40xbf16>, vector<72x40xbf16>, vector<72x40xbf16> -> vector<72x200xbf16>
      %c0_302 = arith.constant 0 : index
      %c0_303 = arith.constant 0 : index
      %461 = vector.load %arg4[%c0_302, %c0_303] : memref<200x16xbf16, #tpu.memory_space<vmem>>, vector<200x16xbf16>
      %cst_304 = arith.constant dense<0.000000e+00> : vector<72x16xf32>
      %462 = tpu.matmul %460, %461, %cst_304 {dimension_numbers = #tpu.dot_dimension_numbers<[1], [0], [0], [1], [0, 0, 1, 1], [], []>} : vector<72x200xbf16>, vector<200x16xbf16>, vector<72x16xf32> -> vector<72x16xf32>
      %c0_305 = arith.constant 0 : index
      %c0_306 = arith.constant 0 : index
      %463 = vector.load %arg5[%c0_305, %c0_306] : memref<1x16xf32, #tpu.memory_space<vmem>>, vector<1x16xf32>
      %464 = vector.broadcast %463 : vector<1x16xf32> to vector<72x16xf32>
      %465 = arith.addf %462, %464 : vector<72x16xf32>
      %cst_307 = arith.constant 0.000000e+00 : f32
      %466 = vector.broadcast %cst_307 : f32 to vector<72x16xf32>
      %467 = arith.maximumf %465, %466 : vector<72x16xf32>
      %c0_308 = arith.constant 0 : index
      %c0_309 = arith.constant 0 : index
      %468 = vector.load %arg16[%c0_308, %c0_309] : memref<136x16xf32, #tpu.memory_space<vmem>>, vector<72x16xf32>
      tpu.vector_store %arg16[%c0_308, %c0_309], %467 {strides = array<i32>} : memref<136x16xf32, #tpu.memory_space<vmem>>, vector<72x16xf32>,
      %c72 = arith.constant 72 : index
      %c0_310 = arith.constant 0 : index
      %469 = vector.load %arg15[%c72, %c0_310] : memref<192x40xf32, #tpu.memory_space<vmem>>, vector<64x40xf32>
      %470 = arith.truncf %469 : vector<64x40xf32> to vector<64x40xbf16>
      %c86 = arith.constant 86 : index
      %c0_311 = arith.constant 0 : index
      %471 = vector.load %arg15[%c86, %c0_311] : memref<192x40xf32, #tpu.memory_space<vmem>>, vector<64x40xf32>
      %472 = arith.truncf %471 : vector<64x40xf32> to vector<64x40xbf16>
      %c100 = arith.constant 100 : index
      %c0_312 = arith.constant 0 : index
      %473 = vector.load %arg15[%c100, %c0_312] : memref<192x40xf32, #tpu.memory_space<vmem>>, vector<64x40xf32>
      %474 = arith.truncf %473 : vector<64x40xf32> to vector<64x40xbf16>
      %c114 = arith.constant 114 : index
      %c0_313 = arith.constant 0 : index
      %475 = vector.load %arg15[%c114, %c0_313] : memref<192x40xf32, #tpu.memory_space<vmem>>, vector<64x40xf32>
      %476 = arith.truncf %475 : vector<64x40xf32> to vector<64x40xbf16>
      %c128_314 = arith.constant 128 : index
      %c0_315 = arith.constant 0 : index
      %477 = vector.load %arg15[%c128_314, %c0_315] : memref<192x40xf32, #tpu.memory_space<vmem>>, vector<64x40xf32>
      %478 = arith.truncf %477 : vector<64x40xf32> to vector<64x40xbf16>
      %479 = tpu.concatenate %470, %472, %474, %476, %478 in 1 : vector<64x40xbf16>, vector<64x40xbf16>, vector<64x40xbf16>, vector<64x40xbf16>, vector<64x40xbf16> -> vector<64x200xbf16>
      %c0_316 = arith.constant 0 : index
      %c0_317 = arith.constant 0 : index
      %480 = vector.load %arg4[%c0_316, %c0_317] : memref<200x16xbf16, #tpu.memory_space<vmem>>, vector<200x16xbf16>
      %cst_318 = arith.constant dense<0.000000e+00> : vector<64x16xf32>
      %481 = tpu.matmul %479, %480, %cst_318 {dimension_numbers = #tpu.dot_dimension_numbers<[1], [0], [0], [1], [0, 0, 1, 1], [], []>} : vector<64x200xbf16>, vector<200x16xbf16>, vector<64x16xf32> -> vector<64x16xf32>
      %c0_319 = arith.constant 0 : index
      %c0_320 = arith.constant 0 : index
      %482 = vector.load %arg5[%c0_319, %c0_320] : memref<1x16xf32, #tpu.memory_space<vmem>>, vector<1x16xf32>
      %483 = vector.broadcast %482 : vector<1x16xf32> to vector<64x16xf32>
      %484 = arith.addf %481, %483 : vector<64x16xf32>
      %cst_321 = arith.constant 0.000000e+00 : f32
      %485 = vector.broadcast %cst_321 : f32 to vector<64x16xf32>
      %486 = arith.maximumf %484, %485 : vector<64x16xf32>
      %c72_322 = arith.constant 72 : index
      %c0_323 = arith.constant 0 : index
      %487 = vector.load %arg16[%c72_322, %c0_323] : memref<136x16xf32, #tpu.memory_space<vmem>>, vector<64x16xf32>
      tpu.vector_store %arg16[%c72_322, %c0_323], %486 {strides = array<i32>} : memref<136x16xf32, #tpu.memory_space<vmem>>, vector<64x16xf32>,
      %c0_324 = arith.constant 0 : index
      %c0_325 = arith.constant 0 : index
      %488 = tpu.strided_load %arg16[%c0_324, %c0_325] {strides = array<i32: 2, 1>} : memref<136x16xf32, #tpu.memory_space<vmem>>, vector<5x16xf32>
      %c1_326 = arith.constant 1 : index
      %c0_327 = arith.constant 0 : index
      %489 = tpu.strided_load %arg16[%c1_326, %c0_327] {strides = array<i32: 2, 1>} : memref<136x16xf32, #tpu.memory_space<vmem>>, vector<5x16xf32>
      %c14_328 = arith.constant 14 : index
      %c0_329 = arith.constant 0 : index
      %490 = tpu.strided_load %arg16[%c14_328, %c0_329] {strides = array<i32: 2, 1>} : memref<136x16xf32, #tpu.memory_space<vmem>>, vector<5x16xf32>
      %c15_330 = arith.constant 15 : index
      %c0_331 = arith.constant 0 : index
      %491 = tpu.strided_load %arg16[%c15_330, %c0_331] {strides = array<i32: 2, 1>} : memref<136x16xf32, #tpu.memory_space<vmem>>, vector<5x16xf32>
      %492 = arith.maximumf %488, %489 : vector<5x16xf32>
      %493 = arith.maximumf %490, %491 : vector<5x16xf32>
      %494 = arith.maximumf %492, %493 : vector<5x16xf32>
      %c25_i32 = arith.constant 25 : i32
      %495 = arith.muli %53, %c25_i32 : i32
      %c0_i32_332 = arith.constant 0 : i32
      %496 = arith.addi %495, %c0_i32_332 : i32
      %497 = arith.index_cast %496 : i32 to index
      %c0_333 = arith.constant 0 : index
      %498 = vector.load %arg17[%497, %c0_333] : memref<200x16xf32, #tpu.memory_space<vmem>>, vector<5x16xf32>
      tpu.vector_store %arg17[%497, %c0_333], %494 {strides = array<i32>} : memref<200x16xf32, #tpu.memory_space<vmem>>, vector<5x16xf32>,
      %c28_334 = arith.constant 28 : index
      %c0_335 = arith.constant 0 : index
      %499 = tpu.strided_load %arg16[%c28_334, %c0_335] {strides = array<i32: 2, 1>} : memref<136x16xf32, #tpu.memory_space<vmem>>, vector<5x16xf32>
      %c29 = arith.constant 29 : index
      %c0_336 = arith.constant 0 : index
      %500 = tpu.strided_load %arg16[%c29, %c0_336] {strides = array<i32: 2, 1>} : memref<136x16xf32, #tpu.memory_space<vmem>>, vector<5x16xf32>
      %c42_337 = arith.constant 42 : index
      %c0_338 = arith.constant 0 : index
      %501 = tpu.strided_load %arg16[%c42_337, %c0_338] {strides = array<i32: 2, 1>} : memref<136x16xf32, #tpu.memory_space<vmem>>, vector<5x16xf32>
      %c43 = arith.constant 43 : index
      %c0_339 = arith.constant 0 : index
      %502 = tpu.strided_load %arg16[%c43, %c0_339] {strides = array<i32: 2, 1>} : memref<136x16xf32, #tpu.memory_space<vmem>>, vector<5x16xf32>
      %503 = arith.maximumf %499, %500 : vector<5x16xf32>
      %504 = arith.maximumf %501, %502 : vector<5x16xf32>
      %505 = arith.maximumf %503, %504 : vector<5x16xf32>
      %c25_i32_340 = arith.constant 25 : i32
      %506 = arith.muli %53, %c25_i32_340 : i32
      %c5_i32 = arith.constant 5 : i32
      %507 = arith.addi %506, %c5_i32 : i32
      %508 = arith.index_cast %507 : i32 to index
      %c0_341 = arith.constant 0 : index
      %509 = vector.load %arg17[%508, %c0_341] : memref<200x16xf32, #tpu.memory_space<vmem>>, vector<5x16xf32>
      tpu.vector_store %arg17[%508, %c0_341], %505 {strides = array<i32>} : memref<200x16xf32, #tpu.memory_space<vmem>>, vector<5x16xf32>,
      %c56_342 = arith.constant 56 : index
      %c0_343 = arith.constant 0 : index
      %510 = tpu.strided_load %arg16[%c56_342, %c0_343] {strides = array<i32: 2, 1>} : memref<136x16xf32, #tpu.memory_space<vmem>>, vector<5x16xf32>
      %c57 = arith.constant 57 : index
      %c0_344 = arith.constant 0 : index
      %511 = tpu.strided_load %arg16[%c57, %c0_344] {strides = array<i32: 2, 1>} : memref<136x16xf32, #tpu.memory_space<vmem>>, vector<5x16xf32>
      %c70_345 = arith.constant 70 : index
      %c0_346 = arith.constant 0 : index
      %512 = tpu.strided_load %arg16[%c70_345, %c0_346] {strides = array<i32: 2, 1>} : memref<136x16xf32, #tpu.memory_space<vmem>>, vector<5x16xf32>
      %c71 = arith.constant 71 : index
      %c0_347 = arith.constant 0 : index
      %513 = tpu.strided_load %arg16[%c71, %c0_347] {strides = array<i32: 2, 1>} : memref<136x16xf32, #tpu.memory_space<vmem>>, vector<5x16xf32>
      %514 = arith.maximumf %510, %511 : vector<5x16xf32>
      %515 = arith.maximumf %512, %513 : vector<5x16xf32>
      %516 = arith.maximumf %514, %515 : vector<5x16xf32>
      %c25_i32_348 = arith.constant 25 : i32
      %517 = arith.muli %53, %c25_i32_348 : i32
      %c10_i32 = arith.constant 10 : i32
      %518 = arith.addi %517, %c10_i32 : i32
      %519 = arith.index_cast %518 : i32 to index
      %c0_349 = arith.constant 0 : index
      %520 = vector.load %arg17[%519, %c0_349] : memref<200x16xf32, #tpu.memory_space<vmem>>, vector<5x16xf32>
      tpu.vector_store %arg17[%519, %c0_349], %516 {strides = array<i32>} : memref<200x16xf32, #tpu.memory_space<vmem>>, vector<5x16xf32>,
      %c84_350 = arith.constant 84 : index
      %c0_351 = arith.constant 0 : index
      %521 = tpu.strided_load %arg16[%c84_350, %c0_351] {strides = array<i32: 2, 1>} : memref<136x16xf32, #tpu.memory_space<vmem>>, vector<5x16xf32>
      %c85 = arith.constant 85 : index
      %c0_352 = arith.constant 0 : index
      %522 = tpu.strided_load %arg16[%c85, %c0_352] {strides = array<i32: 2, 1>} : memref<136x16xf32, #tpu.memory_space<vmem>>, vector<5x16xf32>
      %c98_353 = arith.constant 98 : index
      %c0_354 = arith.constant 0 : index
      %523 = tpu.strided_load %arg16[%c98_353, %c0_354] {strides = array<i32: 2, 1>} : memref<136x16xf32, #tpu.memory_space<vmem>>, vector<5x16xf32>
      %c99 = arith.constant 99 : index
      %c0_355 = arith.constant 0 : index
      %524 = tpu.strided_load %arg16[%c99, %c0_355] {strides = array<i32: 2, 1>} : memref<136x16xf32, #tpu.memory_space<vmem>>, vector<5x16xf32>
      %525 = arith.maximumf %521, %522 : vector<5x16xf32>
      %526 = arith.maximumf %523, %524 : vector<5x16xf32>
      %527 = arith.maximumf %525, %526 : vector<5x16xf32>
      %c25_i32_356 = arith.constant 25 : i32
      %528 = arith.muli %53, %c25_i32_356 : i32
      %c15_i32 = arith.constant 15 : i32
      %529 = arith.addi %528, %c15_i32 : i32
      %530 = arith.index_cast %529 : i32 to index
      %c0_357 = arith.constant 0 : index
      %531 = vector.load %arg17[%530, %c0_357] : memref<200x16xf32, #tpu.memory_space<vmem>>, vector<5x16xf32>
      tpu.vector_store %arg17[%530, %c0_357], %527 {strides = array<i32>} : memref<200x16xf32, #tpu.memory_space<vmem>>, vector<5x16xf32>,
      %c112_358 = arith.constant 112 : index
      %c0_359 = arith.constant 0 : index
      %532 = tpu.strided_load %arg16[%c112_358, %c0_359] {strides = array<i32: 2, 1>} : memref<136x16xf32, #tpu.memory_space<vmem>>, vector<5x16xf32>
      %c113 = arith.constant 113 : index
      %c0_360 = arith.constant 0 : index
      %533 = tpu.strided_load %arg16[%c113, %c0_360] {strides = array<i32: 2, 1>} : memref<136x16xf32, #tpu.memory_space<vmem>>, vector<5x16xf32>
      %c126_361 = arith.constant 126 : index
      %c0_362 = arith.constant 0 : index
      %534 = tpu.strided_load %arg16[%c126_361, %c0_362] {strides = array<i32: 2, 1>} : memref<136x16xf32, #tpu.memory_space<vmem>>, vector<5x16xf32>
      %c127 = arith.constant 127 : index
      %c0_363 = arith.constant 0 : index
      %535 = tpu.strided_load %arg16[%c127, %c0_363] {strides = array<i32: 2, 1>} : memref<136x16xf32, #tpu.memory_space<vmem>>, vector<5x16xf32>
      %536 = arith.maximumf %532, %533 : vector<5x16xf32>
      %537 = arith.maximumf %534, %535 : vector<5x16xf32>
      %538 = arith.maximumf %536, %537 : vector<5x16xf32>
      %c25_i32_364 = arith.constant 25 : i32
      %539 = arith.muli %53, %c25_i32_364 : i32
      %c20_i32 = arith.constant 20 : i32
      %540 = arith.addi %539, %c20_i32 : i32
      %541 = arith.index_cast %540 : i32 to index
      %c0_365 = arith.constant 0 : index
      %542 = vector.load %arg17[%541, %c0_365] : memref<200x16xf32, #tpu.memory_space<vmem>>, vector<5x16xf32>
      tpu.vector_store %arg17[%541, %c0_365], %538 {strides = array<i32>} : memref<200x16xf32, #tpu.memory_space<vmem>>, vector<5x16xf32>,
    }
    %c8_i32_0 = arith.constant 8 : i32
    %c0 = arith.constant 0 : index
    %c0_1 = arith.constant 0 : index
    %1 = tpu.strided_load %arg17[%c0, %c0_1] {strides = array<i32: 25, 1>} : memref<200x16xf32, #tpu.memory_space<vmem>>, vector<8x16xf32>
    %c1 = arith.constant 1 : index
    %c0_2 = arith.constant 0 : index
    %2 = tpu.strided_load %arg17[%c1, %c0_2] {strides = array<i32: 25, 1>} : memref<200x16xf32, #tpu.memory_space<vmem>>, vector<8x16xf32>
    %c2 = arith.constant 2 : index
    %c0_3 = arith.constant 0 : index
    %3 = tpu.strided_load %arg17[%c2, %c0_3] {strides = array<i32: 25, 1>} : memref<200x16xf32, #tpu.memory_space<vmem>>, vector<8x16xf32>
    %c3 = arith.constant 3 : index
    %c0_4 = arith.constant 0 : index
    %4 = tpu.strided_load %arg17[%c3, %c0_4] {strides = array<i32: 25, 1>} : memref<200x16xf32, #tpu.memory_space<vmem>>, vector<8x16xf32>
    %c4 = arith.constant 4 : index
    %c0_5 = arith.constant 0 : index
    %5 = tpu.strided_load %arg17[%c4, %c0_5] {strides = array<i32: 25, 1>} : memref<200x16xf32, #tpu.memory_space<vmem>>, vector<8x16xf32>
    %c5 = arith.constant 5 : index
    %c0_6 = arith.constant 0 : index
    %6 = tpu.strided_load %arg17[%c5, %c0_6] {strides = array<i32: 25, 1>} : memref<200x16xf32, #tpu.memory_space<vmem>>, vector<8x16xf32>
    %c6 = arith.constant 6 : index
    %c0_7 = arith.constant 0 : index
    %7 = tpu.strided_load %arg17[%c6, %c0_7] {strides = array<i32: 25, 1>} : memref<200x16xf32, #tpu.memory_space<vmem>>, vector<8x16xf32>
    %c7 = arith.constant 7 : index
    %c0_8 = arith.constant 0 : index
    %8 = tpu.strided_load %arg17[%c7, %c0_8] {strides = array<i32: 25, 1>} : memref<200x16xf32, #tpu.memory_space<vmem>>, vector<8x16xf32>
    %c8 = arith.constant 8 : index
    %c0_9 = arith.constant 0 : index
    %9 = tpu.strided_load %arg17[%c8, %c0_9] {strides = array<i32: 25, 1>} : memref<200x16xf32, #tpu.memory_space<vmem>>, vector<8x16xf32>
    %c9 = arith.constant 9 : index
    %c0_10 = arith.constant 0 : index
    %10 = tpu.strided_load %arg17[%c9, %c0_10] {strides = array<i32: 25, 1>} : memref<200x16xf32, #tpu.memory_space<vmem>>, vector<8x16xf32>
    %c10 = arith.constant 10 : index
    %c0_11 = arith.constant 0 : index
    %11 = tpu.strided_load %arg17[%c10, %c0_11] {strides = array<i32: 25, 1>} : memref<200x16xf32, #tpu.memory_space<vmem>>, vector<8x16xf32>
    %c11 = arith.constant 11 : index
    %c0_12 = arith.constant 0 : index
    %12 = tpu.strided_load %arg17[%c11, %c0_12] {strides = array<i32: 25, 1>} : memref<200x16xf32, #tpu.memory_space<vmem>>, vector<8x16xf32>
    %c12 = arith.constant 12 : index
    %c0_13 = arith.constant 0 : index
    %13 = tpu.strided_load %arg17[%c12, %c0_13] {strides = array<i32: 25, 1>} : memref<200x16xf32, #tpu.memory_space<vmem>>, vector<8x16xf32>
    %c13 = arith.constant 13 : index
    %c0_14 = arith.constant 0 : index
    %14 = tpu.strided_load %arg17[%c13, %c0_14] {strides = array<i32: 25, 1>} : memref<200x16xf32, #tpu.memory_space<vmem>>, vector<8x16xf32>
    %c14 = arith.constant 14 : index
    %c0_15 = arith.constant 0 : index
    %15 = tpu.strided_load %arg17[%c14, %c0_15] {strides = array<i32: 25, 1>} : memref<200x16xf32, #tpu.memory_space<vmem>>, vector<8x16xf32>
    %c15 = arith.constant 15 : index
    %c0_16 = arith.constant 0 : index
    %16 = tpu.strided_load %arg17[%c15, %c0_16] {strides = array<i32: 25, 1>} : memref<200x16xf32, #tpu.memory_space<vmem>>, vector<8x16xf32>
    %c16 = arith.constant 16 : index
    %c0_17 = arith.constant 0 : index
    %17 = tpu.strided_load %arg17[%c16, %c0_17] {strides = array<i32: 25, 1>} : memref<200x16xf32, #tpu.memory_space<vmem>>, vector<8x16xf32>
    %c17 = arith.constant 17 : index
    %c0_18 = arith.constant 0 : index
    %18 = tpu.strided_load %arg17[%c17, %c0_18] {strides = array<i32: 25, 1>} : memref<200x16xf32, #tpu.memory_space<vmem>>, vector<8x16xf32>
    %c18 = arith.constant 18 : index
    %c0_19 = arith.constant 0 : index
    %19 = tpu.strided_load %arg17[%c18, %c0_19] {strides = array<i32: 25, 1>} : memref<200x16xf32, #tpu.memory_space<vmem>>, vector<8x16xf32>
    %c19 = arith.constant 19 : index
    %c0_20 = arith.constant 0 : index
    %20 = tpu.strided_load %arg17[%c19, %c0_20] {strides = array<i32: 25, 1>} : memref<200x16xf32, #tpu.memory_space<vmem>>, vector<8x16xf32>
    %c20 = arith.constant 20 : index
    %c0_21 = arith.constant 0 : index
    %21 = tpu.strided_load %arg17[%c20, %c0_21] {strides = array<i32: 25, 1>} : memref<200x16xf32, #tpu.memory_space<vmem>>, vector<8x16xf32>
    %c21 = arith.constant 21 : index
    %c0_22 = arith.constant 0 : index
    %22 = tpu.strided_load %arg17[%c21, %c0_22] {strides = array<i32: 25, 1>} : memref<200x16xf32, #tpu.memory_space<vmem>>, vector<8x16xf32>
    %c22 = arith.constant 22 : index
    %c0_23 = arith.constant 0 : index
    %23 = tpu.strided_load %arg17[%c22, %c0_23] {strides = array<i32: 25, 1>} : memref<200x16xf32, #tpu.memory_space<vmem>>, vector<8x16xf32>
    %c23 = arith.constant 23 : index
    %c0_24 = arith.constant 0 : index
    %24 = tpu.strided_load %arg17[%c23, %c0_24] {strides = array<i32: 25, 1>} : memref<200x16xf32, #tpu.memory_space<vmem>>, vector<8x16xf32>
    %c24 = arith.constant 24 : index
    %c0_25 = arith.constant 0 : index
    %25 = tpu.strided_load %arg17[%c24, %c0_25] {strides = array<i32: 25, 1>} : memref<200x16xf32, #tpu.memory_space<vmem>>, vector<8x16xf32>
    %26 = tpu.concatenate %1, %2, %3, %4, %5, %6, %7, %8, %9, %10, %11, %12, %13, %14, %15, %16 in 1 : vector<8x16xf32>, vector<8x16xf32>, vector<8x16xf32>, vector<8x16xf32>, vector<8x16xf32>, vector<8x16xf32>, vector<8x16xf32>, vector<8x16xf32>, vector<8x16xf32>, vector<8x16xf32>, vector<8x16xf32>, vector<8x16xf32>, vector<8x16xf32>, vector<8x16xf32>, vector<8x16xf32>, vector<8x16xf32> -> vector<8x256xf32>
    %27 = tpu.concatenate %17, %18, %19, %20, %21, %22, %23, %24, %25 in 1 : vector<8x16xf32>, vector<8x16xf32>, vector<8x16xf32>, vector<8x16xf32>, vector<8x16xf32>, vector<8x16xf32>, vector<8x16xf32>, vector<8x16xf32>, vector<8x16xf32> -> vector<8x144xf32>
    %28 = tpu.concatenate %26, %27 in 1 : vector<8x256xf32>, vector<8x144xf32> -> vector<8x400xf32>
    %29 = arith.truncf %28 : vector<8x400xf32> to vector<8x400xbf16>
    %c0_26 = arith.constant 0 : index
    %c0_27 = arith.constant 0 : index
    %30 = vector.load %arg6[%c0_26, %c0_27] : memref<400x128xbf16, #tpu.memory_space<vmem>>, vector<400x128xbf16>
    %cst = arith.constant dense<0.000000e+00> : vector<8x128xf32>
    %31 = tpu.matmul %29, %30, %cst {dimension_numbers = #tpu.dot_dimension_numbers<[1], [0], [0], [1], [0, 0, 1, 1], [], []>} : vector<8x400xbf16>, vector<400x128xbf16>, vector<8x128xf32> -> vector<8x128xf32>
    %c0_28 = arith.constant 0 : index
    %c0_29 = arith.constant 0 : index
    %32 = vector.load %arg7[%c0_28, %c0_29] : memref<1x128xf32, #tpu.memory_space<vmem>>, vector<1x128xf32>
    %33 = vector.broadcast %32 : vector<1x128xf32> to vector<8x128xf32>
    %34 = arith.addf %31, %33 : vector<8x128xf32>
    %cst_30 = arith.constant 0.000000e+00 : f32
    %35 = vector.broadcast %cst_30 : f32 to vector<8x128xf32>
    %36 = arith.maximumf %34, %35 : vector<8x128xf32>
    %37 = arith.truncf %36 : vector<8x128xf32> to vector<8x128xbf16>
    %c0_31 = arith.constant 0 : index
    %c0_32 = arith.constant 0 : index
    %38 = vector.load %arg8[%c0_31, %c0_32] : memref<128x128xbf16, #tpu.memory_space<vmem>>, vector<128x128xbf16>
    %cst_33 = arith.constant dense<0.000000e+00> : vector<8x128xf32>
    %39 = tpu.matmul %37, %38, %cst_33 {dimension_numbers = #tpu.dot_dimension_numbers<[1], [0], [0], [1], [0, 0, 1, 1], [], []>} : vector<8x128xbf16>, vector<128x128xbf16>, vector<8x128xf32> -> vector<8x128xf32>
    %c0_34 = arith.constant 0 : index
    %c0_35 = arith.constant 0 : index
    %40 = vector.load %arg9[%c0_34, %c0_35] : memref<1x128xf32, #tpu.memory_space<vmem>>, vector<1x128xf32>
    %41 = vector.broadcast %40 : vector<1x128xf32> to vector<8x128xf32>
    %42 = arith.addf %39, %41 : vector<8x128xf32>
    %cst_36 = arith.constant 0.000000e+00 : f32
    %43 = vector.broadcast %cst_36 : f32 to vector<8x128xf32>
    %44 = arith.maximumf %42, %43 : vector<8x128xf32>
    %45 = arith.truncf %44 : vector<8x128xf32> to vector<8x128xbf16>
    %c0_37 = arith.constant 0 : index
    %c0_38 = arith.constant 0 : index
    %46 = vector.load %arg10[%c0_37, %c0_38] : memref<128x128xbf16, #tpu.memory_space<vmem>>, vector<128x128xbf16>
    %cst_39 = arith.constant dense<0.000000e+00> : vector<8x128xf32>
    %47 = tpu.matmul %45, %46, %cst_39 {dimension_numbers = #tpu.dot_dimension_numbers<[1], [0], [0], [1], [0, 0, 1, 1], [], []>} : vector<8x128xbf16>, vector<128x128xbf16>, vector<8x128xf32> -> vector<8x128xf32>
    %c0_40 = arith.constant 0 : index
    %c0_41 = arith.constant 0 : index
    %48 = vector.load %arg11[%c0_40, %c0_41] : memref<1x128xf32, #tpu.memory_space<vmem>>, vector<1x128xf32>
    %49 = vector.broadcast %48 : vector<1x128xf32> to vector<8x128xf32>
    %50 = arith.addf %47, %49 : vector<8x128xf32>
    %c0_42 = arith.constant 0 : index
    %c0_43 = arith.constant 0 : index
    %51 = vector.load %arg12[%c0_42, %c0_43] : memref<8x128xf32, #tpu.memory_space<vmem>>, vector<8x128xf32>
    tpu.vector_store %arg12[%c0_42, %c0_43], %50 {strides = array<i32>} : memref<8x128xf32, #tpu.memory_space<vmem>>, vector<8x128xf32>,
    return
  }
  func.func @transform_0(%arg0: i32) -> (i32, i32) {
    %c0_i32 = arith.constant 0 : i32
    %c0_i32_0 = arith.constant 0 : i32
    return %arg0, %c0_i32 : i32, i32
  }
  func.func @transform_1(%arg0: i32) -> (i32, i32) {
    %c0_i32 = arith.constant 0 : i32
    %c0_i32_0 = arith.constant 0 : i32
    %c0_i32_1 = arith.constant 0 : i32
    return %c0_i32, %c0_i32_0 : i32, i32
  }
  func.func @transform_2(%arg0: i32) -> (i32, i32) {
    %c0_i32 = arith.constant 0 : i32
    %c0_i32_0 = arith.constant 0 : i32
    %c0_i32_1 = arith.constant 0 : i32
    return %c0_i32, %c0_i32_0 : i32, i32
  }
  func.func @transform_3(%arg0: i32) -> (i32, i32) {
    %c0_i32 = arith.constant 0 : i32
    %c0_i32_0 = arith.constant 0 : i32
    %c0_i32_1 = arith.constant 0 : i32
    return %c0_i32, %c0_i32_0 : i32, i32
  }
  func.func @transform_4(%arg0: i32) -> (i32, i32) {
    %c0_i32 = arith.constant 0 : i32
    %c0_i32_0 = arith.constant 0 : i32
    %c0_i32_1 = arith.constant 0 : i32
    return %c0_i32, %c0_i32_0 : i32, i32
  }
  func.func @transform_5(%arg0: i32) -> (i32, i32) {
    %c0_i32 = arith.constant 0 : i32
    %c0_i32_0 = arith.constant 0 : i32
    %c0_i32_1 = arith.constant 0 : i32
    return %c0_i32, %c0_i32_0 : i32, i32
  }
  func.func @transform_6(%arg0: i32) -> (i32, i32) {
    %c0_i32 = arith.constant 0 : i32
    %c0_i32_0 = arith.constant 0 : i32
    %c0_i32_1 = arith.constant 0 : i32
    return %c0_i32, %c0_i32_0 : i32, i32
  }
  func.func @transform_7(%arg0: i32) -> (i32, i32) {
    %c0_i32 = arith.constant 0 : i32
    %c0_i32_0 = arith.constant 0 : i32
    %c0_i32_1 = arith.constant 0 : i32
    return %c0_i32, %c0_i32_0 : i32, i32
  }
  func.func @transform_8(%arg0: i32) -> (i32, i32) {
    %c0_i32 = arith.constant 0 : i32
    %c0_i32_0 = arith.constant 0 : i32
    %c0_i32_1 = arith.constant 0 : i32
    return %c0_i32, %c0_i32_0 : i32, i32
  }
  func.func @transform_9(%arg0: i32) -> (i32, i32) {
    %c0_i32 = arith.constant 0 : i32
    %c0_i32_0 = arith.constant 0 : i32
    %c0_i32_1 = arith.constant 0 : i32
    return %c0_i32, %c0_i32_0 : i32, i32
  }
  func.func @transform_10(%arg0: i32) -> (i32, i32) {
    %c0_i32 = arith.constant 0 : i32
    %c0_i32_0 = arith.constant 0 : i32
    %c0_i32_1 = arith.constant 0 : i32
    return %c0_i32, %c0_i32_0 : i32, i32
  }
  func.func @transform_11(%arg0: i32) -> (i32, i32) {
    %c0_i32 = arith.constant 0 : i32
    %c0_i32_0 = arith.constant 0 : i32
    return %arg0, %c0_i32 : i32, i32
  }
}

</mosaic_0001>

<llo_original>
// kernel: net_forward.1
$region0: #{net_forward.1}
  #allocation0 [shape = 'u32[]', space=smem, size = 0x4, offset = 0x4, fixed_abs, tag = 'smem constant byte address 0x4 - core index']
  #allocation1 [shape = 'u32[144,128]{1,0:T(1,128)}', space=vmem, size = 0x12000, scoped, tag = 'internal scratch']
  #allocation2 [shape = 'f32[896,8]{1,0:T(8,128)}', space=vmem, size = 0x70000, scoped, tag = 'scratch operand']
  #allocation3 [shape = 'f32[196,8]{1,0:T(8,128)}', space=vmem, size = 0x19000, scoped, tag = 'scratch operand']
  #allocation4 [shape = 'f32[192,40]{1,0:T(8,128)}', space=vmem, size = 0x18000, scoped, tag = 'scratch operand']
  #allocation5 [shape = 'f32[136,16]{1,0:T(8,128)}', space=vmem, size = 0x11000, scoped, tag = 'scratch operand']
  #allocation6 [shape = 'f32[200,16]{1,0:T(8,128)}', space=vmem, size = 0x19000, scoped, tag = 'scratch operand']
  %s0 = inlined_call_operand.vmem [shape: f32[8192,16], index: 0, kind: input, shape index: {}]
  %s1 = inlined_call_operand.vmem [shape: bf16[80,8], index: 1, kind: input, shape index: {}]
  %s2 = inlined_call_operand.vmem [shape: f32[1,8], index: 2, kind: input, shape index: {}]
  %s3 = inlined_call_operand.vmem [shape: bf16[200,16], index: 3, kind: input, shape index: {}]
  %s4 = inlined_call_operand.vmem [shape: f32[1,16], index: 4, kind: input, shape index: {}]
  %s5 = inlined_call_operand.vmem [shape: bf16[400,128], index: 5, kind: input, shape index: {}]
  %s6 = inlined_call_operand.vmem [shape: f32[1,128], index: 6, kind: input, shape index: {}]
  %s7 = inlined_call_operand.vmem [shape: bf16[128,128], index: 7, kind: input, shape index: {}]
  %s8 = inlined_call_operand.vmem [shape: f32[1,128], index: 8, kind: input, shape index: {}]
  %s9 = inlined_call_operand.vmem [shape: bf16[128,128], index: 9, kind: input, shape index: {}]
  %s10 = inlined_call_operand.vmem [shape: f32[1,128], index: 10, kind: input, shape index: {}]
  %s11 = inlined_call_operand.vmem [shape: f32[8,128], index: 11, kind: output, shape index: {}]
  %s12 = sld [smem:[#allocation0]]
  $region61: #{net_forward.1} parent=0
    _
  %s14 = ssub.s32 1, %s12
  %s15 = scalar_select 0, %s14, %s12
  // Predicated region
  $region2: #{net_forward.1} parent=0 // pred_check
    _
  $region3: #{net_forward.1} parent=0 // pred_check_branch
    %17 = sbr.rel (0) target = $region5
  $region4: #{net_forward.1} parent=0 // pred_region
    _
  $region5: #{net_forward.1} parent=0 // pred_fallthru
    _
  // Predicated region
  $region6: #{net_forward.1} parent=0 // pred_check
    _
  $region7: #{net_forward.1} parent=0 // pred_check_branch
    %19 = sbr.rel (0) target = $region9
  $region8: #{net_forward.1} parent=0 // pred_region
    _
  $region9: #{net_forward.1} parent=0 // pred_fallthru
    _
  // Predicated region
  $region10: #{net_forward.1} parent=0 // pred_check
    _
  $region11: #{net_forward.1} parent=0 // pred_check_branch
    %21 = sbr.rel (0) target = $region13
  $region12: #{net_forward.1} parent=0 // pred_region
    _
  $region13: #{net_forward.1} parent=0 // pred_fallthru
    _
  // Predicated region
  $region14: #{net_forward.1} parent=0 // pred_check
    _
  $region15: #{net_forward.1} parent=0 // pred_check_branch
    %23 = sbr.rel (0) target = $region17
  $region16: #{net_forward.1} parent=0 // pred_region
    _
  $region17: #{net_forward.1} parent=0 // pred_fallthru
    _
  // Predicated region
  $region18: #{net_forward.1} parent=0 // pred_check
    _
  $region19: #{net_forward.1} parent=0 // pred_check_branch
    %25 = sbr.rel (0) target = $region21
  $region20: #{net_forward.1} parent=0 // pred_region
    _
  $region21: #{net_forward.1} parent=0 // pred_fallthru
    _
  // Predicated region
  $region22: #{net_forward.1} parent=0 // pred_check
    _
  $region23: #{net_forward.1} parent=0 // pred_check_branch
    %27 = sbr.rel (0) target = $region25
  $region24: #{net_forward.1} parent=0 // pred_region
    _
  $region25: #{net_forward.1} parent=0 // pred_fallthru
    _
  // Predicated region
  $region26: #{net_forward.1} parent=0 // pred_check
    _
  $region27: #{net_forward.1} parent=0 // pred_check_branch
    %29 = sbr.rel (0) target = $region29
  $region28: #{net_forward.1} parent=0 // pred_region
    _
  $region29: #{net_forward.1} parent=0 // pred_fallthru
    _
  // Predicated region
  $region30: #{net_forward.1} parent=0 // pred_check
    _
  $region31: #{net_forward.1} parent=0 // pred_check_branch
    %31 = sbr.rel (0) target = $region33
  $region32: #{net_forward.1} parent=0 // pred_region
    _
  $region33: #{net_forward.1} parent=0 // pred_fallthru
    _
  // Predicated region
  $region34: #{net_forward.1} parent=0 // pred_check
    _
  $region35: #{net_forward.1} parent=0 // pred_check_branch
    %33 = sbr.rel (0) target = $region37
  $region36: #{net_forward.1} parent=0 // pred_region
    _
  $region37: #{net_forward.1} parent=0 // pred_fallthru
    _
  // Predicated region
  $region38: #{net_forward.1} parent=0 // pred_check
    _
  $region39: #{net_forward.1} parent=0 // pred_check_branch
    %35 = sbr.rel (0) target = $region41
  $region40: #{net_forward.1} parent=0 // pred_region
    _
  $region41: #{net_forward.1} parent=0 // pred_fallthru
    _
  // Predicated region
  $region42: #{net_forward.1} parent=0 // pred_check
    _
  $region43: #{net_forward.1} parent=0 // pred_check_branch
    %37 = sbr.rel (0) target = $region45
  $region44: #{net_forward.1} parent=0 // pred_region
    _
  $region45: #{net_forward.1} parent=0 // pred_fallthru
    _
  loop: start=0, step=1, limit=8
  $region46: #{net_forward.1} parent=0 // loop_pre_header
    _
  $region47: #{net_forward.1} parent=0 // loop_header
    %s40 = sphi 0, %s44
    %p41 = scmp.ge.s32.totalorder %s40, 8
  $region48: #{net_forward.1} parent=0 // loop_header_branch
    %43 = sbr.rel (%p41) target = $region52
  $region49: #{net_forward.1} parent=0 // loop_body
    %s45 = smul.u32 %s40, 1024
    %s46 = scalar_lea.vmem %s0, %s45
    %v47 = vld [vmem:[%s46] sm:$0xff]
    %v48 = vld [vmem:[%s46 + $0x8] sm:$0xff]
    %v49 = vld [vmem:[%s46 + $0x10] sm:$0xff]
    %v50 = vld [vmem:[%s46 + $0x18] sm:$0xff]
    %v51 = vld [vmem:[%s46 + $0x20] sm:$0xff]
    %v52 = vld [vmem:[%s46 + $0x28] sm:$0xff]
    %v53 = vld [vmem:[%s46 + $0x30] sm:$0xff]
    %v54 = vld [vmem:[%s46 + $0x38] sm:$0xff]
    %v55 = vld [vmem:[%s46 + $0x40] sm:$0xff]
    %v56 = vld [vmem:[%s46 + $0x48] sm:$0xff]
    %v57 = vld [vmem:[%s46 + $0x50] sm:$0xff]
    %v58 = vld [vmem:[%s46 + $0x58] sm:$0xff]
    %v59 = vld [vmem:[%s46 + $0x60] sm:$0xff]
    %v60 = vld [vmem:[%s46 + $0x68] sm:$0xff]
    %v61 = vld [vmem:[%s46 + $0x70] sm:$0xff]
    %v62 = vld [vmem:[%s46 + $0x78] sm:$0xff]
    %v63 = vpack.c.bf16 %v48, %v47
    %v64 = vpack.c.bf16 %v50, %v49
    %v65 = vpack.c.bf16 %v52, %v51
    %v66 = vpack.c.bf16 %v54, %v53
    %v67 = vpack.c.bf16 %v56, %v55
    %v68 = vpack.c.bf16 %v58, %v57
    %v69 = vpack.c.bf16 %v60, %v59
    %v70 = vpack.c.bf16 %v62, %v61
    %s71 = sadd.s32 %s45, 32
    %s72 = scalar_lea.vmem %s0, %s71
    %v73 = vld [vmem:[%s72] sm:$0xff]
    %v74 = vld [vmem:[%s72 + $0x8] sm:$0xff]
    %v75 = vld [vmem:[%s72 + $0x10] sm:$0xff]
    %v76 = vld [vmem:[%s72 + $0x18] sm:$0xff]
    %v77 = vld [vmem:[%s72 + $0x20] sm:$0xff]
    %v78 = vld [vmem:[%s72 + $0x28] sm:$0xff]
    %v79 = vld [vmem:[%s72 + $0x30] sm:$0xff]
    %v80 = vld [vmem:[%s72 + $0x38] sm:$0xff]
    %v81 = vld [vmem:[%s72 + $0x40] sm:$0xff]
    %v82 = vld [vmem:[%s72 + $0x48] sm:$0xff]
    %v83 = vld [vmem:[%s72 + $0x50] sm:$0xff]
    %v84 = vld [vmem:[%s72 + $0x58] sm:$0xff]
    %v85 = vld [vmem:[%s72 + $0x60] sm:$0xff]
    %v86 = vld [vmem:[%s72 + $0x68] sm:$0xff]
    %v87 = vld [vmem:[%s72 + $0x70] sm:$0xff]
    %v88 = vld [vmem:[%s72 + $0x78] sm:$0xff]
    %v89 = vpack.c.bf16 %v74, %v73
    %v90 = vpack.c.bf16 %v76, %v75
    %v91 = vpack.c.bf16 %v78, %v77
    %v92 = vpack.c.bf16 %v80, %v79
    %v93 = vpack.c.bf16 %v82, %v81
    %v94 = vpack.c.bf16 %v84, %v83
    %v95 = vpack.c.bf16 %v86, %v85
    %v96 = vpack.c.bf16 %v88, %v87
    %s97 = sadd.s32 %s45, 64
    %s98 = scalar_lea.vmem %s0, %s97
    %v99 = vld [vmem:[%s98] sm:$0xff]
    %v100 = vld [vmem:[%s98 + $0x8] sm:$0xff]
    %v101 = vld [vmem:[%s98 + $0x10] sm:$0xff]
    %v102 = vld [vmem:[%s98 + $0x18] sm:$0xff]
    %v103 = vld [vmem:[%s98 + $0x20] sm:$0xff]
    %v104 = vld [vmem:[%s98 + $0x28] sm:$0xff]
    %v105 = vld [vmem:[%s98 + $0x30] sm:$0xff]
    %v106 = vld [vmem:[%s98 + $0x38] sm:$0xff]
    %v107 = vld [vmem:[%s98 + $0x40] sm:$0xff]
    %v108 = vld [vmem:[%s98 + $0x48] sm:$0xff]
    %v109 = vld [vmem:[%s98 + $0x50] sm:$0xff]
    %v110 = vld [vmem:[%s98 + $0x58] sm:$0xff]
    %v111 = vld [vmem:[%s98 + $0x60] sm:$0xff]
    %v112 = vld [vmem:[%s98 + $0x68] sm:$0xff]
    %v113 = vld [vmem:[%s98 + $0x70] sm:$0xff]
    %v114 = vld [vmem:[%s98 + $0x78] sm:$0xff]
    %v115 = vpack.c.bf16 %v100, %v99
    %v116 = vpack.c.bf16 %v102, %v101
    %v117 = vpack.c.bf16 %v104, %v103
    %v118 = vpack.c.bf16 %v106, %v105
    %v119 = vpack.c.bf16 %v108, %v107
    %v120 = vpack.c.bf16 %v110, %v109
    %v121 = vpack.c.bf16 %v112, %v111
    %v122 = vpack.c.bf16 %v114, %v113
    %s123 = sadd.s32 %s45, 96
    %s124 = scalar_lea.vmem %s0, %s123
    %v125 = vld [vmem:[%s124] sm:$0xff]
    %v126 = vld [vmem:[%s124 + $0x8] sm:$0xff]
    %v127 = vld [vmem:[%s124 + $0x10] sm:$0xff]
    %v128 = vld [vmem:[%s124 + $0x18] sm:$0xff]
    %v129 = vld [vmem:[%s124 + $0x20] sm:$0xff]
    %v130 = vld [vmem:[%s124 + $0x28] sm:$0xff]
    %v131 = vld [vmem:[%s124 + $0x30] sm:$0xff]
    %v132 = vld [vmem:[%s124 + $0x38] sm:$0xff]
    %v133 = vld [vmem:[%s124 + $0x40] sm:$0xff]
    %v134 = vld [vmem:[%s124 + $0x48] sm:$0xff]
    %v135 = vld [vmem:[%s124 + $0x50] sm:$0xff]
    %v136 = vld [vmem:[%s124 + $0x58] sm:$0xff]
    %v137 = vld [vmem:[%s124 + $0x60] sm:$0xff]
    %v138 = vld [vmem:[%s124 + $0x68] sm:$0xff]
    %v139 = vld [vmem:[%s124 + $0x70] sm:$0xff]
    %v140 = vld [vmem:[%s124 + $0x78] sm:$0xff]
    %v141 = vpack.c.bf16 %v126, %v125
    %v142 = vpack.c.bf16 %v128, %v127
    %v143 = vpack.c.bf16 %v130, %v129
    %v144 = vpack.c.bf16 %v132, %v131
    %v145 = vpack.c.bf16 %v134, %v133
    %v146 = vpack.c.bf16 %v136, %v135
    %v147 = vpack.c.bf16 %v138, %v137
    %v148 = vpack.c.bf16 %v140, %v139
    %s149 = sadd.s32 %s45, 128
    %s150 = scalar_lea.vmem %s0, %s149
    %v151 = vld [vmem:[%s150] sm:$0xff]
    %v152 = vld [vmem:[%s150 + $0x8] sm:$0xff]
    %v153 = vld [vmem:[%s150 + $0x10] sm:$0xff]
    %v154 = vld [vmem:[%s150 + $0x18] sm:$0xff]
    %v155 = vld [vmem:[%s150 + $0x20] sm:$0xff]
    %v156 = vld [vmem:[%s150 + $0x28] sm:$0xff]
    %v157 = vld [vmem:[%s150 + $0x30] sm:$0xff]
    %v158 = vld [vmem:[%s150 + $0x38] sm:$0xff]
    %v159 = vld [vmem:[%s150 + $0x40] sm:$0xff]
    %v160 = vld [vmem:[%s150 + $0x48] sm:$0xff]
    %v161 = vld [vmem:[%s150 + $0x50] sm:$0xff]
    %v162 = vld [vmem:[%s150 + $0x58] sm:$0xff]
    %v163 = vld [vmem:[%s150 + $0x60] sm:$0xff]
    %v164 = vld [vmem:[%s150 + $0x68] sm:$0xff]
    %v165 = vld [vmem:[%s150 + $0x70] sm:$0xff]
    %v166 = vld [vmem:[%s150 + $0x78] sm:$0xff]
    %v167 = vpack.c.bf16 %v152, %v151
    %v168 = vpack.c.bf16 %v154, %v153
    %v169 = vpack.c.bf16 %v156, %v155
    %v170 = vpack.c.bf16 %v158, %v157
    %v171 = vpack.c.bf16 %v160, %v159
    %v172 = vpack.c.bf16 %v162, %v161
    %v173 = vpack.c.bf16 %v164, %v163
    %v174 = vpack.c.bf16 %v166, %v165
    %183 = vrot.lane.b32.xlu0 %v89, 16
    %v184 = vpop.permute.xlu0 %183
    %185 = vrot.lane.b32.xlu0 %v90, 16
    %v186 = vpop.permute.xlu0 %185
    %187 = vrot.lane.b32.xlu0 %v91, 16
    %v188 = vpop.permute.xlu0 %187
    %189 = vrot.lane.b32.xlu0 %v92, 16
    %v190 = vpop.permute.xlu0 %189
    %191 = vrot.lane.b32.xlu0 %v93, 16
    %v192 = vpop.permute.xlu0 %191
    %193 = vrot.lane.b32.xlu0 %v94, 16
    %v194 = vpop.permute.xlu0 %193
    %195 = vrot.lane.b32.xlu0 %v95, 16
    %v196 = vpop.permute.xlu0 %195
    %197 = vrot.lane.b32.xlu0 %v96, 16
    %v198 = vpop.permute.xlu0 %197
    %207 = vrot.lane.b32.xlu0 %v115, 32
    %v208 = vpop.permute.xlu0 %207
    %209 = vrot.lane.b32.xlu0 %v116, 32
    %v210 = vpop.permute.xlu0 %209
    %211 = vrot.lane.b32.xlu0 %v117, 32
    %v212 = vpop.permute.xlu0 %211
    %213 = vrot.lane.b32.xlu0 %v118, 32
    %v214 = vpop.permute.xlu0 %213
    %215 = vrot.lane.b32.xlu0 %v119, 32
    %v216 = vpop.permute.xlu0 %215
    %217 = vrot.lane.b32.xlu0 %v120, 32
    %v218 = vpop.permute.xlu0 %217
    %219 = vrot.lane.b32.xlu0 %v121, 32
    %v220 = vpop.permute.xlu0 %219
    %221 = vrot.lane.b32.xlu0 %v122, 32
    %v222 = vpop.permute.xlu0 %221
    %231 = vrot.lane.b32.xlu0 %v141, 48
    %v232 = vpop.permute.xlu0 %231
    %233 = vrot.lane.b32.xlu0 %v142, 48
    %v234 = vpop.permute.xlu0 %233
    %235 = vrot.lane.b32.xlu0 %v143, 48
    %v236 = vpop.permute.xlu0 %235
    %237 = vrot.lane.b32.xlu0 %v144, 48
    %v238 = vpop.permute.xlu0 %237
    %239 = vrot.lane.b32.xlu0 %v145, 48
    %v240 = vpop.permute.xlu0 %239
    %241 = vrot.lane.b32.xlu0 %v146, 48
    %v242 = vpop.permute.xlu0 %241
    %243 = vrot.lane.b32.xlu0 %v147, 48
    %v244 = vpop.permute.xlu0 %243
    %245 = vrot.lane.b32.xlu0 %v148, 48
    %v246 = vpop.permute.xlu0 %245
    %255 = vrot.lane.b32.xlu0 %v167, 64
    %v256 = vpop.permute.xlu0 %255
    %257 = vrot.lane.b32.xlu0 %v168, 64
    %v258 = vpop.permute.xlu0 %257
    %259 = vrot.lane.b32.xlu0 %v169, 64
    %v260 = vpop.permute.xlu0 %259
    %261 = vrot.lane.b32.xlu0 %v170, 64
    %v262 = vpop.permute.xlu0 %261
    %263 = vrot.lane.b32.xlu0 %v171, 64
    %v264 = vpop.permute.xlu0 %263
    %265 = vrot.lane.b32.xlu0 %v172, 64
    %v266 = vpop.permute.xlu0 %265
    %267 = vrot.lane.b32.xlu0 %v173, 64
    %v268 = vpop.permute.xlu0 %267
    %269 = vrot.lane.b32.xlu0 %v174, 64
    %v270 = vpop.permute.xlu0 %269
    %vm271 = vcmask 130048
    %v274 = vsel %vm271, %v63, %v184
    %v277 = vsel %vm271, %v64, %v186
    %v280 = vsel %vm271, %v65, %v188
    %v283 = vsel %vm271, %v66, %v190
    %v286 = vsel %vm271, %v67, %v192
    %v289 = vsel %vm271, %v68, %v194
    %v292 = vsel %vm271, %v69, %v196
    %v295 = vsel %vm271, %v70, %v198
    %vm296 = vcmask 261120
    %v298 = vsel %vm296, %v274, %v208
    %v300 = vsel %vm296, %v277, %v210
    %v302 = vsel %vm296, %v280, %v212
    %v304 = vsel %vm296, %v283, %v214
    %v306 = vsel %vm296, %v286, %v216
    %v308 = vsel %vm296, %v289, %v218
    %v310 = vsel %vm296, %v292, %v220
    %v312 = vsel %vm296, %v295, %v222
    %vm313 = vcmask 392192
    %v315 = vsel %vm313, %v298, %v232
    %v317 = vsel %vm313, %v300, %v234
    %v319 = vsel %vm313, %v302, %v236
    %v321 = vsel %vm313, %v304, %v238
    %v323 = vsel %vm313, %v306, %v240
    %v325 = vsel %vm313, %v308, %v242
    %v327 = vsel %vm313, %v310, %v244
    %v329 = vsel %vm313, %v312, %v246
    %vm330 = vcmask 523264
    %v332 = vsel %vm330, %v315, %v256
    %v334 = vsel %vm330, %v317, %v258
    %v336 = vsel %vm330, %v319, %v260
    %v338 = vsel %vm330, %v321, %v262
    %v340 = vsel %vm330, %v323, %v264
    %v342 = vsel %vm330, %v325, %v266
    %v344 = vsel %vm330, %v327, %v268
    %v346 = vsel %vm330, %v329, %v270
    %v347 = vld [vmem:[%s1] sm:$0xf]
    %v348 = vld [vmem:[%s1 + $0x4] sm:$0xf]
    %v349 = vld [vmem:[%s1 + $0x8] sm:$0xf]
    %v350 = vld [vmem:[%s1 + $0xc] sm:$0xf]
    %v351 = vld [vmem:[%s1 + $0x10] sm:$0xf]
    %v352 = vld [vmem:[%s1 + $0x14] sm:$0xf]
    %v353 = vld [vmem:[%s1 + $0x18] sm:$0xf]
    %v354 = vld [vmem:[%s1 + $0x1c] sm:$0xf]
    %v355 = vld [vmem:[%s1 + $0x20] sm:$0xf]
    %v356 = vld [vmem:[%s1 + $0x24] sm:$0xf]
    %v357 = vld [vmem:[%s2] sm:$0x1]
    %v359 = vlaneseq
    %v360 = vshrl.u32 %v359, 7
    %v361 = vsub.s32 0, %v360
    %v362 = vrot.slane %v357, %v361
    %v374 = vunpack.c.l.b16 %v347
    %v375 = vunpack.c.l.b16 %v348
    %v376 = vunpack.c.l.b16 %v349
    %v377 = vunpack.c.l.b16 %v350
    %v378 = vunpack.c.l.b16 %v351
    %v379 = vunpack.c.l.b16 %v352
    %v380 = vunpack.c.l.b16 %v353
    %v381 = vunpack.c.l.b16 %v354
    %v382 = vunpack.c.l.b16 %v355
    %v383 = vunpack.c.l.b16 %v356
    %v384 = vpack.c.b16 %v375, %v374
    %v385 = vpack.c.b16 %v377, %v376
    %v386 = vpack.c.b16 %v379, %v378
    %v387 = vpack.c.b16 %v381, %v380
    %v388 = vpack.c.b16 %v383, %v382
    %vm394 = vcmask 654336
    %v395 = vsel %vm394, %v332, 0
    %v397 = vsel %vm394, %v334, 0
    %v399 = vsel %vm394, %v336, 0
    %v401 = vsel %vm394, %v338, 0
    %v403 = vsel %vm394, %v340, 0
    %v405 = vsel %vm394, %v342, 0
    %v407 = vsel %vm394, %v344, 0
    %v409 = vsel %vm394, %v346, 0
    %411 = vmatprep.subr.bf16.mxu0 0
    %412 = vmatpush1.bf16.msra.mxu0 %v384
    %413 = vmatprep.subr.bf16.mxu0 0
    %414 = vmatpush1.bf16.msra.mxu0 %v385
    %415 = vmatprep.subr.bf16.mxu0 0
    %416 = vmatpush1.bf16.msra.mxu0 %v386
    %417 = vmatprep.subr.bf16.mxu0 0
    %418 = vmatpush1.bf16.msra.mxu0 %v387
    %419 = vmatprep.subr.bf16.mxu0 0
    %420 = vmatpush1.bf16.msra.mxu0 %v388
    %421 = vmatprep.subr.bf16.mxu0 0
    %422 = vmatpush1.bf16.msra.mxu0 0
    %423 = vmatprep.subr.bf16.mxu0 0
    %424 = vmatpush1.bf16.msra.mxu0 0
    %425 = vmatprep.subr.bf16.mxu0 0
    %426 = vmatpush1.bf16.msra.mxu0 0
    %427 = vmatprep.subr.bf16.mxu0 0
    %428 = vmatpush1.bf16.msra.mxu0 0
    %429 = vmatprep.subr.bf16.mxu0 0
    %430 = vmatpush1.bf16.msra.mxu0 0
    %431 = vmatprep.subr.bf16.mxu0 0
    %432 = vmatpush1.bf16.msra.mxu0 0
    %433 = vmatprep.subr.bf16.mxu0 0
    %434 = vmatpush1.bf16.msra.mxu0 0
    %435 = vmatprep.subr.bf16.mxu0 0
    %436 = vmatpush1.bf16.msra.mxu0 0
    %437 = vmatprep.subr.bf16.mxu0 0
    %438 = vmatpush1.bf16.msra.mxu0 0
    %439 = vmatprep.subr.bf16.mxu0 0
    %440 = vmatpush1.bf16.msra.mxu0 0
    %441 = vmatprep.subr.bf16.mxu0 0
    %442 = vmatpush1.bf16.msra.mxu0 0
    %443 = vmatprep.mubr.bf16.mxu0 0
    %444 = vmatmul.mubr.bf16.gmra.mrb[0].mxu0 %v395
    %v445 = vpop.f32.mrb[0].mxu0
    %v446 = vadd.f32 %v362, %v445
    %v447 = vpop.f32.mrb[0].mxu0
    %v448 = vpop.f32.mrb[0].mxu0
    %v449 = vadd.f32 %v362, %v448
    %v450 = vpop.f32.mrb[0].mxu0
    %451 = vmatprep.mubr.bf16.mxu0 0
    %452 = vmatmul.mubr.bf16.gmra.mrb[0].mxu0 %v397
    %v453 = vpop.f32.mrb[0].mxu0
    %v454 = vadd.f32 %v362, %v453
    %v455 = vpop.f32.mrb[0].mxu0
    %v456 = vpop.f32.mrb[0].mxu0
    %v457 = vadd.f32 %v362, %v456
    %v458 = vpop.f32.mrb[0].mxu0
    %459 = vmatprep.mubr.bf16.mxu0 0
    %460 = vmatmul.mubr.bf16.gmra.mrb[0].mxu0 %v399
    %v461 = vpop.f32.mrb[0].mxu0
    %v462 = vadd.f32 %v362, %v461
    %v463 = vpop.f32.mrb[0].mxu0
    %v464 = vpop.f32.mrb[0].mxu0
    %v465 = vadd.f32 %v362, %v464
    %v466 = vpop.f32.mrb[0].mxu0
    %467 = vmatprep.mubr.bf16.mxu0 0
    %468 = vmatmul.mubr.bf16.gmra.mrb[0].mxu0 %v401
    %v469 = vpop.f32.mrb[0].mxu0
    %v470 = vadd.f32 %v362, %v469
    %v471 = vpop.f32.mrb[0].mxu0
    %v472 = vpop.f32.mrb[0].mxu0
    %v473 = vadd.f32 %v362, %v472
    %v474 = vpop.f32.mrb[0].mxu0
    %475 = vmatprep.mubr.bf16.mxu0 0
    %476 = vmatmul.mubr.bf16.gmra.mrb[0].mxu0 %v403
    %v477 = vpop.f32.mrb[0].mxu0
    %v478 = vadd.f32 %v362, %v477
    %v479 = vpop.f32.mrb[0].mxu0
    %v480 = vpop.f32.mrb[0].mxu0
    %v481 = vadd.f32 %v362, %v480
    %v482 = vpop.f32.mrb[0].mxu0
    %483 = vmatprep.mubr.bf16.mxu0 0
    %484 = vmatmul.mubr.bf16.gmra.mrb[0].mxu0 %v405
    %v485 = vpop.f32.mrb[0].mxu0
    %v486 = vadd.f32 %v362, %v485
    %v487 = vpop.f32.mrb[0].mxu0
    %v488 = vpop.f32.mrb[0].mxu0
    %v489 = vadd.f32 %v362, %v488
    %v490 = vpop.f32.mrb[0].mxu0
    %491 = vmatprep.mubr.bf16.mxu0 0
    %492 = vmatmul.mubr.bf16.gmra.mrb[0].mxu0 %v407
    %v493 = vpop.f32.mrb[0].mxu0
    %v494 = vadd.f32 %v362, %v493
    %v495 = vpop.f32.mrb[0].mxu0
    %v496 = vpop.f32.mrb[0].mxu0
    %v497 = vadd.f32 %v362, %v496
    %v498 = vpop.f32.mrb[0].mxu0
    %499 = vmatprep.mubr.bf16.mxu0 0
    %500 = vmatmul.mubr.bf16.gmra.mrb[0].mxu0 %v409
    %v501 = vpop.f32.mrb[0].mxu0
    %v502 = vadd.f32 %v362, %v501
    %v503 = vpop.f32.mrb[0].mxu0
    %v504 = vpop.f32.mrb[0].mxu0
    %v505 = vadd.f32 %v362, %v504
    %v506 = vpop.f32.mrb[0].mxu0
    %507 = vdwg.mxu0
    %v508 = vmax.f32 %v446, 0.0
    %v509 = vmax.f32 %v449, 0.0
    %v510 = vmax.f32 %v454, 0.0
    %v511 = vmax.f32 %v457, 0.0
    %v512 = vmax.f32 %v462, 0.0
    %v513 = vmax.f32 %v465, 0.0
    %v514 = vmax.f32 %v470, 0.0
    %v515 = vmax.f32 %v473, 0.0
    %v516 = vmax.f32 %v478, 0.0
    %v517 = vmax.f32 %v481, 0.0
    %v518 = vmax.f32 %v486, 0.0
    %v519 = vmax.f32 %v489, 0.0
    %v520 = vmax.f32 %v494, 0.0
    %v521 = vmax.f32 %v497, 0.0
    %v522 = vmax.f32 %v502, 0.0
    %v523 = vmax.f32 %v505, 0.0
    %vm524 = vcmask 64512
    %525 = vst.msk [vmem:[#allocation2] sm:$0xff] %vm524, %v508
    %526 = vst.msk [vmem:[#allocation2 + $0x8] sm:$0xff] %vm524, %v509
    %527 = vst.msk [vmem:[#allocation2 + $0x10] sm:$0xff] %vm524, %v510
    %528 = vst.msk [vmem:[#allocation2 + $0x18] sm:$0xff] %vm524, %v511
    %529 = vst.msk [vmem:[#allocation2 + $0x20] sm:$0xff] %vm524, %v512
    %530 = vst.msk [vmem:[#allocation2 + $0x28] sm:$0xff] %vm524, %v513
    %531 = vst.msk [vmem:[#allocation2 + $0x30] sm:$0xff] %vm524, %v514
    %532 = vst.msk [vmem:[#allocation2 + $0x38] sm:$0xff] %vm524, %v515
    %533 = vst.msk [vmem:[#allocation2 + $0x40] sm:$0xff] %vm524, %v516
    %534 = vst.msk [vmem:[#allocation2 + $0x48] sm:$0xff] %vm524, %v517
    %535 = vst.msk [vmem:[#allocation2 + $0x50] sm:$0xff] %vm524, %v518
    %536 = vst.msk [vmem:[#allocation2 + $0x58] sm:$0xff] %vm524, %v519
    %537 = vst.msk [vmem:[#allocation2 + $0x60] sm:$0xff] %vm524, %v520
    %538 = vst.msk [vmem:[#allocation2 + $0x68] sm:$0xff] %vm524, %v521
    %539 = vst.msk [vmem:[#allocation2 + $0x70] sm:$0xff] %vm524, %v522
    %540 = vst.msk [vmem:[#allocation2 + $0x78] sm:$0xff] %vm524, %v523
    %v541 = vld [vmem:[%s150] sm:$0xff]
    %v542 = vld [vmem:[%s150 + $0x8] sm:$0xff]
    %v543 = vld [vmem:[%s150 + $0x10] sm:$0xff]
    %v544 = vld [vmem:[%s150 + $0x18] sm:$0xff]
    %v545 = vld [vmem:[%s150 + $0x20] sm:$0xff]
    %v546 = vld [vmem:[%s150 + $0x28] sm:$0xff]
    %v547 = vld [vmem:[%s150 + $0x30] sm:$0xff]
    %v548 = vld [vmem:[%s150 + $0x38] sm:$0xff]
    %v549 = vld [vmem:[%s150 + $0x40] sm:$0xff]
    %v550 = vld [vmem:[%s150 + $0x48] sm:$0xff]
    %v551 = vld [vmem:[%s150 + $0x50] sm:$0xff]
    %v552 = vld [vmem:[%s150 + $0x58] sm:$0xff]
    %v553 = vld [vmem:[%s150 + $0x60] sm:$0xff]
    %v554 = vld [vmem:[%s150 + $0x68] sm:$0xff]
    %v555 = vld [vmem:[%s150 + $0x70] sm:$0xff]
    %v556 = vld [vmem:[%s150 + $0x78] sm:$0xff]
    %v557 = vpack.c.bf16 %v542, %v541
    %v558 = vpack.c.bf16 %v544, %v543
    %v559 = vpack.c.bf16 %v546, %v545
    %v560 = vpack.c.bf16 %v548, %v547
    %v561 = vpack.c.bf16 %v550, %v549
    %v562 = vpack.c.bf16 %v552, %v551
    %v563 = vpack.c.bf16 %v554, %v553
    %v564 = vpack.c.bf16 %v556, %v555
    %s565 = sadd.s32 %s45, 160
    %s566 = scalar_lea.vmem %s0, %s565
    %v567 = vld [vmem:[%s566] sm:$0xff]
    %v568 = vld [vmem:[%s566 + $0x8] sm:$0xff]
    %v569 = vld [vmem:[%s566 + $0x10] sm:$0xff]
    %v570 = vld [vmem:[%s566 + $0x18] sm:$0xff]
    %v571 = vld [vmem:[%s566 + $0x20] sm:$0xff]
    %v572 = vld [vmem:[%s566 + $0x28] sm:$0xff]
    %v573 = vld [vmem:[%s566 + $0x30] sm:$0xff]
    %v574 = vld [vmem:[%s566 + $0x38] sm:$0xff]
    %v575 = vld [vmem:[%s566 + $0x40] sm:$0xff]
    %v576 = vld [vmem:[%s566 + $0x48] sm:$0xff]
    %v577 = vld [vmem:[%s566 + $0x50] sm:$0xff]
    %v578 = vld [vmem:[%s566 + $0x58] sm:$0xff]
    %v579 = vld [vmem:[%s566 + $0x60] sm:$0xff]
    %v580 = vld [vmem:[%s566 + $0x68] sm:$0xff]
    %v581 = vld [vmem:[%s566 + $0x70] sm:$0xff]
    %v582 = vld [vmem:[%s566 + $0x78] sm:$0xff]
    %v583 = vpack.c.bf16 %v568, %v567
    %v584 = vpack.c.bf16 %v570, %v569
    %v585 = vpack.c.bf16 %v572, %v571
    %v586 = vpack.c.bf16 %v574, %v573
    %v587 = vpack.c.bf16 %v576, %v575
    %v588 = vpack.c.bf16 %v578, %v577
    %v589 = vpack.c.bf16 %v580, %v579
    %v590 = vpack.c.bf16 %v582, %v581
    %s591 = sadd.s32 %s45, 192
    %s592 = scalar_lea.vmem %s0, %s591
    %v593 = vld [vmem:[%s592] sm:$0xff]
    %v594 = vld [vmem:[%s592 + $0x8] sm:$0xff]
    %v595 = vld [vmem:[%s592 + $0x10] sm:$0xff]
    %v596 = vld [vmem:[%s592 + $0x18] sm:$0xff]
    %v597 = vld [vmem:[%s592 + $0x20] sm:$0xff]
    %v598 = vld [vmem:[%s592 + $0x28] sm:$0xff]
    %v599 = vld [vmem:[%s592 + $0x30] sm:$0xff]
    %v600 = vld [vmem:[%s592 + $0x38] sm:$0xff]
    %v601 = vld [vmem:[%s592 + $0x40] sm:$0xff]
    %v602 = vld [vmem:[%s592 + $0x48] sm:$0xff]
    %v603 = vld [vmem:[%s592 + $0x50] sm:$0xff]
    %v604 = vld [vmem:[%s592 + $0x58] sm:$0xff]
    %v605 = vld [vmem:[%s592 + $0x60] sm:$0xff]
    %v606 = vld [vmem:[%s592 + $0x68] sm:$0xff]
    %v607 = vld [vmem:[%s592 + $0x70] sm:$0xff]
    %v608 = vld [vmem:[%s592 + $0x78] sm:$0xff]
    %v609 = vpack.c.bf16 %v594, %v593
    %v610 = vpack.c.bf16 %v596, %v595
    %v611 = vpack.c.bf16 %v598, %v597
    %v612 = vpack.c.bf16 %v600, %v599
    %v613 = vpack.c.bf16 %v602, %v601
    %v614 = vpack.c.bf16 %v604, %v603
    %v615 = vpack.c.bf16 %v606, %v605
    %v616 = vpack.c.bf16 %v608, %v607
    %s617 = sadd.s32 %s45, 224
    %s618 = scalar_lea.vmem %s0, %s617
    %v619 = vld [vmem:[%s618] sm:$0xff]
    %v620 = vld [vmem:[%s618 + $0x8] sm:$0xff]
    %v621 = vld [vmem:[%s618 + $0x10] sm:$0xff]
    %v622 = vld [vmem:[%s618 + $0x18] sm:$0xff]
    %v623 = vld [vmem:[%s618 + $0x20] sm:$0xff]
    %v624 = vld [vmem:[%s618 + $0x28] sm:$0xff]
    %v625 = vld [vmem:[%s618 + $0x30] sm:$0xff]
    %v626 = vld [vmem:[%s618 + $0x38] sm:$0xff]
    %v627 = vld [vmem:[%s618 + $0x40] sm:$0xff]
    %v628 = vld [vmem:[%s618 + $0x48] sm:$0xff]
    %v629 = vld [vmem:[%s618 + $0x50] sm:$0xff]
    %v630 = vld [vmem:[%s618 + $0x58] sm:$0xff]
    %v631 = vld [vmem:[%s618 + $0x60] sm:$0xff]
    %v632 = vld [vmem:[%s618 + $0x68] sm:$0xff]
    %v633 = vld [vmem:[%s618 + $0x70] sm:$0xff]
    %v634 = vld [vmem:[%s618 + $0x78] sm:$0xff]
    %v635 = vpack.c.bf16 %v620, %v619
    %v636 = vpack.c.bf16 %v622, %v621
    %v637 = vpack.c.bf16 %v624, %v623
    %v638 = vpack.c.bf16 %v626, %v625
    %v639 = vpack.c.bf16 %v628, %v627
    %v640 = vpack.c.bf16 %v630, %v629
    %v641 = vpack.c.bf16 %v632, %v631
    %v642 = vpack.c.bf16 %v634, %v633
    %s643 = sadd.s32 %s45, 256
    %s644 = scalar_lea.vmem %s0, %s643
    %v645 = vld [vmem:[%s644] sm:$0xff]
    %v646 = vld [vmem:[%s644 + $0x8] sm:$0xff]
    %v647 = vld [vmem:[%s644 + $0x10] sm:$0xff]
    %v648 = vld [vmem:[%s644 + $0x18] sm:$0xff]
    %v649 = vld [vmem:[%s644 + $0x20] sm:$0xff]
    %v650 = vld [vmem:[%s644 + $0x28] sm:$0xff]
    %v651 = vld [vmem:[%s644 + $0x30] sm:$0xff]
    %v652 = vld [vmem:[%s644 + $0x38] sm:$0xff]
    %v653 = vld [vmem:[%s644 + $0x40] sm:$0xff]
    %v654 = vld [vmem:[%s644 + $0x48] sm:$0xff]
    %v655 = vld [vmem:[%s644 + $0x50] sm:$0xff]
    %v656 = vld [vmem:[%s644 + $0x58] sm:$0xff]
    %v657 = vld [vmem:[%s644 + $0x60] sm:$0xff]
    %v658 = vld [vmem:[%s644 + $0x68] sm:$0xff]
    %v659 = vld [vmem:[%s644 + $0x70] sm:$0xff]
    %v660 = vld [vmem:[%s644 + $0x78] sm:$0xff]
    %v661 = vpack.c.bf16 %v646, %v645
    %v662 = vpack.c.bf16 %v648, %v647
    %v663 = vpack.c.bf16 %v650, %v649
    %v664 = vpack.c.bf16 %v652, %v651
    %v665 = vpack.c.bf16 %v654, %v653
    %v666 = vpack.c.bf16 %v656, %v655
    %v667 = vpack.c.bf16 %v658, %v657
    %v668 = vpack.c.bf16 %v660, %v659
    %677 = vrot.lane.b32.xlu0 %v583, 16
    %v678 = vpop.permute.xlu0 %677
    %679 = vrot.lane.b32.xlu0 %v584, 16
    %v680 = vpop.permute.xlu0 %679
    %681 = vrot.lane.b32.xlu0 %v585, 16
    %v682 = vpop.permute.xlu0 %681
    %683 = vrot.lane.b32.xlu0 %v586, 16
    %v684 = vpop.permute.xlu0 %683
    %685 = vrot.lane.b32.xlu0 %v587, 16
    %v686 = vpop.permute.xlu0 %685
    %687 = vrot.lane.b32.xlu0 %v588, 16
    %v688 = vpop.permute.xlu0 %687
    %689 = vrot.lane.b32.xlu0 %v589, 16
    %v690 = vpop.permute.xlu0 %689
    %691 = vrot.lane.b32.xlu0 %v590, 16
    %v692 = vpop.permute.xlu0 %691
    %701 = vrot.lane.b32.xlu0 %v609, 32
    %v702 = vpop.permute.xlu0 %701
    %703 = vrot.lane.b32.xlu0 %v610, 32
    %v704 = vpop.permute.xlu0 %703
    %705 = vrot.lane.b32.xlu0 %v611, 32
    %v706 = vpop.permute.xlu0 %705
    %707 = vrot.lane.b32.xlu0 %v612, 32
    %v708 = vpop.permute.xlu0 %707
    %709 = vrot.lane.b32.xlu0 %v613, 32
    %v710 = vpop.permute.xlu0 %709
    %711 = vrot.lane.b32.xlu0 %v614, 32
    %v712 = vpop.permute.xlu0 %711
    %713 = vrot.lane.b32.xlu0 %v615, 32
    %v714 = vpop.permute.xlu0 %713
    %715 = vrot.lane.b32.xlu0 %v616, 32
    %v716 = vpop.permute.xlu0 %715
    %725 = vrot.lane.b32.xlu0 %v635, 48
    %v726 = vpop.permute.xlu0 %725
    %727 = vrot.lane.b32.xlu0 %v636, 48
    %v728 = vpop.permute.xlu0 %727
    %729 = vrot.lane.b32.xlu0 %v637, 48
    %v730 = vpop.permute.xlu0 %729
    %731 = vrot.lane.b32.xlu0 %v638, 48
    %v732 = vpop.permute.xlu0 %731
    %733 = vrot.lane.b32.xlu0 %v639, 48
    %v734 = vpop.permute.xlu0 %733
    %735 = vrot.lane.b32.xlu0 %v640, 48
    %v736 = vpop.permute.xlu0 %735
    %737 = vrot.lane.b32.xlu0 %v641, 48
    %v738 = vpop.permute.xlu0 %737
    %739 = vrot.lane.b32.xlu0 %v642, 48
    %v740 = vpop.permute.xlu0 %739
    %749 = vrot.lane.b32.xlu0 %v661, 64
    %v750 = vpop.permute.xlu0 %749
    %751 = vrot.lane.b32.xlu0 %v662, 64
    %v752 = vpop.permute.xlu0 %751
    %753 = vrot.lane.b32.xlu0 %v663, 64
    %v754 = vpop.permute.xlu0 %753
    %755 = vrot.lane.b32.xlu0 %v664, 64
    %v756 = vpop.permute.xlu0 %755
    %757 = vrot.lane.b32.xlu0 %v665, 64
    %v758 = vpop.permute.xlu0 %757
    %759 = vrot.lane.b32.xlu0 %v666, 64
    %v760 = vpop.permute.xlu0 %759
    %761 = vrot.lane.b32.xlu0 %v667, 64
    %v762 = vpop.permute.xlu0 %761
    %763 = vrot.lane.b32.xlu0 %v668, 64
    %v764 = vpop.permute.xlu0 %763
    %v767 = vsel %vm271, %v557, %v678
    %v770 = vsel %vm271, %v558, %v680
    %v773 = vsel %vm271, %v559, %v682
    %v776 = vsel %vm271, %v560, %v684
    %v779 = vsel %vm271, %v561, %v686
    %v782 = vsel %vm271, %v562, %v688
    %v785 = vsel %vm271, %v563, %v690
    %v788 = vsel %vm271, %v564, %v692
    %v790 = vsel %vm296, %v767, %v702
    %v792 = vsel %vm296, %v770, %v704
    %v794 = vsel %vm296, %v773, %v706
    %v796 = vsel %vm296, %v776, %v708
    %v798 = vsel %vm296, %v779, %v710
    %v800 = vsel %vm296, %v782, %v712
    %v802 = vsel %vm296, %v785, %v714
    %v804 = vsel %vm296, %v788, %v716
    %v806 = vsel %vm313, %v790, %v726
    %v808 = vsel %vm313, %v792, %v728
    %v810 = vsel %vm313, %v794, %v730
    %v812 = vsel %vm313, %v796, %v732
    %v814 = vsel %vm313, %v798, %v734
    %v816 = vsel %vm313, %v800, %v736
    %v818 = vsel %vm313, %v802, %v738
    %v820 = vsel %vm313, %v804, %v740
    %v822 = vsel %vm330, %v806, %v750
    %v824 = vsel %vm330, %v808, %v752
    %v826 = vsel %vm330, %v810, %v754
    %v828 = vsel %vm330, %v812, %v756
    %v830 = vsel %vm330, %v814, %v758
    %v832 = vsel %vm330, %v816, %v760
    %v834 = vsel %vm330, %v818, %v762
    %v836 = vsel %vm330, %v820, %v764
    %v837 = vld [vmem:[%s1] sm:$0xf]
    %v838 = vld [vmem:[%s1 + $0x4] sm:$0xf]
    %v839 = vld [vmem:[%s1 + $0x8] sm:$0xf]
    %v840 = vld [vmem:[%s1 + $0xc] sm:$0xf]
    %v841 = vld [vmem:[%s1 + $0x10] sm:$0xf]
    %v842 = vld [vmem:[%s1 + $0x14] sm:$0xf]
    %v843 = vld [vmem:[%s1 + $0x18] sm:$0xf]
    %v844 = vld [vmem:[%s1 + $0x1c] sm:$0xf]
    %v845 = vld [vmem:[%s1 + $0x20] sm:$0xf]
    %v846 = vld [vmem:[%s1 + $0x24] sm:$0xf]
    %v847 = vld [vmem:[%s2] sm:$0x1]
    %v849 = vlaneseq
    %v850 = vshrl.u32 %v849, 7
    %v851 = vsub.s32 0, %v850
    %v852 = vrot.slane %v847, %v851
    %v864 = vunpack.c.l.b16 %v837
    %v865 = vunpack.c.l.b16 %v838
    %v866 = vunpack.c.l.b16 %v839
    %v867 = vunpack.c.l.b16 %v840
    %v868 = vunpack.c.l.b16 %v841
    %v869 = vunpack.c.l.b16 %v842
    %v870 = vunpack.c.l.b16 %v843
    %v871 = vunpack.c.l.b16 %v844
    %v872 = vunpack.c.l.b16 %v845
    %v873 = vunpack.c.l.b16 %v846
    %v874 = vpack.c.b16 %v865, %v864
    %v875 = vpack.c.b16 %v867, %v866
    %v876 = vpack.c.b16 %v869, %v868
    %v877 = vpack.c.b16 %v871, %v870
    %v878 = vpack.c.b16 %v873, %v872
    %v884 = vsel %vm394, %v822, 0
    %v886 = vsel %vm394, %v824, 0
    %v888 = vsel %vm394, %v826, 0
    %v890 = vsel %vm394, %v828, 0
    %v892 = vsel %vm394, %v830, 0
    %v894 = vsel %vm394, %v832, 0
    %v896 = vsel %vm394, %v834, 0
    %v898 = vsel %vm394, %v836, 0
    %900 = vmatprep.subr.bf16.mxu0 0
    %901 = vmatpush1.bf16.msra.mxu0 %v874
    %902 = vmatprep.subr.bf16.mxu0 0
    %903 = vmatpush1.bf16.msra.mxu0 %v875
    %904 = vmatprep.subr.bf16.mxu0 0
    %905 = vmatpush1.bf16.msra.mxu0 %v876
    %906 = vmatprep.subr.bf16.mxu0 0
    %907 = vmatpush1.bf16.msra.mxu0 %v877
    %908 = vmatprep.subr.bf16.mxu0 0
    %909 = vmatpush1.bf16.msra.mxu0 %v878
    %910 = vmatprep.subr.bf16.mxu0 0
    %911 = vmatpush1.bf16.msra.mxu0 0
    %912 = vmatprep.subr.bf16.mxu0 0
    %913 = vmatpush1.bf16.msra.mxu0 0
    %914 = vmatprep.subr.bf16.mxu0 0
    %915 = vmatpush1.bf16.msra.mxu0 0
    %916 = vmatprep.subr.bf16.mxu0 0
    %917 = vmatpush1.bf16.msra.mxu0 0
    %918 = vmatprep.subr.bf16.mxu0 0
    %919 = vmatpush1.bf16.msra.mxu0 0
    %920 = vmatprep.subr.bf16.mxu0 0
    %921 = vmatpush1.bf16.msra.mxu0 0
    %922 = vmatprep.subr.bf16.mxu0 0
    %923 = vmatpush1.bf16.msra.mxu0 0
    %924 = vmatprep.subr.bf16.mxu0 0
    %925 = vmatpush1.bf16.msra.mxu0 0
    %926 = vmatprep.subr.bf16.mxu0 0
    %927 = vmatpush1.bf16.msra.mxu0 0
    %928 = vmatprep.subr.bf16.mxu0 0
    %929 = vmatpush1.bf16.msra.mxu0 0
    %930 = vmatprep.subr.bf16.mxu0 0
    %931 = vmatpush1.bf16.msra.mxu0 0
    %932 = vmatprep.mubr.bf16.mxu0 0
    %933 = vmatmul.mubr.bf16.gmra.mrb[0].mxu0 %v884
    %v934 = vpop.f32.mrb[0].mxu0
    %v935 = vadd.f32 %v852, %v934
    %v936 = vpop.f32.mrb[0].mxu0
    %v937 = vpop.f32.mrb[0].mxu0
    %v938 = vadd.f32 %v852, %v937
    %v939 = vpop.f32.mrb[0].mxu0
    %940 = vmatprep.mubr.bf16.mxu0 0
    %941 = vmatmul.mubr.bf16.gmra.mrb[0].mxu0 %v886
    %v942 = vpop.f32.mrb[0].mxu0
    %v943 = vadd.f32 %v852, %v942
    %v944 = vpop.f32.mrb[0].mxu0
    %v945 = vpop.f32.mrb[0].mxu0
    %v946 = vadd.f32 %v852, %v945
    %v947 = vpop.f32.mrb[0].mxu0
    %948 = vmatprep.mubr.bf16.mxu0 0
    %949 = vmatmul.mubr.bf16.gmra.mrb[0].mxu0 %v888
    %v950 = vpop.f32.mrb[0].mxu0
    %v951 = vadd.f32 %v852, %v950
    %v952 = vpop.f32.mrb[0].mxu0
    %v953 = vpop.f32.mrb[0].mxu0
    %v954 = vadd.f32 %v852, %v953
    %v955 = vpop.f32.mrb[0].mxu0
    %956 = vmatprep.mubr.bf16.mxu0 0
    %957 = vmatmul.mubr.bf16.gmra.mrb[0].mxu0 %v890
    %v958 = vpop.f32.mrb[0].mxu0
    %v959 = vadd.f32 %v852, %v958
    %v960 = vpop.f32.mrb[0].mxu0
    %v961 = vpop.f32.mrb[0].mxu0
    %v962 = vadd.f32 %v852, %v961
    %v963 = vpop.f32.mrb[0].mxu0
    %964 = vmatprep.mubr.bf16.mxu0 0
    %965 = vmatmul.mubr.bf16.gmra.mrb[0].mxu0 %v892
    %v966 = vpop.f32.mrb[0].mxu0
    %v967 = vadd.f32 %v852, %v966
    %v968 = vpop.f32.mrb[0].mxu0
    %v969 = vpop.f32.mrb[0].mxu0
    %v970 = vadd.f32 %v852, %v969
    %v971 = vpop.f32.mrb[0].mxu0
    %972 = vmatprep.mubr.bf16.mxu0 0
    %973 = vmatmul.mubr.bf16.gmra.mrb[0].mxu0 %v894
    %v974 = vpop.f32.mrb[0].mxu0
    %v975 = vadd.f32 %v852, %v974
    %v976 = vpop.f32.mrb[0].mxu0
    %v977 = vpop.f32.mrb[0].mxu0
    %v978 = vadd.f32 %v852, %v977
    %v979 = vpop.f32.mrb[0].mxu0
    %980 = vmatprep.mubr.bf16.mxu0 0
    %981 = vmatmul.mubr.bf16.gmra.mrb[0].mxu0 %v896
    %v982 = vpop.f32.mrb[0].mxu0
    %v983 = vadd.f32 %v852, %v982
    %v984 = vpop.f32.mrb[0].mxu0
    %v985 = vpop.f32.mrb[0].mxu0
    %v986 = vadd.f32 %v852, %v985
    %v987 = vpop.f32.mrb[0].mxu0
    %988 = vmatprep.mubr.bf16.mxu0 0
    %989 = vmatmul.mubr.bf16.gmra.mrb[0].mxu0 %v898
    %v990 = vpop.f32.mrb[0].mxu0
    %v991 = vadd.f32 %v852, %v990
    %v992 = vpop.f32.mrb[0].mxu0
    %v993 = vpop.f32.mrb[0].mxu0
    %v994 = vadd.f32 %v852, %v993
    %v995 = vpop.f32.mrb[0].mxu0
    %996 = vdwg.mxu0
    %v997 = vmax.f32 %v935, 0.0
    %v998 = vmax.f32 %v938, 0.0
    %v999 = vmax.f32 %v943, 0.0
    %v1000 = vmax.f32 %v946, 0.0
    %v1001 = vmax.f32 %v951, 0.0
    %v1002 = vmax.f32 %v954, 0.0
    %v1003 = vmax.f32 %v959, 0.0
    %v1004 = vmax.f32 %v962, 0.0
    %v1005 = vmax.f32 %v967, 0.0
    %v1006 = vmax.f32 %v970, 0.0
    %v1007 = vmax.f32 %v975, 0.0
    %v1008 = vmax.f32 %v978, 0.0
    %v1009 = vmax.f32 %v983, 0.0
    %v1010 = vmax.f32 %v986, 0.0
    %v1011 = vmax.f32 %v991, 0.0
    %v1012 = vmax.f32 %v994, 0.0
    %1013 = vst.msk [vmem:[#allocation2 + $0x80] sm:$0xff] %vm524, %v997
    %1014 = vst.msk [vmem:[#allocation2 + $0x88] sm:$0xff] %vm524, %v998
    %1015 = vst.msk [vmem:[#allocation2 + $0x90] sm:$0xff] %vm524, %v999
    %1016 = vst.msk [vmem:[#allocation2 + $0x98] sm:$0xff] %vm524, %v1000
    %1017 = vst.msk [vmem:[#allocation2 + $0xa0] sm:$0xff] %vm524, %v1001
    %1018 = vst.msk [vmem:[#allocation2 + $0xa8] sm:$0xff] %vm524, %v1002
    %1019 = vst.msk [vmem:[#allocation2 + $0xb0] sm:$0xff] %vm524, %v1003
    %1020 = vst.msk [vmem:[#allocation2 + $0xb8] sm:$0xff] %vm524, %v1004
    %1021 = vst.msk [vmem:[#allocation2 + $0xc0] sm:$0xff] %vm524, %v1005
    %1022 = vst.msk [vmem:[#allocation2 + $0xc8] sm:$0xff] %vm524, %v1006
    %1023 = vst.msk [vmem:[#allocation2 + $0xd0] sm:$0xff] %vm524, %v1007
    %1024 = vst.msk [vmem:[#allocation2 + $0xd8] sm:$0xff] %vm524, %v1008
    %1025 = vst.msk [vmem:[#allocation2 + $0xe0] sm:$0xff] %vm524, %v1009
    %1026 = vst.msk [vmem:[#allocation2 + $0xe8] sm:$0xff] %vm524, %v1010
    %1027 = vst.msk [vmem:[#allocation2 + $0xf0] sm:$0xff] %vm524, %v1011
    %1028 = vst.msk [vmem:[#allocation2 + $0xf8] sm:$0xff] %vm524, %v1012
    %v1029 = vld [vmem:[%s644] sm:$0xff]
    %v1030 = vld [vmem:[%s644 + $0x8] sm:$0xff]
    %v1031 = vld [vmem:[%s644 + $0x10] sm:$0xff]
    %v1032 = vld [vmem:[%s644 + $0x18] sm:$0xff]
    %v1033 = vld [vmem:[%s644 + $0x20] sm:$0xff]
    %v1034 = vld [vmem:[%s644 + $0x28] sm:$0xff]
    %v1035 = vld [vmem:[%s644 + $0x30] sm:$0xff]
    %v1036 = vld [vmem:[%s644 + $0x38] sm:$0xff]
    %v1037 = vld [vmem:[%s644 + $0x40] sm:$0xff]
    %v1038 = vld [vmem:[%s644 + $0x48] sm:$0xff]
    %v1039 = vld [vmem:[%s644 + $0x50] sm:$0xff]
    %v1040 = vld [vmem:[%s644 + $0x58] sm:$0xff]
    %v1041 = vld [vmem:[%s644 + $0x60] sm:$0xff]
    %v1042 = vld [vmem:[%s644 + $0x68] sm:$0xff]
    %v1043 = vld [vmem:[%s644 + $0x70] sm:$0xff]
    %v1044 = vld [vmem:[%s644 + $0x78] sm:$0xff]
    %v1045 = vpack.c.bf16 %v1030, %v1029
    %v1046 = vpack.c.bf16 %v1032, %v1031
    %v1047 = vpack.c.bf16 %v1034, %v1033
    %v1048 = vpack.c.bf16 %v1036, %v1035
    %v1049 = vpack.c.bf16 %v1038, %v1037
    %v1050 = vpack.c.bf16 %v1040, %v1039
    %v1051 = vpack.c.bf16 %v1042, %v1041
    %v1052 = vpack.c.bf16 %v1044, %v1043
    %s1053 = sadd.s32 %s45, 288
    %s1054 = scalar_lea.vmem %s0, %s1053
    %v1055 = vld [vmem:[%s1054] sm:$0xff]
    %v1056 = vld [vmem:[%s1054 + $0x8] sm:$0xff]
    %v1057 = vld [vmem:[%s1054 + $0x10] sm:$0xff]
    %v1058 = vld [vmem:[%s1054 + $0x18] sm:$0xff]
    %v1059 = vld [vmem:[%s1054 + $0x20] sm:$0xff]
    %v1060 = vld [vmem:[%s1054 + $0x28] sm:$0xff]
    %v1061 = vld [vmem:[%s1054 + $0x30] sm:$0xff]
    %v1062 = vld [vmem:[%s1054 + $0x38] sm:$0xff]
    %v1063 = vld [vmem:[%s1054 + $0x40] sm:$0xff]
    %v1064 = vld [vmem:[%s1054 + $0x48] sm:$0xff]
    %v1065 = vld [vmem:[%s1054 + $0x50] sm:$0xff]
    %v1066 = vld [vmem:[%s1054 + $0x58] sm:$0xff]
    %v1067 = vld [vmem:[%s1054 + $0x60] sm:$0xff]
    %v1068 = vld [vmem:[%s1054 + $0x68] sm:$0xff]
    %v1069 = vld [vmem:[%s1054 + $0x70] sm:$0xff]
    %v1070 = vld [vmem:[%s1054 + $0x78] sm:$0xff]
    %v1071 = vpack.c.bf16 %v1056, %v1055
    %v1072 = vpack.c.bf16 %v1058, %v1057
    %v1073 = vpack.c.bf16 %v1060, %v1059
    %v1074 = vpack.c.bf16 %v1062, %v1061
    %v1075 = vpack.c.bf16 %v1064, %v1063
    %v1076 = vpack.c.bf16 %v1066, %v1065
    %v1077 = vpack.c.bf16 %v1068, %v1067
    %v1078 = vpack.c.bf16 %v1070, %v1069
    %s1079 = sadd.s32 %s45, 320
    %s1080 = scalar_lea.vmem %s0, %s1079
    %v1081 = vld [vmem:[%s1080] sm:$0xff]
    %v1082 = vld [vmem:[%s1080 + $0x8] sm:$0xff]
    %v1083 = vld [vmem:[%s1080 + $0x10] sm:$0xff]
    %v1084 = vld [vmem:[%s1080 + $0x18] sm:$0xff]
    %v1085 = vld [vmem:[%s1080 + $0x20] sm:$0xff]
    %v1086 = vld [vmem:[%s1080 + $0x28] sm:$0xff]
    %v1087 = vld [vmem:[%s1080 + $0x30] sm:$0xff]
    %v1088 = vld [vmem:[%s1080 + $0x38] sm:$0xff]
    %v1089 = vld [vmem:[%s1080 + $0x40] sm:$0xff]
    %v1090 = vld [vmem:[%s1080 + $0x48] sm:$0xff]
    %v1091 = vld [vmem:[%s1080 + $0x50] sm:$0xff]
    %v1092 = vld [vmem:[%s1080 + $0x58] sm:$0xff]
    %v1093 = vld [vmem:[%s1080 + $0x60] sm:$0xff]
    %v1094 = vld [vmem:[%s1080 + $0x68] sm:$0xff]
    %v1095 = vld [vmem:[%s1080 + $0x70] sm:$0xff]
    %v1096 = vld [vmem:[%s1080 + $0x78] sm:$0xff]
    %v1097 = vpack.c.bf16 %v1082, %v1081
    %v1098 = vpack.c.bf16 %v1084, %v1083
    %v1099 = vpack.c.bf16 %v1086, %v1085
    %v1100 = vpack.c.bf16 %v1088, %v1087
    %v1101 = vpack.c.bf16 %v1090, %v1089
    %v1102 = vpack.c.bf16 %v1092, %v1091
    %v1103 = vpack.c.bf16 %v1094, %v1093
    %v1104 = vpack.c.bf16 %v1096, %v1095
    %s1105 = sadd.s32 %s45, 352
    %s1106 = scalar_lea.vmem %s0, %s1105
    %v1107 = vld [vmem:[%s1106] sm:$0xff]
    %v1108 = vld [vmem:[%s1106 + $0x8] sm:$0xff]
    %v1109 = vld [vmem:[%s1106 + $0x10] sm:$0xff]
    %v1110 = vld [vmem:[%s1106 + $0x18] sm:$0xff]
    %v1111 = vld [vmem:[%s1106 + $0x20] sm:$0xff]
    %v1112 = vld [vmem:[%s1106 + $0x28] sm:$0xff]
    %v1113 = vld [vmem:[%s1106 + $0x30] sm:$0xff]
    %v1114 = vld [vmem:[%s1106 + $0x38] sm:$0xff]
    %v1115 = vld [vmem:[%s1106 + $0x40] sm:$0xff]
    %v1116 = vld [vmem:[%s1106 + $0x48] sm:$0xff]
    %v1117 = vld [vmem:[%s1106 + $0x50] sm:$0xff]
    %v1118 = vld [vmem:[%s1106 + $0x58] sm:$0xff]
    %v1119 = vld [vmem:[%s1106 + $0x60] sm:$0xff]
    %v1120 = vld [vmem:[%s1106 + $0x68] sm:$0xff]
    %v1121 = vld [vmem:[%s1106 + $0x70] sm:$0xff]
    %v1122 = vld [vmem:[%s1106 + $0x78] sm:$0xff]
    %v1123 = vpack.c.bf16 %v1108, %v1107
    %v1124 = vpack.c.bf16 %v1110, %v1109
    %v1125 = vpack.c.bf16 %v1112, %v1111
    %v1126 = vpack.c.bf16 %v1114, %v1113
    %v1127 = vpack.c.bf16 %v1116, %v1115
    %v1128 = vpack.c.bf16 %v1118, %v1117
    %v1129 = vpack.c.bf16 %v1120, %v1119
    %v1130 = vpack.c.bf16 %v1122, %v1121
    %s1131 = sadd.s32 %s45, 384
    %s1132 = scalar_lea.vmem %s0, %s1131
    %v1133 = vld [vmem:[%s1132] sm:$0xff]
    %v1134 = vld [vmem:[%s1132 + $0x8] sm:$0xff]
    %v1135 = vld [vmem:[%s1132 + $0x10] sm:$0xff]
    %v1136 = vld [vmem:[%s1132 + $0x18] sm:$0xff]
    %v1137 = vld [vmem:[%s1132 + $0x20] sm:$0xff]
    %v1138 = vld [vmem:[%s1132 + $0x28] sm:$0xff]
    %v1139 = vld [vmem:[%s1132 + $0x30] sm:$0xff]
    %v1140 = vld [vmem:[%s1132 + $0x38] sm:$0xff]
    %v1141 = vld [vmem:[%s1132 + $0x40] sm:$0xff]
    %v1142 = vld [vmem:[%s1132 + $0x48] sm:$0xff]
    %v1143 = vld [vmem:[%s1132 + $0x50] sm:$0xff]
    %v1144 = vld [vmem:[%s1132 + $0x58] sm:$0xff]
    %v1145 = vld [vmem:[%s1132 + $0x60] sm:$0xff]
    %v1146 = vld [vmem:[%s1132 + $0x68] sm:$0xff]
    %v1147 = vld [vmem:[%s1132 + $0x70] sm:$0xff]
    %v1148 = vld [vmem:[%s1132 + $0x78] sm:$0xff]
    %v1149 = vpack.c.bf16 %v1134, %v1133
    %v1150 = vpack.c.bf16 %v1136, %v1135
    %v1151 = vpack.c.bf16 %v1138, %v1137
    %v1152 = vpack.c.bf16 %v1140, %v1139
    %v1153 = vpack.c.bf16 %v1142, %v1141
    %v1154 = vpack.c.bf16 %v1144, %v1143
    %v1155 = vpack.c.bf16 %v1146, %v1145
    %v1156 = vpack.c.bf16 %v1148, %v1147
    %1165 = vrot.lane.b32.xlu0 %v1071, 16
    %v1166 = vpop.permute.xlu0 %1165
    %1167 = vrot.lane.b32.xlu0 %v1072, 16
    %v1168 = vpop.permute.xlu0 %1167
    %1169 = vrot.lane.b32.xlu0 %v1073, 16
    %v1170 = vpop.permute.xlu0 %1169
    %1171 = vrot.lane.b32.xlu0 %v1074, 16
    %v1172 = vpop.permute.xlu0 %1171
    %1173 = vrot.lane.b32.xlu0 %v1075, 16
    %v1174 = vpop.permute.xlu0 %1173
    %1175 = vrot.lane.b32.xlu0 %v1076, 16
    %v1176 = vpop.permute.xlu0 %1175
    %1177 = vrot.lane.b32.xlu0 %v1077, 16
    %v1178 = vpop.permute.xlu0 %1177
    %1179 = vrot.lane.b32.xlu0 %v1078, 16
    %v1180 = vpop.permute.xlu0 %1179
    %1189 = vrot.lane.b32.xlu0 %v1097, 32
    %v1190 = vpop.permute.xlu0 %1189
    %1191 = vrot.lane.b32.xlu0 %v1098, 32
    %v1192 = vpop.permute.xlu0 %1191
    %1193 = vrot.lane.b32.xlu0 %v1099, 32
    %v1194 = vpop.permute.xlu0 %1193
    %1195 = vrot.lane.b32.xlu0 %v1100, 32
    %v1196 = vpop.permute.xlu0 %1195
    %1197 = vrot.lane.b32.xlu0 %v1101, 32
    %v1198 = vpop.permute.xlu0 %1197
    %1199 = vrot.lane.b32.xlu0 %v1102, 32
    %v1200 = vpop.permute.xlu0 %1199
    %1201 = vrot.lane.b32.xlu0 %v1103, 32
    %v1202 = vpop.permute.xlu0 %1201
    %1203 = vrot.lane.b32.xlu0 %v1104, 32
    %v1204 = vpop.permute.xlu0 %1203
    %1213 = vrot.lane.b32.xlu0 %v1123, 48
    %v1214 = vpop.permute.xlu0 %1213
    %1215 = vrot.lane.b32.xlu0 %v1124, 48
    %v1216 = vpop.permute.xlu0 %1215
    %1217 = vrot.lane.b32.xlu0 %v1125, 48
    %v1218 = vpop.permute.xlu0 %1217
    %1219 = vrot.lane.b32.xlu0 %v1126, 48
    %v1220 = vpop.permute.xlu0 %1219
    %1221 = vrot.lane.b32.xlu0 %v1127, 48
    %v1222 = vpop.permute.xlu0 %1221
    %1223 = vrot.lane.b32.xlu0 %v1128, 48
    %v1224 = vpop.permute.xlu0 %1223
    %1225 = vrot.lane.b32.xlu0 %v1129, 48
    %v1226 = vpop.permute.xlu0 %1225
    %1227 = vrot.lane.b32.xlu0 %v1130, 48
    %v1228 = vpop.permute.xlu0 %1227
    %1237 = vrot.lane.b32.xlu0 %v1149, 64
    %v1238 = vpop.permute.xlu0 %1237
    %1239 = vrot.lane.b32.xlu0 %v1150, 64
    %v1240 = vpop.permute.xlu0 %1239
    %1241 = vrot.lane.b32.xlu0 %v1151, 64
    %v1242 = vpop.permute.xlu0 %1241
    %1243 = vrot.lane.b32.xlu0 %v1152, 64
    %v1244 = vpop.permute.xlu0 %1243
    %1245 = vrot.lane.b32.xlu0 %v1153, 64
    %v1246 = vpop.permute.xlu0 %1245
    %1247 = vrot.lane.b32.xlu0 %v1154, 64
    %v1248 = vpop.permute.xlu0 %1247
    %1249 = vrot.lane.b32.xlu0 %v1155, 64
    %v1250 = vpop.permute.xlu0 %1249
    %1251 = vrot.lane.b32.xlu0 %v1156, 64
    %v1252 = vpop.permute.xlu0 %1251
    %v1255 = vsel %vm271, %v1045, %v1166
    %v1258 = vsel %vm271, %v1046, %v1168
    %v1261 = vsel %vm271, %v1047, %v1170
    %v1264 = vsel %vm271, %v1048, %v1172
    %v1267 = vsel %vm271, %v1049, %v1174
    %v1270 = vsel %vm271, %v1050, %v1176
    %v1273 = vsel %vm271, %v1051, %v1178
    %v1276 = vsel %vm271, %v1052, %v1180
    %v1278 = vsel %vm296, %v1255, %v1190
    %v1280 = vsel %vm296, %v1258, %v1192
    %v1282 = vsel %vm296, %v1261, %v1194
    %v1284 = vsel %vm296, %v1264, %v1196
    %v1286 = vsel %vm296, %v1267, %v1198
    %v1288 = vsel %vm296, %v1270, %v1200
    %v1290 = vsel %vm296, %v1273, %v1202
    %v1292 = vsel %vm296, %v1276, %v1204
    %v1294 = vsel %vm313, %v1278, %v1214
    %v1296 = vsel %vm313, %v1280, %v1216
    %v1298 = vsel %vm313, %v1282, %v1218
    %v1300 = vsel %vm313, %v1284, %v1220
    %v1302 = vsel %vm313, %v1286, %v1222
    %v1304 = vsel %vm313, %v1288, %v1224
    %v1306 = vsel %vm313, %v1290, %v1226
    %v1308 = vsel %vm313, %v1292, %v1228
    %v1310 = vsel %vm330, %v1294, %v1238
    %v1312 = vsel %vm330, %v1296, %v1240
    %v1314 = vsel %vm330, %v1298, %v1242
    %v1316 = vsel %vm330, %v1300, %v1244
    %v1318 = vsel %vm330, %v1302, %v1246
    %v1320 = vsel %vm330, %v1304, %v1248
    %v1322 = vsel %vm330, %v1306, %v1250
    %v1324 = vsel %vm330, %v1308, %v1252
    %v1325 = vld [vmem:[%s1] sm:$0xf]
    %v1326 = vld [vmem:[%s1 + $0x4] sm:$0xf]
    %v1327 = vld [vmem:[%s1 + $0x8] sm:$0xf]
    %v1328 = vld [vmem:[%s1 + $0xc] sm:$0xf]
    %v1329 = vld [vmem:[%s1 + $0x10] sm:$0xf]
    %v1330 = vld [vmem:[%s1 + $0x14] sm:$0xf]
    %v1331 = vld [vmem:[%s1 + $0x18] sm:$0xf]
    %v1332 = vld [vmem:[%s1 + $0x1c] sm:$0xf]
    %v1333 = vld [vmem:[%s1 + $0x20] sm:$0xf]
    %v1334 = vld [vmem:[%s1 + $0x24] sm:$0xf]
    %v1335 = vld [vmem:[%s2] sm:$0x1]
    %v1337 = vlaneseq
    %v1338 = vshrl.u32 %v1337, 7
    %v1339 = vsub.s32 0, %v1338
    %v1340 = vrot.slane %v1335, %v1339
    %v1352 = vunpack.c.l.b16 %v1325
    %v1353 = vunpack.c.l.b16 %v1326
    %v1354 = vunpack.c.l.b16 %v1327
    %v1355 = vunpack.c.l.b16 %v1328
    %v1356 = vunpack.c.l.b16 %v1329
    %v1357 = vunpack.c.l.b16 %v1330
    %v1358 = vunpack.c.l.b16 %v1331
    %v1359 = vunpack.c.l.b16 %v1332
    %v1360 = vunpack.c.l.b16 %v1333
    %v1361 = vunpack.c.l.b16 %v1334
    %v1362 = vpack.c.b16 %v1353, %v1352
    %v1363 = vpack.c.b16 %v1355, %v1354
    %v1364 = vpack.c.b16 %v1357, %v1356
    %v1365 = vpack.c.b16 %v1359, %v1358
    %v1366 = vpack.c.b16 %v1361, %v1360
    %v1372 = vsel %vm394, %v1310, 0
    %v1374 = vsel %vm394, %v1312, 0
    %v1376 = vsel %vm394, %v1314, 0
    %v1378 = vsel %vm394, %v1316, 0
    %v1380 = vsel %vm394, %v1318, 0
    %v1382 = vsel %vm394, %v1320, 0
    %v1384 = vsel %vm394, %v1322, 0
    %v1386 = vsel %vm394, %v1324, 0
    %1388 = vmatprep.subr.bf16.mxu0 0
    %1389 = vmatpush1.bf16.msra.mxu0 %v1362
    %1390 = vmatprep.subr.bf16.mxu0 0
    %1391 = vmatpush1.bf16.msra.mxu0 %v1363
    %1392 = vmatprep.subr.bf16.mxu0 0
    %1393 = vmatpush1.bf16.msra.mxu0 %v1364
    %1394 = vmatprep.subr.bf16.mxu0 0
    %1395 = vmatpush1.bf16.msra.mxu0 %v1365
    %1396 = vmatprep.subr.bf16.mxu0 0
    %1397 = vmatpush1.bf16.msra.mxu0 %v1366
    %1398 = vmatprep.subr.bf16.mxu0 0
    %1399 = vmatpush1.bf16.msra.mxu0 0
    %1400 = vmatprep.subr.bf16.mxu0 0
    %1401 = vmatpush1.bf16.msra.mxu0 0
    %1402 = vmatprep.subr.bf16.mxu0 0
    %1403 = vmatpush1.bf16.msra.mxu0 0
    %1404 = vmatprep.subr.bf16.mxu0 0
    %1405 = vmatpush1.bf16.msra.mxu0 0
    %1406 = vmatprep.subr.bf16.mxu0 0
    %1407 = vmatpush1.bf16.msra.mxu0 0
    %1408 = vmatprep.subr.bf16.mxu0 0
    %1409 = vmatpush1.bf16.msra.mxu0 0
    %1410 = vmatprep.subr.bf16.mxu0 0
    %1411 = vmatpush1.bf16.msra.mxu0 0
    %1412 = vmatprep.subr.bf16.mxu0 0
    %1413 = vmatpush1.bf16.msra.mxu0 0
    %1414 = vmatprep.subr.bf16.mxu0 0
    %1415 = vmatpush1.bf16.msra.mxu0 0
    %1416 = vmatprep.subr.bf16.mxu0 0
    %1417 = vmatpush1.bf16.msra.mxu0 0
    %1418 = vmatprep.subr.bf16.mxu0 0
    %1419 = vmatpush1.bf16.msra.mxu0 0
    %1420 = vmatprep.mubr.bf16.mxu0 0
    %1421 = vmatmul.mubr.bf16.gmra.mrb[0].mxu0 %v1372
    %v1422 = vpop.f32.mrb[0].mxu0
    %v1423 = vadd.f32 %v1340, %v1422
    %v1424 = vpop.f32.mrb[0].mxu0
    %v1425 = vpop.f32.mrb[0].mxu0
    %v1426 = vadd.f32 %v1340, %v1425
    %v1427 = vpop.f32.mrb[0].mxu0
    %1428 = vmatprep.mubr.bf16.mxu0 0
    %1429 = vmatmul.mubr.bf16.gmra.mrb[0].mxu0 %v1374
    %v1430 = vpop.f32.mrb[0].mxu0
    %v1431 = vadd.f32 %v1340, %v1430
    %v1432 = vpop.f32.mrb[0].mxu0
    %v1433 = vpop.f32.mrb[0].mxu0
    %v1434 = vadd.f32 %v1340, %v1433
    %v1435 = vpop.f32.mrb[0].mxu0
    %1436 = vmatprep.mubr.bf16.mxu0 0
    %1437 = vmatmul.mubr.bf16.gmra.mrb[0].mxu0 %v1376
    %v1438 = vpop.f32.mrb[0].mxu0
    %v1439 = vadd.f32 %v1340, %v1438
    %v1440 = vpop.f32.mrb[0].mxu0
    %v1441 = vpop.f32.mrb[0].mxu0
    %v1442 = vadd.f32 %v1340, %v1441
    %v1443 = vpop.f32.mrb[0].mxu0
    %1444 = vmatprep.mubr.bf16.mxu0 0
    %1445 = vmatmul.mubr.bf16.gmra.mrb[0].mxu0 %v1378
    %v1446 = vpop.f32.mrb[0].mxu0
    %v1447 = vadd.f32 %v1340, %v1446
    %v1448 = vpop.f32.mrb[0].mxu0
    %v1449 = vpop.f32.mrb[0].mxu0
    %v1450 = vadd.f32 %v1340, %v1449
    %v1451 = vpop.f32.mrb[0].mxu0
    %1452 = vmatprep.mubr.bf16.mxu0 0
    %1453 = vmatmul.mubr.bf16.gmra.mrb[0].mxu0 %v1380
    %v1454 = vpop.f32.mrb[0].mxu0
    %v1455 = vadd.f32 %v1340, %v1454
    %v1456 = vpop.f32.mrb[0].mxu0
    %v1457 = vpop.f32.mrb[0].mxu0
    %v1458 = vadd.f32 %v1340, %v1457
    %v1459 = vpop.f32.mrb[0].mxu0
    %1460 = vmatprep.mubr.bf16.mxu0 0
    %1461 = vmatmul.mubr.bf16.gmra.mrb[0].mxu0 %v1382
    %v1462 = vpop.f32.mrb[0].mxu0
    %v1463 = vadd.f32 %v1340, %v1462
    %v1464 = vpop.f32.mrb[0].mxu0
    %v1465 = vpop.f32.mrb[0].mxu0
    %v1466 = vadd.f32 %v1340, %v1465
    %v1467 = vpop.f32.mrb[0].mxu0
    %1468 = vmatprep.mubr.bf16.mxu0 0
    %1469 = vmatmul.mubr.bf16.gmra.mrb[0].mxu0 %v1384
    %v1470 = vpop.f32.mrb[0].mxu0
    %v1471 = vadd.f32 %v1340, %v1470
    %v1472 = vpop.f32.mrb[0].mxu0
    %v1473 = vpop.f32.mrb[0].mxu0
    %v1474 = vadd.f32 %v1340, %v1473
    %v1475 = vpop.f32.mrb[0].mxu0
    %1476 = vmatprep.mubr.bf16.mxu0 0
    %1477 = vmatmul.mubr.bf16.gmra.mrb[0].mxu0 %v1386
    %v1478 = vpop.f32.mrb[0].mxu0
    %v1479 = vadd.f32 %v1340, %v1478
    %v1480 = vpop.f32.mrb[0].mxu0
    %v1481 = vpop.f32.mrb[0].mxu0
    %v1482 = vadd.f32 %v1340, %v1481
    %v1483 = vpop.f32.mrb[0].mxu0
    %1484 = vdwg.mxu0
    %v1485 = vmax.f32 %v1423, 0.0
    %v1486 = vmax.f32 %v1426, 0.0
    %v1487 = vmax.f32 %v1431, 0.0
    %v1488 = vmax.f32 %v1434, 0.0
    %v1489 = vmax.f32 %v1439, 0.0
    %v1490 = vmax.f32 %v1442, 0.0
    %v1491 = vmax.f32 %v1447, 0.0
    %v1492 = vmax.f32 %v1450, 0.0
    %v1493 = vmax.f32 %v1455, 0.0
    %v1494 = vmax.f32 %v1458, 0.0
    %v1495 = vmax.f32 %v1463, 0.0
    %v1496 = vmax.f32 %v1466, 0.0
    %v1497 = vmax.f32 %v1471, 0.0
    %v1498 = vmax.f32 %v1474, 0.0
    %v1499 = vmax.f32 %v1479, 0.0
    %v1500 = vmax.f32 %v1482, 0.0
    %1501 = vst.msk [vmem:[#allocation2 + $0x100] sm:$0xff] %vm524, %v1485
    %1502 = vst.msk [vmem:[#allocation2 + $0x108] sm:$0xff] %vm524, %v1486
    %1503 = vst.msk [vmem:[#allocation2 + $0x110] sm:$0xff] %vm524, %v1487
    %1504 = vst.msk [vmem:[#allocation2 + $0x118] sm:$0xff] %vm524, %v1488
    %1505 = vst.msk [vmem:[#allocation2 + $0x120] sm:$0xff] %vm524, %v1489
    %1506 = vst.msk [vmem:[#allocation2 + $0x128] sm:$0xff] %vm524, %v1490
    %1507 = vst.msk [vmem:[#allocation2 + $0x130] sm:$0xff] %vm524, %v1491
    %1508 = vst.msk [vmem:[#allocation2 + $0x138] sm:$0xff] %vm524, %v1492
    %1509 = vst.msk [vmem:[#allocation2 + $0x140] sm:$0xff] %vm524, %v1493
    %1510 = vst.msk [vmem:[#allocation2 + $0x148] sm:$0xff] %vm524, %v1494
    %1511 = vst.msk [vmem:[#allocation2 + $0x150] sm:$0xff] %vm524, %v1495
    %1512 = vst.msk [vmem:[#allocation2 + $0x158] sm:$0xff] %vm524, %v1496
    %1513 = vst.msk [vmem:[#allocation2 + $0x160] sm:$0xff] %vm524, %v1497
    %1514 = vst.msk [vmem:[#allocation2 + $0x168] sm:$0xff] %vm524, %v1498
    %1515 = vst.msk [vmem:[#allocation2 + $0x170] sm:$0xff] %vm524, %v1499
    %1516 = vst.msk [vmem:[#allocation2 + $0x178] sm:$0xff] %vm524, %v1500
    %v1517 = vld [vmem:[%s1132] sm:$0xff]
    %v1518 = vld [vmem:[%s1132 + $0x8] sm:$0xff]
    %v1519 = vld [vmem:[%s1132 + $0x10] sm:$0xff]
    %v1520 = vld [vmem:[%s1132 + $0x18] sm:$0xff]
    %v1521 = vld [vmem:[%s1132 + $0x20] sm:$0xff]
    %v1522 = vld [vmem:[%s1132 + $0x28] sm:$0xff]
    %v1523 = vld [vmem:[%s1132 + $0x30] sm:$0xff]
    %v1524 = vld [vmem:[%s1132 + $0x38] sm:$0xff]
    %v1525 = vld [vmem:[%s1132 + $0x40] sm:$0xff]
    %v1526 = vld [vmem:[%s1132 + $0x48] sm:$0xff]
    %v1527 = vld [vmem:[%s1132 + $0x50] sm:$0xff]
    %v1528 = vld [vmem:[%s1132 + $0x58] sm:$0xff]
    %v1529 = vld [vmem:[%s1132 + $0x60] sm:$0xff]
    %v1530 = vld [vmem:[%s1132 + $0x68] sm:$0xff]
    %v1531 = vld [vmem:[%s1132 + $0x70] sm:$0xff]
    %v1532 = vld [vmem:[%s1132 + $0x78] sm:$0xff]
    %v1533 = vpack.c.bf16 %v1518, %v1517
    %v1534 = vpack.c.bf16 %v1520, %v1519
    %v1535 = vpack.c.bf16 %v1522, %v1521
    %v1536 = vpack.c.bf16 %v1524, %v1523
    %v1537 = vpack.c.bf16 %v1526, %v1525
    %v1538 = vpack.c.bf16 %v1528, %v1527
    %v1539 = vpack.c.bf16 %v1530, %v1529
    %v1540 = vpack.c.bf16 %v1532, %v1531
    %s1541 = sadd.s32 %s45, 416
    %s1542 = scalar_lea.vmem %s0, %s1541
    %v1543 = vld [vmem:[%s1542] sm:$0xff]
    %v1544 = vld [vmem:[%s1542 + $0x8] sm:$0xff]
    %v1545 = vld [vmem:[%s1542 + $0x10] sm:$0xff]
    %v1546 = vld [vmem:[%s1542 + $0x18] sm:$0xff]
    %v1547 = vld [vmem:[%s1542 + $0x20] sm:$0xff]
    %v1548 = vld [vmem:[%s1542 + $0x28] sm:$0xff]
    %v1549 = vld [vmem:[%s1542 + $0x30] sm:$0xff]
    %v1550 = vld [vmem:[%s1542 + $0x38] sm:$0xff]
    %v1551 = vld [vmem:[%s1542 + $0x40] sm:$0xff]
    %v1552 = vld [vmem:[%s1542 + $0x48] sm:$0xff]
    %v1553 = vld [vmem:[%s1542 + $0x50] sm:$0xff]
    %v1554 = vld [vmem:[%s1542 + $0x58] sm:$0xff]
    %v1555 = vld [vmem:[%s1542 + $0x60] sm:$0xff]
    %v1556 = vld [vmem:[%s1542 + $0x68] sm:$0xff]
    %v1557 = vld [vmem:[%s1542 + $0x70] sm:$0xff]
    %v1558 = vld [vmem:[%s1542 + $0x78] sm:$0xff]
    %v1559 = vpack.c.bf16 %v1544, %v1543
    %v1560 = vpack.c.bf16 %v1546, %v1545
    %v1561 = vpack.c.bf16 %v1548, %v1547
    %v1562 = vpack.c.bf16 %v1550, %v1549
    %v1563 = vpack.c.bf16 %v1552, %v1551
    %v1564 = vpack.c.bf16 %v1554, %v1553
    %v1565 = vpack.c.bf16 %v1556, %v1555
    %v1566 = vpack.c.bf16 %v1558, %v1557
    %s1567 = sadd.s32 %s45, 448
    %s1568 = scalar_lea.vmem %s0, %s1567
    %v1569 = vld [vmem:[%s1568] sm:$0xff]
    %v1570 = vld [vmem:[%s1568 + $0x8] sm:$0xff]
    %v1571 = vld [vmem:[%s1568 + $0x10] sm:$0xff]
    %v1572 = vld [vmem:[%s1568 + $0x18] sm:$0xff]
    %v1573 = vld [vmem:[%s1568 + $0x20] sm:$0xff]
    %v1574 = vld [vmem:[%s1568 + $0x28] sm:$0xff]
    %v1575 = vld [vmem:[%s1568 + $0x30] sm:$0xff]
    %v1576 = vld [vmem:[%s1568 + $0x38] sm:$0xff]
    %v1577 = vld [vmem:[%s1568 + $0x40] sm:$0xff]
    %v1578 = vld [vmem:[%s1568 + $0x48] sm:$0xff]
    %v1579 = vld [vmem:[%s1568 + $0x50] sm:$0xff]
    %v1580 = vld [vmem:[%s1568 + $0x58] sm:$0xff]
    %v1581 = vld [vmem:[%s1568 + $0x60] sm:$0xff]
    %v1582 = vld [vmem:[%s1568 + $0x68] sm:$0xff]
    %v1583 = vld [vmem:[%s1568 + $0x70] sm:$0xff]
    %v1584 = vld [vmem:[%s1568 + $0x78] sm:$0xff]
    %v1585 = vpack.c.bf16 %v1570, %v1569
    %v1586 = vpack.c.bf16 %v1572, %v1571
    %v1587 = vpack.c.bf16 %v1574, %v1573
    %v1588 = vpack.c.bf16 %v1576, %v1575
    %v1589 = vpack.c.bf16 %v1578, %v1577
    %v1590 = vpack.c.bf16 %v1580, %v1579
    %v1591 = vpack.c.bf16 %v1582, %v1581
    %v1592 = vpack.c.bf16 %v1584, %v1583
    %s1593 = sadd.s32 %s45, 480
    %s1594 = scalar_lea.vmem %s0, %s1593
    %v1595 = vld [vmem:[%s1594] sm:$0xff]
    %v1596 = vld [vmem:[%s1594 + $0x8] sm:$0xff]
    %v1597 = vld [vmem:[%s1594 + $0x10] sm:$0xff]
    %v1598 = vld [vmem:[%s1594 + $0x18] sm:$0xff]
    %v1599 = vld [vmem:[%s1594 + $0x20] sm:$0xff]
    %v1600 = vld [vmem:[%s1594 + $0x28] sm:$0xff]
    %v1601 = vld [vmem:[%s1594 + $0x30] sm:$0xff]
    %v1602 = vld [vmem:[%s1594 + $0x38] sm:$0xff]
    %v1603 = vld [vmem:[%s1594 + $0x40] sm:$0xff]
    %v1604 = vld [vmem:[%s1594 + $0x48] sm:$0xff]
    %v1605 = vld [vmem:[%s1594 + $0x50] sm:$0xff]
    %v1606 = vld [vmem:[%s1594 + $0x58] sm:$0xff]
    %v1607 = vld [vmem:[%s1594 + $0x60] sm:$0xff]
    %v1608 = vld [vmem:[%s1594 + $0x68] sm:$0xff]
    %v1609 = vld [vmem:[%s1594 + $0x70] sm:$0xff]
    %v1610 = vld [vmem:[%s1594 + $0x78] sm:$0xff]
    %v1611 = vpack.c.bf16 %v1596, %v1595
    %v1612 = vpack.c.bf16 %v1598, %v1597
    %v1613 = vpack.c.bf16 %v1600, %v1599
    %v1614 = vpack.c.bf16 %v1602, %v1601
    %v1615 = vpack.c.bf16 %v1604, %v1603
    %v1616 = vpack.c.bf16 %v1606, %v1605
    %v1617 = vpack.c.bf16 %v1608, %v1607
    %v1618 = vpack.c.bf16 %v1610, %v1609
    %s1619 = sadd.s32 %s45, 512
    %s1620 = scalar_lea.vmem %s0, %s1619
    %v1621 = vld [vmem:[%s1620] sm:$0xff]
    %v1622 = vld [vmem:[%s1620 + $0x8] sm:$0xff]
    %v1623 = vld [vmem:[%s1620 + $0x10] sm:$0xff]
    %v1624 = vld [vmem:[%s1620 + $0x18] sm:$0xff]
    %v1625 = vld [vmem:[%s1620 + $0x20] sm:$0xff]
    %v1626 = vld [vmem:[%s1620 + $0x28] sm:$0xff]
    %v1627 = vld [vmem:[%s1620 + $0x30] sm:$0xff]
    %v1628 = vld [vmem:[%s1620 + $0x38] sm:$0xff]
    %v1629 = vld [vmem:[%s1620 + $0x40] sm:$0xff]
    %v1630 = vld [vmem:[%s1620 + $0x48] sm:$0xff]
    %v1631 = vld [vmem:[%s1620 + $0x50] sm:$0xff]
    %v1632 = vld [vmem:[%s1620 + $0x58] sm:$0xff]
    %v1633 = vld [vmem:[%s1620 + $0x60] sm:$0xff]
    %v1634 = vld [vmem:[%s1620 + $0x68] sm:$0xff]
    %v1635 = vld [vmem:[%s1620 + $0x70] sm:$0xff]
    %v1636 = vld [vmem:[%s1620 + $0x78] sm:$0xff]
    %v1637 = vpack.c.bf16 %v1622, %v1621
    %v1638 = vpack.c.bf16 %v1624, %v1623
    %v1639 = vpack.c.bf16 %v1626, %v1625
    %v1640 = vpack.c.bf16 %v1628, %v1627
    %v1641 = vpack.c.bf16 %v1630, %v1629
    %v1642 = vpack.c.bf16 %v1632, %v1631
    %v1643 = vpack.c.bf16 %v1634, %v1633
    %v1644 = vpack.c.bf16 %v1636, %v1635
    %1653 = vrot.lane.b32.xlu0 %v1559, 16
    %v1654 = vpop.permute.xlu0 %1653
    %1655 = vrot.lane.b32.xlu0 %v1560, 16
    %v1656 = vpop.permute.xlu0 %1655
    %1657 = vrot.lane.b32.xlu0 %v1561, 16
    %v1658 = vpop.permute.xlu0 %1657
    %1659 = vrot.lane.b32.xlu0 %v1562, 16
    %v1660 = vpop.permute.xlu0 %1659
    %1661 = vrot.lane.b32.xlu0 %v1563, 16
    %v1662 = vpop.permute.xlu0 %1661
    %1663 = vrot.lane.b32.xlu0 %v1564, 16
    %v1664 = vpop.permute.xlu0 %1663
    %1665 = vrot.lane.b32.xlu0 %v1565, 16
    %v1666 = vpop.permute.xlu0 %1665
    %1667 = vrot.lane.b32.xlu0 %v1566, 16
    %v1668 = vpop.permute.xlu0 %1667
    %1677 = vrot.lane.b32.xlu0 %v1585, 32
    %v1678 = vpop.permute.xlu0 %1677
    %1679 = vrot.lane.b32.xlu0 %v1586, 32
    %v1680 = vpop.permute.xlu0 %1679
    %1681 = vrot.lane.b32.xlu0 %v1587, 32
    %v1682 = vpop.permute.xlu0 %1681
    %1683 = vrot.lane.b32.xlu0 %v1588, 32
    %v1684 = vpop.permute.xlu0 %1683
    %1685 = vrot.lane.b32.xlu0 %v1589, 32
    %v1686 = vpop.permute.xlu0 %1685
    %1687 = vrot.lane.b32.xlu0 %v1590, 32
    %v1688 = vpop.permute.xlu0 %1687
    %1689 = vrot.lane.b32.xlu0 %v1591, 32
    %v1690 = vpop.permute.xlu0 %1689
    %1691 = vrot.lane.b32.xlu0 %v1592, 32
    %v1692 = vpop.permute.xlu0 %1691
    %1701 = vrot.lane.b32.xlu0 %v1611, 48
    %v1702 = vpop.permute.xlu0 %1701
    %1703 = vrot.lane.b32.xlu0 %v1612, 48
    %v1704 = vpop.permute.xlu0 %1703
    %1705 = vrot.lane.b32.xlu0 %v1613, 48
    %v1706 = vpop.permute.xlu0 %1705
    %1707 = vrot.lane.b32.xlu0 %v1614, 48
    %v1708 = vpop.permute.xlu0 %1707
    %1709 = vrot.lane.b32.xlu0 %v1615, 48
    %v1710 = vpop.permute.xlu0 %1709
    %1711 = vrot.lane.b32.xlu0 %v1616, 48
    %v1712 = vpop.permute.xlu0 %1711
    %1713 = vrot.lane.b32.xlu0 %v1617, 48
    %v1714 = vpop.permute.xlu0 %1713
    %1715 = vrot.lane.b32.xlu0 %v1618, 48
    %v1716 = vpop.permute.xlu0 %1715
    %1725 = vrot.lane.b32.xlu0 %v1637, 64
    %v1726 = vpop.permute.xlu0 %1725
    %1727 = vrot.lane.b32.xlu0 %v1638, 64
    %v1728 = vpop.permute.xlu0 %1727
    %1729 = vrot.lane.b32.xlu0 %v1639, 64
    %v1730 = vpop.permute.xlu0 %1729
    %1731 = vrot.lane.b32.xlu0 %v1640, 64
    %v1732 = vpop.permute.xlu0 %1731
    %1733 = vrot.lane.b32.xlu0 %v1641, 64
    %v1734 = vpop.permute.xlu0 %1733
    %1735 = vrot.lane.b32.xlu0 %v1642, 64
    %v1736 = vpop.permute.xlu0 %1735
    %1737 = vrot.lane.b32.xlu0 %v1643, 64
    %v1738 = vpop.permute.xlu0 %1737
    %1739 = vrot.lane.b32.xlu0 %v1644, 64
    %v1740 = vpop.permute.xlu0 %1739
    %v1743 = vsel %vm271, %v1533, %v1654
    %v1746 = vsel %vm271, %v1534, %v1656
    %v1749 = vsel %vm271, %v1535, %v1658
    %v1752 = vsel %vm271, %v1536, %v1660
    %v1755 = vsel %vm271, %v1537, %v1662
    %v1758 = vsel %vm271, %v1538, %v1664
    %v1761 = vsel %vm271, %v1539, %v1666
    %v1764 = vsel %vm271, %v1540, %v1668
    %v1766 = vsel %vm296, %v1743, %v1678
    %v1768 = vsel %vm296, %v1746, %v1680
    %v1770 = vsel %vm296, %v1749, %v1682
    %v1772 = vsel %vm296, %v1752, %v1684
    %v1774 = vsel %vm296, %v1755, %v1686
    %v1776 = vsel %vm296, %v1758, %v1688
    %v1778 = vsel %vm296, %v1761, %v1690
    %v1780 = vsel %vm296, %v1764, %v1692
    %v1782 = vsel %vm313, %v1766, %v1702
    %v1784 = vsel %vm313, %v1768, %v1704
    %v1786 = vsel %vm313, %v1770, %v1706
    %v1788 = vsel %vm313, %v1772, %v1708
    %v1790 = vsel %vm313, %v1774, %v1710
    %v1792 = vsel %vm313, %v1776, %v1712
    %v1794 = vsel %vm313, %v1778, %v1714
    %v1796 = vsel %vm313, %v1780, %v1716
    %v1798 = vsel %vm330, %v1782, %v1726
    %v1800 = vsel %vm330, %v1784, %v1728
    %v1802 = vsel %vm330, %v1786, %v1730
    %v1804 = vsel %vm330, %v1788, %v1732
    %v1806 = vsel %vm330, %v1790, %v1734
    %v1808 = vsel %vm330, %v1792, %v1736
    %v1810 = vsel %vm330, %v1794, %v1738
    %v1812 = vsel %vm330, %v1796, %v1740
    %v1813 = vld [vmem:[%s1] sm:$0xf]
    %v1814 = vld [vmem:[%s1 + $0x4] sm:$0xf]
    %v1815 = vld [vmem:[%s1 + $0x8] sm:$0xf]
    %v1816 = vld [vmem:[%s1 + $0xc] sm:$0xf]
    %v1817 = vld [vmem:[%s1 + $0x10] sm:$0xf]
    %v1818 = vld [vmem:[%s1 + $0x14] sm:$0xf]
    %v1819 = vld [vmem:[%s1 + $0x18] sm:$0xf]
    %v1820 = vld [vmem:[%s1 + $0x1c] sm:$0xf]
    %v1821 = vld [vmem:[%s1 + $0x20] sm:$0xf]
    %v1822 = vld [vmem:[%s1 + $0x24] sm:$0xf]
    %v1823 = vld [vmem:[%s2] sm:$0x1]
    %v1825 = vlaneseq
    %v1826 = vshrl.u32 %v1825, 7
    %v1827 = vsub.s32 0, %v1826
    %v1828 = vrot.slane %v1823, %v1827
    %v1840 = vunpack.c.l.b16 %v1813
    %v1841 = vunpack.c.l.b16 %v1814
    %v1842 = vunpack.c.l.b16 %v1815
    %v1843 = vunpack.c.l.b16 %v1816
    %v1844 = vunpack.c.l.b16 %v1817
    %v1845 = vunpack.c.l.b16 %v1818
    %v1846 = vunpack.c.l.b16 %v1819
    %v1847 = vunpack.c.l.b16 %v1820
    %v1848 = vunpack.c.l.b16 %v1821
    %v1849 = vunpack.c.l.b16 %v1822
    %v1850 = vpack.c.b16 %v1841, %v1840
    %v1851 = vpack.c.b16 %v1843, %v1842
    %v1852 = vpack.c.b16 %v1845, %v1844
    %v1853 = vpack.c.b16 %v1847, %v1846
    %v1854 = vpack.c.b16 %v1849, %v1848
    %v1860 = vsel %vm394, %v1798, 0
    %v1862 = vsel %vm394, %v1800, 0
    %v1864 = vsel %vm394, %v1802, 0
    %v1866 = vsel %vm394, %v1804, 0
    %v1868 = vsel %vm394, %v1806, 0
    %v1870 = vsel %vm394, %v1808, 0
    %v1872 = vsel %vm394, %v1810, 0
    %v1874 = vsel %vm394, %v1812, 0
    %1876 = vmatprep.subr.bf16.mxu0 0
    %1877 = vmatpush1.bf16.msra.mxu0 %v1850
    %1878 = vmatprep.subr.bf16.mxu0 0
    %1879 = vmatpush1.bf16.msra.mxu0 %v1851
    %1880 = vmatprep.subr.bf16.mxu0 0
    %1881 = vmatpush1.bf16.msra.mxu0 %v1852
    %1882 = vmatprep.subr.bf16.mxu0 0
    %1883 = vmatpush1.bf16.msra.mxu0 %v1853
    %1884 = vmatprep.subr.bf16.mxu0 0
    %1885 = vmatpush1.bf16.msra.mxu0 %v1854
    %1886 = vmatprep.subr.bf16.mxu0 0
    %1887 = vmatpush1.bf16.msra.mxu0 0
    %1888 = vmatprep.subr.bf16.mxu0 0
    %1889 = vmatpush1.bf16.msra.mxu0 0
    %1890 = vmatprep.subr.bf16.mxu0 0
    %1891 = vmatpush1.bf16.msra.mxu0 0
    %1892 = vmatprep.subr.bf16.mxu0 0
    %1893 = vmatpush1.bf16.msra.mxu0 0
    %1894 = vmatprep.subr.bf16.mxu0 0
    %1895 = vmatpush1.bf16.msra.mxu0 0
    %1896 = vmatprep.subr.bf16.mxu0 0
    %1897 = vmatpush1.bf16.msra.mxu0 0
    %1898 = vmatprep.subr.bf16.mxu0 0
    %1899 = vmatpush1.bf16.msra.mxu0 0
    %1900 = vmatprep.subr.bf16.mxu0 0
    %1901 = vmatpush1.bf16.msra.mxu0 0
    %1902 = vmatprep.subr.bf16.mxu0 0
    %1903 = vmatpush1.bf16.msra.mxu0 0
    %1904 = vmatprep.subr.bf16.mxu0 0
    %1905 = vmatpush1.bf16.msra.mxu0 0
    %1906 = vmatprep.subr.bf16.mxu0 0
    %1907 = vmatpush1.bf16.msra.mxu0 0
    %1908 = vmatprep.mubr.bf16.mxu0 0
    %1909 = vmatmul.mubr.bf16.gmra.mrb[0].mxu0 %v1860
    %v1910 = vpop.f32.mrb[0].mxu0
    %v1911 = vadd.f32 %v1828, %v1910
    %v1912 = vpop.f32.mrb[0].mxu0
    %v1913 = vpop.f32.mrb[0].mxu0
    %v1914 = vadd.f32 %v1828, %v1913
    %v1915 = vpop.f32.mrb[0].mxu0
    %1916 = vmatprep.mubr.bf16.mxu0 0
    %1917 = vmatmul.mubr.bf16.gmra.mrb[0].mxu0 %v1862
    %v1918 = vpop.f32.mrb[0].mxu0
    %v1919 = vadd.f32 %v1828, %v1918
    %v1920 = vpop.f32.mrb[0].mxu0
    %v1921 = vpop.f32.mrb[0].mxu0
    %v1922 = vadd.f32 %v1828, %v1921
    %v1923 = vpop.f32.mrb[0].mxu0
    %1924 = vmatprep.mubr.bf16.mxu0 0
    %1925 = vmatmul.mubr.bf16.gmra.mrb[0].mxu0 %v1864
    %v1926 = vpop.f32.mrb[0].mxu0
    %v1927 = vadd.f32 %v1828, %v1926
    %v1928 = vpop.f32.mrb[0].mxu0
    %v1929 = vpop.f32.mrb[0].mxu0
    %v1930 = vadd.f32 %v1828, %v1929
    %v1931 = vpop.f32.mrb[0].mxu0
    %1932 = vmatprep.mubr.bf16.mxu0 0
    %1933 = vmatmul.mubr.bf16.gmra.mrb[0].mxu0 %v1866
    %v1934 = vpop.f32.mrb[0].mxu0
    %v1935 = vadd.f32 %v1828, %v1934
    %v1936 = vpop.f32.mrb[0].mxu0
    %v1937 = vpop.f32.mrb[0].mxu0
    %v1938 = vadd.f32 %v1828, %v1937
    %v1939 = vpop.f32.mrb[0].mxu0
    %1940 = vmatprep.mubr.bf16.mxu0 0
    %1941 = vmatmul.mubr.bf16.gmra.mrb[0].mxu0 %v1868
    %v1942 = vpop.f32.mrb[0].mxu0
    %v1943 = vadd.f32 %v1828, %v1942
    %v1944 = vpop.f32.mrb[0].mxu0
    %v1945 = vpop.f32.mrb[0].mxu0
    %v1946 = vadd.f32 %v1828, %v1945
    %v1947 = vpop.f32.mrb[0].mxu0
    %1948 = vmatprep.mubr.bf16.mxu0 0
    %1949 = vmatmul.mubr.bf16.gmra.mrb[0].mxu0 %v1870
    %v1950 = vpop.f32.mrb[0].mxu0
    %v1951 = vadd.f32 %v1828, %v1950
    %v1952 = vpop.f32.mrb[0].mxu0
    %v1953 = vpop.f32.mrb[0].mxu0
    %v1954 = vadd.f32 %v1828, %v1953
    %v1955 = vpop.f32.mrb[0].mxu0
    %1956 = vmatprep.mubr.bf16.mxu0 0
    %1957 = vmatmul.mubr.bf16.gmra.mrb[0].mxu0 %v1872
    %v1958 = vpop.f32.mrb[0].mxu0
    %v1959 = vadd.f32 %v1828, %v1958
    %v1960 = vpop.f32.mrb[0].mxu0
    %v1961 = vpop.f32.mrb[0].mxu0
    %v1962 = vadd.f32 %v1828, %v1961
    %v1963 = vpop.f32.mrb[0].mxu0
    %1964 = vmatprep.mubr.bf16.mxu0 0
    %1965 = vmatmul.mubr.bf16.gmra.mrb[0].mxu0 %v1874
    %v1966 = vpop.f32.mrb[0].mxu0
    %v1967 = vadd.f32 %v1828, %v1966
    %v1968 = vpop.f32.mrb[0].mxu0
    %v1969 = vpop.f32.mrb[0].mxu0
    %v1970 = vadd.f32 %v1828, %v1969
    %v1971 = vpop.f32.mrb[0].mxu0
    %1972 = vdwg.mxu0
    %v1973 = vmax.f32 %v1911, 0.0
    %v1974 = vmax.f32 %v1914, 0.0
    %v1975 = vmax.f32 %v1919, 0.0
    %v1976 = vmax.f32 %v1922, 0.0
    %v1977 = vmax.f32 %v1927, 0.0
    %v1978 = vmax.f32 %v1930, 0.0
    %v1979 = vmax.f32 %v1935, 0.0
    %v1980 = vmax.f32 %v1938, 0.0
    %v1981 = vmax.f32 %v1943, 0.0
    %v1982 = vmax.f32 %v1946, 0.0
    %v1983 = vmax.f32 %v1951, 0.0
    %v1984 = vmax.f32 %v1954, 0.0
    %v1985 = vmax.f32 %v1959, 0.0
    %v1986 = vmax.f32 %v1962, 0.0
    %v1987 = vmax.f32 %v1967, 0.0
    %v1988 = vmax.f32 %v1970, 0.0
    %1989 = vst.msk [vmem:[#allocation2 + $0x180] sm:$0xff] %vm524, %v1973
    %1990 = vst.msk [vmem:[#allocation2 + $0x188] sm:$0xff] %vm524, %v1974
    %1991 = vst.msk [vmem:[#allocation2 + $0x190] sm:$0xff] %vm524, %v1975
    %1992 = vst.msk [vmem:[#allocation2 + $0x198] sm:$0xff] %vm524, %v1976
    %1993 = vst.msk [vmem:[#allocation2 + $0x1a0] sm:$0xff] %vm524, %v1977
    %1994 = vst.msk [vmem:[#allocation2 + $0x1a8] sm:$0xff] %vm524, %v1978
    %1995 = vst.msk [vmem:[#allocation2 + $0x1b0] sm:$0xff] %vm524, %v1979
    %1996 = vst.msk [vmem:[#allocation2 + $0x1b8] sm:$0xff] %vm524, %v1980
    %1997 = vst.msk [vmem:[#allocation2 + $0x1c0] sm:$0xff] %vm524, %v1981
    %1998 = vst.msk [vmem:[#allocation2 + $0x1c8] sm:$0xff] %vm524, %v1982
    %1999 = vst.msk [vmem:[#allocation2 + $0x1d0] sm:$0xff] %vm524, %v1983
    %2000 = vst.msk [vmem:[#allocation2 + $0x1d8] sm:$0xff] %vm524, %v1984
    %2001 = vst.msk [vmem:[#allocation2 + $0x1e0] sm:$0xff] %vm524, %v1985
    %2002 = vst.msk [vmem:[#allocation2 + $0x1e8] sm:$0xff] %vm524, %v1986
    %2003 = vst.msk [vmem:[#allocation2 + $0x1f0] sm:$0xff] %vm524, %v1987
    %2004 = vst.msk [vmem:[#allocation2 + $0x1f8] sm:$0xff] %vm524, %v1988
    %v2005 = vld [vmem:[%s1620] sm:$0xff]
    %v2006 = vld [vmem:[%s1620 + $0x8] sm:$0xff]
    %v2007 = vld [vmem:[%s1620 + $0x10] sm:$0xff]
    %v2008 = vld [vmem:[%s1620 + $0x18] sm:$0xff]
    %v2009 = vld [vmem:[%s1620 + $0x20] sm:$0xff]
    %v2010 = vld [vmem:[%s1620 + $0x28] sm:$0xff]
    %v2011 = vld [vmem:[%s1620 + $0x30] sm:$0xff]
    %v2012 = vld [vmem:[%s1620 + $0x38] sm:$0xff]
    %v2013 = vld [vmem:[%s1620 + $0x40] sm:$0xff]
    %v2014 = vld [vmem:[%s1620 + $0x48] sm:$0xff]
    %v2015 = vld [vmem:[%s1620 + $0x50] sm:$0xff]
    %v2016 = vld [vmem:[%s1620 + $0x58] sm:$0xff]
    %v2017 = vld [vmem:[%s1620 + $0x60] sm:$0xff]
    %v2018 = vld [vmem:[%s1620 + $0x68] sm:$0xff]
    %v2019 = vld [vmem:[%s1620 + $0x70] sm:$0xff]
    %v2020 = vld [vmem:[%s1620 + $0x78] sm:$0xff]
    %v2021 = vpack.c.bf16 %v2006, %v2005
    %v2022 = vpack.c.bf16 %v2008, %v2007
    %v2023 = vpack.c.bf16 %v2010, %v2009
    %v2024 = vpack.c.bf16 %v2012, %v2011
    %v2025 = vpack.c.bf16 %v2014, %v2013
    %v2026 = vpack.c.bf16 %v2016, %v2015
    %v2027 = vpack.c.bf16 %v2018, %v2017
    %v2028 = vpack.c.bf16 %v2020, %v2019
    %s2029 = sadd.s32 %s45, 544
    %s2030 = scalar_lea.vmem %s0, %s2029
    %v2031 = vld [vmem:[%s2030] sm:$0xff]
    %v2032 = vld [vmem:[%s2030 + $0x8] sm:$0xff]
    %v2033 = vld [vmem:[%s2030 + $0x10] sm:$0xff]
    %v2034 = vld [vmem:[%s2030 + $0x18] sm:$0xff]
    %v2035 = vld [vmem:[%s2030 + $0x20] sm:$0xff]
    %v2036 = vld [vmem:[%s2030 + $0x28] sm:$0xff]
    %v2037 = vld [vmem:[%s2030 + $0x30] sm:$0xff]
    %v2038 = vld [vmem:[%s2030 + $0x38] sm:$0xff]
    %v2039 = vld [vmem:[%s2030 + $0x40] sm:$0xff]
    %v2040 = vld [vmem:[%s2030 + $0x48] sm:$0xff]
    %v2041 = vld [vmem:[%s2030 + $0x50] sm:$0xff]
    %v2042 = vld [vmem:[%s2030 + $0x58] sm:$0xff]
    %v2043 = vld [vmem:[%s2030 + $0x60] sm:$0xff]
    %v2044 = vld [vmem:[%s2030 + $0x68] sm:$0xff]
    %v2045 = vld [vmem:[%s2030 + $0x70] sm:$0xff]
    %v2046 = vld [vmem:[%s2030 + $0x78] sm:$0xff]
    %v2047 = vpack.c.bf16 %v2032, %v2031
    %v2048 = vpack.c.bf16 %v2034, %v2033
    %v2049 = vpack.c.bf16 %v2036, %v2035
    %v2050 = vpack.c.bf16 %v2038, %v2037
    %v2051 = vpack.c.bf16 %v2040, %v2039
    %v2052 = vpack.c.bf16 %v2042, %v2041
    %v2053 = vpack.c.bf16 %v2044, %v2043
    %v2054 = vpack.c.bf16 %v2046, %v2045
    %s2055 = sadd.s32 %s45, 576
    %s2056 = scalar_lea.vmem %s0, %s2055
    %v2057 = vld [vmem:[%s2056] sm:$0xff]
    %v2058 = vld [vmem:[%s2056 + $0x8] sm:$0xff]
    %v2059 = vld [vmem:[%s2056 + $0x10] sm:$0xff]
    %v2060 = vld [vmem:[%s2056 + $0x18] sm:$0xff]
    %v2061 = vld [vmem:[%s2056 + $0x20] sm:$0xff]
    %v2062 = vld [vmem:[%s2056 + $0x28] sm:$0xff]
    %v2063 = vld [vmem:[%s2056 + $0x30] sm:$0xff]
    %v2064 = vld [vmem:[%s2056 + $0x38] sm:$0xff]
    %v2065 = vld [vmem:[%s2056 + $0x40] sm:$0xff]
    %v2066 = vld [vmem:[%s2056 + $0x48] sm:$0xff]
    %v2067 = vld [vmem:[%s2056 + $0x50] sm:$0xff]
    %v2068 = vld [vmem:[%s2056 + $0x58] sm:$0xff]
    %v2069 = vld [vmem:[%s2056 + $0x60] sm:$0xff]
    %v2070 = vld [vmem:[%s2056 + $0x68] sm:$0xff]
    %v2071 = vld [vmem:[%s2056 + $0x70] sm:$0xff]
    %v2072 = vld [vmem:[%s2056 + $0x78] sm:$0xff]
    %v2073 = vpack.c.bf16 %v2058, %v2057
    %v2074 = vpack.c.bf16 %v2060, %v2059
    %v2075 = vpack.c.bf16 %v2062, %v2061
    %v2076 = vpack.c.bf16 %v2064, %v2063
    %v2077 = vpack.c.bf16 %v2066, %v2065
    %v2078 = vpack.c.bf16 %v2068, %v2067
    %v2079 = vpack.c.bf16 %v2070, %v2069
    %v2080 = vpack.c.bf16 %v2072, %v2071
    %s2081 = sadd.s32 %s45, 608
    %s2082 = scalar_lea.vmem %s0, %s2081
    %v2083 = vld [vmem:[%s2082] sm:$0xff]
    %v2084 = vld [vmem:[%s2082 + $0x8] sm:$0xff]
    %v2085 = vld [vmem:[%s2082 + $0x10] sm:$0xff]
    %v2086 = vld [vmem:[%s2082 + $0x18] sm:$0xff]
    %v2087 = vld [vmem:[%s2082 + $0x20] sm:$0xff]
    %v2088 = vld [vmem:[%s2082 + $0x28] sm:$0xff]
    %v2089 = vld [vmem:[%s2082 + $0x30] sm:$0xff]
    %v2090 = vld [vmem:[%s2082 + $0x38] sm:$0xff]
    %v2091 = vld [vmem:[%s2082 + $0x40] sm:$0xff]
    %v2092 = vld [vmem:[%s2082 + $0x48] sm:$0xff]
    %v2093 = vld [vmem:[%s2082 + $0x50] sm:$0xff]
    %v2094 = vld [vmem:[%s2082 + $0x58] sm:$0xff]
    %v2095 = vld [vmem:[%s2082 + $0x60] sm:$0xff]
    %v2096 = vld [vmem:[%s2082 + $0x68] sm:$0xff]
    %v2097 = vld [vmem:[%s2082 + $0x70] sm:$0xff]
    %v2098 = vld [vmem:[%s2082 + $0x78] sm:$0xff]
    %v2099 = vpack.c.bf16 %v2084, %v2083
    %v2100 = vpack.c.bf16 %v2086, %v2085
    %v2101 = vpack.c.bf16 %v2088, %v2087
    %v2102 = vpack.c.bf16 %v2090, %v2089
    %v2103 = vpack.c.bf16 %v2092, %v2091
    %v2104 = vpack.c.bf16 %v2094, %v2093
    %v2105 = vpack.c.bf16 %v2096, %v2095
    %v2106 = vpack.c.bf16 %v2098, %v2097
    %s2107 = sadd.s32 %s45, 640
    %s2108 = scalar_lea.vmem %s0, %s2107
    %v2109 = vld [vmem:[%s2108] sm:$0xff]
    %v2110 = vld [vmem:[%s2108 + $0x8] sm:$0xff]
    %v2111 = vld [vmem:[%s2108 + $0x10] sm:$0xff]
    %v2112 = vld [vmem:[%s2108 + $0x18] sm:$0xff]
    %v2113 = vld [vmem:[%s2108 + $0x20] sm:$0xff]
    %v2114 = vld [vmem:[%s2108 + $0x28] sm:$0xff]
    %v2115 = vld [vmem:[%s2108 + $0x30] sm:$0xff]
    %v2116 = vld [vmem:[%s2108 + $0x38] sm:$0xff]
    %v2117 = vld [vmem:[%s2108 + $0x40] sm:$0xff]
    %v2118 = vld [vmem:[%s2108 + $0x48] sm:$0xff]
    %v2119 = vld [vmem:[%s2108 + $0x50] sm:$0xff]
    %v2120 = vld [vmem:[%s2108 + $0x58] sm:$0xff]
    %v2121 = vld [vmem:[%s2108 + $0x60] sm:$0xff]
    %v2122 = vld [vmem:[%s2108 + $0x68] sm:$0xff]
    %v2123 = vld [vmem:[%s2108 + $0x70] sm:$0xff]
    %v2124 = vld [vmem:[%s2108 + $0x78] sm:$0xff]
    %v2125 = vpack.c.bf16 %v2110, %v2109
    %v2126 = vpack.c.bf16 %v2112, %v2111
    %v2127 = vpack.c.bf16 %v2114, %v2113
    %v2128 = vpack.c.bf16 %v2116, %v2115
    %v2129 = vpack.c.bf16 %v2118, %v2117
    %v2130 = vpack.c.bf16 %v2120, %v2119
    %v2131 = vpack.c.bf16 %v2122, %v2121
    %v2132 = vpack.c.bf16 %v2124, %v2123
    %2141 = vrot.lane.b32.xlu0 %v2047, 16
    %v2142 = vpop.permute.xlu0 %2141
    %2143 = vrot.lane.b32.xlu0 %v2048, 16
    %v2144 = vpop.permute.xlu0 %2143
    %2145 = vrot.lane.b32.xlu0 %v2049, 16
    %v2146 = vpop.permute.xlu0 %2145
    %2147 = vrot.lane.b32.xlu0 %v2050, 16
    %v2148 = vpop.permute.xlu0 %2147
    %2149 = vrot.lane.b32.xlu0 %v2051, 16
    %v2150 = vpop.permute.xlu0 %2149
    %2151 = vrot.lane.b32.xlu0 %v2052, 16
    %v2152 = vpop.permute.xlu0 %2151
    %2153 = vrot.lane.b32.xlu0 %v2053, 16
    %v2154 = vpop.permute.xlu0 %2153
    %2155 = vrot.lane.b32.xlu0 %v2054, 16
    %v2156 = vpop.permute.xlu0 %2155
    %2165 = vrot.lane.b32.xlu0 %v2073, 32
    %v2166 = vpop.permute.xlu0 %2165
    %2167 = vrot.lane.b32.xlu0 %v2074, 32
    %v2168 = vpop.permute.xlu0 %2167
    %2169 = vrot.lane.b32.xlu0 %v2075, 32
    %v2170 = vpop.permute.xlu0 %2169
    %2171 = vrot.lane.b32.xlu0 %v2076, 32
    %v2172 = vpop.permute.xlu0 %2171
    %2173 = vrot.lane.b32.xlu0 %v2077, 32
    %v2174 = vpop.permute.xlu0 %2173
    %2175 = vrot.lane.b32.xlu0 %v2078, 32
    %v2176 = vpop.permute.xlu0 %2175
    %2177 = vrot.lane.b32.xlu0 %v2079, 32
    %v2178 = vpop.permute.xlu0 %2177
    %2179 = vrot.lane.b32.xlu0 %v2080, 32
    %v2180 = vpop.permute.xlu0 %2179
    %2189 = vrot.lane.b32.xlu0 %v2099, 48
    %v2190 = vpop.permute.xlu0 %2189
    %2191 = vrot.lane.b32.xlu0 %v2100, 48
    %v2192 = vpop.permute.xlu0 %2191
    %2193 = vrot.lane.b32.xlu0 %v2101, 48
    %v2194 = vpop.permute.xlu0 %2193
    %2195 = vrot.lane.b32.xlu0 %v2102, 48
    %v2196 = vpop.permute.xlu0 %2195
    %2197 = vrot.lane.b32.xlu0 %v2103, 48
    %v2198 = vpop.permute.xlu0 %2197
    %2199 = vrot.lane.b32.xlu0 %v2104, 48
    %v2200 = vpop.permute.xlu0 %2199
    %2201 = vrot.lane.b32.xlu0 %v2105, 48
    %v2202 = vpop.permute.xlu0 %2201
    %2203 = vrot.lane.b32.xlu0 %v2106, 48
    %v2204 = vpop.permute.xlu0 %2203
    %2213 = vrot.lane.b32.xlu0 %v2125, 64
    %v2214 = vpop.permute.xlu0 %2213
    %2215 = vrot.lane.b32.xlu0 %v2126, 64
    %v2216 = vpop.permute.xlu0 %2215
    %2217 = vrot.lane.b32.xlu0 %v2127, 64
    %v2218 = vpop.permute.xlu0 %2217
    %2219 = vrot.lane.b32.xlu0 %v2128, 64
    %v2220 = vpop.permute.xlu0 %2219
    %2221 = vrot.lane.b32.xlu0 %v2129, 64
    %v2222 = vpop.permute.xlu0 %2221
    %2223 = vrot.lane.b32.xlu0 %v2130, 64
    %v2224 = vpop.permute.xlu0 %2223
    %2225 = vrot.lane.b32.xlu0 %v2131, 64
    %v2226 = vpop.permute.xlu0 %2225
    %2227 = vrot.lane.b32.xlu0 %v2132, 64
    %v2228 = vpop.permute.xlu0 %2227
    %v2231 = vsel %vm271, %v2021, %v2142
    %v2234 = vsel %vm271, %v2022, %v2144
    %v2237 = vsel %vm271, %v2023, %v2146
    %v2240 = vsel %vm271, %v2024, %v2148
    %v2243 = vsel %vm271, %v2025, %v2150
    %v2246 = vsel %vm271, %v2026, %v2152
    %v2249 = vsel %vm271, %v2027, %v2154
    %v2252 = vsel %vm271, %v2028, %v2156
    %v2254 = vsel %vm296, %v2231, %v2166
    %v2256 = vsel %vm296, %v2234, %v2168
    %v2258 = vsel %vm296, %v2237, %v2170
    %v2260 = vsel %vm296, %v2240, %v2172
    %v2262 = vsel %vm296, %v2243, %v2174
    %v2264 = vsel %vm296, %v2246, %v2176
    %v2266 = vsel %vm296, %v2249, %v2178
    %v2268 = vsel %vm296, %v2252, %v2180
    %v2270 = vsel %vm313, %v2254, %v2190
    %v2272 = vsel %vm313, %v2256, %v2192
    %v2274 = vsel %vm313, %v2258, %v2194
    %v2276 = vsel %vm313, %v2260, %v2196
    %v2278 = vsel %vm313, %v2262, %v2198
    %v2280 = vsel %vm313, %v2264, %v2200
    %v2282 = vsel %vm313, %v2266, %v2202
    %v2284 = vsel %vm313, %v2268, %v2204
    %v2286 = vsel %vm330, %v2270, %v2214
    %v2288 = vsel %vm330, %v2272, %v2216
    %v2290 = vsel %vm330, %v2274, %v2218
    %v2292 = vsel %vm330, %v2276, %v2220
    %v2294 = vsel %vm330, %v2278, %v2222
    %v2296 = vsel %vm330, %v2280, %v2224
    %v2298 = vsel %vm330, %v2282, %v2226
    %v2300 = vsel %vm330, %v2284, %v2228
    %v2301 = vld [vmem:[%s1] sm:$0xf]
    %v2302 = vld [vmem:[%s1 + $0x4] sm:$0xf]
    %v2303 = vld [vmem:[%s1 + $0x8] sm:$0xf]
    %v2304 = vld [vmem:[%s1 + $0xc] sm:$0xf]
    %v2305 = vld [vmem:[%s1 + $0x10] sm:$0xf]
    %v2306 = vld [vmem:[%s1 + $0x14] sm:$0xf]
    %v2307 = vld [vmem:[%s1 + $0x18] sm:$0xf]
    %v2308 = vld [vmem:[%s1 + $0x1c] sm:$0xf]
    %v2309 = vld [vmem:[%s1 + $0x20] sm:$0xf]
    %v2310 = vld [vmem:[%s1 + $0x24] sm:$0xf]
    %v2311 = vld [vmem:[%s2] sm:$0x1]
    %v2313 = vlaneseq
    %v2314 = vshrl.u32 %v2313, 7
    %v2315 = vsub.s32 0, %v2314
    %v2316 = vrot.slane %v2311, %v2315
    %v2328 = vunpack.c.l.b16 %v2301
    %v2329 = vunpack.c.l.b16 %v2302
    %v2330 = vunpack.c.l.b16 %v2303
    %v2331 = vunpack.c.l.b16 %v2304
    %v2332 = vunpack.c.l.b16 %v2305
    %v2333 = vunpack.c.l.b16 %v2306
    %v2334 = vunpack.c.l.b16 %v2307
    %v2335 = vunpack.c.l.b16 %v2308
    %v2336 = vunpack.c.l.b16 %v2309
    %v2337 = vunpack.c.l.b16 %v2310
    %v2338 = vpack.c.b16 %v2329, %v2328
    %v2339 = vpack.c.b16 %v2331, %v2330
    %v2340 = vpack.c.b16 %v2333, %v2332
    %v2341 = vpack.c.b16 %v2335, %v2334
    %v2342 = vpack.c.b16 %v2337, %v2336
    %v2348 = vsel %vm394, %v2286, 0
    %v2350 = vsel %vm394, %v2288, 0
    %v2352 = vsel %vm394, %v2290, 0
    %v2354 = vsel %vm394, %v2292, 0
    %v2356 = vsel %vm394, %v2294, 0
    %v2358 = vsel %vm394, %v2296, 0
    %v2360 = vsel %vm394, %v2298, 0
    %v2362 = vsel %vm394, %v2300, 0
    %2364 = vmatprep.subr.bf16.mxu0 0
    %2365 = vmatpush1.bf16.msra.mxu0 %v2338
    %2366 = vmatprep.subr.bf16.mxu0 0
    %2367 = vmatpush1.bf16.msra.mxu0 %v2339
    %2368 = vmatprep.subr.bf16.mxu0 0
    %2369 = vmatpush1.bf16.msra.mxu0 %v2340
    %2370 = vmatprep.subr.bf16.mxu0 0
    %2371 = vmatpush1.bf16.msra.mxu0 %v2341
    %2372 = vmatprep.subr.bf16.mxu0 0
    %2373 = vmatpush1.bf16.msra.mxu0 %v2342
    %2374 = vmatprep.subr.bf16.mxu0 0
    %2375 = vmatpush1.bf16.msra.mxu0 0
    %2376 = vmatprep.subr.bf16.mxu0 0
    %2377 = vmatpush1.bf16.msra.mxu0 0
    %2378 = vmatprep.subr.bf16.mxu0 0
    %2379 = vmatpush1.bf16.msra.mxu0 0
    %2380 = vmatprep.subr.bf16.mxu0 0
    %2381 = vmatpush1.bf16.msra.mxu0 0
    %2382 = vmatprep.subr.bf16.mxu0 0
    %2383 = vmatpush1.bf16.msra.mxu0 0
    %2384 = vmatprep.subr.bf16.mxu0 0
    %2385 = vmatpush1.bf16.msra.mxu0 0
    %2386 = vmatprep.subr.bf16.mxu0 0
    %2387 = vmatpush1.bf16.msra.mxu0 0
    %2388 = vmatprep.subr.bf16.mxu0 0
    %2389 = vmatpush1.bf16.msra.mxu0 0
    %2390 = vmatprep.subr.bf16.mxu0 0
    %2391 = vmatpush1.bf16.msra.mxu0 0
    %2392 = vmatprep.subr.bf16.mxu0 0
    %2393 = vmatpush1.bf16.msra.mxu0 0
    %2394 = vmatprep.subr.bf16.mxu0 0
    %2395 = vmatpush1.bf16.msra.mxu0 0
    %2396 = vmatprep.mubr.bf16.mxu0 0
    %2397 = vmatmul.mubr.bf16.gmra.mrb[0].mxu0 %v2348
    %v2398 = vpop.f32.mrb[0].mxu0
    %v2399 = vadd.f32 %v2316, %v2398
    %v2400 = vpop.f32.mrb[0].mxu0
    %v2401 = vpop.f32.mrb[0].mxu0
    %v2402 = vadd.f32 %v2316, %v2401
    %v2403 = vpop.f32.mrb[0].mxu0
    %2404 = vmatprep.mubr.bf16.mxu0 0
    %2405 = vmatmul.mubr.bf16.gmra.mrb[0].mxu0 %v2350
    %v2406 = vpop.f32.mrb[0].mxu0
    %v2407 = vadd.f32 %v2316, %v2406
    %v2408 = vpop.f32.mrb[0].mxu0
    %v2409 = vpop.f32.mrb[0].mxu0
    %v2410 = vadd.f32 %v2316, %v2409
    %v2411 = vpop.f32.mrb[0].mxu0
    %2412 = vmatprep.mubr.bf16.mxu0 0
    %2413 = vmatmul.mubr.bf16.gmra.mrb[0].mxu0 %v2352
    %v2414 = vpop.f32.mrb[0].mxu0
    %v2415 = vadd.f32 %v2316, %v2414
    %v2416 = vpop.f32.mrb[0].mxu0
    %v2417 = vpop.f32.mrb[0].mxu0
    %v2418 = vadd.f32 %v2316, %v2417
    %v2419 = vpop.f32.mrb[0].mxu0
    %2420 = vmatprep.mubr.bf16.mxu0 0
    %2421 = vmatmul.mubr.bf16.gmra.mrb[0].mxu0 %v2354
    %v2422 = vpop.f32.mrb[0].mxu0
    %v2423 = vadd.f32 %v2316, %v2422
    %v2424 = vpop.f32.mrb[0].mxu0
    %v2425 = vpop.f32.mrb[0].mxu0
    %v2426 = vadd.f32 %v2316, %v2425
    %v2427 = vpop.f32.mrb[0].mxu0
    %2428 = vmatprep.mubr.bf16.mxu0 0
    %2429 = vmatmul.mubr.bf16.gmra.mrb[0].mxu0 %v2356
    %v2430 = vpop.f32.mrb[0].mxu0
    %v2431 = vadd.f32 %v2316, %v2430
    %v2432 = vpop.f32.mrb[0].mxu0
    %v2433 = vpop.f32.mrb[0].mxu0
    %v2434 = vadd.f32 %v2316, %v2433
    %v2435 = vpop.f32.mrb[0].mxu0
    %2436 = vmatprep.mubr.bf16.mxu0 0
    %2437 = vmatmul.mubr.bf16.gmra.mrb[0].mxu0 %v2358
    %v2438 = vpop.f32.mrb[0].mxu0
    %v2439 = vadd.f32 %v2316, %v2438
    %v2440 = vpop.f32.mrb[0].mxu0
    %v2441 = vpop.f32.mrb[0].mxu0
    %v2442 = vadd.f32 %v2316, %v2441
    %v2443 = vpop.f32.mrb[0].mxu0
    %2444 = vmatprep.mubr.bf16.mxu0 0
    %2445 = vmatmul.mubr.bf16.gmra.mrb[0].mxu0 %v2360
    %v2446 = vpop.f32.mrb[0].mxu0
    %v2447 = vadd.f32 %v2316, %v2446
    %v2448 = vpop.f32.mrb[0].mxu0
    %v2449 = vpop.f32.mrb[0].mxu0
    %v2450 = vadd.f32 %v2316, %v2449
    %v2451 = vpop.f32.mrb[0].mxu0
    %2452 = vmatprep.mubr.bf16.mxu0 0
    %2453 = vmatmul.mubr.bf16.gmra.mrb[0].mxu0 %v2362
    %v2454 = vpop.f32.mrb[0].mxu0
    %v2455 = vadd.f32 %v2316, %v2454
    %v2456 = vpop.f32.mrb[0].mxu0
    %v2457 = vpop.f32.mrb[0].mxu0
    %v2458 = vadd.f32 %v2316, %v2457
    %v2459 = vpop.f32.mrb[0].mxu0
    %2460 = vdwg.mxu0
    %v2461 = vmax.f32 %v2399, 0.0
    %v2462 = vmax.f32 %v2402, 0.0
    %v2463 = vmax.f32 %v2407, 0.0
    %v2464 = vmax.f32 %v2410, 0.0
    %v2465 = vmax.f32 %v2415, 0.0
    %v2466 = vmax.f32 %v2418, 0.0
    %v2467 = vmax.f32 %v2423, 0.0
    %v2468 = vmax.f32 %v2426, 0.0
    %v2469 = vmax.f32 %v2431, 0.0
    %v2470 = vmax.f32 %v2434, 0.0
    %v2471 = vmax.f32 %v2439, 0.0
    %v2472 = vmax.f32 %v2442, 0.0
    %v2473 = vmax.f32 %v2447, 0.0
    %v2474 = vmax.f32 %v2450, 0.0
    %v2475 = vmax.f32 %v2455, 0.0
    %v2476 = vmax.f32 %v2458, 0.0
    %2477 = vst.msk [vmem:[#allocation2 + $0x200] sm:$0xff] %vm524, %v2461
    %2478 = vst.msk [vmem:[#allocation2 + $0x208] sm:$0xff] %vm524, %v2462
    %2479 = vst.msk [vmem:[#allocation2 + $0x210] sm:$0xff] %vm524, %v2463
    %2480 = vst.msk [vmem:[#allocation2 + $0x218] sm:$0xff] %vm524, %v2464
    %2481 = vst.msk [vmem:[#allocation2 + $0x220] sm:$0xff] %vm524, %v2465
    %2482 = vst.msk [vmem:[#allocation2 + $0x228] sm:$0xff] %vm524, %v2466
    %2483 = vst.msk [vmem:[#allocation2 + $0x230] sm:$0xff] %vm524, %v2467
    %2484 = vst.msk [vmem:[#allocation2 + $0x238] sm:$0xff] %vm524, %v2468
    %2485 = vst.msk [vmem:[#allocation2 + $0x240] sm:$0xff] %vm524, %v2469
    %2486 = vst.msk [vmem:[#allocation2 + $0x248] sm:$0xff] %vm524, %v2470
    %2487 = vst.msk [vmem:[#allocation2 + $0x250] sm:$0xff] %vm524, %v2471
    %2488 = vst.msk [vmem:[#allocation2 + $0x258] sm:$0xff] %vm524, %v2472
    %2489 = vst.msk [vmem:[#allocation2 + $0x260] sm:$0xff] %vm524, %v2473
    %2490 = vst.msk [vmem:[#allocation2 + $0x268] sm:$0xff] %vm524, %v2474
    %2491 = vst.msk [vmem:[#allocation2 + $0x270] sm:$0xff] %vm524, %v2475
    %2492 = vst.msk [vmem:[#allocation2 + $0x278] sm:$0xff] %vm524, %v2476
    %v2493 = vld [vmem:[%s2108] sm:$0xff]
    %v2494 = vld [vmem:[%s2108 + $0x8] sm:$0xff]
    %v2495 = vld [vmem:[%s2108 + $0x10] sm:$0xff]
    %v2496 = vld [vmem:[%s2108 + $0x18] sm:$0xff]
    %v2497 = vld [vmem:[%s2108 + $0x20] sm:$0xff]
    %v2498 = vld [vmem:[%s2108 + $0x28] sm:$0xff]
    %v2499 = vld [vmem:[%s2108 + $0x30] sm:$0xff]
    %v2500 = vld [vmem:[%s2108 + $0x38] sm:$0xff]
    %v2501 = vld [vmem:[%s2108 + $0x40] sm:$0xff]
    %v2502 = vld [vmem:[%s2108 + $0x48] sm:$0xff]
    %v2503 = vld [vmem:[%s2108 + $0x50] sm:$0xff]
    %v2504 = vld [vmem:[%s2108 + $0x58] sm:$0xff]
    %v2505 = vld [vmem:[%s2108 + $0x60] sm:$0xff]
    %v2506 = vld [vmem:[%s2108 + $0x68] sm:$0xff]
    %v2507 = vld [vmem:[%s2108 + $0x70] sm:$0xff]
    %v2508 = vld [vmem:[%s2108 + $0x78] sm:$0xff]
    %v2509 = vpack.c.bf16 %v2494, %v2493
    %v2510 = vpack.c.bf16 %v2496, %v2495
    %v2511 = vpack.c.bf16 %v2498, %v2497
    %v2512 = vpack.c.bf16 %v2500, %v2499
    %v2513 = vpack.c.bf16 %v2502, %v2501
    %v2514 = vpack.c.bf16 %v2504, %v2503
    %v2515 = vpack.c.bf16 %v2506, %v2505
    %v2516 = vpack.c.bf16 %v2508, %v2507
    %s2517 = sadd.s32 %s45, 672
    %s2518 = scalar_lea.vmem %s0, %s2517
    %v2519 = vld [vmem:[%s2518] sm:$0xff]
    %v2520 = vld [vmem:[%s2518 + $0x8] sm:$0xff]
    %v2521 = vld [vmem:[%s2518 + $0x10] sm:$0xff]
    %v2522 = vld [vmem:[%s2518 + $0x18] sm:$0xff]
    %v2523 = vld [vmem:[%s2518 + $0x20] sm:$0xff]
    %v2524 = vld [vmem:[%s2518 + $0x28] sm:$0xff]
    %v2525 = vld [vmem:[%s2518 + $0x30] sm:$0xff]
    %v2526 = vld [vmem:[%s2518 + $0x38] sm:$0xff]
    %v2527 = vld [vmem:[%s2518 + $0x40] sm:$0xff]
    %v2528 = vld [vmem:[%s2518 + $0x48] sm:$0xff]
    %v2529 = vld [vmem:[%s2518 + $0x50] sm:$0xff]
    %v2530 = vld [vmem:[%s2518 + $0x58] sm:$0xff]
    %v2531 = vld [vmem:[%s2518 + $0x60] sm:$0xff]
    %v2532 = vld [vmem:[%s2518 + $0x68] sm:$0xff]
    %v2533 = vld [vmem:[%s2518 + $0x70] sm:$0xff]
    %v2534 = vld [vmem:[%s2518 + $0x78] sm:$0xff]
    %v2535 = vpack.c.bf16 %v2520, %v2519
    %v2536 = vpack.c.bf16 %v2522, %v2521
    %v2537 = vpack.c.bf16 %v2524, %v2523
    %v2538 = vpack.c.bf16 %v2526, %v2525
    %v2539 = vpack.c.bf16 %v2528, %v2527
    %v2540 = vpack.c.bf16 %v2530, %v2529
    %v2541 = vpack.c.bf16 %v2532, %v2531
    %v2542 = vpack.c.bf16 %v2534, %v2533
    %s2543 = sadd.s32 %s45, 704
    %s2544 = scalar_lea.vmem %s0, %s2543
    %v2545 = vld [vmem:[%s2544] sm:$0xff]
    %v2546 = vld [vmem:[%s2544 + $0x8] sm:$0xff]
    %v2547 = vld [vmem:[%s2544 + $0x10] sm:$0xff]
    %v2548 = vld [vmem:[%s2544 + $0x18] sm:$0xff]
    %v2549 = vld [vmem:[%s2544 + $0x20] sm:$0xff]
    %v2550 = vld [vmem:[%s2544 + $0x28] sm:$0xff]
    %v2551 = vld [vmem:[%s2544 + $0x30] sm:$0xff]
    %v2552 = vld [vmem:[%s2544 + $0x38] sm:$0xff]
    %v2553 = vld [vmem:[%s2544 + $0x40] sm:$0xff]
    %v2554 = vld [vmem:[%s2544 + $0x48] sm:$0xff]
    %v2555 = vld [vmem:[%s2544 + $0x50] sm:$0xff]
    %v2556 = vld [vmem:[%s2544 + $0x58] sm:$0xff]
    %v2557 = vld [vmem:[%s2544 + $0x60] sm:$0xff]
    %v2558 = vld [vmem:[%s2544 + $0x68] sm:$0xff]
    %v2559 = vld [vmem:[%s2544 + $0x70] sm:$0xff]
    %v2560 = vld [vmem:[%s2544 + $0x78] sm:$0xff]
    %v2561 = vpack.c.bf16 %v2546, %v2545
    %v2562 = vpack.c.bf16 %v2548, %v2547
    %v2563 = vpack.c.bf16 %v2550, %v2549
    %v2564 = vpack.c.bf16 %v2552, %v2551
    %v2565 = vpack.c.bf16 %v2554, %v2553
    %v2566 = vpack.c.bf16 %v2556, %v2555
    %v2567 = vpack.c.bf16 %v2558, %v2557
    %v2568 = vpack.c.bf16 %v2560, %v2559
    %s2569 = sadd.s32 %s45, 736
    %s2570 = scalar_lea.vmem %s0, %s2569
    %v2571 = vld [vmem:[%s2570] sm:$0xff]
    %v2572 = vld [vmem:[%s2570 + $0x8] sm:$0xff]
    %v2573 = vld [vmem:[%s2570 + $0x10] sm:$0xff]
    %v2574 = vld [vmem:[%s2570 + $0x18] sm:$0xff]
    %v2575 = vld [vmem:[%s2570 + $0x20] sm:$0xff]
    %v2576 = vld [vmem:[%s2570 + $0x28] sm:$0xff]
    %v2577 = vld [vmem:[%s2570 + $0x30] sm:$0xff]
    %v2578 = vld [vmem:[%s2570 + $0x38] sm:$0xff]
    %v2579 = vld [vmem:[%s2570 + $0x40] sm:$0xff]
    %v2580 = vld [vmem:[%s2570 + $0x48] sm:$0xff]
    %v2581 = vld [vmem:[%s2570 + $0x50] sm:$0xff]
    %v2582 = vld [vmem:[%s2570 + $0x58] sm:$0xff]
    %v2583 = vld [vmem:[%s2570 + $0x60] sm:$0xff]
    %v2584 = vld [vmem:[%s2570 + $0x68] sm:$0xff]
    %v2585 = vld [vmem:[%s2570 + $0x70] sm:$0xff]
    %v2586 = vld [vmem:[%s2570 + $0x78] sm:$0xff]
    %v2587 = vpack.c.bf16 %v2572, %v2571
    %v2588 = vpack.c.bf16 %v2574, %v2573
    %v2589 = vpack.c.bf16 %v2576, %v2575
    %v2590 = vpack.c.bf16 %v2578, %v2577
    %v2591 = vpack.c.bf16 %v2580, %v2579
    %v2592 = vpack.c.bf16 %v2582, %v2581
    %v2593 = vpack.c.bf16 %v2584, %v2583
    %v2594 = vpack.c.bf16 %v2586, %v2585
    %s2595 = sadd.s32 %s45, 768
    %s2596 = scalar_lea.vmem %s0, %s2595
    %v2597 = vld [vmem:[%s2596] sm:$0xff]
    %v2598 = vld [vmem:[%s2596 + $0x8] sm:$0xff]
    %v2599 = vld [vmem:[%s2596 + $0x10] sm:$0xff]
    %v2600 = vld [vmem:[%s2596 + $0x18] sm:$0xff]
    %v2601 = vld [vmem:[%s2596 + $0x20] sm:$0xff]
    %v2602 = vld [vmem:[%s2596 + $0x28] sm:$0xff]
    %v2603 = vld [vmem:[%s2596 + $0x30] sm:$0xff]
    %v2604 = vld [vmem:[%s2596 + $0x38] sm:$0xff]
    %v2605 = vld [vmem:[%s2596 + $0x40] sm:$0xff]
    %v2606 = vld [vmem:[%s2596 + $0x48] sm:$0xff]
    %v2607 = vld [vmem:[%s2596 + $0x50] sm:$0xff]
    %v2608 = vld [vmem:[%s2596 + $0x58] sm:$0xff]
    %v2609 = vld [vmem:[%s2596 + $0x60] sm:$0xff]
    %v2610 = vld [vmem:[%s2596 + $0x68] sm:$0xff]
    %v2611 = vld [vmem:[%s2596 + $0x70] sm:$0xff]
    %v2612 = vld [vmem:[%s2596 + $0x78] sm:$0xff]
    %v2613 = vpack.c.bf16 %v2598, %v2597
    %v2614 = vpack.c.bf16 %v2600, %v2599
    %v2615 = vpack.c.bf16 %v2602, %v2601
    %v2616 = vpack.c.bf16 %v2604, %v2603
    %v2617 = vpack.c.bf16 %v2606, %v2605
    %v2618 = vpack.c.bf16 %v2608, %v2607
    %v2619 = vpack.c.bf16 %v2610, %v2609
    %v2620 = vpack.c.bf16 %v2612, %v2611
    %2629 = vrot.lane.b32.xlu0 %v2535, 16
    %v2630 = vpop.permute.xlu0 %2629
    %2631 = vrot.lane.b32.xlu0 %v2536, 16
    %v2632 = vpop.permute.xlu0 %2631
    %2633 = vrot.lane.b32.xlu0 %v2537, 16
    %v2634 = vpop.permute.xlu0 %2633
    %2635 = vrot.lane.b32.xlu0 %v2538, 16
    %v2636 = vpop.permute.xlu0 %2635
    %2637 = vrot.lane.b32.xlu0 %v2539, 16
    %v2638 = vpop.permute.xlu0 %2637
    %2639 = vrot.lane.b32.xlu0 %v2540, 16
    %v2640 = vpop.permute.xlu0 %2639
    %2641 = vrot.lane.b32.xlu0 %v2541, 16
    %v2642 = vpop.permute.xlu0 %2641
    %2643 = vrot.lane.b32.xlu0 %v2542, 16
    %v2644 = vpop.permute.xlu0 %2643
    %2653 = vrot.lane.b32.xlu0 %v2561, 32
    %v2654 = vpop.permute.xlu0 %2653
    %2655 = vrot.lane.b32.xlu0 %v2562, 32
    %v2656 = vpop.permute.xlu0 %2655
    %2657 = vrot.lane.b32.xlu0 %v2563, 32
    %v2658 = vpop.permute.xlu0 %2657
    %2659 = vrot.lane.b32.xlu0 %v2564, 32
    %v2660 = vpop.permute.xlu0 %2659
    %2661 = vrot.lane.b32.xlu0 %v2565, 32
    %v2662 = vpop.permute.xlu0 %2661
    %2663 = vrot.lane.b32.xlu0 %v2566, 32
    %v2664 = vpop.permute.xlu0 %2663
    %2665 = vrot.lane.b32.xlu0 %v2567, 32
    %v2666 = vpop.permute.xlu0 %2665
    %2667 = vrot.lane.b32.xlu0 %v2568, 32
    %v2668 = vpop.permute.xlu0 %2667
    %2677 = vrot.lane.b32.xlu0 %v2587, 48
    %v2678 = vpop.permute.xlu0 %2677
    %2679 = vrot.lane.b32.xlu0 %v2588, 48
    %v2680 = vpop.permute.xlu0 %2679
    %2681 = vrot.lane.b32.xlu0 %v2589, 48
    %v2682 = vpop.permute.xlu0 %2681
    %2683 = vrot.lane.b32.xlu0 %v2590, 48
    %v2684 = vpop.permute.xlu0 %2683
    %2685 = vrot.lane.b32.xlu0 %v2591, 48
    %v2686 = vpop.permute.xlu0 %2685
    %2687 = vrot.lane.b32.xlu0 %v2592, 48
    %v2688 = vpop.permute.xlu0 %2687
    %2689 = vrot.lane.b32.xlu0 %v2593, 48
    %v2690 = vpop.permute.xlu0 %2689
    %2691 = vrot.lane.b32.xlu0 %v2594, 48
    %v2692 = vpop.permute.xlu0 %2691
    %2701 = vrot.lane.b32.xlu0 %v2613, 64
    %v2702 = vpop.permute.xlu0 %2701
    %2703 = vrot.lane.b32.xlu0 %v2614, 64
    %v2704 = vpop.permute.xlu0 %2703
    %2705 = vrot.lane.b32.xlu0 %v2615, 64
    %v2706 = vpop.permute.xlu0 %2705
    %2707 = vrot.lane.b32.xlu0 %v2616, 64
    %v2708 = vpop.permute.xlu0 %2707
    %2709 = vrot.lane.b32.xlu0 %v2617, 64
    %v2710 = vpop.permute.xlu0 %2709
    %2711 = vrot.lane.b32.xlu0 %v2618, 64
    %v2712 = vpop.permute.xlu0 %2711
    %2713 = vrot.lane.b32.xlu0 %v2619, 64
    %v2714 = vpop.permute.xlu0 %2713
    %2715 = vrot.lane.b32.xlu0 %v2620, 64
    %v2716 = vpop.permute.xlu0 %2715
    %v2719 = vsel %vm271, %v2509, %v2630
    %v2722 = vsel %vm271, %v2510, %v2632
    %v2725 = vsel %vm271, %v2511, %v2634
    %v2728 = vsel %vm271, %v2512, %v2636
    %v2731 = vsel %vm271, %v2513, %v2638
    %v2734 = vsel %vm271, %v2514, %v2640
    %v2737 = vsel %vm271, %v2515, %v2642
    %v2740 = vsel %vm271, %v2516, %v2644
    %v2742 = vsel %vm296, %v2719, %v2654
    %v2744 = vsel %vm296, %v2722, %v2656
    %v2746 = vsel %vm296, %v2725, %v2658
    %v2748 = vsel %vm296, %v2728, %v2660
    %v2750 = vsel %vm296, %v2731, %v2662
    %v2752 = vsel %vm296, %v2734, %v2664
    %v2754 = vsel %vm296, %v2737, %v2666
    %v2756 = vsel %vm296, %v2740, %v2668
    %v2758 = vsel %vm313, %v2742, %v2678
    %v2760 = vsel %vm313, %v2744, %v2680
    %v2762 = vsel %vm313, %v2746, %v2682
    %v2764 = vsel %vm313, %v2748, %v2684
    %v2766 = vsel %vm313, %v2750, %v2686
    %v2768 = vsel %vm313, %v2752, %v2688
    %v2770 = vsel %vm313, %v2754, %v2690
    %v2772 = vsel %vm313, %v2756, %v2692
    %v2774 = vsel %vm330, %v2758, %v2702
    %v2776 = vsel %vm330, %v2760, %v2704
    %v2778 = vsel %vm330, %v2762, %v2706
    %v2780 = vsel %vm330, %v2764, %v2708
    %v2782 = vsel %vm330, %v2766, %v2710
    %v2784 = vsel %vm330, %v2768, %v2712
    %v2786 = vsel %vm330, %v2770, %v2714
    %v2788 = vsel %vm330, %v2772, %v2716
    %v2789 = vld [vmem:[%s1] sm:$0xf]
    %v2790 = vld [vmem:[%s1 + $0x4] sm:$0xf]
    %v2791 = vld [vmem:[%s1 + $0x8] sm:$0xf]
    %v2792 = vld [vmem:[%s1 + $0xc] sm:$0xf]
    %v2793 = vld [vmem:[%s1 + $0x10] sm:$0xf]
    %v2794 = vld [vmem:[%s1 + $0x14] sm:$0xf]
    %v2795 = vld [vmem:[%s1 + $0x18] sm:$0xf]
    %v2796 = vld [vmem:[%s1 + $0x1c] sm:$0xf]
    %v2797 = vld [vmem:[%s1 + $0x20] sm:$0xf]
    %v2798 = vld [vmem:[%s1 + $0x24] sm:$0xf]
    %v2799 = vld [vmem:[%s2] sm:$0x1]
    %v2801 = vlaneseq
    %v2802 = vshrl.u32 %v2801, 7
    %v2803 = vsub.s32 0, %v2802
    %v2804 = vrot.slane %v2799, %v2803
    %v2816 = vunpack.c.l.b16 %v2789
    %v2817 = vunpack.c.l.b16 %v2790
    %v2818 = vunpack.c.l.b16 %v2791
    %v2819 = vunpack.c.l.b16 %v2792
    %v2820 = vunpack.c.l.b16 %v2793
    %v2821 = vunpack.c.l.b16 %v2794
    %v2822 = vunpack.c.l.b16 %v2795
    %v2823 = vunpack.c.l.b16 %v2796
    %v2824 = vunpack.c.l.b16 %v2797
    %v2825 = vunpack.c.l.b16 %v2798
    %v2826 = vpack.c.b16 %v2817, %v2816
    %v2827 = vpack.c.b16 %v2819, %v2818
    %v2828 = vpack.c.b16 %v2821, %v2820
    %v2829 = vpack.c.b16 %v2823, %v2822
    %v2830 = vpack.c.b16 %v2825, %v2824
    %v2836 = vsel %vm394, %v2774, 0
    %v2838 = vsel %vm394, %v2776, 0
    %v2840 = vsel %vm394, %v2778, 0
    %v2842 = vsel %vm394, %v2780, 0
    %v2844 = vsel %vm394, %v2782, 0
    %v2846 = vsel %vm394, %v2784, 0
    %v2848 = vsel %vm394, %v2786, 0
    %v2850 = vsel %vm394, %v2788, 0
    %2852 = vmatprep.subr.bf16.mxu0 0
    %2853 = vmatpush1.bf16.msra.mxu0 %v2826
    %2854 = vmatprep.subr.bf16.mxu0 0
    %2855 = vmatpush1.bf16.msra.mxu0 %v2827
    %2856 = vmatprep.subr.bf16.mxu0 0
    %2857 = vmatpush1.bf16.msra.mxu0 %v2828
    %2858 = vmatprep.subr.bf16.mxu0 0
    %2859 = vmatpush1.bf16.msra.mxu0 %v2829
    %2860 = vmatprep.subr.bf16.mxu0 0
    %2861 = vmatpush1.bf16.msra.mxu0 %v2830
    %2862 = vmatprep.subr.bf16.mxu0 0
    %2863 = vmatpush1.bf16.msra.mxu0 0
    %2864 = vmatprep.subr.bf16.mxu0 0
    %2865 = vmatpush1.bf16.msra.mxu0 0
    %2866 = vmatprep.subr.bf16.mxu0 0
    %2867 = vmatpush1.bf16.msra.mxu0 0
    %2868 = vmatprep.subr.bf16.mxu0 0
    %2869 = vmatpush1.bf16.msra.mxu0 0
    %2870 = vmatprep.subr.bf16.mxu0 0
    %2871 = vmatpush1.bf16.msra.mxu0 0
    %2872 = vmatprep.subr.bf16.mxu0 0
    %2873 = vmatpush1.bf16.msra.mxu0 0
    %2874 = vmatprep.subr.bf16.mxu0 0
    %2875 = vmatpush1.bf16.msra.mxu0 0
    %2876 = vmatprep.subr.bf16.mxu0 0
    %2877 = vmatpush1.bf16.msra.mxu0 0
    %2878 = vmatprep.subr.bf16.mxu0 0
    %2879 = vmatpush1.bf16.msra.mxu0 0
    %2880 = vmatprep.subr.bf16.mxu0 0
    %2881 = vmatpush1.bf16.msra.mxu0 0
    %2882 = vmatprep.subr.bf16.mxu0 0
    %2883 = vmatpush1.bf16.msra.mxu0 0
    %2884 = vmatprep.mubr.bf16.mxu0 0
    %2885 = vmatmul.mubr.bf16.gmra.mrb[0].mxu0 %v2836
    %v2886 = vpop.f32.mrb[0].mxu0
    %v2887 = vadd.f32 %v2804, %v2886
    %v2888 = vpop.f32.mrb[0].mxu0
    %v2889 = vpop.f32.mrb[0].mxu0
    %v2890 = vadd.f32 %v2804, %v2889
    %v2891 = vpop.f32.mrb[0].mxu0
    %2892 = vmatprep.mubr.bf16.mxu0 0
    %2893 = vmatmul.mubr.bf16.gmra.mrb[0].mxu0 %v2838
    %v2894 = vpop.f32.mrb[0].mxu0
    %v2895 = vadd.f32 %v2804, %v2894
    %v2896 = vpop.f32.mrb[0].mxu0
    %v2897 = vpop.f32.mrb[0].mxu0
    %v2898 = vadd.f32 %v2804, %v2897
    %v2899 = vpop.f32.mrb[0].mxu0
    %2900 = vmatprep.mubr.bf16.mxu0 0
    %2901 = vmatmul.mubr.bf16.gmra.mrb[0].mxu0 %v2840
    %v2902 = vpop.f32.mrb[0].mxu0
    %v2903 = vadd.f32 %v2804, %v2902
    %v2904 = vpop.f32.mrb[0].mxu0
    %v2905 = vpop.f32.mrb[0].mxu0
    %v2906 = vadd.f32 %v2804, %v2905
    %v2907 = vpop.f32.mrb[0].mxu0
    %2908 = vmatprep.mubr.bf16.mxu0 0
    %2909 = vmatmul.mubr.bf16.gmra.mrb[0].mxu0 %v2842
    %v2910 = vpop.f32.mrb[0].mxu0
    %v2911 = vadd.f32 %v2804, %v2910
    %v2912 = vpop.f32.mrb[0].mxu0
    %v2913 = vpop.f32.mrb[0].mxu0
    %v2914 = vadd.f32 %v2804, %v2913
    %v2915 = vpop.f32.mrb[0].mxu0
    %2916 = vmatprep.mubr.bf16.mxu0 0
    %2917 = vmatmul.mubr.bf16.gmra.mrb[0].mxu0 %v2844
    %v2918 = vpop.f32.mrb[0].mxu0
    %v2919 = vadd.f32 %v2804, %v2918
    %v2920 = vpop.f32.mrb[0].mxu0
    %v2921 = vpop.f32.mrb[0].mxu0
    %v2922 = vadd.f32 %v2804, %v2921
    %v2923 = vpop.f32.mrb[0].mxu0
    %2924 = vmatprep.mubr.bf16.mxu0 0
    %2925 = vmatmul.mubr.bf16.gmra.mrb[0].mxu0 %v2846
    %v2926 = vpop.f32.mrb[0].mxu0
    %v2927 = vadd.f32 %v2804, %v2926
    %v2928 = vpop.f32.mrb[0].mxu0
    %v2929 = vpop.f32.mrb[0].mxu0
    %v2930 = vadd.f32 %v2804, %v2929
    %v2931 = vpop.f32.mrb[0].mxu0
    %2932 = vmatprep.mubr.bf16.mxu0 0
    %2933 = vmatmul.mubr.bf16.gmra.mrb[0].mxu0 %v2848
    %v2934 = vpop.f32.mrb[0].mxu0
    %v2935 = vadd.f32 %v2804, %v2934
    %v2936 = vpop.f32.mrb[0].mxu0
    %v2937 = vpop.f32.mrb[0].mxu0
    %v2938 = vadd.f32 %v2804, %v2937
    %v2939 = vpop.f32.mrb[0].mxu0
    %2940 = vmatprep.mubr.bf16.mxu0 0
    %2941 = vmatmul.mubr.bf16.gmra.mrb[0].mxu0 %v2850
    %v2942 = vpop.f32.mrb[0].mxu0
    %v2943 = vadd.f32 %v2804, %v2942
    %v2944 = vpop.f32.mrb[0].mxu0
    %v2945 = vpop.f32.mrb[0].mxu0
    %v2946 = vadd.f32 %v2804, %v2945
    %v2947 = vpop.f32.mrb[0].mxu0
    %2948 = vdwg.mxu0
    %v2949 = vmax.f32 %v2887, 0.0
    %v2950 = vmax.f32 %v2890, 0.0
    %v2951 = vmax.f32 %v2895, 0.0
    %v2952 = vmax.f32 %v2898, 0.0
    %v2953 = vmax.f32 %v2903, 0.0
    %v2954 = vmax.f32 %v2906, 0.0
    %v2955 = vmax.f32 %v2911, 0.0
    %v2956 = vmax.f32 %v2914, 0.0
    %v2957 = vmax.f32 %v2919, 0.0
    %v2958 = vmax.f32 %v2922, 0.0
    %v2959 = vmax.f32 %v2927, 0.0
    %v2960 = vmax.f32 %v2930, 0.0
    %v2961 = vmax.f32 %v2935, 0.0
    %v2962 = vmax.f32 %v2938, 0.0
    %v2963 = vmax.f32 %v2943, 0.0
    %v2964 = vmax.f32 %v2946, 0.0
    %2965 = vst.msk [vmem:[#allocation2 + $0x280] sm:$0xff] %vm524, %v2949
    %2966 = vst.msk [vmem:[#allocation2 + $0x288] sm:$0xff] %vm524, %v2950
    %2967 = vst.msk [vmem:[#allocation2 + $0x290] sm:$0xff] %vm524, %v2951
    %2968 = vst.msk [vmem:[#allocation2 + $0x298] sm:$0xff] %vm524, %v2952
    %2969 = vst.msk [vmem:[#allocation2 + $0x2a0] sm:$0xff] %vm524, %v2953
    %2970 = vst.msk [vmem:[#allocation2 + $0x2a8] sm:$0xff] %vm524, %v2954
    %2971 = vst.msk [vmem:[#allocation2 + $0x2b0] sm:$0xff] %vm524, %v2955
    %2972 = vst.msk [vmem:[#allocation2 + $0x2b8] sm:$0xff] %vm524, %v2956
    %2973 = vst.msk [vmem:[#allocation2 + $0x2c0] sm:$0xff] %vm524, %v2957
    %2974 = vst.msk [vmem:[#allocation2 + $0x2c8] sm:$0xff] %vm524, %v2958
    %2975 = vst.msk [vmem:[#allocation2 + $0x2d0] sm:$0xff] %vm524, %v2959
    %2976 = vst.msk [vmem:[#allocation2 + $0x2d8] sm:$0xff] %vm524, %v2960
    %2977 = vst.msk [vmem:[#allocation2 + $0x2e0] sm:$0xff] %vm524, %v2961
    %2978 = vst.msk [vmem:[#allocation2 + $0x2e8] sm:$0xff] %vm524, %v2962
    %2979 = vst.msk [vmem:[#allocation2 + $0x2f0] sm:$0xff] %vm524, %v2963
    %2980 = vst.msk [vmem:[#allocation2 + $0x2f8] sm:$0xff] %vm524, %v2964
    %v2981 = vld [vmem:[%s2596] sm:$0xff]
    %v2982 = vld [vmem:[%s2596 + $0x8] sm:$0xff]
    %v2983 = vld [vmem:[%s2596 + $0x10] sm:$0xff]
    %v2984 = vld [vmem:[%s2596 + $0x18] sm:$0xff]
    %v2985 = vld [vmem:[%s2596 + $0x20] sm:$0xff]
    %v2986 = vld [vmem:[%s2596 + $0x28] sm:$0xff]
    %v2987 = vld [vmem:[%s2596 + $0x30] sm:$0xff]
    %v2988 = vld [vmem:[%s2596 + $0x38] sm:$0xff]
    %v2989 = vld [vmem:[%s2596 + $0x40] sm:$0xff]
    %v2990 = vld [vmem:[%s2596 + $0x48] sm:$0xff]
    %v2991 = vld [vmem:[%s2596 + $0x50] sm:$0xff]
    %v2992 = vld [vmem:[%s2596 + $0x58] sm:$0xff]
    %v2993 = vld [vmem:[%s2596 + $0x60] sm:$0xff]
    %v2994 = vld [vmem:[%s2596 + $0x68] sm:$0xff]
    %v2995 = vld [vmem:[%s2596 + $0x70] sm:$0xff]
    %v2996 = vld [vmem:[%s2596 + $0x78] sm:$0xff]
    %v2997 = vpack.c.bf16 %v2982, %v2981
    %v2998 = vpack.c.bf16 %v2984, %v2983
    %v2999 = vpack.c.bf16 %v2986, %v2985
    %v3000 = vpack.c.bf16 %v2988, %v2987
    %v3001 = vpack.c.bf16 %v2990, %v2989
    %v3002 = vpack.c.bf16 %v2992, %v2991
    %v3003 = vpack.c.bf16 %v2994, %v2993
    %v3004 = vpack.c.bf16 %v2996, %v2995
    %s3005 = sadd.s32 %s45, 800
    %s3006 = scalar_lea.vmem %s0, %s3005
    %v3007 = vld [vmem:[%s3006] sm:$0xff]
    %v3008 = vld [vmem:[%s3006 + $0x8] sm:$0xff]
    %v3009 = vld [vmem:[%s3006 + $0x10] sm:$0xff]
    %v3010 = vld [vmem:[%s3006 + $0x18] sm:$0xff]
    %v3011 = vld [vmem:[%s3006 + $0x20] sm:$0xff]
    %v3012 = vld [vmem:[%s3006 + $0x28] sm:$0xff]
    %v3013 = vld [vmem:[%s3006 + $0x30] sm:$0xff]
    %v3014 = vld [vmem:[%s3006 + $0x38] sm:$0xff]
    %v3015 = vld [vmem:[%s3006 + $0x40] sm:$0xff]
    %v3016 = vld [vmem:[%s3006 + $0x48] sm:$0xff]
    %v3017 = vld [vmem:[%s3006 + $0x50] sm:$0xff]
    %v3018 = vld [vmem:[%s3006 + $0x58] sm:$0xff]
    %v3019 = vld [vmem:[%s3006 + $0x60] sm:$0xff]
    %v3020 = vld [vmem:[%s3006 + $0x68] sm:$0xff]
    %v3021 = vld [vmem:[%s3006 + $0x70] sm:$0xff]
    %v3022 = vld [vmem:[%s3006 + $0x78] sm:$0xff]
    %v3023 = vpack.c.bf16 %v3008, %v3007
    %v3024 = vpack.c.bf16 %v3010, %v3009
    %v3025 = vpack.c.bf16 %v3012, %v3011
    %v3026 = vpack.c.bf16 %v3014, %v3013
    %v3027 = vpack.c.bf16 %v3016, %v3015
    %v3028 = vpack.c.bf16 %v3018, %v3017
    %v3029 = vpack.c.bf16 %v3020, %v3019
    %v3030 = vpack.c.bf16 %v3022, %v3021
    %s3031 = sadd.s32 %s45, 832
    %s3032 = scalar_lea.vmem %s0, %s3031
    %v3033 = vld [vmem:[%s3032] sm:$0xff]
    %v3034 = vld [vmem:[%s3032 + $0x8] sm:$0xff]
    %v3035 = vld [vmem:[%s3032 + $0x10] sm:$0xff]
    %v3036 = vld [vmem:[%s3032 + $0x18] sm:$0xff]
    %v3037 = vld [vmem:[%s3032 + $0x20] sm:$0xff]
    %v3038 = vld [vmem:[%s3032 + $0x28] sm:$0xff]
    %v3039 = vld [vmem:[%s3032 + $0x30] sm:$0xff]
    %v3040 = vld [vmem:[%s3032 + $0x38] sm:$0xff]
    %v3041 = vld [vmem:[%s3032 + $0x40] sm:$0xff]
    %v3042 = vld [vmem:[%s3032 + $0x48] sm:$0xff]
    %v3043 = vld [vmem:[%s3032 + $0x50] sm:$0xff]
    %v3044 = vld [vmem:[%s3032 + $0x58] sm:$0xff]
    %v3045 = vld [vmem:[%s3032 + $0x60] sm:$0xff]
    %v3046 = vld [vmem:[%s3032 + $0x68] sm:$0xff]
    %v3047 = vld [vmem:[%s3032 + $0x70] sm:$0xff]
    %v3048 = vld [vmem:[%s3032 + $0x78] sm:$0xff]
    %v3049 = vpack.c.bf16 %v3034, %v3033
    %v3050 = vpack.c.bf16 %v3036, %v3035
    %v3051 = vpack.c.bf16 %v3038, %v3037
    %v3052 = vpack.c.bf16 %v3040, %v3039
    %v3053 = vpack.c.bf16 %v3042, %v3041
    %v3054 = vpack.c.bf16 %v3044, %v3043
    %v3055 = vpack.c.bf16 %v3046, %v3045
    %v3056 = vpack.c.bf16 %v3048, %v3047
    %s3057 = sadd.s32 %s45, 864
    %s3058 = scalar_lea.vmem %s0, %s3057
    %v3059 = vld [vmem:[%s3058] sm:$0xff]
    %v3060 = vld [vmem:[%s3058 + $0x8] sm:$0xff]
    %v3061 = vld [vmem:[%s3058 + $0x10] sm:$0xff]
    %v3062 = vld [vmem:[%s3058 + $0x18] sm:$0xff]
    %v3063 = vld [vmem:[%s3058 + $0x20] sm:$0xff]
    %v3064 = vld [vmem:[%s3058 + $0x28] sm:$0xff]
    %v3065 = vld [vmem:[%s3058 + $0x30] sm:$0xff]
    %v3066 = vld [vmem:[%s3058 + $0x38] sm:$0xff]
    %v3067 = vld [vmem:[%s3058 + $0x40] sm:$0xff]
    %v3068 = vld [vmem:[%s3058 + $0x48] sm:$0xff]
    %v3069 = vld [vmem:[%s3058 + $0x50] sm:$0xff]
    %v3070 = vld [vmem:[%s3058 + $0x58] sm:$0xff]
    %v3071 = vld [vmem:[%s3058 + $0x60] sm:$0xff]
    %v3072 = vld [vmem:[%s3058 + $0x68] sm:$0xff]
    %v3073 = vld [vmem:[%s3058 + $0x70] sm:$0xff]
    %v3074 = vld [vmem:[%s3058 + $0x78] sm:$0xff]
    %v3075 = vpack.c.bf16 %v3060, %v3059
    %v3076 = vpack.c.bf16 %v3062, %v3061
    %v3077 = vpack.c.bf16 %v3064, %v3063
    %v3078 = vpack.c.bf16 %v3066, %v3065
    %v3079 = vpack.c.bf16 %v3068, %v3067
    %v3080 = vpack.c.bf16 %v3070, %v3069
    %v3081 = vpack.c.bf16 %v3072, %v3071
    %v3082 = vpack.c.bf16 %v3074, %v3073
    %s3083 = sadd.s32 %s45, 896
    %s3084 = scalar_lea.vmem %s0, %s3083
    %v3085 = vld [vmem:[%s3084] sm:$0xff]
    %v3086 = vld [vmem:[%s3084 + $0x8] sm:$0xff]
    %v3087 = vld [vmem:[%s3084 + $0x10] sm:$0xff]
    %v3088 = vld [vmem:[%s3084 + $0x18] sm:$0xff]
    %v3089 = vld [vmem:[%s3084 + $0x20] sm:$0xff]
    %v3090 = vld [vmem:[%s3084 + $0x28] sm:$0xff]
    %v3091 = vld [vmem:[%s3084 + $0x30] sm:$0xff]
    %v3092 = vld [vmem:[%s3084 + $0x38] sm:$0xff]
    %v3093 = vld [vmem:[%s3084 + $0x40] sm:$0xff]
    %v3094 = vld [vmem:[%s3084 + $0x48] sm:$0xff]
    %v3095 = vld [vmem:[%s3084 + $0x50] sm:$0xff]
    %v3096 = vld [vmem:[%s3084 + $0x58] sm:$0xff]
    %v3097 = vld [vmem:[%s3084 + $0x60] sm:$0xff]
    %v3098 = vld [vmem:[%s3084 + $0x68] sm:$0xff]
    %v3099 = vld [vmem:[%s3084 + $0x70] sm:$0xff]
    %v3100 = vld [vmem:[%s3084 + $0x78] sm:$0xff]
    %v3101 = vpack.c.bf16 %v3086, %v3085
    %v3102 = vpack.c.bf16 %v3088, %v3087
    %v3103 = vpack.c.bf16 %v3090, %v3089
    %v3104 = vpack.c.bf16 %v3092, %v3091
    %v3105 = vpack.c.bf16 %v3094, %v3093
    %v3106 = vpack.c.bf16 %v3096, %v3095
    %v3107 = vpack.c.bf16 %v3098, %v3097
    %v3108 = vpack.c.bf16 %v3100, %v3099
    %3117 = vrot.lane.b32.xlu0 %v3023, 16
    %v3118 = vpop.permute.xlu0 %3117
    %3119 = vrot.lane.b32.xlu0 %v3024, 16
    %v3120 = vpop.permute.xlu0 %3119
    %3121 = vrot.lane.b32.xlu0 %v3025, 16
    %v3122 = vpop.permute.xlu0 %3121
    %3123 = vrot.lane.b32.xlu0 %v3026, 16
    %v3124 = vpop.permute.xlu0 %3123
    %3125 = vrot.lane.b32.xlu0 %v3027, 16
    %v3126 = vpop.permute.xlu0 %3125
    %3127 = vrot.lane.b32.xlu0 %v3028, 16
    %v3128 = vpop.permute.xlu0 %3127
    %3129 = vrot.lane.b32.xlu0 %v3029, 16
    %v3130 = vpop.permute.xlu0 %3129
    %3131 = vrot.lane.b32.xlu0 %v3030, 16
    %v3132 = vpop.permute.xlu0 %3131
    %3141 = vrot.lane.b32.xlu0 %v3049, 32
    %v3142 = vpop.permute.xlu0 %3141
    %3143 = vrot.lane.b32.xlu0 %v3050, 32
    %v3144 = vpop.permute.xlu0 %3143
    %3145 = vrot.lane.b32.xlu0 %v3051, 32
    %v3146 = vpop.permute.xlu0 %3145
    %3147 = vrot.lane.b32.xlu0 %v3052, 32
    %v3148 = vpop.permute.xlu0 %3147
    %3149 = vrot.lane.b32.xlu0 %v3053, 32
    %v3150 = vpop.permute.xlu0 %3149
    %3151 = vrot.lane.b32.xlu0 %v3054, 32
    %v3152 = vpop.permute.xlu0 %3151
    %3153 = vrot.lane.b32.xlu0 %v3055, 32
    %v3154 = vpop.permute.xlu0 %3153
    %3155 = vrot.lane.b32.xlu0 %v3056, 32
    %v3156 = vpop.permute.xlu0 %3155
    %3165 = vrot.lane.b32.xlu0 %v3075, 48
    %v3166 = vpop.permute.xlu0 %3165
    %3167 = vrot.lane.b32.xlu0 %v3076, 48
    %v3168 = vpop.permute.xlu0 %3167
    %3169 = vrot.lane.b32.xlu0 %v3077, 48
    %v3170 = vpop.permute.xlu0 %3169
    %3171 = vrot.lane.b32.xlu0 %v3078, 48
    %v3172 = vpop.permute.xlu0 %3171
    %3173 = vrot.lane.b32.xlu0 %v3079, 48
    %v3174 = vpop.permute.xlu0 %3173
    %3175 = vrot.lane.b32.xlu0 %v3080, 48
    %v3176 = vpop.permute.xlu0 %3175
    %3177 = vrot.lane.b32.xlu0 %v3081, 48
    %v3178 = vpop.permute.xlu0 %3177
    %3179 = vrot.lane.b32.xlu0 %v3082, 48
    %v3180 = vpop.permute.xlu0 %3179
    %3189 = vrot.lane.b32.xlu0 %v3101, 64
    %v3190 = vpop.permute.xlu0 %3189
    %3191 = vrot.lane.b32.xlu0 %v3102, 64
    %v3192 = vpop.permute.xlu0 %3191
    %3193 = vrot.lane.b32.xlu0 %v3103, 64
    %v3194 = vpop.permute.xlu0 %3193
    %3195 = vrot.lane.b32.xlu0 %v3104, 64
    %v3196 = vpop.permute.xlu0 %3195
    %3197 = vrot.lane.b32.xlu0 %v3105, 64
    %v3198 = vpop.permute.xlu0 %3197
    %3199 = vrot.lane.b32.xlu0 %v3106, 64
    %v3200 = vpop.permute.xlu0 %3199
    %3201 = vrot.lane.b32.xlu0 %v3107, 64
    %v3202 = vpop.permute.xlu0 %3201
    %3203 = vrot.lane.b32.xlu0 %v3108, 64
    %v3204 = vpop.permute.xlu0 %3203
    %v3207 = vsel %vm271, %v2997, %v3118
    %v3210 = vsel %vm271, %v2998, %v3120
    %v3213 = vsel %vm271, %v2999, %v3122
    %v3216 = vsel %vm271, %v3000, %v3124
    %v3219 = vsel %vm271, %v3001, %v3126
    %v3222 = vsel %vm271, %v3002, %v3128
    %v3225 = vsel %vm271, %v3003, %v3130
    %v3228 = vsel %vm271, %v3004, %v3132
    %v3230 = vsel %vm296, %v3207, %v3142
    %v3232 = vsel %vm296, %v3210, %v3144
    %v3234 = vsel %vm296, %v3213, %v3146
    %v3236 = vsel %vm296, %v3216, %v3148
    %v3238 = vsel %vm296, %v3219, %v3150
    %v3240 = vsel %vm296, %v3222, %v3152
    %v3242 = vsel %vm296, %v3225, %v3154
    %v3244 = vsel %vm296, %v3228, %v3156
    %v3246 = vsel %vm313, %v3230, %v3166
    %v3248 = vsel %vm313, %v3232, %v3168
    %v3250 = vsel %vm313, %v3234, %v3170
    %v3252 = vsel %vm313, %v3236, %v3172
    %v3254 = vsel %vm313, %v3238, %v3174
    %v3256 = vsel %vm313, %v3240, %v3176
    %v3258 = vsel %vm313, %v3242, %v3178
    %v3260 = vsel %vm313, %v3244, %v3180
    %v3262 = vsel %vm330, %v3246, %v3190
    %v3264 = vsel %vm330, %v3248, %v3192
    %v3266 = vsel %vm330, %v3250, %v3194
    %v3268 = vsel %vm330, %v3252, %v3196
    %v3270 = vsel %vm330, %v3254, %v3198
    %v3272 = vsel %vm330, %v3256, %v3200
    %v3274 = vsel %vm330, %v3258, %v3202
    %v3276 = vsel %vm330, %v3260, %v3204
    %v3277 = vld [vmem:[%s1] sm:$0xf]
    %v3278 = vld [vmem:[%s1 + $0x4] sm:$0xf]
    %v3279 = vld [vmem:[%s1 + $0x8] sm:$0xf]
    %v3280 = vld [vmem:[%s1 + $0xc] sm:$0xf]
    %v3281 = vld [vmem:[%s1 + $0x10] sm:$0xf]
    %v3282 = vld [vmem:[%s1 + $0x14] sm:$0xf]
    %v3283 = vld [vmem:[%s1 + $0x18] sm:$0xf]
    %v3284 = vld [vmem:[%s1 + $0x1c] sm:$0xf]
    %v3285 = vld [vmem:[%s1 + $0x20] sm:$0xf]
    %v3286 = vld [vmem:[%s1 + $0x24] sm:$0xf]
    %v3287 = vld [vmem:[%s2] sm:$0x1]
    %v3289 = vlaneseq
    %v3290 = vshrl.u32 %v3289, 7
    %v3291 = vsub.s32 0, %v3290
    %v3292 = vrot.slane %v3287, %v3291
    %v3304 = vunpack.c.l.b16 %v3277
    %v3305 = vunpack.c.l.b16 %v3278
    %v3306 = vunpack.c.l.b16 %v3279
    %v3307 = vunpack.c.l.b16 %v3280
    %v3308 = vunpack.c.l.b16 %v3281
    %v3309 = vunpack.c.l.b16 %v3282
    %v3310 = vunpack.c.l.b16 %v3283
    %v3311 = vunpack.c.l.b16 %v3284
    %v3312 = vunpack.c.l.b16 %v3285
    %v3313 = vunpack.c.l.b16 %v3286
    %v3314 = vpack.c.b16 %v3305, %v3304
    %v3315 = vpack.c.b16 %v3307, %v3306
    %v3316 = vpack.c.b16 %v3309, %v3308
    %v3317 = vpack.c.b16 %v3311, %v3310
    %v3318 = vpack.c.b16 %v3313, %v3312
    %v3324 = vsel %vm394, %v3262, 0
    %v3326 = vsel %vm394, %v3264, 0
    %v3328 = vsel %vm394, %v3266, 0
    %v3330 = vsel %vm394, %v3268, 0
    %v3332 = vsel %vm394, %v3270, 0
    %v3334 = vsel %vm394, %v3272, 0
    %v3336 = vsel %vm394, %v3274, 0
    %v3338 = vsel %vm394, %v3276, 0
    %3340 = vmatprep.subr.bf16.mxu0 0
    %3341 = vmatpush1.bf16.msra.mxu0 %v3314
    %3342 = vmatprep.subr.bf16.mxu0 0
    %3343 = vmatpush1.bf16.msra.mxu0 %v3315
    %3344 = vmatprep.subr.bf16.mxu0 0
    %3345 = vmatpush1.bf16.msra.mxu0 %v3316
    %3346 = vmatprep.subr.bf16.mxu0 0
    %3347 = vmatpush1.bf16.msra.mxu0 %v3317
    %3348 = vmatprep.subr.bf16.mxu0 0
    %3349 = vmatpush1.bf16.msra.mxu0 %v3318
    %3350 = vmatprep.subr.bf16.mxu0 0
    %3351 = vmatpush1.bf16.msra.mxu0 0
    %3352 = vmatprep.subr.bf16.mxu0 0
    %3353 = vmatpush1.bf16.msra.mxu0 0
    %3354 = vmatprep.subr.bf16.mxu0 0
    %3355 = vmatpush1.bf16.msra.mxu0 0
    %3356 = vmatprep.subr.bf16.mxu0 0
    %3357 = vmatpush1.bf16.msra.mxu0 0
    %3358 = vmatprep.subr.bf16.mxu0 0
    %3359 = vmatpush1.bf16.msra.mxu0 0
    %3360 = vmatprep.subr.bf16.mxu0 0
    %3361 = vmatpush1.bf16.msra.mxu0 0
    %3362 = vmatprep.subr.bf16.mxu0 0
    %3363 = vmatpush1.bf16.msra.mxu0 0
    %3364 = vmatprep.subr.bf16.mxu0 0
    %3365 = vmatpush1.bf16.msra.mxu0 0
    %3366 = vmatprep.subr.bf16.mxu0 0
    %3367 = vmatpush1.bf16.msra.mxu0 0
    %3368 = vmatprep.subr.bf16.mxu0 0
    %3369 = vmatpush1.bf16.msra.mxu0 0
    %3370 = vmatprep.subr.bf16.mxu0 0
    %3371 = vmatpush1.bf16.msra.mxu0 0
    %3372 = vmatprep.mubr.bf16.mxu0 0
    %3373 = vmatmul.mubr.bf16.gmra.mrb[0].mxu0 %v3324
    %v3374 = vpop.f32.mrb[0].mxu0
    %v3375 = vadd.f32 %v3292, %v3374
    %v3376 = vpop.f32.mrb[0].mxu0
    %v3377 = vpop.f32.mrb[0].mxu0
    %v3378 = vadd.f32 %v3292, %v3377
    %v3379 = vpop.f32.mrb[0].mxu0
    %3380 = vmatprep.mubr.bf16.mxu0 0
    %3381 = vmatmul.mubr.bf16.gmra.mrb[0].mxu0 %v3326
    %v3382 = vpop.f32.mrb[0].mxu0
    %v3383 = vadd.f32 %v3292, %v3382
    %v3384 = vpop.f32.mrb[0].mxu0
    %v3385 = vpop.f32.mrb[0].mxu0
    %v3386 = vadd.f32 %v3292, %v3385
    %v3387 = vpop.f32.mrb[0].mxu0
    %3388 = vmatprep.mubr.bf16.mxu0 0
    %3389 = vmatmul.mubr.bf16.gmra.mrb[0].mxu0 %v3328
    %v3390 = vpop.f32.mrb[0].mxu0
    %v3391 = vadd.f32 %v3292, %v3390
    %v3392 = vpop.f32.mrb[0].mxu0
    %v3393 = vpop.f32.mrb[0].mxu0
    %v3394 = vadd.f32 %v3292, %v3393
    %v3395 = vpop.f32.mrb[0].mxu0
    %3396 = vmatprep.mubr.bf16.mxu0 0
    %3397 = vmatmul.mubr.bf16.gmra.mrb[0].mxu0 %v3330
    %v3398 = vpop.f32.mrb[0].mxu0
    %v3399 = vadd.f32 %v3292, %v3398
    %v3400 = vpop.f32.mrb[0].mxu0
    %v3401 = vpop.f32.mrb[0].mxu0
    %v3402 = vadd.f32 %v3292, %v3401
    %v3403 = vpop.f32.mrb[0].mxu0
    %3404 = vmatprep.mubr.bf16.mxu0 0
    %3405 = vmatmul.mubr.bf16.gmra.mrb[0].mxu0 %v3332
    %v3406 = vpop.f32.mrb[0].mxu0
    %v3407 = vadd.f32 %v3292, %v3406
    %v3408 = vpop.f32.mrb[0].mxu0
    %v3409 = vpop.f32.mrb[0].mxu0
    %v3410 = vadd.f32 %v3292, %v3409
    %v3411 = vpop.f32.mrb[0].mxu0
    %3412 = vmatprep.mubr.bf16.mxu0 0
    %3413 = vmatmul.mubr.bf16.gmra.mrb[0].mxu0 %v3334
    %v3414 = vpop.f32.mrb[0].mxu0
    %v3415 = vadd.f32 %v3292, %v3414
    %v3416 = vpop.f32.mrb[0].mxu0
    %v3417 = vpop.f32.mrb[0].mxu0
    %v3418 = vadd.f32 %v3292, %v3417
    %v3419 = vpop.f32.mrb[0].mxu0
    %3420 = vmatprep.mubr.bf16.mxu0 0
    %3421 = vmatmul.mubr.bf16.gmra.mrb[0].mxu0 %v3336
    %v3422 = vpop.f32.mrb[0].mxu0
    %v3423 = vadd.f32 %v3292, %v3422
    %v3424 = vpop.f32.mrb[0].mxu0
    %v3425 = vpop.f32.mrb[0].mxu0
    %v3426 = vadd.f32 %v3292, %v3425
    %v3427 = vpop.f32.mrb[0].mxu0
    %3428 = vmatprep.mubr.bf16.mxu0 0
    %3429 = vmatmul.mubr.bf16.gmra.mrb[0].mxu0 %v3338
    %v3430 = vpop.f32.mrb[0].mxu0
    %v3431 = vadd.f32 %v3292, %v3430
    %v3432 = vpop.f32.mrb[0].mxu0
    %v3433 = vpop.f32.mrb[0].mxu0
    %v3434 = vadd.f32 %v3292, %v3433
    %v3435 = vpop.f32.mrb[0].mxu0
    %3436 = vdwg.mxu0
    %v3437 = vmax.f32 %v3375, 0.0
    %v3438 = vmax.f32 %v3378, 0.0
    %v3439 = vmax.f32 %v3383, 0.0
    %v3440 = vmax.f32 %v3386, 0.0
    %v3441 = vmax.f32 %v3391, 0.0
    %v3442 = vmax.f32 %v3394, 0.0
    %v3443 = vmax.f32 %v3399, 0.0
    %v3444 = vmax.f32 %v3402, 0.0
    %v3445 = vmax.f32 %v3407, 0.0
    %v3446 = vmax.f32 %v3410, 0.0
    %v3447 = vmax.f32 %v3415, 0.0
    %v3448 = vmax.f32 %v3418, 0.0
    %v3449 = vmax.f32 %v3423, 0.0
    %v3450 = vmax.f32 %v3426, 0.0
    %v3451 = vmax.f32 %v3431, 0.0
    %v3452 = vmax.f32 %v3434, 0.0
    %3453 = vst.msk [vmem:[#allocation2 + $0x300] sm:$0xff] %vm524, %v3437
    %3454 = vst.msk [vmem:[#allocation2 + $0x308] sm:$0xff] %vm524, %v3438
    %3455 = vst.msk [vmem:[#allocation2 + $0x310] sm:$0xff] %vm524, %v3439
    %3456 = vst.msk [vmem:[#allocation2 + $0x318] sm:$0xff] %vm524, %v3440
    %3457 = vst.msk [vmem:[#allocation2 + $0x320] sm:$0xff] %vm524, %v3441
    %3458 = vst.msk [vmem:[#allocation2 + $0x328] sm:$0xff] %vm524, %v3442
    %3459 = vst.msk [vmem:[#allocation2 + $0x330] sm:$0xff] %vm524, %v3443
    %3460 = vst.msk [vmem:[#allocation2 + $0x338] sm:$0xff] %vm524, %v3444
    %3461 = vst.msk [vmem:[#allocation2 + $0x340] sm:$0xff] %vm524, %v3445
    %3462 = vst.msk [vmem:[#allocation2 + $0x348] sm:$0xff] %vm524, %v3446
    %3463 = vst.msk [vmem:[#allocation2 + $0x350] sm:$0xff] %vm524, %v3447
    %3464 = vst.msk [vmem:[#allocation2 + $0x358] sm:$0xff] %vm524, %v3448
    %3465 = vst.msk [vmem:[#allocation2 + $0x360] sm:$0xff] %vm524, %v3449
    %3466 = vst.msk [vmem:[#allocation2 + $0x368] sm:$0xff] %vm524, %v3450
    %3467 = vst.msk [vmem:[#allocation2 + $0x370] sm:$0xff] %vm524, %v3451
    %3468 = vst.msk [vmem:[#allocation2 + $0x378] sm:$0xff] %vm524, %v3452
    %v3469 = vld [vmem:[#allocation2] ss:$2 sm:$0xff]
    %s3470 = scalar_lea.vmem [#allocation2], 16
    %v3471 = vld [vmem:[%s3470] ss:$2 sm:$0x3f]
    %s3472 = scalar_lea.vmem [#allocation2], 1
    %v3473 = vld [vmem:[%s3472] ss:$2 sm:$0xff]
    %s3474 = scalar_lea.vmem [#allocation2], 17
    %v3475 = vld [vmem:[%s3474] ss:$2 sm:$0x3f]
    %s3476 = scalar_lea.vmem [#allocation2], 32
    %v3477 = vld [vmem:[%s3476] ss:$2 sm:$0xff]
    %s3478 = scalar_lea.vmem [#allocation2], 48
    %v3479 = vld [vmem:[%s3478] ss:$2 sm:$0x3f]
    %s3480 = scalar_lea.vmem [#allocation2], 33
    %v3481 = vld [vmem:[%s3480] ss:$2 sm:$0xff]
    %s3482 = scalar_lea.vmem [#allocation2], 49
    %v3483 = vld [vmem:[%s3482] ss:$2 sm:$0x3f]
    %v3484 = vmax.f32 %v3469, %v3473
    %v3485 = vmax.f32 %v3471, %v3475
    %v3486 = vmax.f32 %v3477, %v3481
    %v3487 = vmax.f32 %v3479, %v3483
    %v3488 = vmax.f32 %v3484, %v3486
    %v3489 = vmax.f32 %v3485, %v3487
    %3490 = vst.msk [vmem:[#allocation3] sm:$0xff] %vm524, %v3488
    %vm3491 = vcmask 62464
    %3492 = vst.msk [vmem:[#allocation3 + $0x8] sm:$0x3f] %vm3491, %v3489
    %s3493 = scalar_lea.vmem [#allocation2], 64
    %v3494 = vld [vmem:[%s3493] ss:$2 sm:$0xff]
    %s3495 = scalar_lea.vmem [#allocation2], 80
    %v3496 = vld [vmem:[%s3495] ss:$2 sm:$0x3f]
    %s3497 = scalar_lea.vmem [#allocation2], 65
    %v3498 = vld [vmem:[%s3497] ss:$2 sm:$0xff]
    %s3499 = scalar_lea.vmem [#allocation2], 81
    %v3500 = vld [vmem:[%s3499] ss:$2 sm:$0x3f]
    %s3501 = scalar_lea.vmem [#allocation2], 96
    %v3502 = vld [vmem:[%s3501] ss:$2 sm:$0xff]
    %s3503 = scalar_lea.vmem [#allocation2], 112
    %v3504 = vld [vmem:[%s3503] ss:$2 sm:$0x3f]
    %s3505 = scalar_lea.vmem [#allocation2], 97
    %v3506 = vld [vmem:[%s3505] ss:$2 sm:$0xff]
    %s3507 = scalar_lea.vmem [#allocation2], 113
    %v3508 = vld [vmem:[%s3507] ss:$2 sm:$0x3f]
    %v3509 = vmax.f32 %v3494, %v3498
    %v3510 = vmax.f32 %v3496, %v3500
    %v3511 = vmax.f32 %v3502, %v3506
    %v3512 = vmax.f32 %v3504, %v3508
    %v3513 = vmax.f32 %v3509, %v3511
    %v3514 = vmax.f32 %v3510, %v3512
    %3515 = vst.msk [vmem:[#allocation3 + $0xe] sm:$0xff] %vm524, %v3513
    %3516 = vst.msk [vmem:[#allocation3 + $0x16] sm:$0x3f] %vm3491, %v3514
    %s3517 = scalar_lea.vmem [#allocation2], 128
    %v3518 = vld [vmem:[%s3517] ss:$2 sm:$0xff]
    %s3519 = scalar_lea.vmem [#allocation2], 144
    %v3520 = vld [vmem:[%s3519] ss:$2 sm:$0x3f]
    %s3521 = scalar_lea.vmem [#allocation2], 129
    %v3522 = vld [vmem:[%s3521] ss:$2 sm:$0xff]
    %s3523 = scalar_lea.vmem [#allocation2], 145
    %v3524 = vld [vmem:[%s3523] ss:$2 sm:$0x3f]
    %s3525 = scalar_lea.vmem [#allocation2], 160
    %v3526 = vld [vmem:[%s3525] ss:$2 sm:$0xff]
    %s3527 = scalar_lea.vmem [#allocation2], 176
    %v3528 = vld [vmem:[%s3527] ss:$2 sm:$0x3f]
    %s3529 = scalar_lea.vmem [#allocation2], 161
    %v3530 = vld [vmem:[%s3529] ss:$2 sm:$0xff]
    %s3531 = scalar_lea.vmem [#allocation2], 177
    %v3532 = vld [vmem:[%s3531] ss:$2 sm:$0x3f]
    %v3533 = vmax.f32 %v3518, %v3522
    %v3534 = vmax.f32 %v3520, %v3524
    %v3535 = vmax.f32 %v3526, %v3530
    %v3536 = vmax.f32 %v3528, %v3532
    %v3537 = vmax.f32 %v3533, %v3535
    %v3538 = vmax.f32 %v3534, %v3536
    %3539 = vst.msk [vmem:[#allocation3 + $0x1c] sm:$0xff] %vm524, %v3537
    %3540 = vst.msk [vmem:[#allocation3 + $0x24] sm:$0x3f] %vm3491, %v3538
    %s3541 = scalar_lea.vmem [#allocation2], 192
    %v3542 = vld [vmem:[%s3541] ss:$2 sm:$0xff]
    %s3543 = scalar_lea.vmem [#allocation2], 208
    %v3544 = vld [vmem:[%s3543] ss:$2 sm:$0x3f]
    %s3545 = scalar_lea.vmem [#allocation2], 193
    %v3546 = vld [vmem:[%s3545] ss:$2 sm:$0xff]
    %s3547 = scalar_lea.vmem [#allocation2], 209
    %v3548 = vld [vmem:[%s3547] ss:$2 sm:$0x3f]
    %s3549 = scalar_lea.vmem [#allocation2], 224
    %v3550 = vld [vmem:[%s3549] ss:$2 sm:$0xff]
    %s3551 = scalar_lea.vmem [#allocation2], 240
    %v3552 = vld [vmem:[%s3551] ss:$2 sm:$0x3f]
    %s3553 = scalar_lea.vmem [#allocation2], 225
    %v3554 = vld [vmem:[%s3553] ss:$2 sm:$0xff]
    %s3555 = scalar_lea.vmem [#allocation2], 241
    %v3556 = vld [vmem:[%s3555] ss:$2 sm:$0x3f]
    %v3557 = vmax.f32 %v3542, %v3546
    %v3558 = vmax.f32 %v3544, %v3548
    %v3559 = vmax.f32 %v3550, %v3554
    %v3560 = vmax.f32 %v3552, %v3556
    %v3561 = vmax.f32 %v3557, %v3559
    %v3562 = vmax.f32 %v3558, %v3560
    %3563 = vst.msk [vmem:[#allocation3 + $0x2a] sm:$0xff] %vm524, %v3561
    %3564 = vst.msk [vmem:[#allocation3 + $0x32] sm:$0x3f] %vm3491, %v3562
    %s3565 = scalar_lea.vmem [#allocation2], 256
    %v3566 = vld [vmem:[%s3565] ss:$2 sm:$0xff]
    %s3567 = scalar_lea.vmem [#allocation2], 272
    %v3568 = vld [vmem:[%s3567] ss:$2 sm:$0x3f]
    %s3569 = scalar_lea.vmem [#allocation2], 257
    %v3570 = vld [vmem:[%s3569] ss:$2 sm:$0xff]
    %s3571 = scalar_lea.vmem [#allocation2], 273
    %v3572 = vld [vmem:[%s3571] ss:$2 sm:$0x3f]
    %s3573 = scalar_lea.vmem [#allocation2], 288
    %v3574 = vld [vmem:[%s3573] ss:$2 sm:$0xff]
    %s3575 = scalar_lea.vmem [#allocation2], 304
    %v3576 = vld [vmem:[%s3575] ss:$2 sm:$0x3f]
    %s3577 = scalar_lea.vmem [#allocation2], 289
    %v3578 = vld [vmem:[%s3577] ss:$2 sm:$0xff]
    %s3579 = scalar_lea.vmem [#allocation2], 305
    %v3580 = vld [vmem:[%s3579] ss:$2 sm:$0x3f]
    %v3581 = vmax.f32 %v3566, %v3570
    %v3582 = vmax.f32 %v3568, %v3572
    %v3583 = vmax.f32 %v3574, %v3578
    %v3584 = vmax.f32 %v3576, %v3580
    %v3585 = vmax.f32 %v3581, %v3583
    %v3586 = vmax.f32 %v3582, %v3584
    %3587 = vst.msk [vmem:[#allocation3 + $0x38] sm:$0xff] %vm524, %v3585
    %3588 = vst.msk [vmem:[#allocation3 + $0x40] sm:$0x3f] %vm3491, %v3586
    %s3589 = scalar_lea.vmem [#allocation2], 320
    %v3590 = vld [vmem:[%s3589] ss:$2 sm:$0xff]
    %s3591 = scalar_lea.vmem [#allocation2], 336
    %v3592 = vld [vmem:[%s3591] ss:$2 sm:$0x3f]
    %s3593 = scalar_lea.vmem [#allocation2], 321
    %v3594 = vld [vmem:[%s3593] ss:$2 sm:$0xff]
    %s3595 = scalar_lea.vmem [#allocation2], 337
    %v3596 = vld [vmem:[%s3595] ss:$2 sm:$0x3f]
    %s3597 = scalar_lea.vmem [#allocation2], 352
    %v3598 = vld [vmem:[%s3597] ss:$2 sm:$0xff]
    %s3599 = scalar_lea.vmem [#allocation2], 368
    %v3600 = vld [vmem:[%s3599] ss:$2 sm:$0x3f]
    %s3601 = scalar_lea.vmem [#allocation2], 353
    %v3602 = vld [vmem:[%s3601] ss:$2 sm:$0xff]
    %s3603 = scalar_lea.vmem [#allocation2], 369
    %v3604 = vld [vmem:[%s3603] ss:$2 sm:$0x3f]
    %v3605 = vmax.f32 %v3590, %v3594
    %v3606 = vmax.f32 %v3592, %v3596
    %v3607 = vmax.f32 %v3598, %v3602
    %v3608 = vmax.f32 %v3600, %v3604
    %v3609 = vmax.f32 %v3605, %v3607
    %v3610 = vmax.f32 %v3606, %v3608
    %3611 = vst.msk [vmem:[#allocation3 + $0x46] sm:$0xff] %vm524, %v3609
    %3612 = vst.msk [vmem:[#allocation3 + $0x4e] sm:$0x3f] %vm3491, %v3610
    %s3613 = scalar_lea.vmem [#allocation2], 384
    %v3614 = vld [vmem:[%s3613] ss:$2 sm:$0xff]
    %s3615 = scalar_lea.vmem [#allocation2], 400
    %v3616 = vld [vmem:[%s3615] ss:$2 sm:$0x3f]
    %s3617 = scalar_lea.vmem [#allocation2], 385
    %v3618 = vld [vmem:[%s3617] ss:$2 sm:$0xff]
    %s3619 = scalar_lea.vmem [#allocation2], 401
    %v3620 = vld [vmem:[%s3619] ss:$2 sm:$0x3f]
    %s3621 = scalar_lea.vmem [#allocation2], 416
    %v3622 = vld [vmem:[%s3621] ss:$2 sm:$0xff]
    %s3623 = scalar_lea.vmem [#allocation2], 432
    %v3624 = vld [vmem:[%s3623] ss:$2 sm:$0x3f]
    %s3625 = scalar_lea.vmem [#allocation2], 417
    %v3626 = vld [vmem:[%s3625] ss:$2 sm:$0xff]
    %s3627 = scalar_lea.vmem [#allocation2], 433
    %v3628 = vld [vmem:[%s3627] ss:$2 sm:$0x3f]
    %v3629 = vmax.f32 %v3614, %v3618
    %v3630 = vmax.f32 %v3616, %v3620
    %v3631 = vmax.f32 %v3622, %v3626
    %v3632 = vmax.f32 %v3624, %v3628
    %v3633 = vmax.f32 %v3629, %v3631
    %v3634 = vmax.f32 %v3630, %v3632
    %3635 = vst.msk [vmem:[#allocation3 + $0x54] sm:$0xff] %vm524, %v3633
    %3636 = vst.msk [vmem:[#allocation3 + $0x5c] sm:$0x3f] %vm3491, %v3634
    %s3637 = scalar_lea.vmem [#allocation2], 448
    %v3638 = vld [vmem:[%s3637] ss:$2 sm:$0xff]
    %s3639 = scalar_lea.vmem [#allocation2], 464
    %v3640 = vld [vmem:[%s3639] ss:$2 sm:$0x3f]
    %s3641 = scalar_lea.vmem [#allocation2], 449
    %v3642 = vld [vmem:[%s3641] ss:$2 sm:$0xff]
    %s3643 = scalar_lea.vmem [#allocation2], 465
    %v3644 = vld [vmem:[%s3643] ss:$2 sm:$0x3f]
    %s3645 = scalar_lea.vmem [#allocation2], 480
    %v3646 = vld [vmem:[%s3645] ss:$2 sm:$0xff]
    %s3647 = scalar_lea.vmem [#allocation2], 496
    %v3648 = vld [vmem:[%s3647] ss:$2 sm:$0x3f]
    %s3649 = scalar_lea.vmem [#allocation2], 481
    %v3650 = vld [vmem:[%s3649] ss:$2 sm:$0xff]
    %s3651 = scalar_lea.vmem [#allocation2], 497
    %v3652 = vld [vmem:[%s3651] ss:$2 sm:$0x3f]
    %v3653 = vmax.f32 %v3638, %v3642
    %v3654 = vmax.f32 %v3640, %v3644
    %v3655 = vmax.f32 %v3646, %v3650
    %v3656 = vmax.f32 %v3648, %v3652
    %v3657 = vmax.f32 %v3653, %v3655
    %v3658 = vmax.f32 %v3654, %v3656
    %3659 = vst.msk [vmem:[#allocation3 + $0x62] sm:$0xff] %vm524, %v3657
    %3660 = vst.msk [vmem:[#allocation3 + $0x6a] sm:$0x3f] %vm3491, %v3658
    %s3661 = scalar_lea.vmem [#allocation2], 512
    %v3662 = vld [vmem:[%s3661] ss:$2 sm:$0xff]
    %s3663 = scalar_lea.vmem [#allocation2], 528
    %v3664 = vld [vmem:[%s3663] ss:$2 sm:$0x3f]
    %s3665 = scalar_lea.vmem [#allocation2], 513
    %v3666 = vld [vmem:[%s3665] ss:$2 sm:$0xff]
    %s3667 = scalar_lea.vmem [#allocation2], 529
    %v3668 = vld [vmem:[%s3667] ss:$2 sm:$0x3f]
    %s3669 = scalar_lea.vmem [#allocation2], 544
    %v3670 = vld [vmem:[%s3669] ss:$2 sm:$0xff]
    %s3671 = scalar_lea.vmem [#allocation2], 560
    %v3672 = vld [vmem:[%s3671] ss:$2 sm:$0x3f]
    %s3673 = scalar_lea.vmem [#allocation2], 545
    %v3674 = vld [vmem:[%s3673] ss:$2 sm:$0xff]
    %s3675 = scalar_lea.vmem [#allocation2], 561
    %v3676 = vld [vmem:[%s3675] ss:$2 sm:$0x3f]
    %v3677 = vmax.f32 %v3662, %v3666
    %v3678 = vmax.f32 %v3664, %v3668
    %v3679 = vmax.f32 %v3670, %v3674
    %v3680 = vmax.f32 %v3672, %v3676
    %v3681 = vmax.f32 %v3677, %v3679
    %v3682 = vmax.f32 %v3678, %v3680
    %3683 = vst.msk [vmem:[#allocation3 + $0x70] sm:$0xff] %vm524, %v3681
    %3684 = vst.msk [vmem:[#allocation3 + $0x78] sm:$0x3f] %vm3491, %v3682
    %s3685 = scalar_lea.vmem [#allocation2], 576
    %v3686 = vld [vmem:[%s3685] ss:$2 sm:$0xff]
    %s3687 = scalar_lea.vmem [#allocation2], 592
    %v3688 = vld [vmem:[%s3687] ss:$2 sm:$0x3f]
    %s3689 = scalar_lea.vmem [#allocation2], 577
    %v3690 = vld [vmem:[%s3689] ss:$2 sm:$0xff]
    %s3691 = scalar_lea.vmem [#allocation2], 593
    %v3692 = vld [vmem:[%s3691] ss:$2 sm:$0x3f]
    %s3693 = scalar_lea.vmem [#allocation2], 608
    %v3694 = vld [vmem:[%s3693] ss:$2 sm:$0xff]
    %s3695 = scalar_lea.vmem [#allocation2], 624
    %v3696 = vld [vmem:[%s3695] ss:$2 sm:$0x3f]
    %s3697 = scalar_lea.vmem [#allocation2], 609
    %v3698 = vld [vmem:[%s3697] ss:$2 sm:$0xff]
    %s3699 = scalar_lea.vmem [#allocation2], 625
    %v3700 = vld [vmem:[%s3699] ss:$2 sm:$0x3f]
    %v3701 = vmax.f32 %v3686, %v3690
    %v3702 = vmax.f32 %v3688, %v3692
    %v3703 = vmax.f32 %v3694, %v3698
    %v3704 = vmax.f32 %v3696, %v3700
    %v3705 = vmax.f32 %v3701, %v3703
    %v3706 = vmax.f32 %v3702, %v3704
    %3707 = vst.msk [vmem:[#allocation3 + $0x7e] sm:$0xff] %vm524, %v3705
    %3708 = vst.msk [vmem:[#allocation3 + $0x86] sm:$0x3f] %vm3491, %v3706
    %s3709 = scalar_lea.vmem [#allocation2], 640
    %v3710 = vld [vmem:[%s3709] ss:$2 sm:$0xff]
    %s3711 = scalar_lea.vmem [#allocation2], 656
    %v3712 = vld [vmem:[%s3711] ss:$2 sm:$0x3f]
    %s3713 = scalar_lea.vmem [#allocation2], 641
    %v3714 = vld [vmem:[%s3713] ss:$2 sm:$0xff]
    %s3715 = scalar_lea.vmem [#allocation2], 657
    %v3716 = vld [vmem:[%s3715] ss:$2 sm:$0x3f]
    %s3717 = scalar_lea.vmem [#allocation2], 672
    %v3718 = vld [vmem:[%s3717] ss:$2 sm:$0xff]
    %s3719 = scalar_lea.vmem [#allocation2], 688
    %v3720 = vld [vmem:[%s3719] ss:$2 sm:$0x3f]
    %s3721 = scalar_lea.vmem [#allocation2], 673
    %v3722 = vld [vmem:[%s3721] ss:$2 sm:$0xff]
    %s3723 = scalar_lea.vmem [#allocation2], 689
    %v3724 = vld [vmem:[%s3723] ss:$2 sm:$0x3f]
    %v3725 = vmax.f32 %v3710, %v3714
    %v3726 = vmax.f32 %v3712, %v3716
    %v3727 = vmax.f32 %v3718, %v3722
    %v3728 = vmax.f32 %v3720, %v3724
    %v3729 = vmax.f32 %v3725, %v3727
    %v3730 = vmax.f32 %v3726, %v3728
    %3731 = vst.msk [vmem:[#allocation3 + $0x8c] sm:$0xff] %vm524, %v3729
    %3732 = vst.msk [vmem:[#allocation3 + $0x94] sm:$0x3f] %vm3491, %v3730
    %s3733 = scalar_lea.vmem [#allocation2], 704
    %v3734 = vld [vmem:[%s3733] ss:$2 sm:$0xff]
    %s3735 = scalar_lea.vmem [#allocation2], 720
    %v3736 = vld [vmem:[%s3735] ss:$2 sm:$0x3f]
    %s3737 = scalar_lea.vmem [#allocation2], 705
    %v3738 = vld [vmem:[%s3737] ss:$2 sm:$0xff]
    %s3739 = scalar_lea.vmem [#allocation2], 721
    %v3740 = vld [vmem:[%s3739] ss:$2 sm:$0x3f]
    %s3741 = scalar_lea.vmem [#allocation2], 736
    %v3742 = vld [vmem:[%s3741] ss:$2 sm:$0xff]
    %s3743 = scalar_lea.vmem [#allocation2], 752
    %v3744 = vld [vmem:[%s3743] ss:$2 sm:$0x3f]
    %s3745 = scalar_lea.vmem [#allocation2], 737
    %v3746 = vld [vmem:[%s3745] ss:$2 sm:$0xff]
    %s3747 = scalar_lea.vmem [#allocation2], 753
    %v3748 = vld [vmem:[%s3747] ss:$2 sm:$0x3f]
    %v3749 = vmax.f32 %v3734, %v3738
    %v3750 = vmax.f32 %v3736, %v3740
    %v3751 = vmax.f32 %v3742, %v3746
    %v3752 = vmax.f32 %v3744, %v3748
    %v3753 = vmax.f32 %v3749, %v3751
    %v3754 = vmax.f32 %v3750, %v3752
    %3755 = vst.msk [vmem:[#allocation3 + $0x9a] sm:$0xff] %vm524, %v3753
    %3756 = vst.msk [vmem:[#allocation3 + $0xa2] sm:$0x3f] %vm3491, %v3754
    %s3757 = scalar_lea.vmem [#allocation2], 768
    %v3758 = vld [vmem:[%s3757] ss:$2 sm:$0xff]
    %s3759 = scalar_lea.vmem [#allocation2], 784
    %v3760 = vld [vmem:[%s3759] ss:$2 sm:$0x3f]
    %s3761 = scalar_lea.vmem [#allocation2], 769
    %v3762 = vld [vmem:[%s3761] ss:$2 sm:$0xff]
    %s3763 = scalar_lea.vmem [#allocation2], 785
    %v3764 = vld [vmem:[%s3763] ss:$2 sm:$0x3f]
    %s3765 = scalar_lea.vmem [#allocation2], 800
    %v3766 = vld [vmem:[%s3765] ss:$2 sm:$0xff]
    %s3767 = scalar_lea.vmem [#allocation2], 816
    %v3768 = vld [vmem:[%s3767] ss:$2 sm:$0x3f]
    %s3769 = scalar_lea.vmem [#allocation2], 801
    %v3770 = vld [vmem:[%s3769] ss:$2 sm:$0xff]
    %s3771 = scalar_lea.vmem [#allocation2], 817
    %v3772 = vld [vmem:[%s3771] ss:$2 sm:$0x3f]
    %v3773 = vmax.f32 %v3758, %v3762
    %v3774 = vmax.f32 %v3760, %v3764
    %v3775 = vmax.f32 %v3766, %v3770
    %v3776 = vmax.f32 %v3768, %v3772
    %v3777 = vmax.f32 %v3773, %v3775
    %v3778 = vmax.f32 %v3774, %v3776
    %3779 = vst.msk [vmem:[#allocation3 + $0xa8] sm:$0xff] %vm524, %v3777
    %3780 = vst.msk [vmem:[#allocation3 + $0xb0] sm:$0x3f] %vm3491, %v3778
    %s3781 = scalar_lea.vmem [#allocation2], 832
    %v3782 = vld [vmem:[%s3781] ss:$2 sm:$0xff]
    %s3783 = scalar_lea.vmem [#allocation2], 848
    %v3784 = vld [vmem:[%s3783] ss:$2 sm:$0x3f]
    %s3785 = scalar_lea.vmem [#allocation2], 833
    %v3786 = vld [vmem:[%s3785] ss:$2 sm:$0xff]
    %s3787 = scalar_lea.vmem [#allocation2], 849
    %v3788 = vld [vmem:[%s3787] ss:$2 sm:$0x3f]
    %s3789 = scalar_lea.vmem [#allocation2], 864
    %v3790 = vld [vmem:[%s3789] ss:$2 sm:$0xff]
    %s3791 = scalar_lea.vmem [#allocation2], 880
    %v3792 = vld [vmem:[%s3791] ss:$2 sm:$0x3f]
    %s3793 = scalar_lea.vmem [#allocation2], 865
    %v3794 = vld [vmem:[%s3793] ss:$2 sm:$0xff]
    %s3795 = scalar_lea.vmem [#allocation2], 881
    %v3796 = vld [vmem:[%s3795] ss:$2 sm:$0x3f]
    %v3797 = vmax.f32 %v3782, %v3786
    %v3798 = vmax.f32 %v3784, %v3788
    %v3799 = vmax.f32 %v3790, %v3794
    %v3800 = vmax.f32 %v3792, %v3796
    %v3801 = vmax.f32 %v3797, %v3799
    %v3802 = vmax.f32 %v3798, %v3800
    %3803 = vst.msk [vmem:[#allocation3 + $0xb6] sm:$0xff] %vm524, %v3801
    %3804 = vst.msk [vmem:[#allocation3 + $0xbe] sm:$0x3f] %vm3491, %v3802
    %v3805 = vld [vmem:[#allocation3] sm:$0xff]
    %v3806 = vld [vmem:[#allocation3 + $0x8] sm:$0xff]
    %v3807 = vld [vmem:[#allocation3 + $0x10] sm:$0xff]
    %v3808 = vld [vmem:[#allocation3 + $0x18] sm:$0xff]
    %v3809 = vld [vmem:[#allocation3 + $0x20] sm:$0xff]
    %v3810 = vld [vmem:[#allocation3 + $0x28] sm:$0xff]
    %v3811 = vld [vmem:[#allocation3 + $0x30] sm:$0xff]
    %v3812 = vld [vmem:[#allocation3 + $0x38] sm:$0xff]
    %v3813 = vld [vmem:[#allocation3 + $0x40] sm:$0xff]
    %v3814 = vld [vmem:[#allocation3 + $0x48] sm:$0xff]
    %v3815 = vld [vmem:[#allocation3 + $0x50] sm:$0xff]
    %v3816 = vld [vmem:[#allocation3 + $0x58] sm:$0xff]
    %v3817 = vld [vmem:[#allocation3 + $0x60] sm:$0xff]
    %v3818 = vld [vmem:[#allocation3 + $0x68] sm:$0xff]
    %v3819 = vld [vmem:[#allocation3 + $0x70] sm:$0xff]
    %v3820 = vld [vmem:[#allocation3 + $0x78] sm:$0xff]
    %v3821 = vld [vmem:[#allocation3 + $0x80] sm:$0xff]
    %v3822 = vld [vmem:[#allocation3 + $0x88] sm:$0xff]
    %v3823 = vld [vmem:[#allocation3 + $0x90] sm:$0xff]
    %v3824 = vld [vmem:[#allocation3 + $0x98] sm:$0xff]
    %v3825 = vld [vmem:[#allocation3 + $0xa0] sm:$0xff]
    %v3826 = vld [vmem:[#allocation3 + $0xa8] sm:$0xff]
    %v3827 = vld [vmem:[#allocation3 + $0xb0] sm:$0xff]
    %v3828 = vld [vmem:[#allocation3 + $0xb8] sm:$0xff]
    %3829 = vst.msk [vmem:[#allocation4] sm:$0xff] %vm524, %v3805
    %3830 = vst.msk [vmem:[#allocation4 + $0x8] sm:$0xff] %vm524, %v3806
    %3831 = vst.msk [vmem:[#allocation4 + $0x10] sm:$0xff] %vm524, %v3807
    %3832 = vst.msk [vmem:[#allocation4 + $0x18] sm:$0xff] %vm524, %v3808
    %3833 = vst.msk [vmem:[#allocation4 + $0x20] sm:$0xff] %vm524, %v3809
    %3834 = vst.msk [vmem:[#allocation4 + $0x28] sm:$0xff] %vm524, %v3810
    %3835 = vst.msk [vmem:[#allocation4 + $0x30] sm:$0xff] %vm524, %v3811
    %3836 = vst.msk [vmem:[#allocation4 + $0x38] sm:$0xff] %vm524, %v3812
    %3837 = vst.msk [vmem:[#allocation4 + $0x40] sm:$0xff] %vm524, %v3813
    %3838 = vst.msk [vmem:[#allocation4 + $0x48] sm:$0xff] %vm524, %v3814
    %3839 = vst.msk [vmem:[#allocation4 + $0x50] sm:$0xff] %vm524, %v3815
    %3840 = vst.msk [vmem:[#allocation4 + $0x58] sm:$0xff] %vm524, %v3816
    %3841 = vst.msk [vmem:[#allocation4 + $0x60] sm:$0xff] %vm524, %v3817
    %3842 = vst.msk [vmem:[#allocation4 + $0x68] sm:$0xff] %vm524, %v3818
    %3843 = vst.msk [vmem:[#allocation4 + $0x70] sm:$0xff] %vm524, %v3819
    %3844 = vst.msk [vmem:[#allocation4 + $0x78] sm:$0xff] %vm524, %v3820
    %3845 = vst.msk [vmem:[#allocation4 + $0x80] sm:$0xff] %vm524, %v3821
    %3846 = vst.msk [vmem:[#allocation4 + $0x88] sm:$0xff] %vm524, %v3822
    %3847 = vst.msk [vmem:[#allocation4 + $0x90] sm:$0xff] %vm524, %v3823
    %3848 = vst.msk [vmem:[#allocation4 + $0x98] sm:$0xff] %vm524, %v3824
    %3849 = vst.msk [vmem:[#allocation4 + $0xa0] sm:$0xff] %vm524, %v3825
    %3850 = vst.msk [vmem:[#allocation4 + $0xa8] sm:$0xff] %vm524, %v3826
    %3851 = vst.msk [vmem:[#allocation4 + $0xb0] sm:$0xff] %vm524, %v3827
    %3852 = vst.msk [vmem:[#allocation4 + $0xb8] sm:$0xff] %vm524, %v3828
    %v3853 = vld [vmem:[#allocation3 + $0x1] sm:$0xff]
    %v3854 = vld [vmem:[#allocation3 + $0x9] sm:$0xff]
    %v3855 = vld [vmem:[#allocation3 + $0x11] sm:$0xff]
    %v3856 = vld [vmem:[#allocation3 + $0x19] sm:$0xff]
    %v3857 = vld [vmem:[#allocation3 + $0x21] sm:$0xff]
    %v3858 = vld [vmem:[#allocation3 + $0x29] sm:$0xff]
    %v3859 = vld [vmem:[#allocation3 + $0x31] sm:$0xff]
    %v3860 = vld [vmem:[#allocation3 + $0x39] sm:$0xff]
    %v3861 = vld [vmem:[#allocation3 + $0x41] sm:$0xff]
    %v3862 = vld [vmem:[#allocation3 + $0x49] sm:$0xff]
    %v3863 = vld [vmem:[#allocation3 + $0x51] sm:$0xff]
    %v3864 = vld [vmem:[#allocation3 + $0x59] sm:$0xff]
    %v3865 = vld [vmem:[#allocation3 + $0x61] sm:$0xff]
    %v3866 = vld [vmem:[#allocation3 + $0x69] sm:$0xff]
    %v3867 = vld [vmem:[#allocation3 + $0x71] sm:$0xff]
    %v3868 = vld [vmem:[#allocation3 + $0x79] sm:$0xff]
    %v3869 = vld [vmem:[#allocation3 + $0x81] sm:$0xff]
    %v3870 = vld [vmem:[#allocation3 + $0x89] sm:$0xff]
    %v3871 = vld [vmem:[#allocation3 + $0x91] sm:$0xff]
    %v3872 = vld [vmem:[#allocation3 + $0x99] sm:$0xff]
    %v3873 = vld [vmem:[#allocation3 + $0xa1] sm:$0xff]
    %v3874 = vld [vmem:[#allocation3 + $0xa9] sm:$0xff]
    %v3875 = vld [vmem:[#allocation3 + $0xb1] sm:$0xff]
    %v3876 = vld [vmem:[#allocation3 + $0xb9] sm:$0xff]
    %3901 = vrot.lane.b32.xlu0 %v3853, 8
    %v3902 = vpop.permute.xlu0 %3901
    %3903 = vrot.lane.b32.xlu0 %v3854, 8
    %v3904 = vpop.permute.xlu0 %3903
    %3905 = vrot.lane.b32.xlu0 %v3855, 8
    %v3906 = vpop.permute.xlu0 %3905
    %3907 = vrot.lane.b32.xlu0 %v3856, 8
    %v3908 = vpop.permute.xlu0 %3907
    %3909 = vrot.lane.b32.xlu0 %v3857, 8
    %v3910 = vpop.permute.xlu0 %3909
    %3911 = vrot.lane.b32.xlu0 %v3858, 8
    %v3912 = vpop.permute.xlu0 %3911
    %3913 = vrot.lane.b32.xlu0 %v3859, 8
    %v3914 = vpop.permute.xlu0 %3913
    %3915 = vrot.lane.b32.xlu0 %v3860, 8
    %v3916 = vpop.permute.xlu0 %3915
    %3917 = vrot.lane.b32.xlu0 %v3861, 8
    %v3918 = vpop.permute.xlu0 %3917
    %3919 = vrot.lane.b32.xlu0 %v3862, 8
    %v3920 = vpop.permute.xlu0 %3919
    %3921 = vrot.lane.b32.xlu0 %v3863, 8
    %v3922 = vpop.permute.xlu0 %3921
    %3923 = vrot.lane.b32.xlu0 %v3864, 8
    %v3924 = vpop.permute.xlu0 %3923
    %3925 = vrot.lane.b32.xlu0 %v3865, 8
    %v3926 = vpop.permute.xlu0 %3925
    %3927 = vrot.lane.b32.xlu0 %v3866, 8
    %v3928 = vpop.permute.xlu0 %3927
    %3929 = vrot.lane.b32.xlu0 %v3867, 8
    %v3930 = vpop.permute.xlu0 %3929
    %3931 = vrot.lane.b32.xlu0 %v3868, 8
    %v3932 = vpop.permute.xlu0 %3931
    %3933 = vrot.lane.b32.xlu0 %v3869, 8
    %v3934 = vpop.permute.xlu0 %3933
    %3935 = vrot.lane.b32.xlu0 %v3870, 8
    %v3936 = vpop.permute.xlu0 %3935
    %3937 = vrot.lane.b32.xlu0 %v3871, 8
    %v3938 = vpop.permute.xlu0 %3937
    %3939 = vrot.lane.b32.xlu0 %v3872, 8
    %v3940 = vpop.permute.xlu0 %3939
    %3941 = vrot.lane.b32.xlu0 %v3873, 8
    %v3942 = vpop.permute.xlu0 %3941
    %3943 = vrot.lane.b32.xlu0 %v3874, 8
    %v3944 = vpop.permute.xlu0 %3943
    %3945 = vrot.lane.b32.xlu0 %v3875, 8
    %v3946 = vpop.permute.xlu0 %3945
    %3947 = vrot.lane.b32.xlu0 %v3876, 8
    %v3948 = vpop.permute.xlu0 %3947
    %vm3973 = vcmask 130112
    %3974 = vst.msk [vmem:[#allocation4] sm:$0xff] %vm3973, %v3902
    %3975 = vst.msk [vmem:[#allocation4 + $0x8] sm:$0xff] %vm3973, %v3904
    %3976 = vst.msk [vmem:[#allocation4 + $0x10] sm:$0xff] %vm3973, %v3906
    %3977 = vst.msk [vmem:[#allocation4 + $0x18] sm:$0xff] %vm3973, %v3908
    %3978 = vst.msk [vmem:[#allocation4 + $0x20] sm:$0xff] %vm3973, %v3910
    %3979 = vst.msk [vmem:[#allocation4 + $0x28] sm:$0xff] %vm3973, %v3912
    %3980 = vst.msk [vmem:[#allocation4 + $0x30] sm:$0xff] %vm3973, %v3914
    %3981 = vst.msk [vmem:[#allocation4 + $0x38] sm:$0xff] %vm3973, %v3916
    %3982 = vst.msk [vmem:[#allocation4 + $0x40] sm:$0xff] %vm3973, %v3918
    %3983 = vst.msk [vmem:[#allocation4 + $0x48] sm:$0xff] %vm3973, %v3920
    %3984 = vst.msk [vmem:[#allocation4 + $0x50] sm:$0xff] %vm3973, %v3922
    %3985 = vst.msk [vmem:[#allocation4 + $0x58] sm:$0xff] %vm3973, %v3924
    %3986 = vst.msk [vmem:[#allocation4 + $0x60] sm:$0xff] %vm3973, %v3926
    %3987 = vst.msk [vmem:[#allocation4 + $0x68] sm:$0xff] %vm3973, %v3928
    %3988 = vst.msk [vmem:[#allocation4 + $0x70] sm:$0xff] %vm3973, %v3930
    %3989 = vst.msk [vmem:[#allocation4 + $0x78] sm:$0xff] %vm3973, %v3932
    %3990 = vst.msk [vmem:[#allocation4 + $0x80] sm:$0xff] %vm3973, %v3934
    %3991 = vst.msk [vmem:[#allocation4 + $0x88] sm:$0xff] %vm3973, %v3936
    %3992 = vst.msk [vmem:[#allocation4 + $0x90] sm:$0xff] %vm3973, %v3938
    %3993 = vst.msk [vmem:[#allocation4 + $0x98] sm:$0xff] %vm3973, %v3940
    %3994 = vst.msk [vmem:[#allocation4 + $0xa0] sm:$0xff] %vm3973, %v3942
    %3995 = vst.msk [vmem:[#allocation4 + $0xa8] sm:$0xff] %vm3973, %v3944
    %3996 = vst.msk [vmem:[#allocation4 + $0xb0] sm:$0xff] %vm3973, %v3946
    %3997 = vst.msk [vmem:[#allocation4 + $0xb8] sm:$0xff] %vm3973, %v3948
    %v3998 = vld [vmem:[#allocation3 + $0x2] sm:$0xff]
    %v3999 = vld [vmem:[#allocation3 + $0xa] sm:$0xff]
    %v4000 = vld [vmem:[#allocation3 + $0x12] sm:$0xff]
    %v4001 = vld [vmem:[#allocation3 + $0x1a] sm:$0xff]
    %v4002 = vld [vmem:[#allocation3 + $0x22] sm:$0xff]
    %v4003 = vld [vmem:[#allocation3 + $0x2a] sm:$0xff]
    %v4004 = vld [vmem:[#allocation3 + $0x32] sm:$0xff]
    %v4005 = vld [vmem:[#allocation3 + $0x3a] sm:$0xff]
    %v4006 = vld [vmem:[#allocation3 + $0x42] sm:$0xff]
    %v4007 = vld [vmem:[#allocation3 + $0x4a] sm:$0xff]
    %v4008 = vld [vmem:[#allocation3 + $0x52] sm:$0xff]
    %v4009 = vld [vmem:[#allocation3 + $0x5a] sm:$0xff]
    %v4010 = vld [vmem:[#allocation3 + $0x62] sm:$0xff]
    %v4011 = vld [vmem:[#allocation3 + $0x6a] sm:$0xff]
    %v4012 = vld [vmem:[#allocation3 + $0x72] sm:$0xff]
    %v4013 = vld [vmem:[#allocation3 + $0x7a] sm:$0xff]
    %v4014 = vld [vmem:[#allocation3 + $0x82] sm:$0xff]
    %v4015 = vld [vmem:[#allocation3 + $0x8a] sm:$0xff]
    %v4016 = vld [vmem:[#allocation3 + $0x92] sm:$0xff]
    %v4017 = vld [vmem:[#allocation3 + $0x9a] sm:$0xff]
    %v4018 = vld [vmem:[#allocation3 + $0xa2] sm:$0xff]
    %v4019 = vld [vmem:[#allocation3 + $0xaa] sm:$0xff]
    %v4020 = vld [vmem:[#allocation3 + $0xb2] sm:$0xff]
    %v4021 = vld [vmem:[#allocation3 + $0xba] sm:$0xff]
    %4046 = vrot.lane.b32.xlu0 %v3998, 16
    %v4047 = vpop.permute.xlu0 %4046
    %4048 = vrot.lane.b32.xlu0 %v3999, 16
    %v4049 = vpop.permute.xlu0 %4048
    %4050 = vrot.lane.b32.xlu0 %v4000, 16
    %v4051 = vpop.permute.xlu0 %4050
    %4052 = vrot.lane.b32.xlu0 %v4001, 16
    %v4053 = vpop.permute.xlu0 %4052
    %4054 = vrot.lane.b32.xlu0 %v4002, 16
    %v4055 = vpop.permute.xlu0 %4054
    %4056 = vrot.lane.b32.xlu0 %v4003, 16
    %v4057 = vpop.permute.xlu0 %4056
    %4058 = vrot.lane.b32.xlu0 %v4004, 16
    %v4059 = vpop.permute.xlu0 %4058
    %4060 = vrot.lane.b32.xlu0 %v4005, 16
    %v4061 = vpop.permute.xlu0 %4060
    %4062 = vrot.lane.b32.xlu0 %v4006, 16
    %v4063 = vpop.permute.xlu0 %4062
    %4064 = vrot.lane.b32.xlu0 %v4007, 16
    %v4065 = vpop.permute.xlu0 %4064
    %4066 = vrot.lane.b32.xlu0 %v4008, 16
    %v4067 = vpop.permute.xlu0 %4066
    %4068 = vrot.lane.b32.xlu0 %v4009, 16
    %v4069 = vpop.permute.xlu0 %4068
    %4070 = vrot.lane.b32.xlu0 %v4010, 16
    %v4071 = vpop.permute.xlu0 %4070
    %4072 = vrot.lane.b32.xlu0 %v4011, 16
    %v4073 = vpop.permute.xlu0 %4072
    %4074 = vrot.lane.b32.xlu0 %v4012, 16
    %v4075 = vpop.permute.xlu0 %4074
    %4076 = vrot.lane.b32.xlu0 %v4013, 16
    %v4077 = vpop.permute.xlu0 %4076
    %4078 = vrot.lane.b32.xlu0 %v4014, 16
    %v4079 = vpop.permute.xlu0 %4078
    %4080 = vrot.lane.b32.xlu0 %v4015, 16
    %v4081 = vpop.permute.xlu0 %4080
    %4082 = vrot.lane.b32.xlu0 %v4016, 16
    %v4083 = vpop.permute.xlu0 %4082
    %4084 = vrot.lane.b32.xlu0 %v4017, 16
    %v4085 = vpop.permute.xlu0 %4084
    %4086 = vrot.lane.b32.xlu0 %v4018, 16
    %v4087 = vpop.permute.xlu0 %4086
    %4088 = vrot.lane.b32.xlu0 %v4019, 16
    %v4089 = vpop.permute.xlu0 %4088
    %4090 = vrot.lane.b32.xlu0 %v4020, 16
    %v4091 = vpop.permute.xlu0 %4090
    %4092 = vrot.lane.b32.xlu0 %v4021, 16
    %v4093 = vpop.permute.xlu0 %4092
    %vm4118 = vcmask 195712
    %4119 = vst.msk [vmem:[#allocation4] sm:$0xff] %vm4118, %v4047
    %4120 = vst.msk [vmem:[#allocation4 + $0x8] sm:$0xff] %vm4118, %v4049
    %4121 = vst.msk [vmem:[#allocation4 + $0x10] sm:$0xff] %vm4118, %v4051
    %4122 = vst.msk [vmem:[#allocation4 + $0x18] sm:$0xff] %vm4118, %v4053
    %4123 = vst.msk [vmem:[#allocation4 + $0x20] sm:$0xff] %vm4118, %v4055
    %4124 = vst.msk [vmem:[#allocation4 + $0x28] sm:$0xff] %vm4118, %v4057
    %4125 = vst.msk [vmem:[#allocation4 + $0x30] sm:$0xff] %vm4118, %v4059
    %4126 = vst.msk [vmem:[#allocation4 + $0x38] sm:$0xff] %vm4118, %v4061
    %4127 = vst.msk [vmem:[#allocation4 + $0x40] sm:$0xff] %vm4118, %v4063
    %4128 = vst.msk [vmem:[#allocation4 + $0x48] sm:$0xff] %vm4118, %v4065
    %4129 = vst.msk [vmem:[#allocation4 + $0x50] sm:$0xff] %vm4118, %v4067
    %4130 = vst.msk [vmem:[#allocation4 + $0x58] sm:$0xff] %vm4118, %v4069
    %4131 = vst.msk [vmem:[#allocation4 + $0x60] sm:$0xff] %vm4118, %v4071
    %4132 = vst.msk [vmem:[#allocation4 + $0x68] sm:$0xff] %vm4118, %v4073
    %4133 = vst.msk [vmem:[#allocation4 + $0x70] sm:$0xff] %vm4118, %v4075
    %4134 = vst.msk [vmem:[#allocation4 + $0x78] sm:$0xff] %vm4118, %v4077
    %4135 = vst.msk [vmem:[#allocation4 + $0x80] sm:$0xff] %vm4118, %v4079
    %4136 = vst.msk [vmem:[#allocation4 + $0x88] sm:$0xff] %vm4118, %v4081
    %4137 = vst.msk [vmem:[#allocation4 + $0x90] sm:$0xff] %vm4118, %v4083
    %4138 = vst.msk [vmem:[#allocation4 + $0x98] sm:$0xff] %vm4118, %v4085
    %4139 = vst.msk [vmem:[#allocation4 + $0xa0] sm:$0xff] %vm4118, %v4087
    %4140 = vst.msk [vmem:[#allocation4 + $0xa8] sm:$0xff] %vm4118, %v4089
    %4141 = vst.msk [vmem:[#allocation4 + $0xb0] sm:$0xff] %vm4118, %v4091
    %4142 = vst.msk [vmem:[#allocation4 + $0xb8] sm:$0xff] %vm4118, %v4093
    %v4143 = vld [vmem:[#allocation3 + $0x3] sm:$0xff]
    %v4144 = vld [vmem:[#allocation3 + $0xb] sm:$0xff]
    %v4145 = vld [vmem:[#allocation3 + $0x13] sm:$0xff]
    %v4146 = vld [vmem:[#allocation3 + $0x1b] sm:$0xff]
    %v4147 = vld [vmem:[#allocation3 + $0x23] sm:$0xff]
    %v4148 = vld [vmem:[#allocation3 + $0x2b] sm:$0xff]
    %v4149 = vld [vmem:[#allocation3 + $0x33] sm:$0xff]
    %v4150 = vld [vmem:[#allocation3 + $0x3b] sm:$0xff]
    %v4151 = vld [vmem:[#allocation3 + $0x43] sm:$0xff]
    %v4152 = vld [vmem:[#allocation3 + $0x4b] sm:$0xff]
    %v4153 = vld [vmem:[#allocation3 + $0x53] sm:$0xff]
    %v4154 = vld [vmem:[#allocation3 + $0x5b] sm:$0xff]
    %v4155 = vld [vmem:[#allocation3 + $0x63] sm:$0xff]
    %v4156 = vld [vmem:[#allocation3 + $0x6b] sm:$0xff]
    %v4157 = vld [vmem:[#allocation3 + $0x73] sm:$0xff]
    %v4158 = vld [vmem:[#allocation3 + $0x7b] sm:$0xff]
    %v4159 = vld [vmem:[#allocation3 + $0x83] sm:$0xff]
    %v4160 = vld [vmem:[#allocation3 + $0x8b] sm:$0xff]
    %v4161 = vld [vmem:[#allocation3 + $0x93] sm:$0xff]
    %v4162 = vld [vmem:[#allocation3 + $0x9b] sm:$0xff]
    %v4163 = vld [vmem:[#allocation3 + $0xa3] sm:$0xff]
    %v4164 = vld [vmem:[#allocation3 + $0xab] sm:$0xff]
    %v4165 = vld [vmem:[#allocation3 + $0xb3] sm:$0xff]
    %v4166 = vld [vmem:[#allocation3 + $0xbb] sm:$0xff]
    %4191 = vrot.lane.b32.xlu0 %v4143, 24
    %v4192 = vpop.permute.xlu0 %4191
    %4193 = vrot.lane.b32.xlu0 %v4144, 24
    %v4194 = vpop.permute.xlu0 %4193
    %4195 = vrot.lane.b32.xlu0 %v4145, 24
    %v4196 = vpop.permute.xlu0 %4195
    %4197 = vrot.lane.b32.xlu0 %v4146, 24
    %v4198 = vpop.permute.xlu0 %4197
    %4199 = vrot.lane.b32.xlu0 %v4147, 24
    %v4200 = vpop.permute.xlu0 %4199
    %4201 = vrot.lane.b32.xlu0 %v4148, 24
    %v4202 = vpop.permute.xlu0 %4201
    %4203 = vrot.lane.b32.xlu0 %v4149, 24
    %v4204 = vpop.permute.xlu0 %4203
    %4205 = vrot.lane.b32.xlu0 %v4150, 24
    %v4206 = vpop.permute.xlu0 %4205
    %4207 = vrot.lane.b32.xlu0 %v4151, 24
    %v4208 = vpop.permute.xlu0 %4207
    %4209 = vrot.lane.b32.xlu0 %v4152, 24
    %v4210 = vpop.permute.xlu0 %4209
    %4211 = vrot.lane.b32.xlu0 %v4153, 24
    %v4212 = vpop.permute.xlu0 %4211
    %4213 = vrot.lane.b32.xlu0 %v4154, 24
    %v4214 = vpop.permute.xlu0 %4213
    %4215 = vrot.lane.b32.xlu0 %v4155, 24
    %v4216 = vpop.permute.xlu0 %4215
    %4217 = vrot.lane.b32.xlu0 %v4156, 24
    %v4218 = vpop.permute.xlu0 %4217
    %4219 = vrot.lane.b32.xlu0 %v4157, 24
    %v4220 = vpop.permute.xlu0 %4219
    %4221 = vrot.lane.b32.xlu0 %v4158, 24
    %v4222 = vpop.permute.xlu0 %4221
    %4223 = vrot.lane.b32.xlu0 %v4159, 24
    %v4224 = vpop.permute.xlu0 %4223
    %4225 = vrot.lane.b32.xlu0 %v4160, 24
    %v4226 = vpop.permute.xlu0 %4225
    %4227 = vrot.lane.b32.xlu0 %v4161, 24
    %v4228 = vpop.permute.xlu0 %4227
    %4229 = vrot.lane.b32.xlu0 %v4162, 24
    %v4230 = vpop.permute.xlu0 %4229
    %4231 = vrot.lane.b32.xlu0 %v4163, 24
    %v4232 = vpop.permute.xlu0 %4231
    %4233 = vrot.lane.b32.xlu0 %v4164, 24
    %v4234 = vpop.permute.xlu0 %4233
    %4235 = vrot.lane.b32.xlu0 %v4165, 24
    %v4236 = vpop.permute.xlu0 %4235
    %4237 = vrot.lane.b32.xlu0 %v4166, 24
    %v4238 = vpop.permute.xlu0 %4237
    %vm4263 = vcmask 261312
    %4264 = vst.msk [vmem:[#allocation4] sm:$0xff] %vm4263, %v4192
    %4265 = vst.msk [vmem:[#allocation4 + $0x8] sm:$0xff] %vm4263, %v4194
    %4266 = vst.msk [vmem:[#allocation4 + $0x10] sm:$0xff] %vm4263, %v4196
    %4267 = vst.msk [vmem:[#allocation4 + $0x18] sm:$0xff] %vm4263, %v4198
    %4268 = vst.msk [vmem:[#allocation4 + $0x20] sm:$0xff] %vm4263, %v4200
    %4269 = vst.msk [vmem:[#allocation4 + $0x28] sm:$0xff] %vm4263, %v4202
    %4270 = vst.msk [vmem:[#allocation4 + $0x30] sm:$0xff] %vm4263, %v4204
    %4271 = vst.msk [vmem:[#allocation4 + $0x38] sm:$0xff] %vm4263, %v4206
    %4272 = vst.msk [vmem:[#allocation4 + $0x40] sm:$0xff] %vm4263, %v4208
    %4273 = vst.msk [vmem:[#allocation4 + $0x48] sm:$0xff] %vm4263, %v4210
    %4274 = vst.msk [vmem:[#allocation4 + $0x50] sm:$0xff] %vm4263, %v4212
    %4275 = vst.msk [vmem:[#allocation4 + $0x58] sm:$0xff] %vm4263, %v4214
    %4276 = vst.msk [vmem:[#allocation4 + $0x60] sm:$0xff] %vm4263, %v4216
    %4277 = vst.msk [vmem:[#allocation4 + $0x68] sm:$0xff] %vm4263, %v4218
    %4278 = vst.msk [vmem:[#allocation4 + $0x70] sm:$0xff] %vm4263, %v4220
    %4279 = vst.msk [vmem:[#allocation4 + $0x78] sm:$0xff] %vm4263, %v4222
    %4280 = vst.msk [vmem:[#allocation4 + $0x80] sm:$0xff] %vm4263, %v4224
    %4281 = vst.msk [vmem:[#allocation4 + $0x88] sm:$0xff] %vm4263, %v4226
    %4282 = vst.msk [vmem:[#allocation4 + $0x90] sm:$0xff] %vm4263, %v4228
    %4283 = vst.msk [vmem:[#allocation4 + $0x98] sm:$0xff] %vm4263, %v4230
    %4284 = vst.msk [vmem:[#allocation4 + $0xa0] sm:$0xff] %vm4263, %v4232
    %4285 = vst.msk [vmem:[#allocation4 + $0xa8] sm:$0xff] %vm4263, %v4234
    %4286 = vst.msk [vmem:[#allocation4 + $0xb0] sm:$0xff] %vm4263, %v4236
    %4287 = vst.msk [vmem:[#allocation4 + $0xb8] sm:$0xff] %vm4263, %v4238
    %v4288 = vld [vmem:[#allocation3 + $0x4] sm:$0xff]
    %v4289 = vld [vmem:[#allocation3 + $0xc] sm:$0xff]
    %v4290 = vld [vmem:[#allocation3 + $0x14] sm:$0xff]
    %v4291 = vld [vmem:[#allocation3 + $0x1c] sm:$0xff]
    %v4292 = vld [vmem:[#allocation3 + $0x24] sm:$0xff]
    %v4293 = vld [vmem:[#allocation3 + $0x2c] sm:$0xff]
    %v4294 = vld [vmem:[#allocation3 + $0x34] sm:$0xff]
    %v4295 = vld [vmem:[#allocation3 + $0x3c] sm:$0xff]
    %v4296 = vld [vmem:[#allocation3 + $0x44] sm:$0xff]
    %v4297 = vld [vmem:[#allocation3 + $0x4c] sm:$0xff]
    %v4298 = vld [vmem:[#allocation3 + $0x54] sm:$0xff]
    %v4299 = vld [vmem:[#allocation3 + $0x5c] sm:$0xff]
    %v4300 = vld [vmem:[#allocation3 + $0x64] sm:$0xff]
    %v4301 = vld [vmem:[#allocation3 + $0x6c] sm:$0xff]
    %v4302 = vld [vmem:[#allocation3 + $0x74] sm:$0xff]
    %v4303 = vld [vmem:[#allocation3 + $0x7c] sm:$0xff]
    %v4304 = vld [vmem:[#allocation3 + $0x84] sm:$0xff]
    %v4305 = vld [vmem:[#allocation3 + $0x8c] sm:$0xff]
    %v4306 = vld [vmem:[#allocation3 + $0x94] sm:$0xff]
    %v4307 = vld [vmem:[#allocation3 + $0x9c] sm:$0xff]
    %v4308 = vld [vmem:[#allocation3 + $0xa4] sm:$0xff]
    %v4309 = vld [vmem:[#allocation3 + $0xac] sm:$0xff]
    %v4310 = vld [vmem:[#allocation3 + $0xb4] sm:$0xff]
    %v4311 = vld [vmem:[#allocation3 + $0xbc] sm:$0xff]
    %4336 = vrot.lane.b32.xlu0 %v4288, 32
    %v4337 = vpop.permute.xlu0 %4336
    %4338 = vrot.lane.b32.xlu0 %v4289, 32
    %v4339 = vpop.permute.xlu0 %4338
    %4340 = vrot.lane.b32.xlu0 %v4290, 32
    %v4341 = vpop.permute.xlu0 %4340
    %4342 = vrot.lane.b32.xlu0 %v4291, 32
    %v4343 = vpop.permute.xlu0 %4342
    %4344 = vrot.lane.b32.xlu0 %v4292, 32
    %v4345 = vpop.permute.xlu0 %4344
    %4346 = vrot.lane.b32.xlu0 %v4293, 32
    %v4347 = vpop.permute.xlu0 %4346
    %4348 = vrot.lane.b32.xlu0 %v4294, 32
    %v4349 = vpop.permute.xlu0 %4348
    %4350 = vrot.lane.b32.xlu0 %v4295, 32
    %v4351 = vpop.permute.xlu0 %4350
    %4352 = vrot.lane.b32.xlu0 %v4296, 32
    %v4353 = vpop.permute.xlu0 %4352
    %4354 = vrot.lane.b32.xlu0 %v4297, 32
    %v4355 = vpop.permute.xlu0 %4354
    %4356 = vrot.lane.b32.xlu0 %v4298, 32
    %v4357 = vpop.permute.xlu0 %4356
    %4358 = vrot.lane.b32.xlu0 %v4299, 32
    %v4359 = vpop.permute.xlu0 %4358
    %4360 = vrot.lane.b32.xlu0 %v4300, 32
    %v4361 = vpop.permute.xlu0 %4360
    %4362 = vrot.lane.b32.xlu0 %v4301, 32
    %v4363 = vpop.permute.xlu0 %4362
    %4364 = vrot.lane.b32.xlu0 %v4302, 32
    %v4365 = vpop.permute.xlu0 %4364
    %4366 = vrot.lane.b32.xlu0 %v4303, 32
    %v4367 = vpop.permute.xlu0 %4366
    %4368 = vrot.lane.b32.xlu0 %v4304, 32
    %v4369 = vpop.permute.xlu0 %4368
    %4370 = vrot.lane.b32.xlu0 %v4305, 32
    %v4371 = vpop.permute.xlu0 %4370
    %4372 = vrot.lane.b32.xlu0 %v4306, 32
    %v4373 = vpop.permute.xlu0 %4372
    %4374 = vrot.lane.b32.xlu0 %v4307, 32
    %v4375 = vpop.permute.xlu0 %4374
    %4376 = vrot.lane.b32.xlu0 %v4308, 32
    %v4377 = vpop.permute.xlu0 %4376
    %4378 = vrot.lane.b32.xlu0 %v4309, 32
    %v4379 = vpop.permute.xlu0 %4378
    %4380 = vrot.lane.b32.xlu0 %v4310, 32
    %v4381 = vpop.permute.xlu0 %4380
    %4382 = vrot.lane.b32.xlu0 %v4311, 32
    %v4383 = vpop.permute.xlu0 %4382
    %vm4408 = vcmask 326912
    %4409 = vst.msk [vmem:[#allocation4] sm:$0xff] %vm4408, %v4337
    %4410 = vst.msk [vmem:[#allocation4 + $0x8] sm:$0xff] %vm4408, %v4339
    %4411 = vst.msk [vmem:[#allocation4 + $0x10] sm:$0xff] %vm4408, %v4341
    %4412 = vst.msk [vmem:[#allocation4 + $0x18] sm:$0xff] %vm4408, %v4343
    %4413 = vst.msk [vmem:[#allocation4 + $0x20] sm:$0xff] %vm4408, %v4345
    %4414 = vst.msk [vmem:[#allocation4 + $0x28] sm:$0xff] %vm4408, %v4347
    %4415 = vst.msk [vmem:[#allocation4 + $0x30] sm:$0xff] %vm4408, %v4349
    %4416 = vst.msk [vmem:[#allocation4 + $0x38] sm:$0xff] %vm4408, %v4351
    %4417 = vst.msk [vmem:[#allocation4 + $0x40] sm:$0xff] %vm4408, %v4353
    %4418 = vst.msk [vmem:[#allocation4 + $0x48] sm:$0xff] %vm4408, %v4355
    %4419 = vst.msk [vmem:[#allocation4 + $0x50] sm:$0xff] %vm4408, %v4357
    %4420 = vst.msk [vmem:[#allocation4 + $0x58] sm:$0xff] %vm4408, %v4359
    %4421 = vst.msk [vmem:[#allocation4 + $0x60] sm:$0xff] %vm4408, %v4361
    %4422 = vst.msk [vmem:[#allocation4 + $0x68] sm:$0xff] %vm4408, %v4363
    %4423 = vst.msk [vmem:[#allocation4 + $0x70] sm:$0xff] %vm4408, %v4365
    %4424 = vst.msk [vmem:[#allocation4 + $0x78] sm:$0xff] %vm4408, %v4367
    %4425 = vst.msk [vmem:[#allocation4 + $0x80] sm:$0xff] %vm4408, %v4369
    %4426 = vst.msk [vmem:[#allocation4 + $0x88] sm:$0xff] %vm4408, %v4371
    %4427 = vst.msk [vmem:[#allocation4 + $0x90] sm:$0xff] %vm4408, %v4373
    %4428 = vst.msk [vmem:[#allocation4 + $0x98] sm:$0xff] %vm4408, %v4375
    %4429 = vst.msk [vmem:[#allocation4 + $0xa0] sm:$0xff] %vm4408, %v4377
    %4430 = vst.msk [vmem:[#allocation4 + $0xa8] sm:$0xff] %vm4408, %v4379
    %4431 = vst.msk [vmem:[#allocation4 + $0xb0] sm:$0xff] %vm4408, %v4381
    %4432 = vst.msk [vmem:[#allocation4 + $0xb8] sm:$0xff] %vm4408, %v4383
    %v4433 = vld [vmem:[#allocation4] sm:$0xff]
    %v4434 = vld [vmem:[#allocation4 + $0x8] sm:$0xff]
    %v4435 = vld [vmem:[#allocation4 + $0x10] sm:$0xff]
    %v4436 = vld [vmem:[#allocation4 + $0x18] sm:$0xff]
    %v4437 = vld [vmem:[#allocation4 + $0x20] sm:$0xff]
    %v4438 = vld [vmem:[#allocation4 + $0x28] sm:$0xff]
    %v4439 = vld [vmem:[#allocation4 + $0x30] sm:$0xff]
    %v4440 = vld [vmem:[#allocation4 + $0x38] sm:$0xff]
    %v4441 = vld [vmem:[#allocation4 + $0x40] sm:$0xff]
    %v4442 = vpack.c.bf16 %v4434, %v4433
    %v4443 = vpack.c.bf16 %v4436, %v4435
    %v4444 = vpack.c.bf16 %v4438, %v4437
    %v4445 = vpack.c.bf16 %v4440, %v4439
    %v4446 = vpack.c.bf16 %v4441, %v4441
    %v4447 = vld [vmem:[#allocation4 + $0xe] sm:$0xff]
    %v4448 = vld [vmem:[#allocation4 + $0x16] sm:$0xff]
    %v4449 = vld [vmem:[#allocation4 + $0x1e] sm:$0xff]
    %v4450 = vld [vmem:[#allocation4 + $0x26] sm:$0xff]
    %v4451 = vld [vmem:[#allocation4 + $0x2e] sm:$0xff]
    %v4452 = vld [vmem:[#allocation4 + $0x36] sm:$0xff]
    %v4453 = vld [vmem:[#allocation4 + $0x3e] sm:$0xff]
    %v4454 = vld [vmem:[#allocation4 + $0x46] sm:$0xff]
    %v4455 = vld [vmem:[#allocation4 + $0x4e] sm:$0xff]
    %v4456 = vpack.c.bf16 %v4448, %v4447
    %v4457 = vpack.c.bf16 %v4450, %v4449
    %v4458 = vpack.c.bf16 %v4452, %v4451
    %v4459 = vpack.c.bf16 %v4454, %v4453
    %v4460 = vpack.c.bf16 %v4455, %v4455
    %v4461 = vld [vmem:[#allocation4 + $0x1c] sm:$0xff]
    %v4462 = vld [vmem:[#allocation4 + $0x24] sm:$0xff]
    %v4463 = vld [vmem:[#allocation4 + $0x2c] sm:$0xff]
    %v4464 = vld [vmem:[#allocation4 + $0x34] sm:$0xff]
    %v4465 = vld [vmem:[#allocation4 + $0x3c] sm:$0xff]
    %v4466 = vld [vmem:[#allocation4 + $0x44] sm:$0xff]
    %v4467 = vld [vmem:[#allocation4 + $0x4c] sm:$0xff]
    %v4468 = vld [vmem:[#allocation4 + $0x54] sm:$0xff]
    %v4469 = vld [vmem:[#allocation4 + $0x5c] sm:$0xff]
    %v4470 = vpack.c.bf16 %v4462, %v4461
    %v4471 = vpack.c.bf16 %v4464, %v4463
    %v4472 = vpack.c.bf16 %v4466, %v4465
    %v4473 = vpack.c.bf16 %v4468, %v4467
    %v4474 = vpack.c.bf16 %v4469, %v4469
    %v4475 = vld [vmem:[#allocation4 + $0x2a] sm:$0xff]
    %v4476 = vld [vmem:[#allocation4 + $0x32] sm:$0xff]
    %v4477 = vld [vmem:[#allocation4 + $0x3a] sm:$0xff]
    %v4478 = vld [vmem:[#allocation4 + $0x42] sm:$0xff]
    %v4479 = vld [vmem:[#allocation4 + $0x4a] sm:$0xff]
    %v4480 = vld [vmem:[#allocation4 + $0x52] sm:$0xff]
    %v4481 = vld [vmem:[#allocation4 + $0x5a] sm:$0xff]
    %v4482 = vld [vmem:[#allocation4 + $0x62] sm:$0xff]
    %v4483 = vld [vmem:[#allocation4 + $0x6a] sm:$0xff]
    %v4484 = vpack.c.bf16 %v4476, %v4475
    %v4485 = vpack.c.bf16 %v4478, %v4477
    %v4486 = vpack.c.bf16 %v4480, %v4479
    %v4487 = vpack.c.bf16 %v4482, %v4481
    %v4488 = vpack.c.bf16 %v4483, %v4483
    %v4489 = vld [vmem:[#allocation4 + $0x48] sm:$0xff]
    %v4490 = vld [vmem:[#allocation4 + $0x50] sm:$0xff]
    %v4491 = vld [vmem:[#allocation4 + $0x58] sm:$0xff]
    %v4492 = vld [vmem:[#allocation4 + $0x60] sm:$0xff]
    %v4493 = vld [vmem:[#allocation4 + $0x68] sm:$0xff]
    %v4494 = vld [vmem:[#allocation4 + $0x70] sm:$0xff]
    %v4495 = vld [vmem:[#allocation4 + $0x78] sm:$0xff]
    %v4496 = vpack.c.bf16 %v4441, %v4440
    %v4497 = vpack.c.bf16 %v4490, %v4489
    %v4498 = vpack.c.bf16 %v4492, %v4491
    %v4499 = vpack.c.bf16 %v4494, %v4493
    %v4500 = vpack.c.bf16 %v4495, %v4495
    %4506 = vrot.lane.b32.xlu0 %v4456, 40
    %v4507 = vpop.permute.xlu0 %4506
    %4508 = vrot.lane.b32.xlu0 %v4457, 40
    %v4509 = vpop.permute.xlu0 %4508
    %4510 = vrot.lane.b32.xlu0 %v4458, 40
    %v4511 = vpop.permute.xlu0 %4510
    %4512 = vrot.lane.b32.xlu0 %v4459, 40
    %v4513 = vpop.permute.xlu0 %4512
    %4514 = vrot.lane.b32.xlu0 %v4460, 40
    %v4515 = vpop.permute.xlu0 %4514
    %4521 = vrot.lane.b32.xlu0 %v4470, 80
    %v4522 = vpop.permute.xlu0 %4521
    %4523 = vrot.lane.b32.xlu0 %v4471, 80
    %v4524 = vpop.permute.xlu0 %4523
    %4525 = vrot.lane.b32.xlu0 %v4472, 80
    %v4526 = vpop.permute.xlu0 %4525
    %4527 = vrot.lane.b32.xlu0 %v4473, 80
    %v4528 = vpop.permute.xlu0 %4527
    %4529 = vrot.lane.b32.xlu0 %v4474, 80
    %v4530 = vpop.permute.xlu0 %4529
    %4536 = vrot.lane.b32.xlu0 %v4484, 120
    %v4537 = vpop.permute.xlu0 %4536
    %4538 = vrot.lane.b32.xlu0 %v4485, 120
    %v4539 = vpop.permute.xlu0 %4538
    %4540 = vrot.lane.b32.xlu0 %v4486, 120
    %v4541 = vpop.permute.xlu0 %4540
    %4542 = vrot.lane.b32.xlu0 %v4487, 120
    %v4543 = vpop.permute.xlu0 %4542
    %4544 = vrot.lane.b32.xlu0 %v4488, 120
    %v4545 = vpop.permute.xlu0 %4544
    %4551 = vrot.lane.b32.xlu0 %v4496, 32
    %v4552 = vpop.permute.xlu0 %4551
    %4553 = vrot.lane.b32.xlu0 %v4497, 32
    %v4554 = vpop.permute.xlu0 %4553
    %4555 = vrot.lane.b32.xlu0 %v4498, 32
    %v4556 = vpop.permute.xlu0 %4555
    %4557 = vrot.lane.b32.xlu0 %v4499, 32
    %v4558 = vpop.permute.xlu0 %4557
    %4559 = vrot.lane.b32.xlu0 %v4500, 32
    %v4560 = vpop.permute.xlu0 %4559
    %vm4561 = vcmask 326656
    %v4564 = vsel %vm4561, %v4442, %v4507
    %v4567 = vsel %vm4561, %v4443, %v4509
    %v4570 = vsel %vm4561, %v4444, %v4511
    %v4573 = vsel %vm4561, %v4445, %v4513
    %v4576 = vsel %vm4561, %v4446, %v4515
    %v4578 = vsel %vm394, %v4564, %v4522
    %v4580 = vsel %vm394, %v4567, %v4524
    %v4582 = vsel %vm394, %v4570, %v4526
    %v4584 = vsel %vm394, %v4573, %v4528
    %v4586 = vsel %vm394, %v4576, %v4530
    %vm4587 = vcmask 982016
    %v4589 = vsel %vm4587, %v4578, %v4537
    %v4592 = vsel %vm4587, %v4580, %v4539
    %v4595 = vsel %vm4587, %v4582, %v4541
    %v4598 = vsel %vm4587, %v4584, %v4543
    %v4601 = vsel %vm4587, %v4586, %v4545
    %v4604 = vsel %vm296, %v4537, %v4552
    %v4606 = vsel %vm296, %v4539, %v4554
    %v4608 = vsel %vm296, %v4541, %v4556
    %v4610 = vsel %vm296, %v4543, %v4558
    %v4612 = vsel %vm296, %v4545, %v4560
    %v4613 = vld [vmem:[%s3] sm:$0xf]
    %v4614 = vld [vmem:[%s3 + $0x4] sm:$0xf]
    %v4615 = vld [vmem:[%s3 + $0x8] sm:$0xf]
    %v4616 = vld [vmem:[%s3 + $0xc] sm:$0xf]
    %v4617 = vld [vmem:[%s3 + $0x10] sm:$0xf]
    %v4618 = vld [vmem:[%s3 + $0x14] sm:$0xf]
    %v4619 = vld [vmem:[%s3 + $0x18] sm:$0xf]
    %v4620 = vld [vmem:[%s3 + $0x1c] sm:$0xf]
    %v4621 = vld [vmem:[%s3 + $0x20] sm:$0xf]
    %v4622 = vld [vmem:[%s3 + $0x24] sm:$0xf]
    %v4623 = vld [vmem:[%s3 + $0x28] sm:$0xf]
    %v4624 = vld [vmem:[%s3 + $0x2c] sm:$0xf]
    %v4625 = vld [vmem:[%s3 + $0x30] sm:$0xf]
    %v4626 = vld [vmem:[%s3 + $0x34] sm:$0xf]
    %v4627 = vld [vmem:[%s3 + $0x38] sm:$0xf]
    %v4628 = vld [vmem:[%s3 + $0x3c] sm:$0xf]
    %v4629 = vld [vmem:[%s3 + $0x40] sm:$0xf]
    %v4630 = vld [vmem:[%s3 + $0x44] sm:$0xf]
    %v4631 = vld [vmem:[%s3 + $0x48] sm:$0xf]
    %v4632 = vld [vmem:[%s3 + $0x4c] sm:$0xf]
    %v4633 = vld [vmem:[%s3 + $0x50] sm:$0xf]
    %v4634 = vld [vmem:[%s3 + $0x54] sm:$0xf]
    %v4635 = vld [vmem:[%s3 + $0x58] sm:$0xf]
    %v4636 = vld [vmem:[%s3 + $0x5c] sm:$0xf]
    %v4637 = vld [vmem:[%s3 + $0x60] sm:$0xf]
    %v4638 = vld [vmem:[%s4] sm:$0x1]
    %v4640 = vlaneseq
    %v4641 = vshrl.u32 %v4640, 7
    %v4642 = vsub.s32 0, %v4641
    %v4643 = vrot.slane %v4638, %v4642
    %v4670 = vunpack.c.l.b16 %v4613
    %v4671 = vunpack.c.l.b16 %v4614
    %v4672 = vunpack.c.l.b16 %v4615
    %v4673 = vunpack.c.l.b16 %v4616
    %v4674 = vunpack.c.l.b16 %v4617
    %v4675 = vunpack.c.l.b16 %v4618
    %v4676 = vunpack.c.l.b16 %v4619
    %v4677 = vunpack.c.l.b16 %v4620
    %v4678 = vunpack.c.l.b16 %v4621
    %v4679 = vunpack.c.l.b16 %v4622
    %v4680 = vunpack.c.l.b16 %v4623
    %v4681 = vunpack.c.l.b16 %v4624
    %v4682 = vunpack.c.l.b16 %v4625
    %v4683 = vunpack.c.l.b16 %v4626
    %v4684 = vunpack.c.l.b16 %v4627
    %v4685 = vunpack.c.l.b16 %v4628
    %v4686 = vunpack.c.l.b16 %v4629
    %v4687 = vunpack.c.l.b16 %v4630
    %v4688 = vunpack.c.l.b16 %v4631
    %v4689 = vunpack.c.l.b16 %v4632
    %v4690 = vunpack.c.l.b16 %v4633
    %v4691 = vunpack.c.l.b16 %v4634
    %v4692 = vunpack.c.l.b16 %v4635
    %v4693 = vunpack.c.l.b16 %v4636
    %v4694 = vunpack.c.l.b16 %v4637
    %v4695 = vpack.c.b16 %v4671, %v4670
    %v4696 = vpack.c.b16 %v4673, %v4672
    %v4697 = vpack.c.b16 %v4675, %v4674
    %v4698 = vpack.c.b16 %v4677, %v4676
    %v4699 = vpack.c.b16 %v4679, %v4678
    %v4700 = vpack.c.b16 %v4681, %v4680
    %v4701 = vpack.c.b16 %v4683, %v4682
    %v4702 = vpack.c.b16 %v4685, %v4684
    %v4703 = vpack.c.b16 %v4687, %v4686
    %v4704 = vpack.c.b16 %v4689, %v4688
    %v4705 = vpack.c.b16 %v4691, %v4690
    %v4706 = vpack.c.b16 %v4693, %v4692
    %v4707 = vpack.c.b16 %v4694, %v4694
    %vm4720 = vcmask 588800
    %v4721 = vsel %vm4720, %v4604, 0
    %v4723 = vsel %vm4720, %v4606, 0
    %v4725 = vsel %vm4720, %v4608, 0
    %v4727 = vsel %vm4720, %v4610, 0
    %v4729 = vsel %vm4720, %v4612, 0
    %vm4731 = vcmask 1043456
    %v4733 = vsel %vm4731, %v4707, 0
    %4735 = vmatprep.subr.bf16.mxu0 0
    %4736 = vmatpush1.bf16.msra.mxu0 %v4695
    %4737 = vmatprep.subr.bf16.mxu0 0
    %4738 = vmatpush1.bf16.msra.mxu0 %v4696
    %4739 = vmatprep.subr.bf16.mxu0 0
    %4740 = vmatpush1.bf16.msra.mxu0 %v4697
    %4741 = vmatprep.subr.bf16.mxu0 0
    %4742 = vmatpush1.bf16.msra.mxu0 %v4698
    %4743 = vmatprep.subr.bf16.mxu0 0
    %4744 = vmatpush1.bf16.msra.mxu0 %v4699
    %4745 = vmatprep.subr.bf16.mxu0 0
    %4746 = vmatpush1.bf16.msra.mxu0 %v4700
    %4747 = vmatprep.subr.bf16.mxu0 0
    %4748 = vmatpush1.bf16.msra.mxu0 %v4701
    %4749 = vmatprep.subr.bf16.mxu0 0
    %4750 = vmatpush1.bf16.msra.mxu0 %v4702
    %4751 = vmatprep.subr.bf16.mxu0 0
    %4752 = vmatpush1.bf16.msra.mxu0 %v4703
    %4753 = vmatprep.subr.bf16.mxu0 0
    %4754 = vmatpush1.bf16.msra.mxu0 %v4704
    %4755 = vmatprep.subr.bf16.mxu0 0
    %4756 = vmatpush1.bf16.msra.mxu0 %v4705
    %4757 = vmatprep.subr.bf16.mxu0 0
    %4758 = vmatpush1.bf16.msra.mxu0 %v4706
    %4759 = vmatprep.subr.bf16.mxu0 0
    %4760 = vmatpush1.bf16.msra.mxu0 %v4733
    %4761 = vmatprep.subr.bf16.mxu0 0
    %4762 = vmatpush1.bf16.msra.mxu0 0
    %4763 = vmatprep.subr.bf16.mxu0 0
    %4764 = vmatpush1.bf16.msra.mxu0 0
    %4765 = vmatprep.subr.bf16.mxu0 0
    %4766 = vmatpush1.bf16.msra.mxu0 0
    %4767 = vmatprep.mubr.bf16.mxu0 %v4721
    %4768 = vmatmul.mubr.bf16.gmra.mrb[0].mxu0 %v4589
    %v4769 = vpop.f32.mrb[0].mxu0
    %v4770 = vadd.f32 %v4643, %v4769
    %v4771 = vpop.f32.mrb[0].mxu0
    %v4772 = vpop.f32.mrb[0].mxu0
    %v4773 = vadd.f32 %v4643, %v4772
    %v4774 = vpop.f32.mrb[0].mxu0
    %4775 = vmatprep.mubr.bf16.mxu0 %v4723
    %4776 = vmatmul.mubr.bf16.gmra.mrb[0].mxu0 %v4592
    %v4777 = vpop.f32.mrb[0].mxu0
    %v4778 = vadd.f32 %v4643, %v4777
    %v4779 = vpop.f32.mrb[0].mxu0
    %v4780 = vpop.f32.mrb[0].mxu0
    %v4781 = vadd.f32 %v4643, %v4780
    %v4782 = vpop.f32.mrb[0].mxu0
    %4783 = vmatprep.mubr.bf16.mxu0 %v4725
    %4784 = vmatmul.mubr.bf16.gmra.mrb[0].mxu0 %v4595
    %v4785 = vpop.f32.mrb[0].mxu0
    %v4786 = vadd.f32 %v4643, %v4785
    %v4787 = vpop.f32.mrb[0].mxu0
    %v4788 = vpop.f32.mrb[0].mxu0
    %v4789 = vadd.f32 %v4643, %v4788
    %v4790 = vpop.f32.mrb[0].mxu0
    %4791 = vmatprep.mubr.bf16.mxu0 %v4727
    %4792 = vmatmul.mubr.bf16.gmra.mrb[0].mxu0 %v4598
    %v4793 = vpop.f32.mrb[0].mxu0
    %v4794 = vadd.f32 %v4643, %v4793
    %v4795 = vpop.f32.mrb[0].mxu0
    %v4796 = vpop.f32.mrb[0].mxu0
    %v4797 = vadd.f32 %v4643, %v4796
    %v4798 = vpop.f32.mrb[0].mxu0
    %4799 = vmatprep.mubr.bf16.mxu0 %v4729
    %4800 = vmatmul.mubr.bf16.gmra.mrb[0].mxu0 %v4601
    %v4801 = vpop.f32.mrb[0].mxu0
    %v4802 = vadd.f32 %v4643, %v4801
    %v4803 = vpop.f32.mrb[0].mxu0
    %v4804 = vpop.f32.mrb[0].mxu0
    %v4805 = vpop.f32.mrb[0].mxu0
    %4806 = vdwg.mxu0
    %v4807 = vmax.f32 %v4770, 0.0
    %v4808 = vmax.f32 %v4773, 0.0
    %v4809 = vmax.f32 %v4778, 0.0
    %v4810 = vmax.f32 %v4781, 0.0
    %v4811 = vmax.f32 %v4786, 0.0
    %v4812 = vmax.f32 %v4789, 0.0
    %v4813 = vmax.f32 %v4794, 0.0
    %v4814 = vmax.f32 %v4797, 0.0
    %v4815 = vmax.f32 %v4802, 0.0
    %4816 = vst.msk [vmem:[#allocation5] sm:$0xff] %vm271, %v4807
    %4817 = vst.msk [vmem:[#allocation5 + $0x8] sm:$0xff] %vm271, %v4808
    %4818 = vst.msk [vmem:[#allocation5 + $0x10] sm:$0xff] %vm271, %v4809
    %4819 = vst.msk [vmem:[#allocation5 + $0x18] sm:$0xff] %vm271, %v4810
    %4820 = vst.msk [vmem:[#allocation5 + $0x20] sm:$0xff] %vm271, %v4811
    %4821 = vst.msk [vmem:[#allocation5 + $0x28] sm:$0xff] %vm271, %v4812
    %4822 = vst.msk [vmem:[#allocation5 + $0x30] sm:$0xff] %vm271, %v4813
    %4823 = vst.msk [vmem:[#allocation5 + $0x38] sm:$0xff] %vm271, %v4814
    %4824 = vst.msk [vmem:[#allocation5 + $0x40] sm:$0xff] %vm271, %v4815
    %v4825 = vld [vmem:[#allocation4 + $0x48] sm:$0xff]
    %v4826 = vld [vmem:[#allocation4 + $0x50] sm:$0xff]
    %v4827 = vld [vmem:[#allocation4 + $0x58] sm:$0xff]
    %v4828 = vld [vmem:[#allocation4 + $0x60] sm:$0xff]
    %v4829 = vld [vmem:[#allocation4 + $0x68] sm:$0xff]
    %v4830 = vld [vmem:[#allocation4 + $0x70] sm:$0xff]
    %v4831 = vld [vmem:[#allocation4 + $0x78] sm:$0xff]
    %v4832 = vld [vmem:[#allocation4 + $0x80] sm:$0xff]
    %v4833 = vpack.c.bf16 %v4826, %v4825
    %v4834 = vpack.c.bf16 %v4828, %v4827
    %v4835 = vpack.c.bf16 %v4830, %v4829
    %v4836 = vpack.c.bf16 %v4832, %v4831
    %v4837 = vld [vmem:[#allocation4 + $0x56] sm:$0xff]
    %v4838 = vld [vmem:[#allocation4 + $0x5e] sm:$0xff]
    %v4839 = vld [vmem:[#allocation4 + $0x66] sm:$0xff]
    %v4840 = vld [vmem:[#allocation4 + $0x6e] sm:$0xff]
    %v4841 = vld [vmem:[#allocation4 + $0x76] sm:$0xff]
    %v4842 = vld [vmem:[#allocation4 + $0x7e] sm:$0xff]
    %v4843 = vld [vmem:[#allocation4 + $0x86] sm:$0xff]
    %v4844 = vld [vmem:[#allocation4 + $0x8e] sm:$0xff]
    %v4845 = vpack.c.bf16 %v4838, %v4837
    %v4846 = vpack.c.bf16 %v4840, %v4839
    %v4847 = vpack.c.bf16 %v4842, %v4841
    %v4848 = vpack.c.bf16 %v4844, %v4843
    %v4849 = vld [vmem:[#allocation4 + $0x64] sm:$0xff]
    %v4850 = vld [vmem:[#allocation4 + $0x6c] sm:$0xff]
    %v4851 = vld [vmem:[#allocation4 + $0x74] sm:$0xff]
    %v4852 = vld [vmem:[#allocation4 + $0x7c] sm:$0xff]
    %v4853 = vld [vmem:[#allocation4 + $0x84] sm:$0xff]
    %v4854 = vld [vmem:[#allocation4 + $0x8c] sm:$0xff]
    %v4855 = vld [vmem:[#allocation4 + $0x94] sm:$0xff]
    %v4856 = vld [vmem:[#allocation4 + $0x9c] sm:$0xff]
    %v4857 = vpack.c.bf16 %v4850, %v4849
    %v4858 = vpack.c.bf16 %v4852, %v4851
    %v4859 = vpack.c.bf16 %v4854, %v4853
    %v4860 = vpack.c.bf16 %v4856, %v4855
    %v4861 = vld [vmem:[#allocation4 + $0x72] sm:$0xff]
    %v4862 = vld [vmem:[#allocation4 + $0x7a] sm:$0xff]
    %v4863 = vld [vmem:[#allocation4 + $0x82] sm:$0xff]
    %v4864 = vld [vmem:[#allocation4 + $0x8a] sm:$0xff]
    %v4865 = vld [vmem:[#allocation4 + $0x92] sm:$0xff]
    %v4866 = vld [vmem:[#allocation4 + $0x9a] sm:$0xff]
    %v4867 = vld [vmem:[#allocation4 + $0xa2] sm:$0xff]
    %v4868 = vld [vmem:[#allocation4 + $0xaa] sm:$0xff]
    %v4869 = vpack.c.bf16 %v4862, %v4861
    %v4870 = vpack.c.bf16 %v4864, %v4863
    %v4871 = vpack.c.bf16 %v4866, %v4865
    %v4872 = vpack.c.bf16 %v4868, %v4867
    %v4873 = vld [vmem:[#allocation4 + $0x88] sm:$0xff]
    %v4874 = vld [vmem:[#allocation4 + $0x90] sm:$0xff]
    %v4875 = vld [vmem:[#allocation4 + $0x98] sm:$0xff]
    %v4876 = vld [vmem:[#allocation4 + $0xa0] sm:$0xff]
    %v4877 = vld [vmem:[#allocation4 + $0xa8] sm:$0xff]
    %v4878 = vld [vmem:[#allocation4 + $0xb0] sm:$0xff]
    %v4879 = vld [vmem:[#allocation4 + $0xb8] sm:$0xff]
    %v4880 = vpack.c.bf16 %v4873, %v4832
    %v4881 = vpack.c.bf16 %v4875, %v4874
    %v4882 = vpack.c.bf16 %v4877, %v4876
    %v4883 = vpack.c.bf16 %v4879, %v4878
    %4888 = vrot.lane.b32.xlu0 %v4845, 40
    %v4889 = vpop.permute.xlu0 %4888
    %4890 = vrot.lane.b32.xlu0 %v4846, 40
    %v4891 = vpop.permute.xlu0 %4890
    %4892 = vrot.lane.b32.xlu0 %v4847, 40
    %v4893 = vpop.permute.xlu0 %4892
    %4894 = vrot.lane.b32.xlu0 %v4848, 40
    %v4895 = vpop.permute.xlu0 %4894
    %4900 = vrot.lane.b32.xlu0 %v4857, 80
    %v4901 = vpop.permute.xlu0 %4900
    %4902 = vrot.lane.b32.xlu0 %v4858, 80
    %v4903 = vpop.permute.xlu0 %4902
    %4904 = vrot.lane.b32.xlu0 %v4859, 80
    %v4905 = vpop.permute.xlu0 %4904
    %4906 = vrot.lane.b32.xlu0 %v4860, 80
    %v4907 = vpop.permute.xlu0 %4906
    %4912 = vrot.lane.b32.xlu0 %v4869, 120
    %v4913 = vpop.permute.xlu0 %4912
    %4914 = vrot.lane.b32.xlu0 %v4870, 120
    %v4915 = vpop.permute.xlu0 %4914
    %4916 = vrot.lane.b32.xlu0 %v4871, 120
    %v4917 = vpop.permute.xlu0 %4916
    %4918 = vrot.lane.b32.xlu0 %v4872, 120
    %v4919 = vpop.permute.xlu0 %4918
    %4924 = vrot.lane.b32.xlu0 %v4880, 32
    %v4925 = vpop.permute.xlu0 %4924
    %4926 = vrot.lane.b32.xlu0 %v4881, 32
    %v4927 = vpop.permute.xlu0 %4926
    %4928 = vrot.lane.b32.xlu0 %v4882, 32
    %v4929 = vpop.permute.xlu0 %4928
    %4930 = vrot.lane.b32.xlu0 %v4883, 32
    %v4931 = vpop.permute.xlu0 %4930
    %v4934 = vsel %vm4561, %v4833, %v4889
    %v4937 = vsel %vm4561, %v4834, %v4891
    %v4940 = vsel %vm4561, %v4835, %v4893
    %v4943 = vsel %vm4561, %v4836, %v4895
    %v4945 = vsel %vm394, %v4934, %v4901
    %v4947 = vsel %vm394, %v4937, %v4903
    %v4949 = vsel %vm394, %v4940, %v4905
    %v4951 = vsel %vm394, %v4943, %v4907
    %v4953 = vsel %vm4587, %v4945, %v4913
    %v4956 = vsel %vm4587, %v4947, %v4915
    %v4959 = vsel %vm4587, %v4949, %v4917
    %v4962 = vsel %vm4587, %v4951, %v4919
    %v4965 = vsel %vm296, %v4913, %v4925
    %v4967 = vsel %vm296, %v4915, %v4927
    %v4969 = vsel %vm296, %v4917, %v4929
    %v4971 = vsel %vm296, %v4919, %v4931
    %v4972 = vld [vmem:[%s3] sm:$0xf]
    %v4973 = vld [vmem:[%s3 + $0x4] sm:$0xf]
    %v4974 = vld [vmem:[%s3 + $0x8] sm:$0xf]
    %v4975 = vld [vmem:[%s3 + $0xc] sm:$0xf]
    %v4976 = vld [vmem:[%s3 + $0x10] sm:$0xf]
    %v4977 = vld [vmem:[%s3 + $0x14] sm:$0xf]
    %v4978 = vld [vmem:[%s3 + $0x18] sm:$0xf]
    %v4979 = vld [vmem:[%s3 + $0x1c] sm:$0xf]
    %v4980 = vld [vmem:[%s3 + $0x20] sm:$0xf]
    %v4981 = vld [vmem:[%s3 + $0x24] sm:$0xf]
    %v4982 = vld [vmem:[%s3 + $0x28] sm:$0xf]
    %v4983 = vld [vmem:[%s3 + $0x2c] sm:$0xf]
    %v4984 = vld [vmem:[%s3 + $0x30] sm:$0xf]
    %v4985 = vld [vmem:[%s3 + $0x34] sm:$0xf]
    %v4986 = vld [vmem:[%s3 + $0x38] sm:$0xf]
    %v4987 = vld [vmem:[%s3 + $0x3c] sm:$0xf]
    %v4988 = vld [vmem:[%s3 + $0x40] sm:$0xf]
    %v4989 = vld [vmem:[%s3 + $0x44] sm:$0xf]
    %v4990 = vld [vmem:[%s3 + $0x48] sm:$0xf]
    %v4991 = vld [vmem:[%s3 + $0x4c] sm:$0xf]
    %v4992 = vld [vmem:[%s3 + $0x50] sm:$0xf]
    %v4993 = vld [vmem:[%s3 + $0x54] sm:$0xf]
    %v4994 = vld [vmem:[%s3 + $0x58] sm:$0xf]
    %v4995 = vld [vmem:[%s3 + $0x5c] sm:$0xf]
    %v4996 = vld [vmem:[%s3 + $0x60] sm:$0xf]
    %v4997 = vld [vmem:[%s4] sm:$0x1]
    %v4999 = vlaneseq
    %v5000 = vshrl.u32 %v4999, 7
    %v5001 = vsub.s32 0, %v5000
    %v5002 = vrot.slane %v4997, %v5001
    %v5029 = vunpack.c.l.b16 %v4972
    %v5030 = vunpack.c.l.b16 %v4973
    %v5031 = vunpack.c.l.b16 %v4974
    %v5032 = vunpack.c.l.b16 %v4975
    %v5033 = vunpack.c.l.b16 %v4976
    %v5034 = vunpack.c.l.b16 %v4977
    %v5035 = vunpack.c.l.b16 %v4978
    %v5036 = vunpack.c.l.b16 %v4979
    %v5037 = vunpack.c.l.b16 %v4980
    %v5038 = vunpack.c.l.b16 %v4981
    %v5039 = vunpack.c.l.b16 %v4982
    %v5040 = vunpack.c.l.b16 %v4983
    %v5041 = vunpack.c.l.b16 %v4984
    %v5042 = vunpack.c.l.b16 %v4985
    %v5043 = vunpack.c.l.b16 %v4986
    %v5044 = vunpack.c.l.b16 %v4987
    %v5045 = vunpack.c.l.b16 %v4988
    %v5046 = vunpack.c.l.b16 %v4989
    %v5047 = vunpack.c.l.b16 %v4990
    %v5048 = vunpack.c.l.b16 %v4991
    %v5049 = vunpack.c.l.b16 %v4992
    %v5050 = vunpack.c.l.b16 %v4993
    %v5051 = vunpack.c.l.b16 %v4994
    %v5052 = vunpack.c.l.b16 %v4995
    %v5053 = vunpack.c.l.b16 %v4996
    %v5054 = vpack.c.b16 %v5030, %v5029
    %v5055 = vpack.c.b16 %v5032, %v5031
    %v5056 = vpack.c.b16 %v5034, %v5033
    %v5057 = vpack.c.b16 %v5036, %v5035
    %v5058 = vpack.c.b16 %v5038, %v5037
    %v5059 = vpack.c.b16 %v5040, %v5039
    %v5060 = vpack.c.b16 %v5042, %v5041
    %v5061 = vpack.c.b16 %v5044, %v5043
    %v5062 = vpack.c.b16 %v5046, %v5045
    %v5063 = vpack.c.b16 %v5048, %v5047
    %v5064 = vpack.c.b16 %v5050, %v5049
    %v5065 = vpack.c.b16 %v5052, %v5051
    %v5066 = vpack.c.b16 %v5053, %v5053
    %v5079 = vsel %vm4720, %v4965, 0
    %v5081 = vsel %vm4720, %v4967, 0
    %v5083 = vsel %vm4720, %v4969, 0
    %v5085 = vsel %vm4720, %v4971, 0
    %v5088 = vsel %vm4731, %v5066, 0
    %5090 = vmatprep.subr.bf16.mxu0 0
    %5091 = vmatpush1.bf16.msra.mxu0 %v5054
    %5092 = vmatprep.subr.bf16.mxu0 0
    %5093 = vmatpush1.bf16.msra.mxu0 %v5055
    %5094 = vmatprep.subr.bf16.mxu0 0
    %5095 = vmatpush1.bf16.msra.mxu0 %v5056
    %5096 = vmatprep.subr.bf16.mxu0 0
    %5097 = vmatpush1.bf16.msra.mxu0 %v5057
    %5098 = vmatprep.subr.bf16.mxu0 0
    %5099 = vmatpush1.bf16.msra.mxu0 %v5058
    %5100 = vmatprep.subr.bf16.mxu0 0
    %5101 = vmatpush1.bf16.msra.mxu0 %v5059
    %5102 = vmatprep.subr.bf16.mxu0 0
    %5103 = vmatpush1.bf16.msra.mxu0 %v5060
    %5104 = vmatprep.subr.bf16.mxu0 0
    %5105 = vmatpush1.bf16.msra.mxu0 %v5061
    %5106 = vmatprep.subr.bf16.mxu0 0
    %5107 = vmatpush1.bf16.msra.mxu0 %v5062
    %5108 = vmatprep.subr.bf16.mxu0 0
    %5109 = vmatpush1.bf16.msra.mxu0 %v5063
    %5110 = vmatprep.subr.bf16.mxu0 0
    %5111 = vmatpush1.bf16.msra.mxu0 %v5064
    %5112 = vmatprep.subr.bf16.mxu0 0
    %5113 = vmatpush1.bf16.msra.mxu0 %v5065
    %5114 = vmatprep.subr.bf16.mxu0 0
    %5115 = vmatpush1.bf16.msra.mxu0 %v5088
    %5116 = vmatprep.subr.bf16.mxu0 0
    %5117 = vmatpush1.bf16.msra.mxu0 0
    %5118 = vmatprep.subr.bf16.mxu0 0
    %5119 = vmatpush1.bf16.msra.mxu0 0
    %5120 = vmatprep.subr.bf16.mxu0 0
    %5121 = vmatpush1.bf16.msra.mxu0 0
    %5122 = vmatprep.mubr.bf16.mxu0 %v5079
    %5123 = vmatmul.mubr.bf16.gmra.mrb[0].mxu0 %v4953
    %v5124 = vpop.f32.mrb[0].mxu0
    %v5125 = vadd.f32 %v5002, %v5124
    %v5126 = vpop.f32.mrb[0].mxu0
    %v5127 = vpop.f32.mrb[0].mxu0
    %v5128 = vadd.f32 %v5002, %v5127
    %v5129 = vpop.f32.mrb[0].mxu0
    %5130 = vmatprep.mubr.bf16.mxu0 %v5081
    %5131 = vmatmul.mubr.bf16.gmra.mrb[0].mxu0 %v4956
    %v5132 = vpop.f32.mrb[0].mxu0
    %v5133 = vadd.f32 %v5002, %v5132
    %v5134 = vpop.f32.mrb[0].mxu0
    %v5135 = vpop.f32.mrb[0].mxu0
    %v5136 = vadd.f32 %v5002, %v5135
    %v5137 = vpop.f32.mrb[0].mxu0
    %5138 = vmatprep.mubr.bf16.mxu0 %v5083
    %5139 = vmatmul.mubr.bf16.gmra.mrb[0].mxu0 %v4959
    %v5140 = vpop.f32.mrb[0].mxu0
    %v5141 = vadd.f32 %v5002, %v5140
    %v5142 = vpop.f32.mrb[0].mxu0
    %v5143 = vpop.f32.mrb[0].mxu0
    %v5144 = vadd.f32 %v5002, %v5143
    %v5145 = vpop.f32.mrb[0].mxu0
    %5146 = vmatprep.mubr.bf16.mxu0 %v5085
    %5147 = vmatmul.mubr.bf16.gmra.mrb[0].mxu0 %v4962
    %v5148 = vpop.f32.mrb[0].mxu0
    %v5149 = vadd.f32 %v5002, %v5148
    %v5150 = vpop.f32.mrb[0].mxu0
    %v5151 = vpop.f32.mrb[0].mxu0
    %v5152 = vadd.f32 %v5002, %v5151
    %v5153 = vpop.f32.mrb[0].mxu0
    %5154 = vdwg.mxu0
    %v5155 = vmax.f32 %v5125, 0.0
    %v5156 = vmax.f32 %v5128, 0.0
    %v5157 = vmax.f32 %v5133, 0.0
    %v5158 = vmax.f32 %v5136, 0.0
    %v5159 = vmax.f32 %v5141, 0.0
    %v5160 = vmax.f32 %v5144, 0.0
    %v5161 = vmax.f32 %v5149, 0.0
    %v5162 = vmax.f32 %v5152, 0.0
    %5163 = vst.msk [vmem:[#allocation5 + $0x48] sm:$0xff] %vm271, %v5155
    %5164 = vst.msk [vmem:[#allocation5 + $0x50] sm:$0xff] %vm271, %v5156
    %5165 = vst.msk [vmem:[#allocation5 + $0x58] sm:$0xff] %vm271, %v5157
    %5166 = vst.msk [vmem:[#allocation5 + $0x60] sm:$0xff] %vm271, %v5158
    %5167 = vst.msk [vmem:[#allocation5 + $0x68] sm:$0xff] %vm271, %v5159
    %5168 = vst.msk [vmem:[#allocation5 + $0x70] sm:$0xff] %vm271, %v5160
    %5169 = vst.msk [vmem:[#allocation5 + $0x78] sm:$0xff] %vm271, %v5161
    %5170 = vst.msk [vmem:[#allocation5 + $0x80] sm:$0xff] %vm271, %v5162
    %v5171 = vld [vmem:[#allocation5] ss:$2 sm:$0x1f]
    %s5172 = scalar_lea.vmem [#allocation5], 1
    %v5173 = vld [vmem:[%s5172] ss:$2 sm:$0x1f]
    %s5174 = scalar_lea.vmem [#allocation5], 14
    %v5175 = vld [vmem:[%s5174] ss:$2 sm:$0x1f]
    %s5176 = scalar_lea.vmem [#allocation5], 15
    %v5177 = vld [vmem:[%s5176] ss:$2 sm:$0x1f]
    %v5178 = vmax.f32 %v5171, %v5173
    %v5179 = vmax.f32 %v5175, %v5177
    %v5180 = vmax.f32 %v5178, %v5179
    %s5181 = smul.u32 %s40, 25
    %s5182 = scalar_lea.vmem [#allocation6], %s5181
    %vm5183 = vcmask 126976
    %5184 = vst.msk [vmem:[%s5182] sm:$0x1f] %vm5183, %v5180
    %s5185 = scalar_lea.vmem [#allocation5], 28
    %v5186 = vld [vmem:[%s5185] ss:$2 sm:$0x1f]
    %s5187 = scalar_lea.vmem [#allocation5], 29
    %v5188 = vld [vmem:[%s5187] ss:$2 sm:$0x1f]
    %s5189 = scalar_lea.vmem [#allocation5], 42
    %v5190 = vld [vmem:[%s5189] ss:$2 sm:$0x1f]
    %s5191 = scalar_lea.vmem [#allocation5], 43
    %v5192 = vld [vmem:[%s5191] ss:$2 sm:$0x1f]
    %v5193 = vmax.f32 %v5186, %v5188
    %v5194 = vmax.f32 %v5190, %v5192
    %v5195 = vmax.f32 %v5193, %v5194
    %s5196 = sadd.s32 %s5181, 5
    %s5197 = scalar_lea.vmem [#allocation6], %s5196
    %5198 = vst.msk [vmem:[%s5197] sm:$0x1f] %vm5183, %v5195
    %s5199 = scalar_lea.vmem [#allocation5], 56
    %v5200 = vld [vmem:[%s5199] ss:$2 sm:$0x1f]
    %s5201 = scalar_lea.vmem [#allocation5], 57
    %v5202 = vld [vmem:[%s5201] ss:$2 sm:$0x1f]
    %s5203 = scalar_lea.vmem [#allocation5], 70
    %v5204 = vld [vmem:[%s5203] ss:$2 sm:$0x1f]
    %s5205 = scalar_lea.vmem [#allocation5], 71
    %v5206 = vld [vmem:[%s5205] ss:$2 sm:$0x1f]
    %v5207 = vmax.f32 %v5200, %v5202
    %v5208 = vmax.f32 %v5204, %v5206
    %v5209 = vmax.f32 %v5207, %v5208
    %s5210 = sadd.s32 %s5181, 10
    %s5211 = scalar_lea.vmem [#allocation6], %s5210
    %5212 = vst.msk [vmem:[%s5211] sm:$0x1f] %vm5183, %v5209
    %s5213 = scalar_lea.vmem [#allocation5], 84
    %v5214 = vld [vmem:[%s5213] ss:$2 sm:$0x1f]
    %s5215 = scalar_lea.vmem [#allocation5], 85
    %v5216 = vld [vmem:[%s5215] ss:$2 sm:$0x1f]
    %s5217 = scalar_lea.vmem [#allocation5], 98
    %v5218 = vld [vmem:[%s5217] ss:$2 sm:$0x1f]
    %s5219 = scalar_lea.vmem [#allocation5], 99
    %v5220 = vld [vmem:[%s5219] ss:$2 sm:$0x1f]
    %v5221 = vmax.f32 %v5214, %v5216
    %v5222 = vmax.f32 %v5218, %v5220
    %v5223 = vmax.f32 %v5221, %v5222
    %s5224 = sadd.s32 %s5181, 15
    %s5225 = scalar_lea.vmem [#allocation6], %s5224
    %5226 = vst.msk [vmem:[%s5225] sm:$0x1f] %vm5183, %v5223
    %s5227 = scalar_lea.vmem [#allocation5], 112
    %v5228 = vld [vmem:[%s5227] ss:$2 sm:$0x1f]
    %s5229 = scalar_lea.vmem [#allocation5], 113
    %v5230 = vld [vmem:[%s5229] ss:$2 sm:$0x1f]
    %s5231 = scalar_lea.vmem [#allocation5], 126
    %v5232 = vld [vmem:[%s5231] ss:$2 sm:$0x1f]
    %s5233 = scalar_lea.vmem [#allocation5], 127
    %v5234 = vld [vmem:[%s5233] ss:$2 sm:$0x1f]
    %v5235 = vmax.f32 %v5228, %v5230
    %v5236 = vmax.f32 %v5232, %v5234
    %v5237 = vmax.f32 %v5235, %v5236
    %s5238 = sadd.s32 %s5181, 20
    %s5239 = scalar_lea.vmem [#allocation6], %s5238
    %5240 = vst.msk [vmem:[%s5239] sm:$0x1f] %vm5183, %v5237
  $region50: #{net_forward.1} parent=0 // loop_footer
    %s44 = sadd.s32 1, %s40
  $region51: #{net_forward.1} parent=0 // loop_footer_branch
    %39 = sbr.rel target = $region47
  $region52: #{net_forward.1} parent=0 // loop_exit
    _
  %v5241 = vld [vmem:[#allocation6] ss:$25 sm:$0xff]
  %s5242 = scalar_lea.vmem [#allocation6], 1
  %v5243 = vld [vmem:[%s5242] ss:$25 sm:$0xff]
  %s5244 = scalar_lea.vmem [#allocation6], 2
  %v5245 = vld [vmem:[%s5244] ss:$25 sm:$0xff]
  %s5246 = scalar_lea.vmem [#allocation6], 3
  %v5247 = vld [vmem:[%s5246] ss:$25 sm:$0xff]
  %s5248 = scalar_lea.vmem [#allocation6], 4
  %v5249 = vld [vmem:[%s5248] ss:$25 sm:$0xff]
  %s5250 = scalar_lea.vmem [#allocation6], 5
  %v5251 = vld [vmem:[%s5250] ss:$25 sm:$0xff]
  %s5252 = scalar_lea.vmem [#allocation6], 6
  %v5253 = vld [vmem:[%s5252] ss:$25 sm:$0xff]
  %s5254 = scalar_lea.vmem [#allocation6], 7
  %v5255 = vld [vmem:[%s5254] ss:$25 sm:$0xff]
  %s5256 = scalar_lea.vmem [#allocation6], 8
  %v5257 = vld [vmem:[%s5256] ss:$25 sm:$0xff]
  %s5258 = scalar_lea.vmem [#allocation6], 9
  %v5259 = vld [vmem:[%s5258] ss:$25 sm:$0xff]
  %s5260 = scalar_lea.vmem [#allocation6], 10
  %v5261 = vld [vmem:[%s5260] ss:$25 sm:$0xff]
  %s5262 = scalar_lea.vmem [#allocation6], 11
  %v5263 = vld [vmem:[%s5262] ss:$25 sm:$0xff]
  %s5264 = scalar_lea.vmem [#allocation6], 12
  %v5265 = vld [vmem:[%s5264] ss:$25 sm:$0xff]
  %s5266 = scalar_lea.vmem [#allocation6], 13
  %v5267 = vld [vmem:[%s5266] ss:$25 sm:$0xff]
  %s5268 = scalar_lea.vmem [#allocation6], 14
  %v5269 = vld [vmem:[%s5268] ss:$25 sm:$0xff]
  %s5270 = scalar_lea.vmem [#allocation6], 15
  %v5271 = vld [vmem:[%s5270] ss:$25 sm:$0xff]
  %s5272 = scalar_lea.vmem [#allocation6], 16
  %v5273 = vld [vmem:[%s5272] ss:$25 sm:$0xff]
  %s5274 = scalar_lea.vmem [#allocation6], 17
  %v5275 = vld [vmem:[%s5274] ss:$25 sm:$0xff]
  %s5276 = scalar_lea.vmem [#allocation6], 18
  %v5277 = vld [vmem:[%s5276] ss:$25 sm:$0xff]
  %s5278 = scalar_lea.vmem [#allocation6], 19
  %v5279 = vld [vmem:[%s5278] ss:$25 sm:$0xff]
  %s5280 = scalar_lea.vmem [#allocation6], 20
  %v5281 = vld [vmem:[%s5280] ss:$25 sm:$0xff]
  %s5282 = scalar_lea.vmem [#allocation6], 21
  %v5283 = vld [vmem:[%s5282] ss:$25 sm:$0xff]
  %s5284 = scalar_lea.vmem [#allocation6], 22
  %v5285 = vld [vmem:[%s5284] ss:$25 sm:$0xff]
  %s5286 = scalar_lea.vmem [#allocation6], 23
  %v5287 = vld [vmem:[%s5286] ss:$25 sm:$0xff]
  %s5288 = scalar_lea.vmem [#allocation6], 24
  %v5289 = vld [vmem:[%s5288] ss:$25 sm:$0xff]
  %5291 = vrot.lane.b32.xlu0 %v5243, 16
  %v5292 = vpop.permute.xlu0 %5291
  %5295 = vrot.lane.b32.xlu0 %v5245, 32
  %v5296 = vpop.permute.xlu0 %5295
  %5299 = vrot.lane.b32.xlu0 %v5247, 48
  %v5300 = vpop.permute.xlu0 %5299
  %5303 = vrot.lane.b32.xlu0 %v5249, 64
  %v5304 = vpop.permute.xlu0 %5303
  %5307 = vrot.lane.b32.xlu0 %v5251, 80
  %v5308 = vpop.permute.xlu0 %5307
  %5311 = vrot.lane.b32.xlu0 %v5253, 96
  %v5312 = vpop.permute.xlu0 %5311
  %5315 = vrot.lane.b32.xlu0 %v5255, 112
  %v5316 = vpop.permute.xlu0 %5315
  %5319 = vrot.lane.b32.xlu0 %v5259, 16
  %v5320 = vpop.permute.xlu0 %5319
  %5323 = vrot.lane.b32.xlu0 %v5261, 32
  %v5324 = vpop.permute.xlu0 %5323
  %5327 = vrot.lane.b32.xlu0 %v5263, 48
  %v5328 = vpop.permute.xlu0 %5327
  %5331 = vrot.lane.b32.xlu0 %v5265, 64
  %v5332 = vpop.permute.xlu0 %5331
  %5335 = vrot.lane.b32.xlu0 %v5267, 80
  %v5336 = vpop.permute.xlu0 %5335
  %5339 = vrot.lane.b32.xlu0 %v5269, 96
  %v5340 = vpop.permute.xlu0 %5339
  %5343 = vrot.lane.b32.xlu0 %v5271, 112
  %v5344 = vpop.permute.xlu0 %5343
  %vm5346 = vcmask 130048
  %v5347 = vsel %vm5346, %v5241, %v5292
  %vm5348 = vcmask 261120
  %v5349 = vsel %vm5348, %v5347, %v5296
  %vm5350 = vcmask 392192
  %v5351 = vsel %vm5350, %v5349, %v5300
  %vm5352 = vcmask 523264
  %v5353 = vsel %vm5352, %v5351, %v5304
  %vm5354 = vcmask 654336
  %v5355 = vsel %vm5354, %v5353, %v5308
  %vm5356 = vcmask 785408
  %v5357 = vsel %vm5356, %v5355, %v5312
  %vm5358 = vcmask 916480
  %v5359 = vsel %vm5358, %v5357, %v5316
  %v5360 = vsel %vm5346, %v5257, %v5320
  %v5361 = vsel %vm5348, %v5360, %v5324
  %v5362 = vsel %vm5350, %v5361, %v5328
  %v5363 = vsel %vm5352, %v5362, %v5332
  %v5364 = vsel %vm5354, %v5363, %v5336
  %v5365 = vsel %vm5356, %v5364, %v5340
  %v5366 = vsel %vm5358, %v5365, %v5344
  %5368 = vrot.lane.b32.xlu0 %v5275, 16
  %v5369 = vpop.permute.xlu0 %5368
  %5372 = vrot.lane.b32.xlu0 %v5277, 32
  %v5373 = vpop.permute.xlu0 %5372
  %5376 = vrot.lane.b32.xlu0 %v5279, 48
  %v5377 = vpop.permute.xlu0 %5376
  %5380 = vrot.lane.b32.xlu0 %v5281, 64
  %v5381 = vpop.permute.xlu0 %5380
  %5384 = vrot.lane.b32.xlu0 %v5283, 80
  %v5385 = vpop.permute.xlu0 %5384
  %5388 = vrot.lane.b32.xlu0 %v5285, 96
  %v5389 = vpop.permute.xlu0 %5388
  %5392 = vrot.lane.b32.xlu0 %v5287, 112
  %v5393 = vpop.permute.xlu0 %5392
  %v5395 = vsel %vm5346, %v5273, %v5369
  %v5396 = vsel %vm5348, %v5395, %v5373
  %v5397 = vsel %vm5350, %v5396, %v5377
  %v5398 = vsel %vm5352, %v5397, %v5381
  %v5399 = vsel %vm5354, %v5398, %v5385
  %v5400 = vsel %vm5356, %v5399, %v5389
  %v5401 = vsel %vm5358, %v5400, %v5393
  %v5402 = vpack.c.bf16 %v5359, %v5359
  %v5403 = vpack.c.bf16 %v5366, %v5366
  %v5404 = vpack.c.bf16 %v5401, %v5401
  %v5405 = vpack.c.bf16 %v5289, %v5289
  %v5406 = vld [vmem:[%s5] sm:$0xf]
  %v5407 = vld [vmem:[%s5 + $0x4] sm:$0xf]
  %v5408 = vld [vmem:[%s5 + $0x8] sm:$0xf]
  %v5409 = vld [vmem:[%s5 + $0xc] sm:$0xf]
  %v5410 = vld [vmem:[%s5 + $0x10] sm:$0xf]
  %v5411 = vld [vmem:[%s5 + $0x14] sm:$0xf]
  %v5412 = vld [vmem:[%s5 + $0x18] sm:$0xf]
  %v5413 = vld [vmem:[%s5 + $0x1c] sm:$0xf]
  %v5414 = vld [vmem:[%s5 + $0x20] sm:$0xf]
  %v5415 = vld [vmem:[%s5 + $0x24] sm:$0xf]
  %v5416 = vld [vmem:[%s5 + $0x28] sm:$0xf]
  %v5417 = vld [vmem:[%s5 + $0x2c] sm:$0xf]
  %v5418 = vld [vmem:[%s5 + $0x30] sm:$0xf]
  %v5419 = vld [vmem:[%s5 + $0x34] sm:$0xf]
  %v5420 = vld [vmem:[%s5 + $0x38] sm:$0xf]
  %v5421 = vld [vmem:[%s5 + $0x3c] sm:$0xf]
  %v5422 = vld [vmem:[%s5 + $0x40] sm:$0xf]
  %v5423 = vld [vmem:[%s5 + $0x44] sm:$0xf]
  %v5424 = vld [vmem:[%s5 + $0x48] sm:$0xf]
  %v5425 = vld [vmem:[%s5 + $0x4c] sm:$0xf]
  %v5426 = vld [vmem:[%s5 + $0x50] sm:$0xf]
  %v5427 = vld [vmem:[%s5 + $0x54] sm:$0xf]
  %v5428 = vld [vmem:[%s5 + $0x58] sm:$0xf]
  %v5429 = vld [vmem:[%s5 + $0x5c] sm:$0xf]
  %v5430 = vld [vmem:[%s5 + $0x60] sm:$0xf]
  %v5431 = vld [vmem:[%s5 + $0x64] sm:$0xf]
  %v5432 = vld [vmem:[%s5 + $0x68] sm:$0xf]
  %v5433 = vld [vmem:[%s5 + $0x6c] sm:$0xf]
  %v5434 = vld [vmem:[%s5 + $0x70] sm:$0xf]
  %v5435 = vld [vmem:[%s5 + $0x74] sm:$0xf]
  %v5436 = vld [vmem:[%s5 + $0x78] sm:$0xf]
  %v5437 = vld [vmem:[%s5 + $0x7c] sm:$0xf]
  %v5438 = vld [vmem:[%s5 + $0x80] sm:$0xf]
  %v5439 = vld [vmem:[%s5 + $0x84] sm:$0xf]
  %v5440 = vld [vmem:[%s5 + $0x88] sm:$0xf]
  %v5441 = vld [vmem:[%s5 + $0x8c] sm:$0xf]
  %v5442 = vld [vmem:[%s5 + $0x90] sm:$0xf]
  %v5443 = vld [vmem:[%s5 + $0x94] sm:$0xf]
  %v5444 = vld [vmem:[%s5 + $0x98] sm:$0xf]
  %v5445 = vld [vmem:[%s5 + $0x9c] sm:$0xf]
  %v5446 = vld [vmem:[%s5 + $0xa0] sm:$0xf]
  %v5447 = vld [vmem:[%s5 + $0xa4] sm:$0xf]
  %v5448 = vld [vmem:[%s5 + $0xa8] sm:$0xf]
  %v5449 = vld [vmem:[%s5 + $0xac] sm:$0xf]
  %v5450 = vld [vmem:[%s5 + $0xb0] sm:$0xf]
  %v5451 = vld [vmem:[%s5 + $0xb4] sm:$0xf]
  %v5452 = vld [vmem:[%s5 + $0xb8] sm:$0xf]
  %v5453 = vld [vmem:[%s5 + $0xbc] sm:$0xf]
  %v5454 = vld [vmem:[%s5 + $0xc0] sm:$0xf]
  %v5455 = vld [vmem:[%s5 + $0xc4] sm:$0xf]
  %v5456 = vld [vmem:[%s6] sm:$0x1]
  %v5458 = vlaneseq
  %v5459 = vshrl.u32 %v5458, 7
  %v5460 = vsub.s32 0, %v5459
  %v5461 = vrot.slane %v5456, %v5460
  %v5513 = vunpack.c.l.b16 %v5406
  %v5514 = vunpack.c.l.b16 %v5407
  %v5515 = vunpack.c.l.b16 %v5408
  %v5516 = vunpack.c.l.b16 %v5409
  %v5517 = vunpack.c.l.b16 %v5410
  %v5518 = vunpack.c.l.b16 %v5411
  %v5519 = vunpack.c.l.b16 %v5412
  %v5520 = vunpack.c.l.b16 %v5413
  %v5521 = vunpack.c.l.b16 %v5414
  %v5522 = vunpack.c.l.b16 %v5415
  %v5523 = vunpack.c.l.b16 %v5416
  %v5524 = vunpack.c.l.b16 %v5417
  %v5525 = vunpack.c.l.b16 %v5418
  %v5526 = vunpack.c.l.b16 %v5419
  %v5527 = vunpack.c.l.b16 %v5420
  %v5528 = vunpack.c.l.b16 %v5421
  %v5529 = vunpack.c.l.b16 %v5422
  %v5530 = vunpack.c.l.b16 %v5423
  %v5531 = vunpack.c.l.b16 %v5424
  %v5532 = vunpack.c.l.b16 %v5425
  %v5533 = vunpack.c.l.b16 %v5426
  %v5534 = vunpack.c.l.b16 %v5427
  %v5535 = vunpack.c.l.b16 %v5428
  %v5536 = vunpack.c.l.b16 %v5429
  %v5537 = vunpack.c.l.b16 %v5430
  %v5538 = vunpack.c.l.b16 %v5431
  %v5539 = vunpack.c.l.b16 %v5432
  %v5540 = vunpack.c.l.b16 %v5433
  %v5541 = vunpack.c.l.b16 %v5434
  %v5542 = vunpack.c.l.b16 %v5435
  %v5543 = vunpack.c.l.b16 %v5436
  %v5544 = vunpack.c.l.b16 %v5437
  %v5545 = vunpack.c.l.b16 %v5438
  %v5546 = vunpack.c.l.b16 %v5439
  %v5547 = vunpack.c.l.b16 %v5440
  %v5548 = vunpack.c.l.b16 %v5441
  %v5549 = vunpack.c.l.b16 %v5442
  %v5550 = vunpack.c.l.b16 %v5443
  %v5551 = vunpack.c.l.b16 %v5444
  %v5552 = vunpack.c.l.b16 %v5445
  %v5553 = vunpack.c.l.b16 %v5446
  %v5554 = vunpack.c.l.b16 %v5447
  %v5555 = vunpack.c.l.b16 %v5448
  %v5556 = vunpack.c.l.b16 %v5449
  %v5557 = vunpack.c.l.b16 %v5450
  %v5558 = vunpack.c.l.b16 %v5451
  %v5559 = vunpack.c.l.b16 %v5452
  %v5560 = vunpack.c.l.b16 %v5453
  %v5561 = vunpack.c.l.b16 %v5454
  %v5562 = vunpack.c.l.b16 %v5455
  %v5563 = vpack.c.b16 %v5514, %v5513
  %v5564 = vpack.c.b16 %v5516, %v5515
  %v5565 = vpack.c.b16 %v5518, %v5517
  %v5566 = vpack.c.b16 %v5520, %v5519
  %v5567 = vpack.c.b16 %v5522, %v5521
  %v5568 = vpack.c.b16 %v5524, %v5523
  %v5569 = vpack.c.b16 %v5526, %v5525
  %v5570 = vpack.c.b16 %v5528, %v5527
  %v5571 = vpack.c.b16 %v5530, %v5529
  %v5572 = vpack.c.b16 %v5532, %v5531
  %v5573 = vpack.c.b16 %v5534, %v5533
  %v5574 = vpack.c.b16 %v5536, %v5535
  %v5575 = vpack.c.b16 %v5538, %v5537
  %v5576 = vpack.c.b16 %v5540, %v5539
  %v5577 = vpack.c.b16 %v5542, %v5541
  %v5578 = vpack.c.b16 %v5544, %v5543
  %v5579 = vpack.c.b16 %v5546, %v5545
  %v5580 = vpack.c.b16 %v5548, %v5547
  %v5581 = vpack.c.b16 %v5550, %v5549
  %v5582 = vpack.c.b16 %v5552, %v5551
  %v5583 = vpack.c.b16 %v5554, %v5553
  %v5584 = vpack.c.b16 %v5556, %v5555
  %v5585 = vpack.c.b16 %v5558, %v5557
  %v5586 = vpack.c.b16 %v5560, %v5559
  %v5587 = vpack.c.b16 %v5562, %v5561
  %v5614 = vsel %vm5346, %v5405, 0
  %5616 = vmatprep.subr.bf16.mxu0 0
  %5617 = vmatpush1.bf16.msra.mxu0 %v5563
  %5618 = vmatprep.subr.bf16.mxu0 0
  %5619 = vmatpush1.bf16.msra.mxu0 %v5564
  %5620 = vmatprep.subr.bf16.mxu0 0
  %5621 = vmatpush1.bf16.msra.mxu0 %v5565
  %5622 = vmatprep.subr.bf16.mxu0 0
  %5623 = vmatpush1.bf16.msra.mxu0 %v5566
  %5624 = vmatprep.subr.bf16.mxu0 0
  %5625 = vmatpush1.bf16.msra.mxu0 %v5567
  %5626 = vmatprep.subr.bf16.mxu0 0
  %5627 = vmatpush1.bf16.msra.mxu0 %v5568
  %5628 = vmatprep.subr.bf16.mxu0 0
  %5629 = vmatpush1.bf16.msra.mxu0 %v5569
  %5630 = vmatprep.subr.bf16.mxu0 0
  %5631 = vmatpush1.bf16.msra.mxu0 %v5570
  %5632 = vmatprep.subr.bf16.mxu0 0
  %5633 = vmatpush1.bf16.msra.mxu0 %v5571
  %5634 = vmatprep.subr.bf16.mxu0 0
  %5635 = vmatpush1.bf16.msra.mxu0 %v5572
  %5636 = vmatprep.subr.bf16.mxu0 0
  %5637 = vmatpush1.bf16.msra.mxu0 %v5573
  %5638 = vmatprep.subr.bf16.mxu0 0
  %5639 = vmatpush1.bf16.msra.mxu0 %v5574
  %5640 = vmatprep.subr.bf16.mxu0 0
  %5641 = vmatpush1.bf16.msra.mxu0 %v5575
  %5642 = vmatprep.subr.bf16.mxu0 0
  %5643 = vmatpush1.bf16.msra.mxu0 %v5576
  %5644 = vmatprep.subr.bf16.mxu0 0
  %5645 = vmatpush1.bf16.msra.mxu0 %v5577
  %5646 = vmatprep.subr.bf16.mxu0 0
  %5647 = vmatpush1.bf16.msra.mxu0 %v5578
  %5648 = vmatprep.mubr.bf16.mxu0 %v5403
  %5649 = vmatmul.mubr.bf16.gmra.mrb[0].mxu0 %v5402
  %v5650 = vpop.f32.mrb[0].mxu0
  %v5651 = vadd.f32 %v5461, %v5650
  %v5652 = vpop.f32.mrb[0].mxu0
  %v5653 = vpop.f32.mrb[0].mxu0
  %v5654 = vpop.f32.mrb[0].mxu0
  %5655 = vdwg.mxu0
  %5656 = vmatprep.subr.bf16.mxu0 0
  %5657 = vmatpush1.bf16.msra.mxu0 %v5579
  %5658 = vmatprep.subr.bf16.mxu0 0
  %5659 = vmatpush1.bf16.msra.mxu0 %v5580
  %5660 = vmatprep.subr.bf16.mxu0 0
  %5661 = vmatpush1.bf16.msra.mxu0 %v5581
  %5662 = vmatprep.subr.bf16.mxu0 0
  %5663 = vmatpush1.bf16.msra.mxu0 %v5582
  %5664 = vmatprep.subr.bf16.mxu0 0
  %5665 = vmatpush1.bf16.msra.mxu0 %v5583
  %5666 = vmatprep.subr.bf16.mxu0 0
  %5667 = vmatpush1.bf16.msra.mxu0 %v5584
  %5668 = vmatprep.subr.bf16.mxu0 0
  %5669 = vmatpush1.bf16.msra.mxu0 %v5585
  %5670 = vmatprep.subr.bf16.mxu0 0
  %5671 = vmatpush1.bf16.msra.mxu0 %v5586
  %5672 = vmatprep.subr.bf16.mxu0 0
  %5673 = vmatpush1.bf16.msra.mxu0 %v5587
  %5674 = vmatprep.subr.bf16.mxu0 0
  %5675 = vmatpush1.bf16.msra.mxu0 0
  %5676 = vmatprep.subr.bf16.mxu0 0
  %5677 = vmatpush1.bf16.msra.mxu0 0
  %5678 = vmatprep.subr.bf16.mxu0 0
  %5679 = vmatpush1.bf16.msra.mxu0 0
  %5680 = vmatprep.subr.bf16.mxu0 0
  %5681 = vmatpush1.bf16.msra.mxu0 0
  %5682 = vmatprep.subr.bf16.mxu0 0
  %5683 = vmatpush1.bf16.msra.mxu0 0
  %5684 = vmatprep.subr.bf16.mxu0 0
  %5685 = vmatpush1.bf16.msra.mxu0 0
  %5686 = vmatprep.subr.bf16.mxu0 0
  %5687 = vmatpush1.bf16.msra.mxu0 0
  %5688 = vmatprep.mubr.bf16.mxu0 %v5614
  %5689 = vmatmul.mubr.bf16.gmra.mrb[0].mxu0 %v5404
  %v5690 = vpop.f32.mrb[0].mxu0
  %v5691 = vadd.f32 %v5651, %v5690
  %v5692 = vpop.f32.mrb[0].mxu0
  %v5693 = vpop.f32.mrb[0].mxu0
  %v5694 = vpop.f32.mrb[0].mxu0
  %5695 = vdwg.mxu0
  %v5696 = vmax.f32 %v5691, 0.0
  %v5697 = vpack.c.bf16 %v5696, %v5696
  %v5698 = vld [vmem:[%s7] sm:$0xf]
  %v5699 = vld [vmem:[%s7 + $0x4] sm:$0xf]
  %v5700 = vld [vmem:[%s7 + $0x8] sm:$0xf]
  %v5701 = vld [vmem:[%s7 + $0xc] sm:$0xf]
  %v5702 = vld [vmem:[%s7 + $0x10] sm:$0xf]
  %v5703 = vld [vmem:[%s7 + $0x14] sm:$0xf]
  %v5704 = vld [vmem:[%s7 + $0x18] sm:$0xf]
  %v5705 = vld [vmem:[%s7 + $0x1c] sm:$0xf]
  %v5706 = vld [vmem:[%s7 + $0x20] sm:$0xf]
  %v5707 = vld [vmem:[%s7 + $0x24] sm:$0xf]
  %v5708 = vld [vmem:[%s7 + $0x28] sm:$0xf]
  %v5709 = vld [vmem:[%s7 + $0x2c] sm:$0xf]
  %v5710 = vld [vmem:[%s7 + $0x30] sm:$0xf]
  %v5711 = vld [vmem:[%s7 + $0x34] sm:$0xf]
  %v5712 = vld [vmem:[%s7 + $0x38] sm:$0xf]
  %v5713 = vld [vmem:[%s7 + $0x3c] sm:$0xf]
  %v5714 = vld [vmem:[%s8] sm:$0x1]
  %v5716 = vlaneseq
  %v5717 = vshrl.u32 %v5716, 7
  %v5718 = vsub.s32 0, %v5717
  %v5719 = vrot.slane %v5714, %v5718
  %v5737 = vunpack.c.l.b16 %v5698
  %v5738 = vunpack.c.l.b16 %v5699
  %v5739 = vunpack.c.l.b16 %v5700
  %v5740 = vunpack.c.l.b16 %v5701
  %v5741 = vunpack.c.l.b16 %v5702
  %v5742 = vunpack.c.l.b16 %v5703
  %v5743 = vunpack.c.l.b16 %v5704
  %v5744 = vunpack.c.l.b16 %v5705
  %v5745 = vunpack.c.l.b16 %v5706
  %v5746 = vunpack.c.l.b16 %v5707
  %v5747 = vunpack.c.l.b16 %v5708
  %v5748 = vunpack.c.l.b16 %v5709
  %v5749 = vunpack.c.l.b16 %v5710
  %v5750 = vunpack.c.l.b16 %v5711
  %v5751 = vunpack.c.l.b16 %v5712
  %v5752 = vunpack.c.l.b16 %v5713
  %v5753 = vpack.c.b16 %v5738, %v5737
  %v5754 = vpack.c.b16 %v5740, %v5739
  %v5755 = vpack.c.b16 %v5742, %v5741
  %v5756 = vpack.c.b16 %v5744, %v5743
  %v5757 = vpack.c.b16 %v5746, %v5745
  %v5758 = vpack.c.b16 %v5748, %v5747
  %v5759 = vpack.c.b16 %v5750, %v5749
  %v5760 = vpack.c.b16 %v5752, %v5751
  %5769 = vmatprep.subr.bf16.mxu0 0
  %5770 = vmatpush1.bf16.msra.mxu0 %v5753
  %5771 = vmatprep.subr.bf16.mxu0 0
  %5772 = vmatpush1.bf16.msra.mxu0 %v5754
  %5773 = vmatprep.subr.bf16.mxu0 0
  %5774 = vmatpush1.bf16.msra.mxu0 %v5755
  %5775 = vmatprep.subr.bf16.mxu0 0
  %5776 = vmatpush1.bf16.msra.mxu0 %v5756
  %5777 = vmatprep.subr.bf16.mxu0 0
  %5778 = vmatpush1.bf16.msra.mxu0 %v5757
  %5779 = vmatprep.subr.bf16.mxu0 0
  %5780 = vmatpush1.bf16.msra.mxu0 %v5758
  %5781 = vmatprep.subr.bf16.mxu0 0
  %5782 = vmatpush1.bf16.msra.mxu0 %v5759
  %5783 = vmatprep.subr.bf16.mxu0 0
  %5784 = vmatpush1.bf16.msra.mxu0 %v5760
  %5785 = vmatprep.subr.bf16.mxu0 0
  %5786 = vmatpush1.bf16.msra.mxu0 0
  %5787 = vmatprep.subr.bf16.mxu0 0
  %5788 = vmatpush1.bf16.msra.mxu0 0
  %5789 = vmatprep.subr.bf16.mxu0 0
  %5790 = vmatpush1.bf16.msra.mxu0 0
  %5791 = vmatprep.subr.bf16.mxu0 0
  %5792 = vmatpush1.bf16.msra.mxu0 0
  %5793 = vmatprep.subr.bf16.mxu0 0
  %5794 = vmatpush1.bf16.msra.mxu0 0
  %5795 = vmatprep.subr.bf16.mxu0 0
  %5796 = vmatpush1.bf16.msra.mxu0 0
  %5797 = vmatprep.subr.bf16.mxu0 0
  %5798 = vmatpush1.bf16.msra.mxu0 0
  %5799 = vmatprep.subr.bf16.mxu0 0
  %5800 = vmatpush1.bf16.msra.mxu0 0
  %5801 = vmatprep.mubr.bf16.mxu0 0
  %5802 = vmatmul.mubr.bf16.gmra.mrb[0].mxu0 %v5697
  %v5803 = vpop.f32.mrb[0].mxu0
  %v5804 = vadd.f32 %v5719, %v5803
  %v5805 = vpop.f32.mrb[0].mxu0
  %v5806 = vpop.f32.mrb[0].mxu0
  %v5807 = vpop.f32.mrb[0].mxu0
  %5808 = vdwg.mxu0
  %v5809 = vmax.f32 %v5804, 0.0
  %v5810 = vpack.c.bf16 %v5809, %v5809
  %v5811 = vld [vmem:[%s9] sm:$0xf]
  %v5812 = vld [vmem:[%s9 + $0x4] sm:$0xf]
  %v5813 = vld [vmem:[%s9 + $0x8] sm:$0xf]
  %v5814 = vld [vmem:[%s9 + $0xc] sm:$0xf]
  %v5815 = vld [vmem:[%s9 + $0x10] sm:$0xf]
  %v5816 = vld [vmem:[%s9 + $0x14] sm:$0xf]
  %v5817 = vld [vmem:[%s9 + $0x18] sm:$0xf]
  %v5818 = vld [vmem:[%s9 + $0x1c] sm:$0xf]
  %v5819 = vld [vmem:[%s9 + $0x20] sm:$0xf]
  %v5820 = vld [vmem:[%s9 + $0x24] sm:$0xf]
  %v5821 = vld [vmem:[%s9 + $0x28] sm:$0xf]
  %v5822 = vld [vmem:[%s9 + $0x2c] sm:$0xf]
  %v5823 = vld [vmem:[%s9 + $0x30] sm:$0xf]
  %v5824 = vld [vmem:[%s9 + $0x34] sm:$0xf]
  %v5825 = vld [vmem:[%s9 + $0x38] sm:$0xf]
  %v5826 = vld [vmem:[%s9 + $0x3c] sm:$0xf]
  %v5827 = vld [vmem:[%s10] sm:$0x1]
  %v5829 = vlaneseq
  %v5830 = vshrl.u32 %v5829, 7
  %v5831 = vsub.s32 0, %v5830
  %v5832 = vrot.slane %v5827, %v5831
  %v5850 = vunpack.c.l.b16 %v5811
  %v5851 = vunpack.c.l.b16 %v5812
  %v5852 = vunpack.c.l.b16 %v5813
  %v5853 = vunpack.c.l.b16 %v5814
  %v5854 = vunpack.c.l.b16 %v5815
  %v5855 = vunpack.c.l.b16 %v5816
  %v5856 = vunpack.c.l.b16 %v5817
  %v5857 = vunpack.c.l.b16 %v5818
  %v5858 = vunpack.c.l.b16 %v5819
  %v5859 = vunpack.c.l.b16 %v5820
  %v5860 = vunpack.c.l.b16 %v5821
  %v5861 = vunpack.c.l.b16 %v5822
  %v5862 = vunpack.c.l.b16 %v5823
  %v5863 = vunpack.c.l.b16 %v5824
  %v5864 = vunpack.c.l.b16 %v5825
  %v5865 = vunpack.c.l.b16 %v5826
  %v5866 = vpack.c.b16 %v5851, %v5850
  %v5867 = vpack.c.b16 %v5853, %v5852
  %v5868 = vpack.c.b16 %v5855, %v5854
  %v5869 = vpack.c.b16 %v5857, %v5856
  %v5870 = vpack.c.b16 %v5859, %v5858
  %v5871 = vpack.c.b16 %v5861, %v5860
  %v5872 = vpack.c.b16 %v5863, %v5862
  %v5873 = vpack.c.b16 %v5865, %v5864
  %5882 = vmatprep.subr.bf16.mxu0 0
  %5883 = vmatpush1.bf16.msra.mxu0 %v5866
  %5884 = vmatprep.subr.bf16.mxu0 0
  %5885 = vmatpush1.bf16.msra.mxu0 %v5867
  %5886 = vmatprep.subr.bf16.mxu0 0
  %5887 = vmatpush1.bf16.msra.mxu0 %v5868
  %5888 = vmatprep.subr.bf16.mxu0 0
  %5889 = vmatpush1.bf16.msra.mxu0 %v5869
  %5890 = vmatprep.subr.bf16.mxu0 0
  %5891 = vmatpush1.bf16.msra.mxu0 %v5870
  %5892 = vmatprep.subr.bf16.mxu0 0
  %5893 = vmatpush1.bf16.msra.mxu0 %v5871
  %5894 = vmatprep.subr.bf16.mxu0 0
  %5895 = vmatpush1.bf16.msra.mxu0 %v5872
  %5896 = vmatprep.subr.bf16.mxu0 0
  %5897 = vmatpush1.bf16.msra.mxu0 %v5873
  %5898 = vmatprep.subr.bf16.mxu0 0
  %5899 = vmatpush1.bf16.msra.mxu0 0
  %5900 = vmatprep.subr.bf16.mxu0 0
  %5901 = vmatpush1.bf16.msra.mxu0 0
  %5902 = vmatprep.subr.bf16.mxu0 0
  %5903 = vmatpush1.bf16.msra.mxu0 0
  %5904 = vmatprep.subr.bf16.mxu0 0
  %5905 = vmatpush1.bf16.msra.mxu0 0
  %5906 = vmatprep.subr.bf16.mxu0 0
  %5907 = vmatpush1.bf16.msra.mxu0 0
  %5908 = vmatprep.subr.bf16.mxu0 0
  %5909 = vmatpush1.bf16.msra.mxu0 0
  %5910 = vmatprep.subr.bf16.mxu0 0
  %5911 = vmatpush1.bf16.msra.mxu0 0
  %5912 = vmatprep.subr.bf16.mxu0 0
  %5913 = vmatpush1.bf16.msra.mxu0 0
  %5914 = vmatprep.mubr.bf16.mxu0 0
  %5915 = vmatmul.mubr.bf16.gmra.mrb[0].mxu0 %v5810
  %v5916 = vpop.f32.mrb[0].mxu0
  %v5917 = vadd.f32 %v5832, %v5916
  %v5918 = vpop.f32.mrb[0].mxu0
  %v5919 = vpop.f32.mrb[0].mxu0
  %v5920 = vpop.f32.mrb[0].mxu0
  %5921 = vdwg.mxu0
  %5922 = vst [vmem:[%s11] sm:$0xff] %v5917
  // Predicated region
  $region53: #{net_forward.1} parent=0 // pred_check
    _
  $region54: #{net_forward.1} parent=0 // pred_check_branch
    %5924 = sbr.rel (0) target = $region56
  $region55: #{net_forward.1} parent=0 // pred_region
    _
  $region56: #{net_forward.1} parent=0 // pred_fallthru
    _
  // Predicated region
  $region57: #{net_forward.1} parent=0 // pred_check
    _
  $region58: #{net_forward.1} parent=0 // pred_check_branch
    %5926 = sbr.rel (0) target = $region60
  $region59: #{net_forward.1} parent=0 // pred_region
    _
  $region60: #{net_forward.1} parent=0 // pred_fallthru
    _

</llo_original>
